<compile_context>
chip_gen: v7x
topology: tpu7x:2x2x1
jax: 0.10.0
libtpu: 0.0.40
codegen_flags: <defaults>
</compile_context>

<pallas_src>
import functools

import jax
import jax.numpy as jnp
from jax.experimental import pallas as pl
from jax.experimental.pallas import tpu as pltpu

EPS = 1e-5
LANE = 128


# --------------------------------------------------------------------------
# Kernels
# --------------------------------------------------------------------------
def _conv1x1_stats_kernel(x_ref, w_ref, o_ref, st_ref):
    """o = x @ w (bf16 MXU, f32 acc); st = per-tile [sum; sum of squares]."""
    h = jnp.dot(x_ref[...], w_ref[...], preferred_element_type=jnp.float32)
    o_ref[...] = h.astype(o_ref.dtype)
    st_ref[...] = jnp.concatenate(
        [jnp.sum(h, axis=0, keepdims=True),
         jnp.sum(h * h, axis=0, keepdims=True)], axis=0)


def _bn_relu_conv1x1_stats_kernel(h_ref, sc_ref, sh_ref, w_ref, o_ref, st_ref):
    """o = relu(h*sc + sh) @ w; st = per-tile [sum; sum of squares]."""
    y = jnp.maximum(h_ref[...].astype(jnp.float32) * sc_ref[...] + sh_ref[...],
                    0.0)
    h = jnp.dot(y.astype(jnp.bfloat16), w_ref[...],
                preferred_element_type=jnp.float32)
    o_ref[...] = h.astype(o_ref.dtype)
    st_ref[...] = jnp.concatenate(
        [jnp.sum(h, axis=0, keepdims=True),
         jnp.sum(h * h, axis=0, keepdims=True)], axis=0)


def _bn_relu_conv3x3_stats_kernel(h_ref, sc_ref, sh_ref, w_ref, o_ref, st_ref,
                                  pad_ref, *, H, W, C):
    """Per-image fused bn1+relu -> 3x3 conv (pad 1) -> partial bn2 stats.

    Builds only the 3 column(kw)-shifted copies of the activation into a
    channel-concatenated slab (H+2, W, 3C); the 3 row(kh) shifts are cheap
    leading-dim slices and the conv is 3 accumulated (HW,3C)x(3C,C) matmuls.
    """
    HW = H * W
    y = jnp.maximum(h_ref[...].astype(jnp.float32) * sc_ref[...] + sh_ref[...],
                    0.0)
    y = y.astype(pad_ref.dtype).reshape(H, W, C)

    # Halo rows re-zeroed every step (2*W*3C stores, negligible) so the
    # kernel is correct even when the parallel grid axis is split across
    # TensorCores (each core has its own, uninitialized scratch).
    zrow = jnp.zeros((1, W, 3 * C), pad_ref.dtype)
    zcol = jnp.zeros((H, 1, C), pad_ref.dtype)
    pad_ref[0:1, :, :] = zrow
    pad_ref[H + 1:H + 2, :, :] = zrow

    # kw = 1 tap: direct, sublane-aligned full-width copy.
    pad_ref[1:H + 1, :, C:2 * C] = y
    # kw = 0 tap: columns shifted right by one (zero column at w = 0).
    pad_ref[1:H + 1, 0:1, 0:C] = zcol
    pad_ref[1:H + 1, 1:W, 0:C] = y[:, 0:W - 1, :]
    # kw = 2 tap: columns shifted left by one (zero column at w = W-1).
    pad_ref[1:H + 1, W - 1:W, 2 * C:3 * C] = zcol
    pad_ref[1:H + 1, 0:W - 1, 2 * C:3 * C] = y[:, 1:W, :]

    # Row (kh) shifts are leading-dim slices of the slab: three accumulated
    # K=3C matmuls instead of nine shifted copies + one huge-K matmul.
    acc = jnp.dot(pad_ref[0:H, :, :].reshape(HW, 3 * C),
                  w_ref[0:3 * C, :], preferred_element_type=jnp.float32)
    acc += jnp.dot(pad_ref[1:H + 1, :, :].reshape(HW, 3 * C),
                   w_ref[3 * C:6 * C, :], preferred_element_type=jnp.float32)
    acc += jnp.dot(pad_ref[2:H + 2, :, :].reshape(HW, 3 * C),
                   w_ref[6 * C:9 * C, :], preferred_element_type=jnp.float32)

    o_ref[...] = acc.astype(o_ref.dtype)
    st_ref[...] = jnp.concatenate(
        [jnp.sum(acc, axis=0, keepdims=True),
         jnp.sum(acc * acc, axis=0, keepdims=True)], axis=0)


def _bn_residual_relu_kernel(h_ref, x_ref, sc_ref, sh_ref, o_ref):
    """o = relu(h*sc + sh + identity); identity streamed in bf16."""
    y = h_ref[...].astype(jnp.float32) * sc_ref[...] + sh_ref[...]
    o_ref[...] = jnp.maximum(y + x_ref[...].astype(jnp.float32), 0.0)


# --------------------------------------------------------------------------
# Wrapper helpers
# --------------------------------------------------------------------------
def _ceil_to(n, m):
    return ((n + m - 1) // m) * m


def _pad_axis(a, axis, new_size):
    if a.shape[axis] == new_size:
        return a
    cfg = [(0, 0)] * a.ndim
    cfg[axis] = (0, new_size - a.shape[axis])
    return jnp.pad(a, cfg)


def _vmem_limit_bytes():
    """~80% of physical VMEM: ~51 MiB on v7x, ~102 MiB on v5e/v6e."""
    try:
        cap = getattr(pltpu.get_tpu_info(), "vmem_capacity_bytes", None)
        if cap is None:
            return 64 * 1024 * 1024
        cap = int(cap)
        return min(int(cap * 0.8), cap - 8 * 1024 * 1024)
    except Exception:
        return 64 * 1024 * 1024          # known-safe fallback


def _pick_row_tile(P, c3p, vmem_limit):
    """Row tile for the 1x1 / residual passes, sized from the VMEM budget."""
    # Heaviest stream (residual): h3 bf16 + identity bf16 + out f32 per row,
    # double-buffered; keep it under ~half the VMEM limit.
    bytes_per_row = 2 * (2 + 2 + 4) * c3p
    tp = (vmem_limit // 2) // max(bytes_per_row, 1)
    tp = max(8, min(1024, tp))
    tp = (tp // 8) * 8
    if tp >= P:
        return P
    # Prefer an exact divisor near the budget tile (avoids row padding).
    for cand in range(tp, max(tp // 2, 7), -8):
        if P % cand == 0:
            return cand
    return tp


def _fold_bn(stats, count, gamma, beta):
    """Fold batch stats + affine params into one per-channel scale/shift."""
    mean = stats[0:1] / count
    var = jnp.maximum(stats[1:2] / count - mean * mean, 0.0)
    scale = gamma * jax.lax.rsqrt(var + EPS)
    shift = beta - mean * scale
    return scale, shift


# --------------------------------------------------------------------------
# Block wrapper
# --------------------------------------------------------------------------
def bottleneck_block(x_nchw, params):
    """x_nchw: (N, Cin, H, W) float32, Cin == 4*out_channels (no downsample)."""
    N, Cin, H, W = x_nchw.shape
    C1 = params["w1"].shape[1]
    C3 = params["w3"].shape[1]
    assert Cin == C3, "identity add requires in_channels == 4*out_channels"
    P = N * H * W
    HW = H * W

    # Lane-dense channel padding (zero-pad to multiples of 128).
    Cip = _ceil_to(Cin, LANE)
    C1p = _ceil_to(C1, LANE)
    C3p = _ceil_to(C3, LANE)
    assert Cip == C3p

    # Weights in bf16 for the MXU.  Conv biases (b1/b2/b3) are dropped: a
    # per-channel constant added right before training-mode BN cancels in
    # (h - mean), so they are a mathematical no-op here.
    w1 = _pad_axis(_pad_axis(params["w1"], 0, Cip), 1, C1p).astype(jnp.bfloat16)
    w2 = _pad_axis(_pad_axis(params["w2"], 1, C1p), 2, C1p)
    w2 = w2.reshape(9 * C1p, C1p).astype(jnp.bfloat16)   # tap = kh*3+kw on K
    w3 = _pad_axis(_pad_axis(params["w3"], 0, C1p), 1, C3p).astype(jnp.bfloat16)
    g1, be1 = _pad_axis(params["g1"], 1, C1p), _pad_axis(params["be1"], 1, C1p)
    g2, be2 = _pad_axis(params["g2"], 1, C1p), _pad_axis(params["be2"], 1, C1p)
    g3, be3 = _pad_axis(params["g3"], 1, C3p), _pad_axis(params["be3"], 1, C3p)

    # NCHW -> NHWC -> (P, Cin) -> lane-padded (P, Cip), streamed as bf16:
    # conv1 casts to bf16 for the MXU anyway, and the bf16 identity halves the
    # HBM read of the mem-bound residual pass.
    x2d = _pad_axis(jnp.transpose(x_nchw, (0, 2, 3, 1)).reshape(P, Cin),
                    1, Cip).astype(jnp.bfloat16)

    vmem_limit = _vmem_limit_bytes()
    cparams = pltpu.CompilerParams(dimension_semantics=("parallel",),
                                   vmem_limit_bytes=vmem_limit)

    TP = _pick_row_tile(P, C3p, vmem_limit)
    Ppad = _ceil_to(P, TP)
    nT = Ppad // TP
    x2d_p = _pad_axis(x2d, 0, Ppad)           # zero rows -> zero conv1 rows

    row_spec = lambda c: pl.BlockSpec((TP, c), lambda i: (i, 0))
    vec_spec = lambda c: pl.BlockSpec((1, c), lambda i: (0, 0))      # resident
    mat_spec = lambda r, c: pl.BlockSpec((r, c), lambda i: (0, 0))   # resident
    st_spec = lambda c: pl.BlockSpec((None, 2, c), lambda i: (i, 0, 0))
    img_spec = lambda c: pl.BlockSpec((None, HW, c), lambda n: (n, 0, 0))
    img_st_spec = lambda c: pl.BlockSpec((None, 2, c), lambda n: (n, 0, 0))

    # ---- conv1 (1x1) + bn1 partial stats ----------------------------------
    h1, st1 = pl.pallas_call(
        _conv1x1_stats_kernel,
        grid=(nT,),
        in_specs=[row_spec(Cip), mat_spec(Cip, C1p)],
        out_specs=[row_spec(C1p), st_spec(C1p)],
        out_shape=[jax.ShapeDtypeStruct((Ppad, C1p), jnp.bfloat16),
                   jax.ShapeDtypeStruct((nT, 2, C1p), jnp.float32)],
        compiler_params=cparams,
    )(x2d_p, w1)
    sc1, sh1 = _fold_bn(st1.sum(axis=0), P, g1, be1)   # padded rows add 0

    # ---- bn1+relu -> conv2 (3x3, pad 1) -> bn2 partial stats (per image) ---
    h1_img = (h1[:P] if Ppad != P else h1).reshape(N, HW, C1p)
    h2, st2 = pl.pallas_call(
        functools.partial(_bn_relu_conv3x3_stats_kernel, H=H, W=W, C=C1p),
        grid=(N,),
        in_specs=[img_spec(C1p), vec_spec(C1p), vec_spec(C1p),
                  mat_spec(9 * C1p, C1p)],
        out_specs=[img_spec(C1p), img_st_spec(C1p)],
        out_shape=[jax.ShapeDtypeStruct((N, HW, C1p), jnp.bfloat16),
                   jax.ShapeDtypeStruct((N, 2, C1p), jnp.float32)],
        scratch_shapes=[pltpu.VMEM((H + 2, W, 3 * C1p), jnp.bfloat16)],
        compiler_params=cparams,
    )(h1_img, sc1, sh1, w2)
    sc2, sh2 = _fold_bn(st2.sum(axis=0), P, g2, be2)

    # ---- bn2+relu -> conv3 (1x1) -> bn3 partial stats ----------------------
    h2_rows = _pad_axis(h2.reshape(P, C1p), 0, Ppad)
    h3, st3 = pl.pallas_call(
        _bn_relu_conv1x1_stats_kernel,
        grid=(nT,),
        in_specs=[row_spec(C1p), vec_spec(C1p), vec_spec(C1p),
                  mat_spec(C1p, C3p)],
        out_specs=[row_spec(C3p), st_spec(C3p)],
        out_shape=[jax.ShapeDtypeStruct((Ppad, C3p), jnp.bfloat16),
                   jax.ShapeDtypeStruct((nT, 2, C3p), jnp.float32)],
        compiler_params=cparams,
    )(h2_rows, sc2, sh2, w3)
    st3_tot = st3.sum(axis=0)
    if Ppad != P:
        # Zero-padded rows pass through bn2+relu as relu(sh2); subtract their
        # (identical) contribution to the bn3 statistics analytically.
        v = jnp.dot(jnp.maximum(sh2, 0.0).astype(jnp.bfloat16), w3,
                    preferred_element_type=jnp.float32)
        st3_tot = st3_tot - (Ppad - P) * jnp.concatenate([v, v * v], axis=0)
    sc3, sh3 = _fold_bn(st3_tot, P, g3, be3)

    # ---- bn3 + residual add + relu -----------------------------------------
    out2d = pl.pallas_call(
        _bn_residual_relu_kernel,
        grid=(nT,),
        in_specs=[row_spec(C3p), row_spec(C3p), vec_spec(C3p), vec_spec(C3p)],
        out_specs=row_spec(C3p),
        out_shape=jax.ShapeDtypeStruct((Ppad, C3p), jnp.float32),
        compiler_params=cparams,
    )(h3, x2d_p, sc3, sh3)

    # (Ppad, C3p) -> drop row/channel padding -> NHWC -> NCHW
    return jnp.transpose(out2d[:P, :C3].reshape(N, H, W, C3), (0, 3, 1, 2))


# --------------------------------------------------------------------------
# Pure-JAX reference (f32, PyTorch training-mode forward semantics)
# --------------------------------------------------------------------------
def reference_block(x_nchw, params):
    x = jnp.transpose(x_nchw, (0, 2, 3, 1))      # NHWC

    def bn(h, g, be):
        mean = h.mean(axis=(0, 1, 2))
        var = ((h - mean) ** 2).mean(axis=(0, 1, 2))
        return (h - mean) / jnp.sqrt(var + EPS) * g + be

    h = jnp.einsum("nhwc,cd->nhwd", x, params["w1"]) + params["b1"][0]
    h = jax.nn.relu(bn(h, params["g1"][0], params["be1"][0]))

    C1 = params["w1"].shape[1]
    w2_hwio = params["w2"].reshape(3, 3, C1, C1)
    h = jax.lax.conv_general_dilated(
        h, w2_hwio, window_strides=(1, 1), padding="SAME",
        dimension_numbers=("NHWC", "HWIO", "NHWC")) + params["b2"][0]
    h = jax.nn.relu(bn(h, params["g2"][0], params["be2"][0]))

    h = jnp.einsum("nhwc,cd->nhwd", h, params["w3"]) + params["b3"][0]
    h = bn(h, params["g3"][0], params["be3"][0])

    out = jax.nn.relu(h + x)
    return jnp.transpose(out, (0, 3, 1, 2))


def make_params(key, in_channels, out_channels):
    C1 = out_channels
    C3 = out_channels * 4
    ks = jax.random.split(key, 12)

    def nrm(k, shape, scale=0.1):
        return scale * jax.random.normal(k, shape, dtype=jnp.float32)

    return {
        # conv1: 1x1, (Cin -> C1); stored as (Cin, C1)
        "w1": nrm(ks[0], (in_channels, C1)),
        "b1": nrm(ks[1], (1, C1)),
        "g1": 1.0 + nrm(ks[2], (1, C1)),
        "be1": nrm(ks[3], (1, C1)),
        # conv2: 3x3, (C1 -> C1); stored as (9 taps, Cin, Cout), tap = kh*3+kw
        "w2": nrm(ks[4], (9, C1, C1)),
        "b2": nrm(ks[5], (1, C1)),
        "g2": 1.0 + nrm(ks[6], (1, C1)),
        "be2": nrm(ks[7], (1, C1)),
        # conv3: 1x1, (C1 -> C3); stored as (C1, C3)
        "w3": nrm(ks[8], (C1, C3)),
        "b3": nrm(ks[9], (1, C3)),
        "g3": 1.0 + nrm(ks[10], (1, C3)),
        "be3": nrm(ks[11], (1, C3)),
    }


if __name__ == "__main__":
    key = jax.random.PRNGKey(0)
    k_x, k_p = jax.random.split(key)

    out_channels = 4
    in_channels = out_channels * 4          # 16, required for identity add
    N, H, W = 2, 16, 16

    x = jax.random.normal(k_x, (N, in_channels, H, W), dtype=jnp.float32)
    params = make_params(k_p, in_channels, out_channels)

    blk = jax.jit(bottleneck_block)
    out = jax.block_until_ready(blk(x, params))
    ref = jax.block_until_ready(reference_block(x, params))

    assert out.shape == (N, in_channels, H, W)
    # Tolerance covers bf16 MXU operands, bf16 intermediate activations and
    # the bf16 identity stream vs. the pure-f32 reference.
    err = float(jnp.max(jnp.abs(out - ref)))
    assert jnp.allclose(out, ref, rtol=4e-2, atol=4e-2), err
    print("KERNEL_OK")
</pallas_src>

<mosaic_0001>
module attributes {stable_mosaic.version = 11 : i64} {
  func.func @_conv1x1_stats_kernel(%arg0: i32, %arg1: memref<512x128xbf16, #tpu.memory_space<vmem>>, %arg2: memref<128x128xbf16, #tpu.memory_space<vmem>>, %arg3: memref<512x128xbf16, #tpu.memory_space<vmem>>, %arg4: memref<1x2x128xf32, #tpu.memory_space<vmem>>) attributes {dimension_semantics = [#tpu.dimension_semantics<parallel>], iteration_bounds = array<i64: 1>, scalar_prefetch = 0 : i64, scratch_operands = 0 : i64, tpu.core_type = #tpu.core_type<tc>, window_params = [{transform_indices = @transform_0, window_bounds = array<i64: 512, 128>}, {pipeline_mode = #tpu.pipeline_mode<synchronous>, transform_indices = @transform_1, window_bounds = array<i64: 128, 128>}, {transform_indices = @transform_2, window_bounds = array<i64: 512, 128>}, {transform_indices = @transform_3, window_bounds = array<i64: 1, 2, 128>}]} {
    %c0 = arith.constant 0 : index
    %c0_0 = arith.constant 0 : index
    %0 = vector.load %arg1[%c0, %c0_0] : memref<512x128xbf16, #tpu.memory_space<vmem>>, vector<512x128xbf16>
    %c0_1 = arith.constant 0 : index
    %c0_2 = arith.constant 0 : index
    %1 = vector.load %arg2[%c0_1, %c0_2] : memref<128x128xbf16, #tpu.memory_space<vmem>>, vector<128x128xbf16>
    %cst = arith.constant dense<0.000000e+00> : vector<512x128xf32>
    %2 = tpu.matmul %0, %1, %cst {dimension_numbers = #tpu.dot_dimension_numbers<[1], [0], [0], [1], [0, 0, 1, 1], [], []>} : vector<512x128xbf16>, vector<128x128xbf16>, vector<512x128xf32> -> vector<512x128xf32>
    %3 = arith.truncf %2 : vector<512x128xf32> to vector<512x128xbf16>
    %c0_3 = arith.constant 0 : index
    %c0_4 = arith.constant 0 : index
    %4 = vector.load %arg3[%c0_3, %c0_4] : memref<512x128xbf16, #tpu.memory_space<vmem>>, vector<512x128xbf16>
    tpu.vector_store %arg3[%c0_3, %c0_4], %3 {strides = array<i32>} : memref<512x128xbf16, #tpu.memory_space<vmem>>, vector<512x128xbf16>,
    %cst_5 = arith.constant dense<0.000000e+00> : vector<128xf32>
    %5 = vector.multi_reduction <add>, %2, %cst_5 [0] : vector<512x128xf32> to vector<128xf32>
    %6 = vector.shape_cast %5 : vector<128xf32> to vector<1x128xf32>
    %7 = arith.mulf %2, %2 : vector<512x128xf32>
    %cst_6 = arith.constant dense<0.000000e+00> : vector<128xf32>
    %8 = vector.multi_reduction <add>, %7, %cst_6 [0] : vector<512x128xf32> to vector<128xf32>
    %9 = vector.shape_cast %8 : vector<128xf32> to vector<1x128xf32>
    %10 = tpu.concatenate %6, %9 in 0 : vector<1x128xf32>, vector<1x128xf32> -> vector<2x128xf32>
    %c0_7 = arith.constant 0 : index
    %c0_8 = arith.constant 0 : index
    %c0_9 = arith.constant 0 : index
    %11 = vector.load %arg4[%c0_7, %c0_8, %c0_9] : memref<1x2x128xf32, #tpu.memory_space<vmem>>, vector<1x2x128xf32>
    %12 = vector.shape_cast %11 : vector<1x2x128xf32> to vector<2x128xf32>
    %13 = vector.shape_cast %10 : vector<2x128xf32> to vector<1x2x128xf32>
    tpu.vector_store %arg4[%c0_7, %c0_8, %c0_9], %13 {strides = array<i32>} : memref<1x2x128xf32, #tpu.memory_space<vmem>>, vector<1x2x128xf32>,
    return
  }
  func.func @transform_0(%arg0: i32) -> (i32, i32) {
    %c0_i32 = arith.constant 0 : i32
    %c0_i32_0 = arith.constant 0 : i32
    return %arg0, %c0_i32 : i32, i32
  }
  func.func @transform_1(%arg0: i32) -> (i32, i32) {
    %c0_i32 = arith.constant 0 : i32
    %c0_i32_0 = arith.constant 0 : i32
    %c0_i32_1 = arith.constant 0 : i32
    return %c0_i32, %c0_i32_0 : i32, i32
  }
  func.func @transform_2(%arg0: i32) -> (i32, i32) {
    %c0_i32 = arith.constant 0 : i32
    %c0_i32_0 = arith.constant 0 : i32
    return %arg0, %c0_i32 : i32, i32
  }
  func.func @transform_3(%arg0: i32) -> (i32, i32, i32) {
    %c0_i32 = arith.constant 0 : i32
    %c0_i32_0 = arith.constant 0 : i32
    %c0_i32_1 = arith.constant 0 : i32
    return %arg0, %c0_i32, %c0_i32_0 : i32, i32, i32
  }
}

module attributes {stable_mosaic.version = 11 : i64} {
  func.func @_bn_relu_conv3x3_stats_kernel(%arg0: i32, %arg1: memref<1x256x128xbf16, #tpu.memory_space<vmem>>, %arg2: memref<1x128xf32, #tpu.memory_space<vmem>>, %arg3: memref<1x128xf32, #tpu.memory_space<vmem>>, %arg4: memref<1152x128xbf16, #tpu.memory_space<vmem>>, %arg5: memref<1x256x128xbf16, #tpu.memory_space<vmem>>, %arg6: memref<1x2x128xf32, #tpu.memory_space<vmem>>, %arg7: memref<18x16x384xbf16, #tpu.memory_space<vmem>>) attributes {dimension_semantics = [#tpu.dimension_semantics<parallel>], iteration_bounds = array<i64: 2>, scalar_prefetch = 0 : i64, scratch_operands = 1 : i64, tpu.core_type = #tpu.core_type<tc>, window_params = [{transform_indices = @transform_0, window_bounds = array<i64: 1, 256, 128>}, {pipeline_mode = #tpu.pipeline_mode<synchronous>, transform_indices = @transform_1, window_bounds = array<i64: 1, 128>}, {pipeline_mode = #tpu.pipeline_mode<synchronous>, transform_indices = @transform_2, window_bounds = array<i64: 1, 128>}, {pipeline_mode = #tpu.pipeline_mode<synchronous>, transform_indices = @transform_3, window_bounds = array<i64: 1152, 128>}, {transform_indices = @transform_4, window_bounds = array<i64: 1, 256, 128>}, {transform_indices = @transform_5, window_bounds = array<i64: 1, 2, 128>}]} {
    %c0 = arith.constant 0 : index
    %c0_0 = arith.constant 0 : index
    %c0_1 = arith.constant 0 : index
    %0 = vector.load %arg1[%c0, %c0_0, %c0_1] : memref<1x256x128xbf16, #tpu.memory_space<vmem>>, vector<1x256x128xbf16>
    %1 = vector.shape_cast %0 : vector<1x256x128xbf16> to vector<256x128xbf16>
    %2 = arith.extf %1 : vector<256x128xbf16> to vector<256x128xf32>
    %c0_2 = arith.constant 0 : index
    %c0_3 = arith.constant 0 : index
    %3 = vector.load %arg2[%c0_2, %c0_3] : memref<1x128xf32, #tpu.memory_space<vmem>>, vector<1x128xf32>
    %4 = vector.broadcast %3 : vector<1x128xf32> to vector<256x128xf32>
    %5 = arith.mulf %2, %4 : vector<256x128xf32>
    %c0_4 = arith.constant 0 : index
    %c0_5 = arith.constant 0 : index
    %6 = vector.load %arg3[%c0_4, %c0_5] : memref<1x128xf32, #tpu.memory_space<vmem>>, vector<1x128xf32>
    %7 = vector.broadcast %6 : vector<1x128xf32> to vector<256x128xf32>
    %8 = arith.addf %5, %7 : vector<256x128xf32>
    %cst = arith.constant 0.000000e+00 : f32
    %9 = vector.broadcast %cst : f32 to vector<256x128xf32>
    %10 = arith.maximumf %8, %9 : vector<256x128xf32>
    %11 = arith.truncf %10 : vector<256x128xf32> to vector<256x128xbf16>
    %12 = vector.shape_cast %11 : vector<256x128xbf16> to vector<16x16x128xbf16>
    %cst_6 = arith.constant 0.000000e+00 : bf16
    %13 = vector.broadcast %cst_6 : bf16 to vector<1x16x384xbf16>
    %cst_7 = arith.constant 0.000000e+00 : bf16
    %14 = vector.broadcast %cst_7 : bf16 to vector<16x1x128xbf16>
    %c0_8 = arith.constant 0 : index
    %c0_9 = arith.constant 0 : index
    %c0_10 = arith.constant 0 : index
    %15 = vector.load %arg7[%c0_8, %c0_9, %c0_10] : memref<18x16x384xbf16, #tpu.memory_space<vmem>>, vector<1x16x384xbf16>
    tpu.vector_store %arg7[%c0_8, %c0_9, %c0_10], %13 {strides = array<i32>} : memref<18x16x384xbf16, #tpu.memory_space<vmem>>, vector<1x16x384xbf16>,
    %c17 = arith.constant 17 : index
    %c0_11 = arith.constant 0 : index
    %c0_12 = arith.constant 0 : index
    %16 = vector.load %arg7[%c17, %c0_11, %c0_12] : memref<18x16x384xbf16, #tpu.memory_space<vmem>>, vector<1x16x384xbf16>
    tpu.vector_store %arg7[%c17, %c0_11, %c0_12], %13 {strides = array<i32>} : memref<18x16x384xbf16, #tpu.memory_space<vmem>>, vector<1x16x384xbf16>,
    %c1 = arith.constant 1 : index
    %c0_13 = arith.constant 0 : index
    %c128 = arith.constant 128 : index
    %17 = vector.load %arg7[%c1, %c0_13, %c128] : memref<18x16x384xbf16, #tpu.memory_space<vmem>>, vector<16x16x128xbf16>
    tpu.vector_store %arg7[%c1, %c0_13, %c128], %12 {strides = array<i32>} : memref<18x16x384xbf16, #tpu.memory_space<vmem>>, vector<16x16x128xbf16>,
    %c1_14 = arith.constant 1 : index
    %c0_15 = arith.constant 0 : index
    %c0_16 = arith.constant 0 : index
    %18 = vector.load %arg7[%c1_14, %c0_15, %c0_16] : memref<18x16x384xbf16, #tpu.memory_space<vmem>>, vector<16x1x128xbf16>
    tpu.vector_store %arg7[%c1_14, %c0_15, %c0_16], %14 {strides = array<i32>} : memref<18x16x384xbf16, #tpu.memory_space<vmem>>, vector<16x1x128xbf16>,
    %19 = vector.extract_strided_slice %12 {offsets = [0, 0, 0], sizes = [16, 15, 128], strides = [1, 1, 1]} : vector<16x16x128xbf16> to vector<16x15x128xbf16>
    %c1_17 = arith.constant 1 : index
    %c1_18 = arith.constant 1 : index
    %c0_19 = arith.constant 0 : index
    %20 = vector.load %arg7[%c1_17, %c1_18, %c0_19] : memref<18x16x384xbf16, #tpu.memory_space<vmem>>, vector<16x15x128xbf16>
    tpu.vector_store %arg7[%c1_17, %c1_18, %c0_19], %19 {strides = array<i32>} : memref<18x16x384xbf16, #tpu.memory_space<vmem>>, vector<16x15x128xbf16>,
    %c1_20 = arith.constant 1 : index
    %c15 = arith.constant 15 : index
    %c256 = arith.constant 256 : index
    %21 = vector.load %arg7[%c1_20, %c15, %c256] : memref<18x16x384xbf16, #tpu.memory_space<vmem>>, vector<16x1x128xbf16>
    tpu.vector_store %arg7[%c1_20, %c15, %c256], %14 {strides = array<i32>} : memref<18x16x384xbf16, #tpu.memory_space<vmem>>, vector<16x1x128xbf16>,
    %22 = vector.extract_strided_slice %12 {offsets = [0, 1, 0], sizes = [16, 15, 128], strides = [1, 1, 1]} : vector<16x16x128xbf16> to vector<16x15x128xbf16>
    %c1_21 = arith.constant 1 : index
    %c0_22 = arith.constant 0 : index
    %c256_23 = arith.constant 256 : index
    %23 = vector.load %arg7[%c1_21, %c0_22, %c256_23] : memref<18x16x384xbf16, #tpu.memory_space<vmem>>, vector<16x15x128xbf16>
    tpu.vector_store %arg7[%c1_21, %c0_22, %c256_23], %22 {strides = array<i32>} : memref<18x16x384xbf16, #tpu.memory_space<vmem>>, vector<16x15x128xbf16>,
    %c0_24 = arith.constant 0 : index
    %c0_25 = arith.constant 0 : index
    %c0_26 = arith.constant 0 : index
    %24 = vector.load %arg7[%c0_24, %c0_25, %c0_26] : memref<18x16x384xbf16, #tpu.memory_space<vmem>>, vector<16x16x384xbf16>
    %25 = vector.shape_cast %24 : vector<16x16x384xbf16> to vector<256x384xbf16>
    %c0_27 = arith.constant 0 : index
    %c0_28 = arith.constant 0 : index
    %26 = vector.load %arg4[%c0_27, %c0_28] : memref<1152x128xbf16, #tpu.memory_space<vmem>>, vector<384x128xbf16>
    %cst_29 = arith.constant dense<0.000000e+00> : vector<256x128xf32>
    %27 = tpu.matmul %25, %26, %cst_29 {dimension_numbers = #tpu.dot_dimension_numbers<[1], [0], [0], [1], [0, 0, 1, 1], [], []>} : vector<256x384xbf16>, vector<384x128xbf16>, vector<256x128xf32> -> vector<256x128xf32>
    %c1_30 = arith.constant 1 : index
    %c0_31 = arith.constant 0 : index
    %c0_32 = arith.constant 0 : index
    %28 = vector.load %arg7[%c1_30, %c0_31, %c0_32] : memref<18x16x384xbf16, #tpu.memory_space<vmem>>, vector<16x16x384xbf16>
    %29 = vector.shape_cast %28 : vector<16x16x384xbf16> to vector<256x384xbf16>
    %c384 = arith.constant 384 : index
    %c0_33 = arith.constant 0 : index
    %30 = vector.load %arg4[%c384, %c0_33] : memref<1152x128xbf16, #tpu.memory_space<vmem>>, vector<384x128xbf16>
    %cst_34 = arith.constant dense<0.000000e+00> : vector<256x128xf32>
    %31 = tpu.matmul %29, %30, %cst_34 {dimension_numbers = #tpu.dot_dimension_numbers<[1], [0], [0], [1], [0, 0, 1, 1], [], []>} : vector<256x384xbf16>, vector<384x128xbf16>, vector<256x128xf32> -> vector<256x128xf32>
    %32 = arith.addf %27, %31 : vector<256x128xf32>
    %c2 = arith.constant 2 : index
    %c0_35 = arith.constant 0 : index
    %c0_36 = arith.constant 0 : index
    %33 = vector.load %arg7[%c2, %c0_35, %c0_36] : memref<18x16x384xbf16, #tpu.memory_space<vmem>>, vector<16x16x384xbf16>
    %34 = vector.shape_cast %33 : vector<16x16x384xbf16> to vector<256x384xbf16>
    %c768 = arith.constant 768 : index
    %c0_37 = arith.constant 0 : index
    %35 = vector.load %arg4[%c768, %c0_37] : memref<1152x128xbf16, #tpu.memory_space<vmem>>, vector<384x128xbf16>
    %cst_38 = arith.constant dense<0.000000e+00> : vector<256x128xf32>
    %36 = tpu.matmul %34, %35, %cst_38 {dimension_numbers = #tpu.dot_dimension_numbers<[1], [0], [0], [1], [0, 0, 1, 1], [], []>} : vector<256x384xbf16>, vector<384x128xbf16>, vector<256x128xf32> -> vector<256x128xf32>
    %37 = arith.addf %32, %36 : vector<256x128xf32>
    %38 = arith.truncf %37 : vector<256x128xf32> to vector<256x128xbf16>
    %c0_39 = arith.constant 0 : index
    %c0_40 = arith.constant 0 : index
    %c0_41 = arith.constant 0 : index
    %39 = vector.load %arg5[%c0_39, %c0_40, %c0_41] : memref<1x256x128xbf16, #tpu.memory_space<vmem>>, vector<1x256x128xbf16>
    %40 = vector.shape_cast %39 : vector<1x256x128xbf16> to vector<256x128xbf16>
    %41 = vector.shape_cast %38 : vector<256x128xbf16> to vector<1x256x128xbf16>
    tpu.vector_store %arg5[%c0_39, %c0_40, %c0_41], %41 {strides = array<i32>} : memref<1x256x128xbf16, #tpu.memory_space<vmem>>, vector<1x256x128xbf16>,
    %cst_42 = arith.constant dense<0.000000e+00> : vector<128xf32>
    %42 = vector.multi_reduction <add>, %37, %cst_42 [0] : vector<256x128xf32> to vector<128xf32>
    %43 = vector.shape_cast %42 : vector<128xf32> to vector<1x128xf32>
    %44 = arith.mulf %37, %37 : vector<256x128xf32>
    %cst_43 = arith.constant dense<0.000000e+00> : vector<128xf32>
    %45 = vector.multi_reduction <add>, %44, %cst_43 [0] : vector<256x128xf32> to vector<128xf32>
    %46 = vector.shape_cast %45 : vector<128xf32> to vector<1x128xf32>
    %47 = tpu.concatenate %43, %46 in 0 : vector<1x128xf32>, vector<1x128xf32> -> vector<2x128xf32>
    %c0_44 = arith.constant 0 : index
    %c0_45 = arith.constant 0 : index
    %c0_46 = arith.constant 0 : index
    %48 = vector.load %arg6[%c0_44, %c0_45, %c0_46] : memref<1x2x128xf32, #tpu.memory_space<vmem>>, vector<1x2x128xf32>
    %49 = vector.shape_cast %48 : vector<1x2x128xf32> to vector<2x128xf32>
    %50 = vector.shape_cast %47 : vector<2x128xf32> to vector<1x2x128xf32>
    tpu.vector_store %arg6[%c0_44, %c0_45, %c0_46], %50 {strides = array<i32>} : memref<1x2x128xf32, #tpu.memory_space<vmem>>, vector<1x2x128xf32>,
    return
  }
  func.func @transform_0(%arg0: i32) -> (i32, i32, i32) {
    %c0_i32 = arith.constant 0 : i32
    %c0_i32_0 = arith.constant 0 : i32
    %c0_i32_1 = arith.constant 0 : i32
    return %arg0, %c0_i32, %c0_i32_0 : i32, i32, i32
  }
  func.func @transform_1(%arg0: i32) -> (i32, i32) {
    %c0_i32 = arith.constant 0 : i32
    %c0_i32_0 = arith.constant 0 : i32
    %c0_i32_1 = arith.constant 0 : i32
    return %c0_i32, %c0_i32_0 : i32, i32
  }
  func.func @transform_2(%arg0: i32) -> (i32, i32) {
    %c0_i32 = arith.constant 0 : i32
    %c0_i32_0 = arith.constant 0 : i32
    %c0_i32_1 = arith.constant 0 : i32
    return %c0_i32, %c0_i32_0 : i32, i32
  }
  func.func @transform_3(%arg0: i32) -> (i32, i32) {
    %c0_i32 = arith.constant 0 : i32
    %c0_i32_0 = arith.constant 0 : i32
    %c0_i32_1 = arith.constant 0 : i32
    return %c0_i32, %c0_i32_0 : i32, i32
  }
  func.func @transform_4(%arg0: i32) -> (i32, i32, i32) {
    %c0_i32 = arith.constant 0 : i32
    %c0_i32_0 = arith.constant 0 : i32
    %c0_i32_1 = arith.constant 0 : i32
    return %arg0, %c0_i32, %c0_i32_0 : i32, i32, i32
  }
  func.func @transform_5(%arg0: i32) -> (i32, i32, i32) {
    %c0_i32 = arith.constant 0 : i32
    %c0_i32_0 = arith.constant 0 : i32
    %c0_i32_1 = arith.constant 0 : i32
    return %arg0, %c0_i32, %c0_i32_0 : i32, i32, i32
  }
}

module attributes {stable_mosaic.version = 11 : i64} {
  func.func @_bn_relu_conv1x1_stats_kernel(%arg0: i32, %arg1: memref<512x128xbf16, #tpu.memory_space<vmem>>, %arg2: memref<1x128xf32, #tpu.memory_space<vmem>>, %arg3: memref<1x128xf32, #tpu.memory_space<vmem>>, %arg4: memref<128x128xbf16, #tpu.memory_space<vmem>>, %arg5: memref<512x128xbf16, #tpu.memory_space<vmem>>, %arg6: memref<1x2x128xf32, #tpu.memory_space<vmem>>) attributes {dimension_semantics = [#tpu.dimension_semantics<parallel>], iteration_bounds = array<i64: 1>, scalar_prefetch = 0 : i64, scratch_operands = 0 : i64, tpu.core_type = #tpu.core_type<tc>, window_params = [{transform_indices = @transform_0, window_bounds = array<i64: 512, 128>}, {pipeline_mode = #tpu.pipeline_mode<synchronous>, transform_indices = @transform_1, window_bounds = array<i64: 1, 128>}, {pipeline_mode = #tpu.pipeline_mode<synchronous>, transform_indices = @transform_2, window_bounds = array<i64: 1, 128>}, {pipeline_mode = #tpu.pipeline_mode<synchronous>, transform_indices = @transform_3, window_bounds = array<i64: 128, 128>}, {transform_indices = @transform_4, window_bounds = array<i64: 512, 128>}, {transform_indices = @transform_5, window_bounds = array<i64: 1, 2, 128>}]} {
    %c0 = arith.constant 0 : index
    %c0_0 = arith.constant 0 : index
    %0 = vector.load %arg1[%c0, %c0_0] : memref<512x128xbf16, #tpu.memory_space<vmem>>, vector<512x128xbf16>
    %1 = arith.extf %0 : vector<512x128xbf16> to vector<512x128xf32>
    %c0_1 = arith.constant 0 : index
    %c0_2 = arith.constant 0 : index
    %2 = vector.load %arg2[%c0_1, %c0_2] : memref<1x128xf32, #tpu.memory_space<vmem>>, vector<1x128xf32>
    %3 = vector.broadcast %2 : vector<1x128xf32> to vector<512x128xf32>
    %4 = arith.mulf %1, %3 : vector<512x128xf32>
    %c0_3 = arith.constant 0 : index
    %c0_4 = arith.constant 0 : index
    %5 = vector.load %arg3[%c0_3, %c0_4] : memref<1x128xf32, #tpu.memory_space<vmem>>, vector<1x128xf32>
    %6 = vector.broadcast %5 : vector<1x128xf32> to vector<512x128xf32>
    %7 = arith.addf %4, %6 : vector<512x128xf32>
    %cst = arith.constant 0.000000e+00 : f32
    %8 = vector.broadcast %cst : f32 to vector<512x128xf32>
    %9 = arith.maximumf %7, %8 : vector<512x128xf32>
    %10 = arith.truncf %9 : vector<512x128xf32> to vector<512x128xbf16>
    %c0_5 = arith.constant 0 : index
    %c0_6 = arith.constant 0 : index
    %11 = vector.load %arg4[%c0_5, %c0_6] : memref<128x128xbf16, #tpu.memory_space<vmem>>, vector<128x128xbf16>
    %cst_7 = arith.constant dense<0.000000e+00> : vector<512x128xf32>
    %12 = tpu.matmul %10, %11, %cst_7 {dimension_numbers = #tpu.dot_dimension_numbers<[1], [0], [0], [1], [0, 0, 1, 1], [], []>} : vector<512x128xbf16>, vector<128x128xbf16>, vector<512x128xf32> -> vector<512x128xf32>
    %13 = arith.truncf %12 : vector<512x128xf32> to vector<512x128xbf16>
    %c0_8 = arith.constant 0 : index
    %c0_9 = arith.constant 0 : index
    %14 = vector.load %arg5[%c0_8, %c0_9] : memref<512x128xbf16, #tpu.memory_space<vmem>>, vector<512x128xbf16>
    tpu.vector_store %arg5[%c0_8, %c0_9], %13 {strides = array<i32>} : memref<512x128xbf16, #tpu.memory_space<vmem>>, vector<512x128xbf16>,
    %cst_10 = arith.constant dense<0.000000e+00> : vector<128xf32>
    %15 = vector.multi_reduction <add>, %12, %cst_10 [0] : vector<512x128xf32> to vector<128xf32>
    %16 = vector.shape_cast %15 : vector<128xf32> to vector<1x128xf32>
    %17 = arith.mulf %12, %12 : vector<512x128xf32>
    %cst_11 = arith.constant dense<0.000000e+00> : vector<128xf32>
    %18 = vector.multi_reduction <add>, %17, %cst_11 [0] : vector<512x128xf32> to vector<128xf32>
    %19 = vector.shape_cast %18 : vector<128xf32> to vector<1x128xf32>
    %20 = tpu.concatenate %16, %19 in 0 : vector<1x128xf32>, vector<1x128xf32> -> vector<2x128xf32>
    %c0_12 = arith.constant 0 : index
    %c0_13 = arith.constant 0 : index
    %c0_14 = arith.constant 0 : index
    %21 = vector.load %arg6[%c0_12, %c0_13, %c0_14] : memref<1x2x128xf32, #tpu.memory_space<vmem>>, vector<1x2x128xf32>
    %22 = vector.shape_cast %21 : vector<1x2x128xf32> to vector<2x128xf32>
    %23 = vector.shape_cast %20 : vector<2x128xf32> to vector<1x2x128xf32>
    tpu.vector_store %arg6[%c0_12, %c0_13, %c0_14], %23 {strides = array<i32>} : memref<1x2x128xf32, #tpu.memory_space<vmem>>, vector<1x2x128xf32>,
    return
  }
  func.func @transform_0(%arg0: i32) -> (i32, i32) {
    %c0_i32 = arith.constant 0 : i32
    %c0_i32_0 = arith.constant 0 : i32
    return %arg0, %c0_i32 : i32, i32
  }
  func.func @transform_1(%arg0: i32) -> (i32, i32) {
    %c0_i32 = arith.constant 0 : i32
    %c0_i32_0 = arith.constant 0 : i32
    %c0_i32_1 = arith.constant 0 : i32
    return %c0_i32, %c0_i32_0 : i32, i32
  }
  func.func @transform_2(%arg0: i32) -> (i32, i32) {
    %c0_i32 = arith.constant 0 : i32
    %c0_i32_0 = arith.constant 0 : i32
    %c0_i32_1 = arith.constant 0 : i32
    return %c0_i32, %c0_i32_0 : i32, i32
  }
  func.func @transform_3(%arg0: i32) -> (i32, i32) {
    %c0_i32 = arith.constant 0 : i32
    %c0_i32_0 = arith.constant 0 : i32
    %c0_i32_1 = arith.constant 0 : i32
    return %c0_i32, %c0_i32_0 : i32, i32
  }
  func.func @transform_4(%arg0: i32) -> (i32, i32) {
    %c0_i32 = arith.constant 0 : i32
    %c0_i32_0 = arith.constant 0 : i32
    return %arg0, %c0_i32 : i32, i32
  }
  func.func @transform_5(%arg0: i32) -> (i32, i32, i32) {
    %c0_i32 = arith.constant 0 : i32
    %c0_i32_0 = arith.constant 0 : i32
    %c0_i32_1 = arith.constant 0 : i32
    return %arg0, %c0_i32, %c0_i32_0 : i32, i32, i32
  }
}

module attributes {stable_mosaic.version = 11 : i64} {
  func.func @_bn_residual_relu_kernel(%arg0: i32, %arg1: memref<512x128xbf16, #tpu.memory_space<vmem>>, %arg2: memref<512x128xbf16, #tpu.memory_space<vmem>>, %arg3: memref<1x128xf32, #tpu.memory_space<vmem>>, %arg4: memref<1x128xf32, #tpu.memory_space<vmem>>, %arg5: memref<512x128xf32, #tpu.memory_space<vmem>>) attributes {dimension_semantics = [#tpu.dimension_semantics<parallel>], iteration_bounds = array<i64: 1>, scalar_prefetch = 0 : i64, scratch_operands = 0 : i64, tpu.core_type = #tpu.core_type<tc>, window_params = [{transform_indices = @transform_0, window_bounds = array<i64: 512, 128>}, {transform_indices = @transform_1, window_bounds = array<i64: 512, 128>}, {pipeline_mode = #tpu.pipeline_mode<synchronous>, transform_indices = @transform_2, window_bounds = array<i64: 1, 128>}, {pipeline_mode = #tpu.pipeline_mode<synchronous>, transform_indices = @transform_3, window_bounds = array<i64: 1, 128>}, {transform_indices = @transform_4, window_bounds = array<i64: 512, 128>}]} {
    %c0 = arith.constant 0 : index
    %c0_0 = arith.constant 0 : index
    %0 = vector.load %arg1[%c0, %c0_0] : memref<512x128xbf16, #tpu.memory_space<vmem>>, vector<512x128xbf16>
    %1 = arith.extf %0 : vector<512x128xbf16> to vector<512x128xf32>
    %c0_1 = arith.constant 0 : index
    %c0_2 = arith.constant 0 : index
    %2 = vector.load %arg3[%c0_1, %c0_2] : memref<1x128xf32, #tpu.memory_space<vmem>>, vector<1x128xf32>
    %3 = vector.broadcast %2 : vector<1x128xf32> to vector<512x128xf32>
    %4 = arith.mulf %1, %3 : vector<512x128xf32>
    %c0_3 = arith.constant 0 : index
    %c0_4 = arith.constant 0 : index
    %5 = vector.load %arg4[%c0_3, %c0_4] : memref<1x128xf32, #tpu.memory_space<vmem>>, vector<1x128xf32>
    %6 = vector.broadcast %5 : vector<1x128xf32> to vector<512x128xf32>
    %7 = arith.addf %4, %6 : vector<512x128xf32>
    %c0_5 = arith.constant 0 : index
    %c0_6 = arith.constant 0 : index
    %8 = vector.load %arg2[%c0_5, %c0_6] : memref<512x128xbf16, #tpu.memory_space<vmem>>, vector<512x128xbf16>
    %9 = arith.extf %8 : vector<512x128xbf16> to vector<512x128xf32>
    %10 = arith.addf %7, %9 : vector<512x128xf32>
    %cst = arith.constant 0.000000e+00 : f32
    %11 = vector.broadcast %cst : f32 to vector<512x128xf32>
    %12 = arith.maximumf %10, %11 : vector<512x128xf32>
    %c0_7 = arith.constant 0 : index
    %c0_8 = arith.constant 0 : index
    %13 = vector.load %arg5[%c0_7, %c0_8] : memref<512x128xf32, #tpu.memory_space<vmem>>, vector<512x128xf32>
    tpu.vector_store %arg5[%c0_7, %c0_8], %12 {strides = array<i32>} : memref<512x128xf32, #tpu.memory_space<vmem>>, vector<512x128xf32>,
    return
  }
  func.func @transform_0(%arg0: i32) -> (i32, i32) {
    %c0_i32 = arith.constant 0 : i32
    %c0_i32_0 = arith.constant 0 : i32
    return %arg0, %c0_i32 : i32, i32
  }
  func.func @transform_1(%arg0: i32) -> (i32, i32) {
    %c0_i32 = arith.constant 0 : i32
    %c0_i32_0 = arith.constant 0 : i32
    return %arg0, %c0_i32 : i32, i32
  }
  func.func @transform_2(%arg0: i32) -> (i32, i32) {
    %c0_i32 = arith.constant 0 : i32
    %c0_i32_0 = arith.constant 0 : i32
    %c0_i32_1 = arith.constant 0 : i32
    return %c0_i32, %c0_i32_0 : i32, i32
  }
  func.func @transform_3(%arg0: i32) -> (i32, i32) {
    %c0_i32 = arith.constant 0 : i32
    %c0_i32_0 = arith.constant 0 : i32
    %c0_i32_1 = arith.constant 0 : i32
    return %c0_i32, %c0_i32_0 : i32, i32
  }
  func.func @transform_4(%arg0: i32) -> (i32, i32) {
    %c0_i32 = arith.constant 0 : i32
    %c0_i32_0 = arith.constant 0 : i32
    return %arg0, %c0_i32 : i32, i32
  }
}

</mosaic_0001>

<llo_original>
// kernel: bottleneck_block.6
$region0: #{bottleneck_block.6}
  #allocation0 [shape = 'u32[]', space=smem, size = 0x4, offset = 0x4, fixed_abs, tag = 'smem constant byte address 0x4 - core index']
  #allocation1 [shape = 'u32[144,128]{1,0:T(1,128)}', space=vmem, size = 0x12000, scoped, tag = 'internal scratch']
  %s0 = inlined_call_operand.hbm [shape: bf16[512,128], index: 0, kind: input, shape index: {}]
  %s1 = inlined_call_operand.hbm [shape: f32[1,128], index: 1, kind: input, shape index: {}]
  %s2 = inlined_call_operand.hbm [shape: f32[1,128], index: 2, kind: input, shape index: {}]
  %s3 = inlined_call_operand.hbm [shape: bf16[128,128], index: 3, kind: input, shape index: {}]
  %s4 = inlined_call_operand.hbm [shape: bf16[512,128], index: 4, kind: output, shape index: {0}]
  %s5 = inlined_call_operand.hbm [shape: f32[1,2,128], index: 5, kind: output, shape index: {1}]
  %6 = xla_tuple %s4, %s5
  %s7 = sld [smem:[#allocation0]]
  $region50: #{bottleneck_block.6} parent=0
    _
  %s9 = ssub.s32 1, %s7
  %s10 = scalar_select 0, %s9, %s7
  $region1: #{bottleneck_block.6} parent=0
    #allocation2 [shape = 'u8[131072]{0}', space=vmem, size = 0x20000, scoped, tag = 'input window, operand 0, single buffered']
    #allocation3 [shape = 's32[1]{0}', space=sflag, size = 0x4, scoped, tag = 'scoped memory for bottleneck_block.6']
    #allocation4 [shape = 's32[1]{0}', space=sflag, size = 0x4, scoped, tag = 'scoped memory for bottleneck_block.6']
    #allocation5 [shape = 'u8[512]{0}', space=vmem, size = 0x400, scoped, tag = 'input window, operand 1, single buffered']
    #allocation6 [shape = 's32[1]{0}', space=sflag, size = 0x4, scoped, tag = 'scoped memory for bottleneck_block.6']
    #allocation7 [shape = 'u8[512]{0}', space=vmem, size = 0x400, scoped, tag = 'input window, operand 2, single buffered']
    #allocation8 [shape = 'u8[32768]{0}', space=vmem, size = 0x8000, scoped, tag = 'input window, operand 3, single buffered']
    #allocation9 [shape = 's32[1]{0}', space=sflag, size = 0x4, scoped, tag = 'scoped memory for bottleneck_block.6']
    #allocation10 [shape = 'u8[131072]{0}', space=vmem, size = 0x20000, scoped, tag = 'output window, operand 0, single buffered']
    #allocation11 [shape = 'u8[1024]{0}', space=vmem, size = 0x400, scoped, tag = 'output window, operand 1, single buffered']
    #allocation12 [shape = 's32[1]{0}', space=sflag, size = 0x4, scoped, tag = 'scoped memory for bottleneck_block.6']
    %11 = vsyncpa [#allocation3], 0
    %12 = vsyncpa [#allocation6], 0
    %13 = vsyncpa [#allocation9], 0
    %14 = vsyncpa [#allocation4], 0
    %15 = vsyncpa [#allocation12], 0
    // Predicated region
    $region2: #{bottleneck_block.6} parent=1 // pred_check
      _
    $region3: #{bottleneck_block.6} parent=1 // pred_check_branch
      %17 = sbr.rel (0) target = $region5
    $region4: #{bottleneck_block.6} parent=1 // pred_region
      %s19 = ssub.s32 4096, 4096
      %20 = vsyncadd [#allocation3], %s19
      %s21 = sshll.u32 [#allocation2], 4
      %s22 = int_to_ptr.vmem [resolvable:$true] %s21
      %27 = dma.hbm_to_vmem [thread:$0]  %s0, 4096, %s22, [#allocation3], 64, 64, 4
    $region5: #{bottleneck_block.6} parent=1 // pred_fallthru
      _
    // Predicated region
    $region6: #{bottleneck_block.6} parent=1 // pred_check
      _
    $region7: #{bottleneck_block.6} parent=1 // pred_check_branch
      %29 = sbr.rel (0) target = $region9
    $region8: #{bottleneck_block.6} parent=1 // pred_region
      %s31 = ssub.s32 16, 16
      %32 = vsyncadd [#allocation6], %s31
      %s34 = sshll.u32 [#allocation5], 4
      %s35 = int_to_ptr.vmem [resolvable:$true] %s34
      %37 = dma.hbm_to_vmem [thread:$0]  %s1, 16, %s35, [#allocation6]
    $region9: #{bottleneck_block.6} parent=1 // pred_fallthru
      _
    // Predicated region
    $region10: #{bottleneck_block.6} parent=1 // pred_check
      _
    $region11: #{bottleneck_block.6} parent=1 // pred_check_branch
      %39 = sbr.rel (0) target = $region13
    $region12: #{bottleneck_block.6} parent=1 // pred_region
      %s41 = ssub.s32 16, 16
      %42 = vsyncadd [#allocation6], %s41
      %s44 = sshll.u32 [#allocation7], 4
      %s45 = int_to_ptr.vmem [resolvable:$true] %s44
      %47 = dma.hbm_to_vmem [thread:$0]  %s2, 16, %s45, [#allocation6]
    $region13: #{bottleneck_block.6} parent=1 // pred_fallthru
      _
    // Predicated region
    $region14: #{bottleneck_block.6} parent=1 // pred_check
      _
    $region15: #{bottleneck_block.6} parent=1 // pred_check_branch
      %49 = sbr.rel (0) target = $region17
    $region16: #{bottleneck_block.6} parent=1 // pred_region
      %s51 = ssub.s32 1024, 1024
      %52 = vsyncadd [#allocation9], %s51
      %s53 = sshll.u32 [#allocation8], 4
      %s54 = int_to_ptr.vmem [resolvable:$true] %s53
      %59 = dma.hbm_to_vmem [thread:$0]  %s3, 1024, %s54, [#allocation9], 64, 64, 4
    $region17: #{bottleneck_block.6} parent=1 // pred_fallthru
      _
    // Predicated region
    $region18: #{bottleneck_block.6} parent=1 // pred_check
      _
    $region19: #{bottleneck_block.6} parent=1 // pred_check_branch
      %61 = sbr.rel (0) target = $region21
    $region20: #{bottleneck_block.6} parent=1 // pred_region
      %62 = dma.done [#allocation3], 4096
    $region21: #{bottleneck_block.6} parent=1 // pred_fallthru
      _
    // Predicated region
    $region22: #{bottleneck_block.6} parent=1 // pred_check
      _
    $region23: #{bottleneck_block.6} parent=1 // pred_check_branch
      %64 = sbr.rel (0) target = $region25
    $region24: #{bottleneck_block.6} parent=1 // pred_region
      %65 = dma.done [#allocation6], 16
    $region25: #{bottleneck_block.6} parent=1 // pred_fallthru
      _
    // Predicated region
    $region26: #{bottleneck_block.6} parent=1 // pred_check
      _
    $region27: #{bottleneck_block.6} parent=1 // pred_check_branch
      %67 = sbr.rel (0) target = $region29
    $region28: #{bottleneck_block.6} parent=1 // pred_region
      %68 = dma.done [#allocation6], 16
    $region29: #{bottleneck_block.6} parent=1 // pred_fallthru
      _
    // Predicated region
    $region30: #{bottleneck_block.6} parent=1 // pred_check
      _
    $region31: #{bottleneck_block.6} parent=1 // pred_check_branch
      %70 = sbr.rel (0) target = $region33
    $region32: #{bottleneck_block.6} parent=1 // pred_region
      %71 = dma.done [#allocation9], 1024
    $region33: #{bottleneck_block.6} parent=1 // pred_fallthru
      _
    %v73 = vld [vmem:[#allocation2] sm:$0xf]
    %v74 = vld [vmem:[#allocation2 + $0x4] sm:$0xf]
    %v75 = vld [vmem:[#allocation2 + $0x8] sm:$0xf]
    %v76 = vld [vmem:[#allocation2 + $0xc] sm:$0xf]
    %v77 = vld [vmem:[#allocation2 + $0x10] sm:$0xf]
    %v78 = vld [vmem:[#allocation2 + $0x14] sm:$0xf]
    %v79 = vld [vmem:[#allocation2 + $0x18] sm:$0xf]
    %v80 = vld [vmem:[#allocation2 + $0x1c] sm:$0xf]
    %v81 = vld [vmem:[#allocation2 + $0x20] sm:$0xf]
    %v82 = vld [vmem:[#allocation2 + $0x24] sm:$0xf]
    %v83 = vld [vmem:[#allocation2 + $0x28] sm:$0xf]
    %v84 = vld [vmem:[#allocation2 + $0x2c] sm:$0xf]
    %v85 = vld [vmem:[#allocation2 + $0x30] sm:$0xf]
    %v86 = vld [vmem:[#allocation2 + $0x34] sm:$0xf]
    %v87 = vld [vmem:[#allocation2 + $0x38] sm:$0xf]
    %v88 = vld [vmem:[#allocation2 + $0x3c] sm:$0xf]
    %v89 = vld [vmem:[#allocation2 + $0x40] sm:$0xf]
    %v90 = vld [vmem:[#allocation2 + $0x44] sm:$0xf]
    %v91 = vld [vmem:[#allocation2 + $0x48] sm:$0xf]
    %v92 = vld [vmem:[#allocation2 + $0x4c] sm:$0xf]
    %v93 = vld [vmem:[#allocation2 + $0x50] sm:$0xf]
    %v94 = vld [vmem:[#allocation2 + $0x54] sm:$0xf]
    %v95 = vld [vmem:[#allocation2 + $0x58] sm:$0xf]
    %v96 = vld [vmem:[#allocation2 + $0x5c] sm:$0xf]
    %v97 = vld [vmem:[#allocation2 + $0x60] sm:$0xf]
    %v98 = vld [vmem:[#allocation2 + $0x64] sm:$0xf]
    %v99 = vld [vmem:[#allocation2 + $0x68] sm:$0xf]
    %v100 = vld [vmem:[#allocation2 + $0x6c] sm:$0xf]
    %v101 = vld [vmem:[#allocation2 + $0x70] sm:$0xf]
    %v102 = vld [vmem:[#allocation2 + $0x74] sm:$0xf]
    %v103 = vld [vmem:[#allocation2 + $0x78] sm:$0xf]
    %v104 = vld [vmem:[#allocation2 + $0x7c] sm:$0xf]
    %v105 = vld [vmem:[#allocation2 + $0x80] sm:$0xf]
    %v106 = vld [vmem:[#allocation2 + $0x84] sm:$0xf]
    %v107 = vld [vmem:[#allocation2 + $0x88] sm:$0xf]
    %v108 = vld [vmem:[#allocation2 + $0x8c] sm:$0xf]
    %v109 = vld [vmem:[#allocation2 + $0x90] sm:$0xf]
    %v110 = vld [vmem:[#allocation2 + $0x94] sm:$0xf]
    %v111 = vld [vmem:[#allocation2 + $0x98] sm:$0xf]
    %v112 = vld [vmem:[#allocation2 + $0x9c] sm:$0xf]
    %v113 = vld [vmem:[#allocation2 + $0xa0] sm:$0xf]
    %v114 = vld [vmem:[#allocation2 + $0xa4] sm:$0xf]
    %v115 = vld [vmem:[#allocation2 + $0xa8] sm:$0xf]
    %v116 = vld [vmem:[#allocation2 + $0xac] sm:$0xf]
    %v117 = vld [vmem:[#allocation2 + $0xb0] sm:$0xf]
    %v118 = vld [vmem:[#allocation2 + $0xb4] sm:$0xf]
    %v119 = vld [vmem:[#allocation2 + $0xb8] sm:$0xf]
    %v120 = vld [vmem:[#allocation2 + $0xbc] sm:$0xf]
    %v121 = vld [vmem:[#allocation2 + $0xc0] sm:$0xf]
    %v122 = vld [vmem:[#allocation2 + $0xc4] sm:$0xf]
    %v123 = vld [vmem:[#allocation2 + $0xc8] sm:$0xf]
    %v124 = vld [vmem:[#allocation2 + $0xcc] sm:$0xf]
    %v125 = vld [vmem:[#allocation2 + $0xd0] sm:$0xf]
    %v126 = vld [vmem:[#allocation2 + $0xd4] sm:$0xf]
    %v127 = vld [vmem:[#allocation2 + $0xd8] sm:$0xf]
    %v128 = vld [vmem:[#allocation2 + $0xdc] sm:$0xf]
    %v129 = vld [vmem:[#allocation2 + $0xe0] sm:$0xf]
    %v130 = vld [vmem:[#allocation2 + $0xe4] sm:$0xf]
    %v131 = vld [vmem:[#allocation2 + $0xe8] sm:$0xf]
    %v132 = vld [vmem:[#allocation2 + $0xec] sm:$0xf]
    %v133 = vld [vmem:[#allocation2 + $0xf0] sm:$0xf]
    %v134 = vld [vmem:[#allocation2 + $0xf4] sm:$0xf]
    %v135 = vld [vmem:[#allocation2 + $0xf8] sm:$0xf]
    %v136 = vld [vmem:[#allocation2 + $0xfc] sm:$0xf]
    %v137 = vunpack.c.l.bf16 %v73
    %v138 = vunpack.c.l.bf16 %v74
    %v139 = vunpack.c.l.bf16 %v75
    %v140 = vunpack.c.l.bf16 %v76
    %v141 = vunpack.c.l.bf16 %v77
    %v142 = vunpack.c.l.bf16 %v78
    %v143 = vunpack.c.l.bf16 %v79
    %v144 = vunpack.c.l.bf16 %v80
    %v145 = vunpack.c.l.bf16 %v81
    %v146 = vunpack.c.l.bf16 %v82
    %v147 = vunpack.c.l.bf16 %v83
    %v148 = vunpack.c.l.bf16 %v84
    %v149 = vunpack.c.l.bf16 %v85
    %v150 = vunpack.c.l.bf16 %v86
    %v151 = vunpack.c.l.bf16 %v87
    %v152 = vunpack.c.l.bf16 %v88
    %v153 = vunpack.c.l.bf16 %v89
    %v154 = vunpack.c.l.bf16 %v90
    %v155 = vunpack.c.l.bf16 %v91
    %v156 = vunpack.c.l.bf16 %v92
    %v157 = vunpack.c.l.bf16 %v93
    %v158 = vunpack.c.l.bf16 %v94
    %v159 = vunpack.c.l.bf16 %v95
    %v160 = vunpack.c.l.bf16 %v96
    %v161 = vunpack.c.l.bf16 %v97
    %v162 = vunpack.c.l.bf16 %v98
    %v163 = vunpack.c.l.bf16 %v99
    %v164 = vunpack.c.l.bf16 %v100
    %v165 = vunpack.c.l.bf16 %v101
    %v166 = vunpack.c.l.bf16 %v102
    %v167 = vunpack.c.l.bf16 %v103
    %v168 = vunpack.c.l.bf16 %v104
    %v169 = vunpack.c.l.bf16 %v105
    %v170 = vunpack.c.l.bf16 %v106
    %v171 = vunpack.c.l.bf16 %v107
    %v172 = vunpack.c.l.bf16 %v108
    %v173 = vunpack.c.l.bf16 %v109
    %v174 = vunpack.c.l.bf16 %v110
    %v175 = vunpack.c.l.bf16 %v111
    %v176 = vunpack.c.l.bf16 %v112
    %v177 = vunpack.c.l.bf16 %v113
    %v178 = vunpack.c.l.bf16 %v114
    %v179 = vunpack.c.l.bf16 %v115
    %v180 = vunpack.c.l.bf16 %v116
    %v181 = vunpack.c.l.bf16 %v117
    %v182 = vunpack.c.l.bf16 %v118
    %v183 = vunpack.c.l.bf16 %v119
    %v184 = vunpack.c.l.bf16 %v120
    %v185 = vunpack.c.l.bf16 %v121
    %v186 = vunpack.c.l.bf16 %v122
    %v187 = vunpack.c.l.bf16 %v123
    %v188 = vunpack.c.l.bf16 %v124
    %v189 = vunpack.c.l.bf16 %v125
    %v190 = vunpack.c.l.bf16 %v126
    %v191 = vunpack.c.l.bf16 %v127
    %v192 = vunpack.c.l.bf16 %v128
    %v193 = vunpack.c.l.bf16 %v129
    %v194 = vunpack.c.l.bf16 %v130
    %v195 = vunpack.c.l.bf16 %v131
    %v196 = vunpack.c.l.bf16 %v132
    %v197 = vunpack.c.l.bf16 %v133
    %v198 = vunpack.c.l.bf16 %v134
    %v199 = vunpack.c.l.bf16 %v135
    %v200 = vunpack.c.l.bf16 %v136
    %v201 = vld [vmem:[#allocation5] sm:$0x1]
    %v203 = vlaneseq
    %v204 = vshrl.u32 %v203, 7
    %v205 = vsub.s32 0, %v204
    %v206 = vrot.slane %v201, %v205
    %v208 = vmul.f32 %v137, %v206
    %v209 = vmul.f32 %v138, %v206
    %v210 = vmul.f32 %v139, %v206
    %v211 = vmul.f32 %v140, %v206
    %v212 = vmul.f32 %v141, %v206
    %v213 = vmul.f32 %v142, %v206
    %v214 = vmul.f32 %v143, %v206
    %v215 = vmul.f32 %v144, %v206
    %v216 = vmul.f32 %v145, %v206
    %v217 = vmul.f32 %v146, %v206
    %v218 = vmul.f32 %v147, %v206
    %v219 = vmul.f32 %v148, %v206
    %v220 = vmul.f32 %v149, %v206
    %v221 = vmul.f32 %v150, %v206
    %v222 = vmul.f32 %v151, %v206
    %v223 = vmul.f32 %v152, %v206
    %v224 = vmul.f32 %v153, %v206
    %v225 = vmul.f32 %v154, %v206
    %v226 = vmul.f32 %v155, %v206
    %v227 = vmul.f32 %v156, %v206
    %v228 = vmul.f32 %v157, %v206
    %v229 = vmul.f32 %v158, %v206
    %v230 = vmul.f32 %v159, %v206
    %v231 = vmul.f32 %v160, %v206
    %v232 = vmul.f32 %v161, %v206
    %v233 = vmul.f32 %v162, %v206
    %v234 = vmul.f32 %v163, %v206
    %v235 = vmul.f32 %v164, %v206
    %v236 = vmul.f32 %v165, %v206
    %v237 = vmul.f32 %v166, %v206
    %v238 = vmul.f32 %v167, %v206
    %v239 = vmul.f32 %v168, %v206
    %v240 = vmul.f32 %v169, %v206
    %v241 = vmul.f32 %v170, %v206
    %v242 = vmul.f32 %v171, %v206
    %v243 = vmul.f32 %v172, %v206
    %v244 = vmul.f32 %v173, %v206
    %v245 = vmul.f32 %v174, %v206
    %v246 = vmul.f32 %v175, %v206
    %v247 = vmul.f32 %v176, %v206
    %v248 = vmul.f32 %v177, %v206
    %v249 = vmul.f32 %v178, %v206
    %v250 = vmul.f32 %v179, %v206
    %v251 = vmul.f32 %v180, %v206
    %v252 = vmul.f32 %v181, %v206
    %v253 = vmul.f32 %v182, %v206
    %v254 = vmul.f32 %v183, %v206
    %v255 = vmul.f32 %v184, %v206
    %v256 = vmul.f32 %v185, %v206
    %v257 = vmul.f32 %v186, %v206
    %v258 = vmul.f32 %v187, %v206
    %v259 = vmul.f32 %v188, %v206
    %v260 = vmul.f32 %v189, %v206
    %v261 = vmul.f32 %v190, %v206
    %v262 = vmul.f32 %v191, %v206
    %v263 = vmul.f32 %v192, %v206
    %v264 = vmul.f32 %v193, %v206
    %v265 = vmul.f32 %v194, %v206
    %v266 = vmul.f32 %v195, %v206
    %v267 = vmul.f32 %v196, %v206
    %v268 = vmul.f32 %v197, %v206
    %v269 = vmul.f32 %v198, %v206
    %v270 = vmul.f32 %v199, %v206
    %v271 = vmul.f32 %v200, %v206
    %v272 = vld [vmem:[#allocation7] sm:$0x1]
    %v274 = vlaneseq
    %v275 = vshrl.u32 %v274, 7
    %v276 = vsub.s32 0, %v275
    %v277 = vrot.slane %v272, %v276
    %v279 = vadd.f32 %v208, %v277
    %v280 = vadd.f32 %v209, %v277
    %v281 = vadd.f32 %v210, %v277
    %v282 = vadd.f32 %v211, %v277
    %v283 = vadd.f32 %v212, %v277
    %v284 = vadd.f32 %v213, %v277
    %v285 = vadd.f32 %v214, %v277
    %v286 = vadd.f32 %v215, %v277
    %v287 = vadd.f32 %v216, %v277
    %v288 = vadd.f32 %v217, %v277
    %v289 = vadd.f32 %v218, %v277
    %v290 = vadd.f32 %v219, %v277
    %v291 = vadd.f32 %v220, %v277
    %v292 = vadd.f32 %v221, %v277
    %v293 = vadd.f32 %v222, %v277
    %v294 = vadd.f32 %v223, %v277
    %v295 = vadd.f32 %v224, %v277
    %v296 = vadd.f32 %v225, %v277
    %v297 = vadd.f32 %v226, %v277
    %v298 = vadd.f32 %v227, %v277
    %v299 = vadd.f32 %v228, %v277
    %v300 = vadd.f32 %v229, %v277
    %v301 = vadd.f32 %v230, %v277
    %v302 = vadd.f32 %v231, %v277
    %v303 = vadd.f32 %v232, %v277
    %v304 = vadd.f32 %v233, %v277
    %v305 = vadd.f32 %v234, %v277
    %v306 = vadd.f32 %v235, %v277
    %v307 = vadd.f32 %v236, %v277
    %v308 = vadd.f32 %v237, %v277
    %v309 = vadd.f32 %v238, %v277
    %v310 = vadd.f32 %v239, %v277
    %v311 = vadd.f32 %v240, %v277
    %v312 = vadd.f32 %v241, %v277
    %v313 = vadd.f32 %v242, %v277
    %v314 = vadd.f32 %v243, %v277
    %v315 = vadd.f32 %v244, %v277
    %v316 = vadd.f32 %v245, %v277
    %v317 = vadd.f32 %v246, %v277
    %v318 = vadd.f32 %v247, %v277
    %v319 = vadd.f32 %v248, %v277
    %v320 = vadd.f32 %v249, %v277
    %v321 = vadd.f32 %v250, %v277
    %v322 = vadd.f32 %v251, %v277
    %v323 = vadd.f32 %v252, %v277
    %v324 = vadd.f32 %v253, %v277
    %v325 = vadd.f32 %v254, %v277
    %v326 = vadd.f32 %v255, %v277
    %v327 = vadd.f32 %v256, %v277
    %v328 = vadd.f32 %v257, %v277
    %v329 = vadd.f32 %v258, %v277
    %v330 = vadd.f32 %v259, %v277
    %v331 = vadd.f32 %v260, %v277
    %v332 = vadd.f32 %v261, %v277
    %v333 = vadd.f32 %v262, %v277
    %v334 = vadd.f32 %v263, %v277
    %v335 = vadd.f32 %v264, %v277
    %v336 = vadd.f32 %v265, %v277
    %v337 = vadd.f32 %v266, %v277
    %v338 = vadd.f32 %v267, %v277
    %v339 = vadd.f32 %v268, %v277
    %v340 = vadd.f32 %v269, %v277
    %v341 = vadd.f32 %v270, %v277
    %v342 = vadd.f32 %v271, %v277
    %v343 = vmax.f32 %v279, 0.0
    %v344 = vmax.f32 %v280, 0.0
    %v345 = vmax.f32 %v281, 0.0
    %v346 = vmax.f32 %v282, 0.0
    %v347 = vmax.f32 %v283, 0.0
    %v348 = vmax.f32 %v284, 0.0
    %v349 = vmax.f32 %v285, 0.0
    %v350 = vmax.f32 %v286, 0.0
    %v351 = vmax.f32 %v287, 0.0
    %v352 = vmax.f32 %v288, 0.0
    %v353 = vmax.f32 %v289, 0.0
    %v354 = vmax.f32 %v290, 0.0
    %v355 = vmax.f32 %v291, 0.0
    %v356 = vmax.f32 %v292, 0.0
    %v357 = vmax.f32 %v293, 0.0
    %v358 = vmax.f32 %v294, 0.0
    %v359 = vmax.f32 %v295, 0.0
    %v360 = vmax.f32 %v296, 0.0
    %v361 = vmax.f32 %v297, 0.0
    %v362 = vmax.f32 %v298, 0.0
    %v363 = vmax.f32 %v299, 0.0
    %v364 = vmax.f32 %v300, 0.0
    %v365 = vmax.f32 %v301, 0.0
    %v366 = vmax.f32 %v302, 0.0
    %v367 = vmax.f32 %v303, 0.0
    %v368 = vmax.f32 %v304, 0.0
    %v369 = vmax.f32 %v305, 0.0
    %v370 = vmax.f32 %v306, 0.0
    %v371 = vmax.f32 %v307, 0.0
    %v372 = vmax.f32 %v308, 0.0
    %v373 = vmax.f32 %v309, 0.0
    %v374 = vmax.f32 %v310, 0.0
    %v375 = vmax.f32 %v311, 0.0
    %v376 = vmax.f32 %v312, 0.0
    %v377 = vmax.f32 %v313, 0.0
    %v378 = vmax.f32 %v314, 0.0
    %v379 = vmax.f32 %v315, 0.0
    %v380 = vmax.f32 %v316, 0.0
    %v381 = vmax.f32 %v317, 0.0
    %v382 = vmax.f32 %v318, 0.0
    %v383 = vmax.f32 %v319, 0.0
    %v384 = vmax.f32 %v320, 0.0
    %v385 = vmax.f32 %v321, 0.0
    %v386 = vmax.f32 %v322, 0.0
    %v387 = vmax.f32 %v323, 0.0
    %v388 = vmax.f32 %v324, 0.0
    %v389 = vmax.f32 %v325, 0.0
    %v390 = vmax.f32 %v326, 0.0
    %v391 = vmax.f32 %v327, 0.0
    %v392 = vmax.f32 %v328, 0.0
    %v393 = vmax.f32 %v329, 0.0
    %v394 = vmax.f32 %v330, 0.0
    %v395 = vmax.f32 %v331, 0.0
    %v396 = vmax.f32 %v332, 0.0
    %v397 = vmax.f32 %v333, 0.0
    %v398 = vmax.f32 %v334, 0.0
    %v399 = vmax.f32 %v335, 0.0
    %v400 = vmax.f32 %v336, 0.0
    %v401 = vmax.f32 %v337, 0.0
    %v402 = vmax.f32 %v338, 0.0
    %v403 = vmax.f32 %v339, 0.0
    %v404 = vmax.f32 %v340, 0.0
    %v405 = vmax.f32 %v341, 0.0
    %v406 = vmax.f32 %v342, 0.0
    %v407 = vpack.c.bf16 %v344, %v343
    %v408 = vpack.c.bf16 %v346, %v345
    %v409 = vpack.c.bf16 %v348, %v347
    %v410 = vpack.c.bf16 %v350, %v349
    %v411 = vpack.c.bf16 %v352, %v351
    %v412 = vpack.c.bf16 %v354, %v353
    %v413 = vpack.c.bf16 %v356, %v355
    %v414 = vpack.c.bf16 %v358, %v357
    %v415 = vpack.c.bf16 %v360, %v359
    %v416 = vpack.c.bf16 %v362, %v361
    %v417 = vpack.c.bf16 %v364, %v363
    %v418 = vpack.c.bf16 %v366, %v365
    %v419 = vpack.c.bf16 %v368, %v367
    %v420 = vpack.c.bf16 %v370, %v369
    %v421 = vpack.c.bf16 %v372, %v371
    %v422 = vpack.c.bf16 %v374, %v373
    %v423 = vpack.c.bf16 %v376, %v375
    %v424 = vpack.c.bf16 %v378, %v377
    %v425 = vpack.c.bf16 %v380, %v379
    %v426 = vpack.c.bf16 %v382, %v381
    %v427 = vpack.c.bf16 %v384, %v383
    %v428 = vpack.c.bf16 %v386, %v385
    %v429 = vpack.c.bf16 %v388, %v387
    %v430 = vpack.c.bf16 %v390, %v389
    %v431 = vpack.c.bf16 %v392, %v391
    %v432 = vpack.c.bf16 %v394, %v393
    %v433 = vpack.c.bf16 %v396, %v395
    %v434 = vpack.c.bf16 %v398, %v397
    %v435 = vpack.c.bf16 %v400, %v399
    %v436 = vpack.c.bf16 %v402, %v401
    %v437 = vpack.c.bf16 %v404, %v403
    %v438 = vpack.c.bf16 %v406, %v405
    %v439 = vld [vmem:[#allocation8] sm:$0xf]
    %v440 = vld [vmem:[#allocation8 + $0x4] sm:$0xf]
    %v441 = vld [vmem:[#allocation8 + $0x8] sm:$0xf]
    %v442 = vld [vmem:[#allocation8 + $0xc] sm:$0xf]
    %v443 = vld [vmem:[#allocation8 + $0x10] sm:$0xf]
    %v444 = vld [vmem:[#allocation8 + $0x14] sm:$0xf]
    %v445 = vld [vmem:[#allocation8 + $0x18] sm:$0xf]
    %v446 = vld [vmem:[#allocation8 + $0x1c] sm:$0xf]
    %v447 = vld [vmem:[#allocation8 + $0x20] sm:$0xf]
    %v448 = vld [vmem:[#allocation8 + $0x24] sm:$0xf]
    %v449 = vld [vmem:[#allocation8 + $0x28] sm:$0xf]
    %v450 = vld [vmem:[#allocation8 + $0x2c] sm:$0xf]
    %v451 = vld [vmem:[#allocation8 + $0x30] sm:$0xf]
    %v452 = vld [vmem:[#allocation8 + $0x34] sm:$0xf]
    %v453 = vld [vmem:[#allocation8 + $0x38] sm:$0xf]
    %v454 = vld [vmem:[#allocation8 + $0x3c] sm:$0xf]
    %v471 = vunpack.c.l.b16 %v439
    %v472 = vunpack.c.l.b16 %v440
    %v473 = vunpack.c.l.b16 %v441
    %v474 = vunpack.c.l.b16 %v442
    %v475 = vunpack.c.l.b16 %v443
    %v476 = vunpack.c.l.b16 %v444
    %v477 = vunpack.c.l.b16 %v445
    %v478 = vunpack.c.l.b16 %v446
    %v479 = vunpack.c.l.b16 %v447
    %v480 = vunpack.c.l.b16 %v448
    %v481 = vunpack.c.l.b16 %v449
    %v482 = vunpack.c.l.b16 %v450
    %v483 = vunpack.c.l.b16 %v451
    %v484 = vunpack.c.l.b16 %v452
    %v485 = vunpack.c.l.b16 %v453
    %v486 = vunpack.c.l.b16 %v454
    %v487 = vpack.c.b16 %v472, %v471
    %v488 = vpack.c.b16 %v474, %v473
    %v489 = vpack.c.b16 %v476, %v475
    %v490 = vpack.c.b16 %v478, %v477
    %v491 = vpack.c.b16 %v480, %v479
    %v492 = vpack.c.b16 %v482, %v481
    %v493 = vpack.c.b16 %v484, %v483
    %v494 = vpack.c.b16 %v486, %v485
    %503 = vmatprep.subr.bf16.mxu0 0
    %504 = vmatpush1.bf16.msra.mxu0 %v487
    %505 = vmatprep.subr.bf16.mxu0 0
    %506 = vmatpush1.bf16.msra.mxu0 %v488
    %507 = vmatprep.subr.bf16.mxu0 0
    %508 = vmatpush1.bf16.msra.mxu0 %v489
    %509 = vmatprep.subr.bf16.mxu0 0
    %510 = vmatpush1.bf16.msra.mxu0 %v490
    %511 = vmatprep.subr.bf16.mxu0 0
    %512 = vmatpush1.bf16.msra.mxu0 %v491
    %513 = vmatprep.subr.bf16.mxu0 0
    %514 = vmatpush1.bf16.msra.mxu0 %v492
    %515 = vmatprep.subr.bf16.mxu0 0
    %516 = vmatpush1.bf16.msra.mxu0 %v493
    %517 = vmatprep.subr.bf16.mxu0 0
    %518 = vmatpush1.bf16.msra.mxu0 %v494
    %519 = vmatprep.subr.bf16.mxu0 0
    %520 = vmatpush1.bf16.msra.mxu0 0
    %521 = vmatprep.subr.bf16.mxu0 0
    %522 = vmatpush1.bf16.msra.mxu0 0
    %523 = vmatprep.subr.bf16.mxu0 0
    %524 = vmatpush1.bf16.msra.mxu0 0
    %525 = vmatprep.subr.bf16.mxu0 0
    %526 = vmatpush1.bf16.msra.mxu0 0
    %527 = vmatprep.subr.bf16.mxu0 0
    %528 = vmatpush1.bf16.msra.mxu0 0
    %529 = vmatprep.subr.bf16.mxu0 0
    %530 = vmatpush1.bf16.msra.mxu0 0
    %531 = vmatprep.subr.bf16.mxu0 0
    %532 = vmatpush1.bf16.msra.mxu0 0
    %533 = vmatprep.subr.bf16.mxu0 0
    %534 = vmatpush1.bf16.msra.mxu0 0
    %535 = vmatprep.mubr.bf16.mxu0 0
    %536 = vmatmul.mubr.bf16.gmra.mrb[0].mxu0 %v407
    %v537 = vpop.f32.mrb[0].mxu0
    %v538 = vadd.f32 0.0, %v537
    %v539 = vpop.f32.mrb[0].mxu0
    %v540 = vpop.f32.mrb[0].mxu0
    %v541 = vadd.f32 0.0, %v540
    %v542 = vpop.f32.mrb[0].mxu0
    %543 = vmatprep.mubr.bf16.mxu0 0
    %544 = vmatmul.mubr.bf16.gmra.mrb[0].mxu0 %v408
    %v545 = vpop.f32.mrb[0].mxu0
    %v546 = vadd.f32 0.0, %v545
    %v547 = vpop.f32.mrb[0].mxu0
    %v548 = vpop.f32.mrb[0].mxu0
    %v549 = vadd.f32 0.0, %v548
    %v550 = vpop.f32.mrb[0].mxu0
    %551 = vmatprep.mubr.bf16.mxu0 0
    %552 = vmatmul.mubr.bf16.gmra.mrb[0].mxu0 %v409
    %v553 = vpop.f32.mrb[0].mxu0
    %v554 = vadd.f32 0.0, %v553
    %v555 = vpop.f32.mrb[0].mxu0
    %v556 = vpop.f32.mrb[0].mxu0
    %v557 = vadd.f32 0.0, %v556
    %v558 = vpop.f32.mrb[0].mxu0
    %559 = vmatprep.mubr.bf16.mxu0 0
    %560 = vmatmul.mubr.bf16.gmra.mrb[0].mxu0 %v410
    %v561 = vpop.f32.mrb[0].mxu0
    %v562 = vadd.f32 0.0, %v561
    %v563 = vpop.f32.mrb[0].mxu0
    %v564 = vpop.f32.mrb[0].mxu0
    %v565 = vadd.f32 0.0, %v564
    %v566 = vpop.f32.mrb[0].mxu0
    %567 = vmatprep.mubr.bf16.mxu0 0
    %568 = vmatmul.mubr.bf16.gmra.mrb[0].mxu0 %v411
    %v569 = vpop.f32.mrb[0].mxu0
    %v570 = vadd.f32 0.0, %v569
    %v571 = vpop.f32.mrb[0].mxu0
    %v572 = vpop.f32.mrb[0].mxu0
    %v573 = vadd.f32 0.0, %v572
    %v574 = vpop.f32.mrb[0].mxu0
    %575 = vmatprep.mubr.bf16.mxu0 0
    %576 = vmatmul.mubr.bf16.gmra.mrb[0].mxu0 %v412
    %v577 = vpop.f32.mrb[0].mxu0
    %v578 = vadd.f32 0.0, %v577
    %v579 = vpop.f32.mrb[0].mxu0
    %v580 = vpop.f32.mrb[0].mxu0
    %v581 = vadd.f32 0.0, %v580
    %v582 = vpop.f32.mrb[0].mxu0
    %583 = vmatprep.mubr.bf16.mxu0 0
    %584 = vmatmul.mubr.bf16.gmra.mrb[0].mxu0 %v413
    %v585 = vpop.f32.mrb[0].mxu0
    %v586 = vadd.f32 0.0, %v585
    %v587 = vpop.f32.mrb[0].mxu0
    %v588 = vpop.f32.mrb[0].mxu0
    %v589 = vadd.f32 0.0, %v588
    %v590 = vpop.f32.mrb[0].mxu0
    %591 = vmatprep.mubr.bf16.mxu0 0
    %592 = vmatmul.mubr.bf16.gmra.mrb[0].mxu0 %v414
    %v593 = vpop.f32.mrb[0].mxu0
    %v594 = vadd.f32 0.0, %v593
    %v595 = vpop.f32.mrb[0].mxu0
    %v596 = vpop.f32.mrb[0].mxu0
    %v597 = vadd.f32 0.0, %v596
    %v598 = vpop.f32.mrb[0].mxu0
    %599 = vmatprep.mubr.bf16.mxu0 0
    %600 = vmatmul.mubr.bf16.gmra.mrb[0].mxu0 %v415
    %v601 = vpop.f32.mrb[0].mxu0
    %v602 = vadd.f32 0.0, %v601
    %v603 = vpop.f32.mrb[0].mxu0
    %v604 = vpop.f32.mrb[0].mxu0
    %v605 = vadd.f32 0.0, %v604
    %v606 = vpop.f32.mrb[0].mxu0
    %607 = vmatprep.mubr.bf16.mxu0 0
    %608 = vmatmul.mubr.bf16.gmra.mrb[0].mxu0 %v416
    %v609 = vpop.f32.mrb[0].mxu0
    %v610 = vadd.f32 0.0, %v609
    %v611 = vpop.f32.mrb[0].mxu0
    %v612 = vpop.f32.mrb[0].mxu0
    %v613 = vadd.f32 0.0, %v612
    %v614 = vpop.f32.mrb[0].mxu0
    %615 = vmatprep.mubr.bf16.mxu0 0
    %616 = vmatmul.mubr.bf16.gmra.mrb[0].mxu0 %v417
    %v617 = vpop.f32.mrb[0].mxu0
    %v618 = vadd.f32 0.0, %v617
    %v619 = vpop.f32.mrb[0].mxu0
    %v620 = vpop.f32.mrb[0].mxu0
    %v621 = vadd.f32 0.0, %v620
    %v622 = vpop.f32.mrb[0].mxu0
    %623 = vmatprep.mubr.bf16.mxu0 0
    %624 = vmatmul.mubr.bf16.gmra.mrb[0].mxu0 %v418
    %v625 = vpop.f32.mrb[0].mxu0
    %v626 = vadd.f32 0.0, %v625
    %v627 = vpop.f32.mrb[0].mxu0
    %v628 = vpop.f32.mrb[0].mxu0
    %v629 = vadd.f32 0.0, %v628
    %v630 = vpop.f32.mrb[0].mxu0
    %631 = vmatprep.mubr.bf16.mxu0 0
    %632 = vmatmul.mubr.bf16.gmra.mrb[0].mxu0 %v419
    %v633 = vpop.f32.mrb[0].mxu0
    %v634 = vadd.f32 0.0, %v633
    %v635 = vpop.f32.mrb[0].mxu0
    %v636 = vpop.f32.mrb[0].mxu0
    %v637 = vadd.f32 0.0, %v636
    %v638 = vpop.f32.mrb[0].mxu0
    %639 = vmatprep.mubr.bf16.mxu0 0
    %640 = vmatmul.mubr.bf16.gmra.mrb[0].mxu0 %v420
    %v641 = vpop.f32.mrb[0].mxu0
    %v642 = vadd.f32 0.0, %v641
    %v643 = vpop.f32.mrb[0].mxu0
    %v644 = vpop.f32.mrb[0].mxu0
    %v645 = vadd.f32 0.0, %v644
    %v646 = vpop.f32.mrb[0].mxu0
    %647 = vmatprep.mubr.bf16.mxu0 0
    %648 = vmatmul.mubr.bf16.gmra.mrb[0].mxu0 %v421
    %v649 = vpop.f32.mrb[0].mxu0
    %v650 = vadd.f32 0.0, %v649
    %v651 = vpop.f32.mrb[0].mxu0
    %v652 = vpop.f32.mrb[0].mxu0
    %v653 = vadd.f32 0.0, %v652
    %v654 = vpop.f32.mrb[0].mxu0
    %655 = vmatprep.mubr.bf16.mxu0 0
    %656 = vmatmul.mubr.bf16.gmra.mrb[0].mxu0 %v422
    %v657 = vpop.f32.mrb[0].mxu0
    %v658 = vadd.f32 0.0, %v657
    %v659 = vpop.f32.mrb[0].mxu0
    %v660 = vpop.f32.mrb[0].mxu0
    %v661 = vadd.f32 0.0, %v660
    %v662 = vpop.f32.mrb[0].mxu0
    %663 = vmatprep.mubr.bf16.mxu0 0
    %664 = vmatmul.mubr.bf16.gmra.mrb[0].mxu0 %v423
    %v665 = vpop.f32.mrb[0].mxu0
    %v666 = vadd.f32 0.0, %v665
    %v667 = vpop.f32.mrb[0].mxu0
    %v668 = vpop.f32.mrb[0].mxu0
    %v669 = vadd.f32 0.0, %v668
    %v670 = vpop.f32.mrb[0].mxu0
    %671 = vmatprep.mubr.bf16.mxu0 0
    %672 = vmatmul.mubr.bf16.gmra.mrb[0].mxu0 %v424
    %v673 = vpop.f32.mrb[0].mxu0
    %v674 = vadd.f32 0.0, %v673
    %v675 = vpop.f32.mrb[0].mxu0
    %v676 = vpop.f32.mrb[0].mxu0
    %v677 = vadd.f32 0.0, %v676
    %v678 = vpop.f32.mrb[0].mxu0
    %679 = vmatprep.mubr.bf16.mxu0 0
    %680 = vmatmul.mubr.bf16.gmra.mrb[0].mxu0 %v425
    %v681 = vpop.f32.mrb[0].mxu0
    %v682 = vadd.f32 0.0, %v681
    %v683 = vpop.f32.mrb[0].mxu0
    %v684 = vpop.f32.mrb[0].mxu0
    %v685 = vadd.f32 0.0, %v684
    %v686 = vpop.f32.mrb[0].mxu0
    %687 = vmatprep.mubr.bf16.mxu0 0
    %688 = vmatmul.mubr.bf16.gmra.mrb[0].mxu0 %v426
    %v689 = vpop.f32.mrb[0].mxu0
    %v690 = vadd.f32 0.0, %v689
    %v691 = vpop.f32.mrb[0].mxu0
    %v692 = vpop.f32.mrb[0].mxu0
    %v693 = vadd.f32 0.0, %v692
    %v694 = vpop.f32.mrb[0].mxu0
    %695 = vmatprep.mubr.bf16.mxu0 0
    %696 = vmatmul.mubr.bf16.gmra.mrb[0].mxu0 %v427
    %v697 = vpop.f32.mrb[0].mxu0
    %v698 = vadd.f32 0.0, %v697
    %v699 = vpop.f32.mrb[0].mxu0
    %v700 = vpop.f32.mrb[0].mxu0
    %v701 = vadd.f32 0.0, %v700
    %v702 = vpop.f32.mrb[0].mxu0
    %703 = vmatprep.mubr.bf16.mxu0 0
    %704 = vmatmul.mubr.bf16.gmra.mrb[0].mxu0 %v428
    %v705 = vpop.f32.mrb[0].mxu0
    %v706 = vadd.f32 0.0, %v705
    %v707 = vpop.f32.mrb[0].mxu0
    %v708 = vpop.f32.mrb[0].mxu0
    %v709 = vadd.f32 0.0, %v708
    %v710 = vpop.f32.mrb[0].mxu0
    %711 = vmatprep.mubr.bf16.mxu0 0
    %712 = vmatmul.mubr.bf16.gmra.mrb[0].mxu0 %v429
    %v713 = vpop.f32.mrb[0].mxu0
    %v714 = vadd.f32 0.0, %v713
    %v715 = vpop.f32.mrb[0].mxu0
    %v716 = vpop.f32.mrb[0].mxu0
    %v717 = vadd.f32 0.0, %v716
    %v718 = vpop.f32.mrb[0].mxu0
    %719 = vmatprep.mubr.bf16.mxu0 0
    %720 = vmatmul.mubr.bf16.gmra.mrb[0].mxu0 %v430
    %v721 = vpop.f32.mrb[0].mxu0
    %v722 = vadd.f32 0.0, %v721
    %v723 = vpop.f32.mrb[0].mxu0
    %v724 = vpop.f32.mrb[0].mxu0
    %v725 = vadd.f32 0.0, %v724
    %v726 = vpop.f32.mrb[0].mxu0
    %727 = vmatprep.mubr.bf16.mxu0 0
    %728 = vmatmul.mubr.bf16.gmra.mrb[0].mxu0 %v431
    %v729 = vpop.f32.mrb[0].mxu0
    %v730 = vadd.f32 0.0, %v729
    %v731 = vpop.f32.mrb[0].mxu0
    %v732 = vpop.f32.mrb[0].mxu0
    %v733 = vadd.f32 0.0, %v732
    %v734 = vpop.f32.mrb[0].mxu0
    %735 = vmatprep.mubr.bf16.mxu0 0
    %736 = vmatmul.mubr.bf16.gmra.mrb[0].mxu0 %v432
    %v737 = vpop.f32.mrb[0].mxu0
    %v738 = vadd.f32 0.0, %v737
    %v739 = vpop.f32.mrb[0].mxu0
    %v740 = vpop.f32.mrb[0].mxu0
    %v741 = vadd.f32 0.0, %v740
    %v742 = vpop.f32.mrb[0].mxu0
    %743 = vmatprep.mubr.bf16.mxu0 0
    %744 = vmatmul.mubr.bf16.gmra.mrb[0].mxu0 %v433
    %v745 = vpop.f32.mrb[0].mxu0
    %v746 = vadd.f32 0.0, %v745
    %v747 = vpop.f32.mrb[0].mxu0
    %v748 = vpop.f32.mrb[0].mxu0
    %v749 = vadd.f32 0.0, %v748
    %v750 = vpop.f32.mrb[0].mxu0
    %751 = vmatprep.mubr.bf16.mxu0 0
    %752 = vmatmul.mubr.bf16.gmra.mrb[0].mxu0 %v434
    %v753 = vpop.f32.mrb[0].mxu0
    %v754 = vadd.f32 0.0, %v753
    %v755 = vpop.f32.mrb[0].mxu0
    %v756 = vpop.f32.mrb[0].mxu0
    %v757 = vadd.f32 0.0, %v756
    %v758 = vpop.f32.mrb[0].mxu0
    %759 = vmatprep.mubr.bf16.mxu0 0
    %760 = vmatmul.mubr.bf16.gmra.mrb[0].mxu0 %v435
    %v761 = vpop.f32.mrb[0].mxu0
    %v762 = vadd.f32 0.0, %v761
    %v763 = vpop.f32.mrb[0].mxu0
    %v764 = vpop.f32.mrb[0].mxu0
    %v765 = vadd.f32 0.0, %v764
    %v766 = vpop.f32.mrb[0].mxu0
    %767 = vmatprep.mubr.bf16.mxu0 0
    %768 = vmatmul.mubr.bf16.gmra.mrb[0].mxu0 %v436
    %v769 = vpop.f32.mrb[0].mxu0
    %v770 = vadd.f32 0.0, %v769
    %v771 = vpop.f32.mrb[0].mxu0
    %v772 = vpop.f32.mrb[0].mxu0
    %v773 = vadd.f32 0.0, %v772
    %v774 = vpop.f32.mrb[0].mxu0
    %775 = vmatprep.mubr.bf16.mxu0 0
    %776 = vmatmul.mubr.bf16.gmra.mrb[0].mxu0 %v437
    %v777 = vpop.f32.mrb[0].mxu0
    %v778 = vadd.f32 0.0, %v777
    %v779 = vpop.f32.mrb[0].mxu0
    %v780 = vpop.f32.mrb[0].mxu0
    %v781 = vadd.f32 0.0, %v780
    %v782 = vpop.f32.mrb[0].mxu0
    %783 = vmatprep.mubr.bf16.mxu0 0
    %784 = vmatmul.mubr.bf16.gmra.mrb[0].mxu0 %v438
    %v785 = vpop.f32.mrb[0].mxu0
    %v786 = vadd.f32 0.0, %v785
    %v787 = vpop.f32.mrb[0].mxu0
    %v788 = vpop.f32.mrb[0].mxu0
    %v789 = vadd.f32 0.0, %v788
    %v790 = vpop.f32.mrb[0].mxu0
    %791 = vdwg.mxu0
    %v792 = vpack.c.bf16 %v541, %v538
    %v793 = vpack.c.bf16 %v549, %v546
    %v794 = vpack.c.bf16 %v557, %v554
    %v795 = vpack.c.bf16 %v565, %v562
    %v796 = vpack.c.bf16 %v573, %v570
    %v797 = vpack.c.bf16 %v581, %v578
    %v798 = vpack.c.bf16 %v589, %v586
    %v799 = vpack.c.bf16 %v597, %v594
    %v800 = vpack.c.bf16 %v605, %v602
    %v801 = vpack.c.bf16 %v613, %v610
    %v802 = vpack.c.bf16 %v621, %v618
    %v803 = vpack.c.bf16 %v629, %v626
    %v804 = vpack.c.bf16 %v637, %v634
    %v805 = vpack.c.bf16 %v645, %v642
    %v806 = vpack.c.bf16 %v653, %v650
    %v807 = vpack.c.bf16 %v661, %v658
    %v808 = vpack.c.bf16 %v669, %v666
    %v809 = vpack.c.bf16 %v677, %v674
    %v810 = vpack.c.bf16 %v685, %v682
    %v811 = vpack.c.bf16 %v693, %v690
    %v812 = vpack.c.bf16 %v701, %v698
    %v813 = vpack.c.bf16 %v709, %v706
    %v814 = vpack.c.bf16 %v717, %v714
    %v815 = vpack.c.bf16 %v725, %v722
    %v816 = vpack.c.bf16 %v733, %v730
    %v817 = vpack.c.bf16 %v741, %v738
    %v818 = vpack.c.bf16 %v749, %v746
    %v819 = vpack.c.bf16 %v757, %v754
    %v820 = vpack.c.bf16 %v765, %v762
    %v821 = vpack.c.bf16 %v773, %v770
    %v822 = vpack.c.bf16 %v781, %v778
    %v823 = vpack.c.bf16 %v789, %v786
    %v856 = vunpack.c.l.b16 %v792
    %v857 = vunpack.c.h.b16 %v792
    %v858 = vunpack.c.l.b16 %v793
    %v859 = vunpack.c.h.b16 %v793
    %v860 = vunpack.c.l.b16 %v794
    %v861 = vunpack.c.h.b16 %v794
    %v862 = vunpack.c.l.b16 %v795
    %v863 = vunpack.c.h.b16 %v795
    %v864 = vunpack.c.l.b16 %v796
    %v865 = vunpack.c.h.b16 %v796
    %v866 = vunpack.c.l.b16 %v797
    %v867 = vunpack.c.h.b16 %v797
    %v868 = vunpack.c.l.b16 %v798
    %v869 = vunpack.c.h.b16 %v798
    %v870 = vunpack.c.l.b16 %v799
    %v871 = vunpack.c.h.b16 %v799
    %v872 = vunpack.c.l.b16 %v800
    %v873 = vunpack.c.h.b16 %v800
    %v874 = vunpack.c.l.b16 %v801
    %v875 = vunpack.c.h.b16 %v801
    %v876 = vunpack.c.l.b16 %v802
    %v877 = vunpack.c.h.b16 %v802
    %v878 = vunpack.c.l.b16 %v803
    %v879 = vunpack.c.h.b16 %v803
    %v880 = vunpack.c.l.b16 %v804
    %v881 = vunpack.c.h.b16 %v804
    %v882 = vunpack.c.l.b16 %v805
    %v883 = vunpack.c.h.b16 %v805
    %v884 = vunpack.c.l.b16 %v806
    %v885 = vunpack.c.h.b16 %v806
    %v886 = vunpack.c.l.b16 %v807
    %v887 = vunpack.c.h.b16 %v807
    %v888 = vunpack.c.l.b16 %v808
    %v889 = vunpack.c.h.b16 %v808
    %v890 = vunpack.c.l.b16 %v809
    %v891 = vunpack.c.h.b16 %v809
    %v892 = vunpack.c.l.b16 %v810
    %v893 = vunpack.c.h.b16 %v810
    %v894 = vunpack.c.l.b16 %v811
    %v895 = vunpack.c.h.b16 %v811
    %v896 = vunpack.c.l.b16 %v812
    %v897 = vunpack.c.h.b16 %v812
    %v898 = vunpack.c.l.b16 %v813
    %v899 = vunpack.c.h.b16 %v813
    %v900 = vunpack.c.l.b16 %v814
    %v901 = vunpack.c.h.b16 %v814
    %v902 = vunpack.c.l.b16 %v815
    %v903 = vunpack.c.h.b16 %v815
    %v904 = vunpack.c.l.b16 %v816
    %v905 = vunpack.c.h.b16 %v816
    %v906 = vunpack.c.l.b16 %v817
    %v907 = vunpack.c.h.b16 %v817
    %v908 = vunpack.c.l.b16 %v818
    %v909 = vunpack.c.h.b16 %v818
    %v910 = vunpack.c.l.b16 %v819
    %v911 = vunpack.c.h.b16 %v819
    %v912 = vunpack.c.l.b16 %v820
    %v913 = vunpack.c.h.b16 %v820
    %v914 = vunpack.c.l.b16 %v821
    %v915 = vunpack.c.h.b16 %v821
    %v916 = vunpack.c.l.b16 %v822
    %v917 = vunpack.c.h.b16 %v822
    %v918 = vunpack.c.l.b16 %v823
    %v919 = vunpack.c.h.b16 %v823
    %v920 = vpack.c.b16 %v856, %v856
    %v921 = vpack.c.b16 %v857, %v857
    %v922 = vpack.c.b16 %v858, %v858
    %v923 = vpack.c.b16 %v859, %v859
    %v924 = vpack.c.b16 %v860, %v860
    %v925 = vpack.c.b16 %v861, %v861
    %v926 = vpack.c.b16 %v862, %v862
    %v927 = vpack.c.b16 %v863, %v863
    %v928 = vpack.c.b16 %v864, %v864
    %v929 = vpack.c.b16 %v865, %v865
    %v930 = vpack.c.b16 %v866, %v866
    %v931 = vpack.c.b16 %v867, %v867
    %v932 = vpack.c.b16 %v868, %v868
    %v933 = vpack.c.b16 %v869, %v869
    %v934 = vpack.c.b16 %v870, %v870
    %v935 = vpack.c.b16 %v871, %v871
    %v936 = vpack.c.b16 %v872, %v872
    %v937 = vpack.c.b16 %v873, %v873
    %v938 = vpack.c.b16 %v874, %v874
    %v939 = vpack.c.b16 %v875, %v875
    %v940 = vpack.c.b16 %v876, %v876
    %v941 = vpack.c.b16 %v877, %v877
    %v942 = vpack.c.b16 %v878, %v878
    %v943 = vpack.c.b16 %v879, %v879
    %v944 = vpack.c.b16 %v880, %v880
    %v945 = vpack.c.b16 %v881, %v881
    %v946 = vpack.c.b16 %v882, %v882
    %v947 = vpack.c.b16 %v883, %v883
    %v948 = vpack.c.b16 %v884, %v884
    %v949 = vpack.c.b16 %v885, %v885
    %v950 = vpack.c.b16 %v886, %v886
    %v951 = vpack.c.b16 %v887, %v887
    %v952 = vpack.c.b16 %v888, %v888
    %v953 = vpack.c.b16 %v889, %v889
    %v954 = vpack.c.b16 %v890, %v890
    %v955 = vpack.c.b16 %v891, %v891
    %v956 = vpack.c.b16 %v892, %v892
    %v957 = vpack.c.b16 %v893, %v893
    %v958 = vpack.c.b16 %v894, %v894
    %v959 = vpack.c.b16 %v895, %v895
    %v960 = vpack.c.b16 %v896, %v896
    %v961 = vpack.c.b16 %v897, %v897
    %v962 = vpack.c.b16 %v898, %v898
    %v963 = vpack.c.b16 %v899, %v899
    %v964 = vpack.c.b16 %v900, %v900
    %v965 = vpack.c.b16 %v901, %v901
    %v966 = vpack.c.b16 %v902, %v902
    %v967 = vpack.c.b16 %v903, %v903
    %v968 = vpack.c.b16 %v904, %v904
    %v969 = vpack.c.b16 %v905, %v905
    %v970 = vpack.c.b16 %v906, %v906
    %v971 = vpack.c.b16 %v907, %v907
    %v972 = vpack.c.b16 %v908, %v908
    %v973 = vpack.c.b16 %v909, %v909
    %v974 = vpack.c.b16 %v910, %v910
    %v975 = vpack.c.b16 %v911, %v911
    %v976 = vpack.c.b16 %v912, %v912
    %v977 = vpack.c.b16 %v913, %v913
    %v978 = vpack.c.b16 %v914, %v914
    %v979 = vpack.c.b16 %v915, %v915
    %v980 = vpack.c.b16 %v916, %v916
    %v981 = vpack.c.b16 %v917, %v917
    %v982 = vpack.c.b16 %v918, %v918
    %v983 = vpack.c.b16 %v919, %v919
    %1048 = vst [vmem:[#allocation10] sm:$0xf] %v920
    %1049 = vst [vmem:[#allocation10 + $0x4] sm:$0xf] %v921
    %1050 = vst [vmem:[#allocation10 + $0x8] sm:$0xf] %v922
    %1051 = vst [vmem:[#allocation10 + $0xc] sm:$0xf] %v923
    %1052 = vst [vmem:[#allocation10 + $0x10] sm:$0xf] %v924
    %1053 = vst [vmem:[#allocation10 + $0x14] sm:$0xf] %v925
    %1054 = vst [vmem:[#allocation10 + $0x18] sm:$0xf] %v926
    %1055 = vst [vmem:[#allocation10 + $0x1c] sm:$0xf] %v927
    %1056 = vst [vmem:[#allocation10 + $0x20] sm:$0xf] %v928
    %1057 = vst [vmem:[#allocation10 + $0x24] sm:$0xf] %v929
    %1058 = vst [vmem:[#allocation10 + $0x28] sm:$0xf] %v930
    %1059 = vst [vmem:[#allocation10 + $0x2c] sm:$0xf] %v931
    %1060 = vst [vmem:[#allocation10 + $0x30] sm:$0xf] %v932
    %1061 = vst [vmem:[#allocation10 + $0x34] sm:$0xf] %v933
    %1062 = vst [vmem:[#allocation10 + $0x38] sm:$0xf] %v934
    %1063 = vst [vmem:[#allocation10 + $0x3c] sm:$0xf] %v935
    %1064 = vst [vmem:[#allocation10 + $0x40] sm:$0xf] %v936
    %1065 = vst [vmem:[#allocation10 + $0x44] sm:$0xf] %v937
    %1066 = vst [vmem:[#allocation10 + $0x48] sm:$0xf] %v938
    %1067 = vst [vmem:[#allocation10 + $0x4c] sm:$0xf] %v939
    %1068 = vst [vmem:[#allocation10 + $0x50] sm:$0xf] %v940
    %1069 = vst [vmem:[#allocation10 + $0x54] sm:$0xf] %v941
    %1070 = vst [vmem:[#allocation10 + $0x58] sm:$0xf] %v942
    %1071 = vst [vmem:[#allocation10 + $0x5c] sm:$0xf] %v943
    %1072 = vst [vmem:[#allocation10 + $0x60] sm:$0xf] %v944
    %1073 = vst [vmem:[#allocation10 + $0x64] sm:$0xf] %v945
    %1074 = vst [vmem:[#allocation10 + $0x68] sm:$0xf] %v946
    %1075 = vst [vmem:[#allocation10 + $0x6c] sm:$0xf] %v947
    %1076 = vst [vmem:[#allocation10 + $0x70] sm:$0xf] %v948
    %1077 = vst [vmem:[#allocation10 + $0x74] sm:$0xf] %v949
    %1078 = vst [vmem:[#allocation10 + $0x78] sm:$0xf] %v950
    %1079 = vst [vmem:[#allocation10 + $0x7c] sm:$0xf] %v951
    %1080 = vst [vmem:[#allocation10 + $0x80] sm:$0xf] %v952
    %1081 = vst [vmem:[#allocation10 + $0x84] sm:$0xf] %v953
    %1082 = vst [vmem:[#allocation10 + $0x88] sm:$0xf] %v954
    %1083 = vst [vmem:[#allocation10 + $0x8c] sm:$0xf] %v955
    %1084 = vst [vmem:[#allocation10 + $0x90] sm:$0xf] %v956
    %1085 = vst [vmem:[#allocation10 + $0x94] sm:$0xf] %v957
    %1086 = vst [vmem:[#allocation10 + $0x98] sm:$0xf] %v958
    %1087 = vst [vmem:[#allocation10 + $0x9c] sm:$0xf] %v959
    %1088 = vst [vmem:[#allocation10 + $0xa0] sm:$0xf] %v960
    %1089 = vst [vmem:[#allocation10 + $0xa4] sm:$0xf] %v961
    %1090 = vst [vmem:[#allocation10 + $0xa8] sm:$0xf] %v962
    %1091 = vst [vmem:[#allocation10 + $0xac] sm:$0xf] %v963
    %1092 = vst [vmem:[#allocation10 + $0xb0] sm:$0xf] %v964
    %1093 = vst [vmem:[#allocation10 + $0xb4] sm:$0xf] %v965
    %1094 = vst [vmem:[#allocation10 + $0xb8] sm:$0xf] %v966
    %1095 = vst [vmem:[#allocation10 + $0xbc] sm:$0xf] %v967
    %1096 = vst [vmem:[#allocation10 + $0xc0] sm:$0xf] %v968
    %1097 = vst [vmem:[#allocation10 + $0xc4] sm:$0xf] %v969
    %1098 = vst [vmem:[#allocation10 + $0xc8] sm:$0xf] %v970
    %1099 = vst [vmem:[#allocation10 + $0xcc] sm:$0xf] %v971
    %1100 = vst [vmem:[#allocation10 + $0xd0] sm:$0xf] %v972
    %1101 = vst [vmem:[#allocation10 + $0xd4] sm:$0xf] %v973
    %1102 = vst [vmem:[#allocation10 + $0xd8] sm:$0xf] %v974
    %1103 = vst [vmem:[#allocation10 + $0xdc] sm:$0xf] %v975
    %1104 = vst [vmem:[#allocation10 + $0xe0] sm:$0xf] %v976
    %1105 = vst [vmem:[#allocation10 + $0xe4] sm:$0xf] %v977
    %1106 = vst [vmem:[#allocation10 + $0xe8] sm:$0xf] %v978
    %1107 = vst [vmem:[#allocation10 + $0xec] sm:$0xf] %v979
    %1108 = vst [vmem:[#allocation10 + $0xf0] sm:$0xf] %v980
    %1109 = vst [vmem:[#allocation10 + $0xf4] sm:$0xf] %v981
    %1110 = vst [vmem:[#allocation10 + $0xf8] sm:$0xf] %v982
    %1111 = vst [vmem:[#allocation10 + $0xfc] sm:$0xf] %v983
    %v1112 = vadd.f32 %v538, %v541
    %v1113 = vadd.f32 %v1112, %v546
    %v1114 = vadd.f32 %v1113, %v549
    %v1115 = vadd.f32 %v1114, %v554
    %v1116 = vadd.f32 %v1115, %v557
    %v1117 = vadd.f32 %v1116, %v562
    %v1118 = vadd.f32 %v1117, %v565
    %v1119 = vadd.f32 %v1118, %v570
    %v1120 = vadd.f32 %v1119, %v573
    %v1121 = vadd.f32 %v1120, %v578
    %v1122 = vadd.f32 %v1121, %v581
    %v1123 = vadd.f32 %v1122, %v586
    %v1124 = vadd.f32 %v1123, %v589
    %v1125 = vadd.f32 %v1124, %v594
    %v1126 = vadd.f32 %v1125, %v597
    %v1127 = vadd.f32 %v1126, %v602
    %v1128 = vadd.f32 %v1127, %v605
    %v1129 = vadd.f32 %v1128, %v610
    %v1130 = vadd.f32 %v1129, %v613
    %v1131 = vadd.f32 %v1130, %v618
    %v1132 = vadd.f32 %v1131, %v621
    %v1133 = vadd.f32 %v1132, %v626
    %v1134 = vadd.f32 %v1133, %v629
    %v1135 = vadd.f32 %v1134, %v634
    %v1136 = vadd.f32 %v1135, %v637
    %v1137 = vadd.f32 %v1136, %v642
    %v1138 = vadd.f32 %v1137, %v645
    %v1139 = vadd.f32 %v1138, %v650
    %v1140 = vadd.f32 %v1139, %v653
    %v1141 = vadd.f32 %v1140, %v658
    %v1142 = vadd.f32 %v1141, %v661
    %v1143 = vadd.f32 %v1142, %v666
    %v1144 = vadd.f32 %v1143, %v669
    %v1145 = vadd.f32 %v1144, %v674
    %v1146 = vadd.f32 %v1145, %v677
    %v1147 = vadd.f32 %v1146, %v682
    %v1148 = vadd.f32 %v1147, %v685
    %v1149 = vadd.f32 %v1148, %v690
    %v1150 = vadd.f32 %v1149, %v693
    %v1151 = vadd.f32 %v1150, %v698
    %v1152 = vadd.f32 %v1151, %v701
    %v1153 = vadd.f32 %v1152, %v706
    %v1154 = vadd.f32 %v1153, %v709
    %v1155 = vadd.f32 %v1154, %v714
    %v1156 = vadd.f32 %v1155, %v717
    %v1157 = vadd.f32 %v1156, %v722
    %v1158 = vadd.f32 %v1157, %v725
    %v1159 = vadd.f32 %v1158, %v730
    %v1160 = vadd.f32 %v1159, %v733
    %v1161 = vadd.f32 %v1160, %v738
    %v1162 = vadd.f32 %v1161, %v741
    %v1163 = vadd.f32 %v1162, %v746
    %v1164 = vadd.f32 %v1163, %v749
    %v1165 = vadd.f32 %v1164, %v754
    %v1166 = vadd.f32 %v1165, %v757
    %v1167 = vadd.f32 %v1166, %v762
    %v1168 = vadd.f32 %v1167, %v765
    %v1169 = vadd.f32 %v1168, %v770
    %v1170 = vadd.f32 %v1169, %v773
    %v1171 = vadd.f32 %v1170, %v778
    %v1172 = vadd.f32 %v1171, %v781
    %v1173 = vadd.f32 %v1172, %v786
    %v1174 = vadd.f32 %v1173, %v789
    %v1175 = vrot.slane %v1174, 4
    %v1176 = vadd.f32 %v1174, %v1175
    %v1177 = vrot.slane %v1176, 2
    %v1178 = vadd.f32 %v1176, %v1177
    %v1179 = vrot.slane %v1178, 1
    %v1180 = vadd.f32 %v1178, %v1179
    %v1181 = vmul.f32 %v538, %v538
    %v1182 = vmul.f32 %v541, %v541
    %v1183 = vmul.f32 %v546, %v546
    %v1184 = vmul.f32 %v549, %v549
    %v1185 = vmul.f32 %v554, %v554
    %v1186 = vmul.f32 %v557, %v557
    %v1187 = vmul.f32 %v562, %v562
    %v1188 = vmul.f32 %v565, %v565
    %v1189 = vmul.f32 %v570, %v570
    %v1190 = vmul.f32 %v573, %v573
    %v1191 = vmul.f32 %v578, %v578
    %v1192 = vmul.f32 %v581, %v581
    %v1193 = vmul.f32 %v586, %v586
    %v1194 = vmul.f32 %v589, %v589
    %v1195 = vmul.f32 %v594, %v594
    %v1196 = vmul.f32 %v597, %v597
    %v1197 = vmul.f32 %v602, %v602
    %v1198 = vmul.f32 %v605, %v605
    %v1199 = vmul.f32 %v610, %v610
    %v1200 = vmul.f32 %v613, %v613
    %v1201 = vmul.f32 %v618, %v618
    %v1202 = vmul.f32 %v621, %v621
    %v1203 = vmul.f32 %v626, %v626
    %v1204 = vmul.f32 %v629, %v629
    %v1205 = vmul.f32 %v634, %v634
    %v1206 = vmul.f32 %v637, %v637
    %v1207 = vmul.f32 %v642, %v642
    %v1208 = vmul.f32 %v645, %v645
    %v1209 = vmul.f32 %v650, %v650
    %v1210 = vmul.f32 %v653, %v653
    %v1211 = vmul.f32 %v658, %v658
    %v1212 = vmul.f32 %v661, %v661
    %v1213 = vmul.f32 %v666, %v666
    %v1214 = vmul.f32 %v669, %v669
    %v1215 = vmul.f32 %v674, %v674
    %v1216 = vmul.f32 %v677, %v677
    %v1217 = vmul.f32 %v682, %v682
    %v1218 = vmul.f32 %v685, %v685
    %v1219 = vmul.f32 %v690, %v690
    %v1220 = vmul.f32 %v693, %v693
    %v1221 = vmul.f32 %v698, %v698
    %v1222 = vmul.f32 %v701, %v701
    %v1223 = vmul.f32 %v706, %v706
    %v1224 = vmul.f32 %v709, %v709
    %v1225 = vmul.f32 %v714, %v714
    %v1226 = vmul.f32 %v717, %v717
    %v1227 = vmul.f32 %v722, %v722
    %v1228 = vmul.f32 %v725, %v725
    %v1229 = vmul.f32 %v730, %v730
    %v1230 = vmul.f32 %v733, %v733
    %v1231 = vmul.f32 %v738, %v738
    %v1232 = vmul.f32 %v741, %v741
    %v1233 = vmul.f32 %v746, %v746
    %v1234 = vmul.f32 %v749, %v749
    %v1235 = vmul.f32 %v754, %v754
    %v1236 = vmul.f32 %v757, %v757
    %v1237 = vmul.f32 %v762, %v762
    %v1238 = vmul.f32 %v765, %v765
    %v1239 = vmul.f32 %v770, %v770
    %v1240 = vmul.f32 %v773, %v773
    %v1241 = vmul.f32 %v778, %v778
    %v1242 = vmul.f32 %v781, %v781
    %v1243 = vmul.f32 %v786, %v786
    %v1244 = vmul.f32 %v789, %v789
    %v1245 = vadd.f32 %v1181, %v1182
    %v1246 = vadd.f32 %v1245, %v1183
    %v1247 = vadd.f32 %v1246, %v1184
    %v1248 = vadd.f32 %v1247, %v1185
    %v1249 = vadd.f32 %v1248, %v1186
    %v1250 = vadd.f32 %v1249, %v1187
    %v1251 = vadd.f32 %v1250, %v1188
    %v1252 = vadd.f32 %v1251, %v1189
    %v1253 = vadd.f32 %v1252, %v1190
    %v1254 = vadd.f32 %v1253, %v1191
    %v1255 = vadd.f32 %v1254, %v1192
    %v1256 = vadd.f32 %v1255, %v1193
    %v1257 = vadd.f32 %v1256, %v1194
    %v1258 = vadd.f32 %v1257, %v1195
    %v1259 = vadd.f32 %v1258, %v1196
    %v1260 = vadd.f32 %v1259, %v1197
    %v1261 = vadd.f32 %v1260, %v1198
    %v1262 = vadd.f32 %v1261, %v1199
    %v1263 = vadd.f32 %v1262, %v1200
    %v1264 = vadd.f32 %v1263, %v1201
    %v1265 = vadd.f32 %v1264, %v1202
    %v1266 = vadd.f32 %v1265, %v1203
    %v1267 = vadd.f32 %v1266, %v1204
    %v1268 = vadd.f32 %v1267, %v1205
    %v1269 = vadd.f32 %v1268, %v1206
    %v1270 = vadd.f32 %v1269, %v1207
    %v1271 = vadd.f32 %v1270, %v1208
    %v1272 = vadd.f32 %v1271, %v1209
    %v1273 = vadd.f32 %v1272, %v1210
    %v1274 = vadd.f32 %v1273, %v1211
    %v1275 = vadd.f32 %v1274, %v1212
    %v1276 = vadd.f32 %v1275, %v1213
    %v1277 = vadd.f32 %v1276, %v1214
    %v1278 = vadd.f32 %v1277, %v1215
    %v1279 = vadd.f32 %v1278, %v1216
    %v1280 = vadd.f32 %v1279, %v1217
    %v1281 = vadd.f32 %v1280, %v1218
    %v1282 = vadd.f32 %v1281, %v1219
    %v1283 = vadd.f32 %v1282, %v1220
    %v1284 = vadd.f32 %v1283, %v1221
    %v1285 = vadd.f32 %v1284, %v1222
    %v1286 = vadd.f32 %v1285, %v1223
    %v1287 = vadd.f32 %v1286, %v1224
    %v1288 = vadd.f32 %v1287, %v1225
    %v1289 = vadd.f32 %v1288, %v1226
    %v1290 = vadd.f32 %v1289, %v1227
    %v1291 = vadd.f32 %v1290, %v1228
    %v1292 = vadd.f32 %v1291, %v1229
    %v1293 = vadd.f32 %v1292, %v1230
    %v1294 = vadd.f32 %v1293, %v1231
    %v1295 = vadd.f32 %v1294, %v1232
    %v1296 = vadd.f32 %v1295, %v1233
    %v1297 = vadd.f32 %v1296, %v1234
    %v1298 = vadd.f32 %v1297, %v1235
    %v1299 = vadd.f32 %v1298, %v1236
    %v1300 = vadd.f32 %v1299, %v1237
    %v1301 = vadd.f32 %v1300, %v1238
    %v1302 = vadd.f32 %v1301, %v1239
    %v1303 = vadd.f32 %v1302, %v1240
    %v1304 = vadd.f32 %v1303, %v1241
    %v1305 = vadd.f32 %v1304, %v1242
    %v1306 = vadd.f32 %v1305, %v1243
    %v1307 = vadd.f32 %v1306, %v1244
    %v1308 = vrot.slane %v1307, 4
    %v1309 = vadd.f32 %v1307, %v1308
    %v1310 = vrot.slane %v1309, 2
    %v1311 = vadd.f32 %v1309, %v1310
    %v1312 = vrot.slane %v1311, 1
    %v1313 = vadd.f32 %v1311, %v1312
    %vm1314 = vcmask 1040384
    %v1315 = vsel %vm1314, %v1180, %v1313
    %1316 = vst [vmem:[#allocation11] sm:$0x3] %v1315
    // Predicated region
    $region34: #{bottleneck_block.6} parent=1 // pred_check
      _
    $region35: #{bottleneck_block.6} parent=1 // pred_check_branch
      %1318 = sbr.rel (0) target = $region37
    $region36: #{bottleneck_block.6} parent=1 // pred_region
      %s1320 = ssub.s32 4096, 4096
      %1321 = vsyncadd [#allocation4], %s1320
      %s1322 = sshll.u32 [#allocation10], 4
      %s1323 = int_to_ptr.vmem [resolvable:$true] %s1322
      %1328 = dma.vmem_to_hbm [thread:$0]  %s1323, 4096, %s4, [#allocation4], 64, 64, 4
    $region37: #{bottleneck_block.6} parent=1 // pred_fallthru
      _
    // Predicated region
    $region38: #{bottleneck_block.6} parent=1 // pred_check
      _
    $region39: #{bottleneck_block.6} parent=1 // pred_check_branch
      %1330 = sbr.rel (0) target = $region41
    $region40: #{bottleneck_block.6} parent=1 // pred_region
      %s1332 = ssub.s32 32, 32
      %1333 = vsyncadd [#allocation12], %s1332
      %s1335 = sshll.u32 [#allocation11], 4
      %s1336 = int_to_ptr.vmem [resolvable:$true] %s1335
      %1338 = dma.vmem_to_hbm [thread:$0]  %s1336, 32, %s5, [#allocation12]
    $region41: #{bottleneck_block.6} parent=1 // pred_fallthru
      _
    // Predicated region
    $region42: #{bottleneck_block.6} parent=1 // pred_check
      _
    $region43: #{bottleneck_block.6} parent=1 // pred_check_branch
      %1340 = sbr.rel (0) target = $region45
    $region44: #{bottleneck_block.6} parent=1 // pred_region
      %1341 = dma.done [#allocation4], 4096
    $region45: #{bottleneck_block.6} parent=1 // pred_fallthru
      _
    // Predicated region
    $region46: #{bottleneck_block.6} parent=1 // pred_check
      _
    $region47: #{bottleneck_block.6} parent=1 // pred_check_branch
      %1343 = sbr.rel (0) target = $region49
    $region48: #{bottleneck_block.6} parent=1 // pred_region
      %1344 = dma.done [#allocation12], 32
    $region49: #{bottleneck_block.6} parent=1 // pred_fallthru
      _
    %1345 = vsyncpa [#allocation3], 1
    %1346 = vsyncpa [#allocation6], 1
    %1347 = vsyncpa [#allocation9], 1
    %1348 = vsyncpa [#allocation4], 1
    %1349 = vsyncpa [#allocation12], 1

// kernel: bottleneck_block.4
$region0: #{bottleneck_block.4}
  #allocation0 [shape = 'u32[]', space=smem, size = 0x4, offset = 0x4, fixed_abs, tag = 'smem constant byte address 0x4 - core index']
  #allocation1 [shape = 'u32[144,128]{1,0:T(1,128)}', space=vmem, size = 0x12000, scoped, tag = 'internal scratch']
  %s0 = inlined_call_operand.hbm [shape: bf16[512,128], index: 0, kind: input, shape index: {}]
  %s1 = inlined_call_operand.hbm [shape: bf16[128,128], index: 1, kind: input, shape index: {}]
  %s2 = inlined_call_operand.hbm [shape: bf16[512,128], index: 2, kind: output, shape index: {0}]
  %s3 = inlined_call_operand.hbm [shape: f32[1,2,128], index: 3, kind: output, shape index: {1}]
  %4 = xla_tuple %s2, %s3
  %s5 = sld [smem:[#allocation0]]
  $region34: #{bottleneck_block.4} parent=0
    _
  %s7 = ssub.s32 1, %s5
  %s8 = scalar_select 0, %s7, %s5
  $region1: #{bottleneck_block.4} parent=0
    #allocation2 [shape = 'u8[131072]{0}', space=vmem, size = 0x20000, scoped, tag = 'input window, operand 0, single buffered']
    #allocation3 [shape = 's32[1]{0}', space=sflag, size = 0x4, scoped, tag = 'scoped memory for bottleneck_block.4']
    #allocation4 [shape = 's32[1]{0}', space=sflag, size = 0x4, scoped, tag = 'scoped memory for bottleneck_block.4']
    #allocation5 [shape = 'u8[32768]{0}', space=vmem, size = 0x8000, scoped, tag = 'input window, operand 1, single buffered']
    #allocation6 [shape = 's32[1]{0}', space=sflag, size = 0x4, scoped, tag = 'scoped memory for bottleneck_block.4']
    #allocation7 [shape = 'u8[131072]{0}', space=vmem, size = 0x20000, scoped, tag = 'output window, operand 0, single buffered']
    #allocation8 [shape = 'u8[1024]{0}', space=vmem, size = 0x400, scoped, tag = 'output window, operand 1, single buffered']
    #allocation9 [shape = 's32[1]{0}', space=sflag, size = 0x4, scoped, tag = 'scoped memory for bottleneck_block.4']
    %9 = vsyncpa [#allocation3], 0
    %10 = vsyncpa [#allocation6], 0
    %11 = vsyncpa [#allocation4], 0
    %12 = vsyncpa [#allocation9], 0
    // Predicated region
    $region2: #{bottleneck_block.4} parent=1 // pred_check
      _
    $region3: #{bottleneck_block.4} parent=1 // pred_check_branch
      %14 = sbr.rel (0) target = $region5
    $region4: #{bottleneck_block.4} parent=1 // pred_region
      %s16 = ssub.s32 4096, 4096
      %17 = vsyncadd [#allocation3], %s16
      %s18 = sshll.u32 [#allocation2], 4
      %s19 = int_to_ptr.vmem [resolvable:$true] %s18
      %24 = dma.hbm_to_vmem [thread:$0]  %s0, 4096, %s19, [#allocation3], 64, 64, 4
    $region5: #{bottleneck_block.4} parent=1 // pred_fallthru
      _
    // Predicated region
    $region6: #{bottleneck_block.4} parent=1 // pred_check
      _
    $region7: #{bottleneck_block.4} parent=1 // pred_check_branch
      %26 = sbr.rel (0) target = $region9
    $region8: #{bottleneck_block.4} parent=1 // pred_region
      %s28 = ssub.s32 1024, 1024
      %29 = vsyncadd [#allocation6], %s28
      %s30 = sshll.u32 [#allocation5], 4
      %s31 = int_to_ptr.vmem [resolvable:$true] %s30
      %36 = dma.hbm_to_vmem [thread:$0]  %s1, 1024, %s31, [#allocation6], 64, 64, 4
    $region9: #{bottleneck_block.4} parent=1 // pred_fallthru
      _
    // Predicated region
    $region10: #{bottleneck_block.4} parent=1 // pred_check
      _
    $region11: #{bottleneck_block.4} parent=1 // pred_check_branch
      %38 = sbr.rel (0) target = $region13
    $region12: #{bottleneck_block.4} parent=1 // pred_region
      %39 = dma.done [#allocation3], 4096
    $region13: #{bottleneck_block.4} parent=1 // pred_fallthru
      _
    // Predicated region
    $region14: #{bottleneck_block.4} parent=1 // pred_check
      _
    $region15: #{bottleneck_block.4} parent=1 // pred_check_branch
      %41 = sbr.rel (0) target = $region17
    $region16: #{bottleneck_block.4} parent=1 // pred_region
      %42 = dma.done [#allocation6], 1024
    $region17: #{bottleneck_block.4} parent=1 // pred_fallthru
      _
    %v44 = vld [vmem:[#allocation2] sm:$0xf]
    %v45 = vld [vmem:[#allocation2 + $0x4] sm:$0xf]
    %v46 = vld [vmem:[#allocation2 + $0x8] sm:$0xf]
    %v47 = vld [vmem:[#allocation2 + $0xc] sm:$0xf]
    %v48 = vld [vmem:[#allocation2 + $0x10] sm:$0xf]
    %v49 = vld [vmem:[#allocation2 + $0x14] sm:$0xf]
    %v50 = vld [vmem:[#allocation2 + $0x18] sm:$0xf]
    %v51 = vld [vmem:[#allocation2 + $0x1c] sm:$0xf]
    %v52 = vld [vmem:[#allocation2 + $0x20] sm:$0xf]
    %v53 = vld [vmem:[#allocation2 + $0x24] sm:$0xf]
    %v54 = vld [vmem:[#allocation2 + $0x28] sm:$0xf]
    %v55 = vld [vmem:[#allocation2 + $0x2c] sm:$0xf]
    %v56 = vld [vmem:[#allocation2 + $0x30] sm:$0xf]
    %v57 = vld [vmem:[#allocation2 + $0x34] sm:$0xf]
    %v58 = vld [vmem:[#allocation2 + $0x38] sm:$0xf]
    %v59 = vld [vmem:[#allocation2 + $0x3c] sm:$0xf]
    %v60 = vld [vmem:[#allocation2 + $0x40] sm:$0xf]
    %v61 = vld [vmem:[#allocation2 + $0x44] sm:$0xf]
    %v62 = vld [vmem:[#allocation2 + $0x48] sm:$0xf]
    %v63 = vld [vmem:[#allocation2 + $0x4c] sm:$0xf]
    %v64 = vld [vmem:[#allocation2 + $0x50] sm:$0xf]
    %v65 = vld [vmem:[#allocation2 + $0x54] sm:$0xf]
    %v66 = vld [vmem:[#allocation2 + $0x58] sm:$0xf]
    %v67 = vld [vmem:[#allocation2 + $0x5c] sm:$0xf]
    %v68 = vld [vmem:[#allocation2 + $0x60] sm:$0xf]
    %v69 = vld [vmem:[#allocation2 + $0x64] sm:$0xf]
    %v70 = vld [vmem:[#allocation2 + $0x68] sm:$0xf]
    %v71 = vld [vmem:[#allocation2 + $0x6c] sm:$0xf]
    %v72 = vld [vmem:[#allocation2 + $0x70] sm:$0xf]
    %v73 = vld [vmem:[#allocation2 + $0x74] sm:$0xf]
    %v74 = vld [vmem:[#allocation2 + $0x78] sm:$0xf]
    %v75 = vld [vmem:[#allocation2 + $0x7c] sm:$0xf]
    %v76 = vld [vmem:[#allocation2 + $0x80] sm:$0xf]
    %v77 = vld [vmem:[#allocation2 + $0x84] sm:$0xf]
    %v78 = vld [vmem:[#allocation2 + $0x88] sm:$0xf]
    %v79 = vld [vmem:[#allocation2 + $0x8c] sm:$0xf]
    %v80 = vld [vmem:[#allocation2 + $0x90] sm:$0xf]
    %v81 = vld [vmem:[#allocation2 + $0x94] sm:$0xf]
    %v82 = vld [vmem:[#allocation2 + $0x98] sm:$0xf]
    %v83 = vld [vmem:[#allocation2 + $0x9c] sm:$0xf]
    %v84 = vld [vmem:[#allocation2 + $0xa0] sm:$0xf]
    %v85 = vld [vmem:[#allocation2 + $0xa4] sm:$0xf]
    %v86 = vld [vmem:[#allocation2 + $0xa8] sm:$0xf]
    %v87 = vld [vmem:[#allocation2 + $0xac] sm:$0xf]
    %v88 = vld [vmem:[#allocation2 + $0xb0] sm:$0xf]
    %v89 = vld [vmem:[#allocation2 + $0xb4] sm:$0xf]
    %v90 = vld [vmem:[#allocation2 + $0xb8] sm:$0xf]
    %v91 = vld [vmem:[#allocation2 + $0xbc] sm:$0xf]
    %v92 = vld [vmem:[#allocation2 + $0xc0] sm:$0xf]
    %v93 = vld [vmem:[#allocation2 + $0xc4] sm:$0xf]
    %v94 = vld [vmem:[#allocation2 + $0xc8] sm:$0xf]
    %v95 = vld [vmem:[#allocation2 + $0xcc] sm:$0xf]
    %v96 = vld [vmem:[#allocation2 + $0xd0] sm:$0xf]
    %v97 = vld [vmem:[#allocation2 + $0xd4] sm:$0xf]
    %v98 = vld [vmem:[#allocation2 + $0xd8] sm:$0xf]
    %v99 = vld [vmem:[#allocation2 + $0xdc] sm:$0xf]
    %v100 = vld [vmem:[#allocation2 + $0xe0] sm:$0xf]
    %v101 = vld [vmem:[#allocation2 + $0xe4] sm:$0xf]
    %v102 = vld [vmem:[#allocation2 + $0xe8] sm:$0xf]
    %v103 = vld [vmem:[#allocation2 + $0xec] sm:$0xf]
    %v104 = vld [vmem:[#allocation2 + $0xf0] sm:$0xf]
    %v105 = vld [vmem:[#allocation2 + $0xf4] sm:$0xf]
    %v106 = vld [vmem:[#allocation2 + $0xf8] sm:$0xf]
    %v107 = vld [vmem:[#allocation2 + $0xfc] sm:$0xf]
    %v108 = vld [vmem:[#allocation5] sm:$0xf]
    %v109 = vld [vmem:[#allocation5 + $0x4] sm:$0xf]
    %v110 = vld [vmem:[#allocation5 + $0x8] sm:$0xf]
    %v111 = vld [vmem:[#allocation5 + $0xc] sm:$0xf]
    %v112 = vld [vmem:[#allocation5 + $0x10] sm:$0xf]
    %v113 = vld [vmem:[#allocation5 + $0x14] sm:$0xf]
    %v114 = vld [vmem:[#allocation5 + $0x18] sm:$0xf]
    %v115 = vld [vmem:[#allocation5 + $0x1c] sm:$0xf]
    %v116 = vld [vmem:[#allocation5 + $0x20] sm:$0xf]
    %v117 = vld [vmem:[#allocation5 + $0x24] sm:$0xf]
    %v118 = vld [vmem:[#allocation5 + $0x28] sm:$0xf]
    %v119 = vld [vmem:[#allocation5 + $0x2c] sm:$0xf]
    %v120 = vld [vmem:[#allocation5 + $0x30] sm:$0xf]
    %v121 = vld [vmem:[#allocation5 + $0x34] sm:$0xf]
    %v122 = vld [vmem:[#allocation5 + $0x38] sm:$0xf]
    %v123 = vld [vmem:[#allocation5 + $0x3c] sm:$0xf]
    %v188 = vunpack.c.l.b16 %v44
    %v189 = vunpack.c.l.b16 %v45
    %v190 = vunpack.c.l.b16 %v46
    %v191 = vunpack.c.l.b16 %v47
    %v192 = vunpack.c.l.b16 %v48
    %v193 = vunpack.c.l.b16 %v49
    %v194 = vunpack.c.l.b16 %v50
    %v195 = vunpack.c.l.b16 %v51
    %v196 = vunpack.c.l.b16 %v52
    %v197 = vunpack.c.l.b16 %v53
    %v198 = vunpack.c.l.b16 %v54
    %v199 = vunpack.c.l.b16 %v55
    %v200 = vunpack.c.l.b16 %v56
    %v201 = vunpack.c.l.b16 %v57
    %v202 = vunpack.c.l.b16 %v58
    %v203 = vunpack.c.l.b16 %v59
    %v204 = vunpack.c.l.b16 %v60
    %v205 = vunpack.c.l.b16 %v61
    %v206 = vunpack.c.l.b16 %v62
    %v207 = vunpack.c.l.b16 %v63
    %v208 = vunpack.c.l.b16 %v64
    %v209 = vunpack.c.l.b16 %v65
    %v210 = vunpack.c.l.b16 %v66
    %v211 = vunpack.c.l.b16 %v67
    %v212 = vunpack.c.l.b16 %v68
    %v213 = vunpack.c.l.b16 %v69
    %v214 = vunpack.c.l.b16 %v70
    %v215 = vunpack.c.l.b16 %v71
    %v216 = vunpack.c.l.b16 %v72
    %v217 = vunpack.c.l.b16 %v73
    %v218 = vunpack.c.l.b16 %v74
    %v219 = vunpack.c.l.b16 %v75
    %v220 = vunpack.c.l.b16 %v76
    %v221 = vunpack.c.l.b16 %v77
    %v222 = vunpack.c.l.b16 %v78
    %v223 = vunpack.c.l.b16 %v79
    %v224 = vunpack.c.l.b16 %v80
    %v225 = vunpack.c.l.b16 %v81
    %v226 = vunpack.c.l.b16 %v82
    %v227 = vunpack.c.l.b16 %v83
    %v228 = vunpack.c.l.b16 %v84
    %v229 = vunpack.c.l.b16 %v85
    %v230 = vunpack.c.l.b16 %v86
    %v231 = vunpack.c.l.b16 %v87
    %v232 = vunpack.c.l.b16 %v88
    %v233 = vunpack.c.l.b16 %v89
    %v234 = vunpack.c.l.b16 %v90
    %v235 = vunpack.c.l.b16 %v91
    %v236 = vunpack.c.l.b16 %v92
    %v237 = vunpack.c.l.b16 %v93
    %v238 = vunpack.c.l.b16 %v94
    %v239 = vunpack.c.l.b16 %v95
    %v240 = vunpack.c.l.b16 %v96
    %v241 = vunpack.c.l.b16 %v97
    %v242 = vunpack.c.l.b16 %v98
    %v243 = vunpack.c.l.b16 %v99
    %v244 = vunpack.c.l.b16 %v100
    %v245 = vunpack.c.l.b16 %v101
    %v246 = vunpack.c.l.b16 %v102
    %v247 = vunpack.c.l.b16 %v103
    %v248 = vunpack.c.l.b16 %v104
    %v249 = vunpack.c.l.b16 %v105
    %v250 = vunpack.c.l.b16 %v106
    %v251 = vunpack.c.l.b16 %v107
    %v252 = vpack.c.b16 %v189, %v188
    %v253 = vpack.c.b16 %v191, %v190
    %v254 = vpack.c.b16 %v193, %v192
    %v255 = vpack.c.b16 %v195, %v194
    %v256 = vpack.c.b16 %v197, %v196
    %v257 = vpack.c.b16 %v199, %v198
    %v258 = vpack.c.b16 %v201, %v200
    %v259 = vpack.c.b16 %v203, %v202
    %v260 = vpack.c.b16 %v205, %v204
    %v261 = vpack.c.b16 %v207, %v206
    %v262 = vpack.c.b16 %v209, %v208
    %v263 = vpack.c.b16 %v211, %v210
    %v264 = vpack.c.b16 %v213, %v212
    %v265 = vpack.c.b16 %v215, %v214
    %v266 = vpack.c.b16 %v217, %v216
    %v267 = vpack.c.b16 %v219, %v218
    %v268 = vpack.c.b16 %v221, %v220
    %v269 = vpack.c.b16 %v223, %v222
    %v270 = vpack.c.b16 %v225, %v224
    %v271 = vpack.c.b16 %v227, %v226
    %v272 = vpack.c.b16 %v229, %v228
    %v273 = vpack.c.b16 %v231, %v230
    %v274 = vpack.c.b16 %v233, %v232
    %v275 = vpack.c.b16 %v235, %v234
    %v276 = vpack.c.b16 %v237, %v236
    %v277 = vpack.c.b16 %v239, %v238
    %v278 = vpack.c.b16 %v241, %v240
    %v279 = vpack.c.b16 %v243, %v242
    %v280 = vpack.c.b16 %v245, %v244
    %v281 = vpack.c.b16 %v247, %v246
    %v282 = vpack.c.b16 %v249, %v248
    %v283 = vpack.c.b16 %v251, %v250
    %v332 = vunpack.c.l.b16 %v108
    %v333 = vunpack.c.l.b16 %v109
    %v334 = vunpack.c.l.b16 %v110
    %v335 = vunpack.c.l.b16 %v111
    %v336 = vunpack.c.l.b16 %v112
    %v337 = vunpack.c.l.b16 %v113
    %v338 = vunpack.c.l.b16 %v114
    %v339 = vunpack.c.l.b16 %v115
    %v340 = vunpack.c.l.b16 %v116
    %v341 = vunpack.c.l.b16 %v117
    %v342 = vunpack.c.l.b16 %v118
    %v343 = vunpack.c.l.b16 %v119
    %v344 = vunpack.c.l.b16 %v120
    %v345 = vunpack.c.l.b16 %v121
    %v346 = vunpack.c.l.b16 %v122
    %v347 = vunpack.c.l.b16 %v123
    %v348 = vpack.c.b16 %v333, %v332
    %v349 = vpack.c.b16 %v335, %v334
    %v350 = vpack.c.b16 %v337, %v336
    %v351 = vpack.c.b16 %v339, %v338
    %v352 = vpack.c.b16 %v341, %v340
    %v353 = vpack.c.b16 %v343, %v342
    %v354 = vpack.c.b16 %v345, %v344
    %v355 = vpack.c.b16 %v347, %v346
    %364 = vmatprep.subr.bf16.mxu0 0
    %365 = vmatpush1.bf16.msra.mxu0 %v348
    %366 = vmatprep.subr.bf16.mxu0 0
    %367 = vmatpush1.bf16.msra.mxu0 %v349
    %368 = vmatprep.subr.bf16.mxu0 0
    %369 = vmatpush1.bf16.msra.mxu0 %v350
    %370 = vmatprep.subr.bf16.mxu0 0
    %371 = vmatpush1.bf16.msra.mxu0 %v351
    %372 = vmatprep.subr.bf16.mxu0 0
    %373 = vmatpush1.bf16.msra.mxu0 %v352
    %374 = vmatprep.subr.bf16.mxu0 0
    %375 = vmatpush1.bf16.msra.mxu0 %v353
    %376 = vmatprep.subr.bf16.mxu0 0
    %377 = vmatpush1.bf16.msra.mxu0 %v354
    %378 = vmatprep.subr.bf16.mxu0 0
    %379 = vmatpush1.bf16.msra.mxu0 %v355
    %380 = vmatprep.subr.bf16.mxu0 0
    %381 = vmatpush1.bf16.msra.mxu0 0
    %382 = vmatprep.subr.bf16.mxu0 0
    %383 = vmatpush1.bf16.msra.mxu0 0
    %384 = vmatprep.subr.bf16.mxu0 0
    %385 = vmatpush1.bf16.msra.mxu0 0
    %386 = vmatprep.subr.bf16.mxu0 0
    %387 = vmatpush1.bf16.msra.mxu0 0
    %388 = vmatprep.subr.bf16.mxu0 0
    %389 = vmatpush1.bf16.msra.mxu0 0
    %390 = vmatprep.subr.bf16.mxu0 0
    %391 = vmatpush1.bf16.msra.mxu0 0
    %392 = vmatprep.subr.bf16.mxu0 0
    %393 = vmatpush1.bf16.msra.mxu0 0
    %394 = vmatprep.subr.bf16.mxu0 0
    %395 = vmatpush1.bf16.msra.mxu0 0
    %396 = vmatprep.mubr.bf16.mxu0 0
    %397 = vmatmul.mubr.bf16.gmra.mrb[0].mxu0 %v252
    %v398 = vpop.f32.mrb[0].mxu0
    %v399 = vadd.f32 0.0, %v398
    %v400 = vpop.f32.mrb[0].mxu0
    %v401 = vpop.f32.mrb[0].mxu0
    %v402 = vadd.f32 0.0, %v401
    %v403 = vpop.f32.mrb[0].mxu0
    %404 = vmatprep.mubr.bf16.mxu0 0
    %405 = vmatmul.mubr.bf16.gmra.mrb[0].mxu0 %v253
    %v406 = vpop.f32.mrb[0].mxu0
    %v407 = vadd.f32 0.0, %v406
    %v408 = vpop.f32.mrb[0].mxu0
    %v409 = vpop.f32.mrb[0].mxu0
    %v410 = vadd.f32 0.0, %v409
    %v411 = vpop.f32.mrb[0].mxu0
    %412 = vmatprep.mubr.bf16.mxu0 0
    %413 = vmatmul.mubr.bf16.gmra.mrb[0].mxu0 %v254
    %v414 = vpop.f32.mrb[0].mxu0
    %v415 = vadd.f32 0.0, %v414
    %v416 = vpop.f32.mrb[0].mxu0
    %v417 = vpop.f32.mrb[0].mxu0
    %v418 = vadd.f32 0.0, %v417
    %v419 = vpop.f32.mrb[0].mxu0
    %420 = vmatprep.mubr.bf16.mxu0 0
    %421 = vmatmul.mubr.bf16.gmra.mrb[0].mxu0 %v255
    %v422 = vpop.f32.mrb[0].mxu0
    %v423 = vadd.f32 0.0, %v422
    %v424 = vpop.f32.mrb[0].mxu0
    %v425 = vpop.f32.mrb[0].mxu0
    %v426 = vadd.f32 0.0, %v425
    %v427 = vpop.f32.mrb[0].mxu0
    %428 = vmatprep.mubr.bf16.mxu0 0
    %429 = vmatmul.mubr.bf16.gmra.mrb[0].mxu0 %v256
    %v430 = vpop.f32.mrb[0].mxu0
    %v431 = vadd.f32 0.0, %v430
    %v432 = vpop.f32.mrb[0].mxu0
    %v433 = vpop.f32.mrb[0].mxu0
    %v434 = vadd.f32 0.0, %v433
    %v435 = vpop.f32.mrb[0].mxu0
    %436 = vmatprep.mubr.bf16.mxu0 0
    %437 = vmatmul.mubr.bf16.gmra.mrb[0].mxu0 %v257
    %v438 = vpop.f32.mrb[0].mxu0
    %v439 = vadd.f32 0.0, %v438
    %v440 = vpop.f32.mrb[0].mxu0
    %v441 = vpop.f32.mrb[0].mxu0
    %v442 = vadd.f32 0.0, %v441
    %v443 = vpop.f32.mrb[0].mxu0
    %444 = vmatprep.mubr.bf16.mxu0 0
    %445 = vmatmul.mubr.bf16.gmra.mrb[0].mxu0 %v258
    %v446 = vpop.f32.mrb[0].mxu0
    %v447 = vadd.f32 0.0, %v446
    %v448 = vpop.f32.mrb[0].mxu0
    %v449 = vpop.f32.mrb[0].mxu0
    %v450 = vadd.f32 0.0, %v449
    %v451 = vpop.f32.mrb[0].mxu0
    %452 = vmatprep.mubr.bf16.mxu0 0
    %453 = vmatmul.mubr.bf16.gmra.mrb[0].mxu0 %v259
    %v454 = vpop.f32.mrb[0].mxu0
    %v455 = vadd.f32 0.0, %v454
    %v456 = vpop.f32.mrb[0].mxu0
    %v457 = vpop.f32.mrb[0].mxu0
    %v458 = vadd.f32 0.0, %v457
    %v459 = vpop.f32.mrb[0].mxu0
    %460 = vmatprep.mubr.bf16.mxu0 0
    %461 = vmatmul.mubr.bf16.gmra.mrb[0].mxu0 %v260
    %v462 = vpop.f32.mrb[0].mxu0
    %v463 = vadd.f32 0.0, %v462
    %v464 = vpop.f32.mrb[0].mxu0
    %v465 = vpop.f32.mrb[0].mxu0
    %v466 = vadd.f32 0.0, %v465
    %v467 = vpop.f32.mrb[0].mxu0
    %468 = vmatprep.mubr.bf16.mxu0 0
    %469 = vmatmul.mubr.bf16.gmra.mrb[0].mxu0 %v261
    %v470 = vpop.f32.mrb[0].mxu0
    %v471 = vadd.f32 0.0, %v470
    %v472 = vpop.f32.mrb[0].mxu0
    %v473 = vpop.f32.mrb[0].mxu0
    %v474 = vadd.f32 0.0, %v473
    %v475 = vpop.f32.mrb[0].mxu0
    %476 = vmatprep.mubr.bf16.mxu0 0
    %477 = vmatmul.mubr.bf16.gmra.mrb[0].mxu0 %v262
    %v478 = vpop.f32.mrb[0].mxu0
    %v479 = vadd.f32 0.0, %v478
    %v480 = vpop.f32.mrb[0].mxu0
    %v481 = vpop.f32.mrb[0].mxu0
    %v482 = vadd.f32 0.0, %v481
    %v483 = vpop.f32.mrb[0].mxu0
    %484 = vmatprep.mubr.bf16.mxu0 0
    %485 = vmatmul.mubr.bf16.gmra.mrb[0].mxu0 %v263
    %v486 = vpop.f32.mrb[0].mxu0
    %v487 = vadd.f32 0.0, %v486
    %v488 = vpop.f32.mrb[0].mxu0
    %v489 = vpop.f32.mrb[0].mxu0
    %v490 = vadd.f32 0.0, %v489
    %v491 = vpop.f32.mrb[0].mxu0
    %492 = vmatprep.mubr.bf16.mxu0 0
    %493 = vmatmul.mubr.bf16.gmra.mrb[0].mxu0 %v264
    %v494 = vpop.f32.mrb[0].mxu0
    %v495 = vadd.f32 0.0, %v494
    %v496 = vpop.f32.mrb[0].mxu0
    %v497 = vpop.f32.mrb[0].mxu0
    %v498 = vadd.f32 0.0, %v497
    %v499 = vpop.f32.mrb[0].mxu0
    %500 = vmatprep.mubr.bf16.mxu0 0
    %501 = vmatmul.mubr.bf16.gmra.mrb[0].mxu0 %v265
    %v502 = vpop.f32.mrb[0].mxu0
    %v503 = vadd.f32 0.0, %v502
    %v504 = vpop.f32.mrb[0].mxu0
    %v505 = vpop.f32.mrb[0].mxu0
    %v506 = vadd.f32 0.0, %v505
    %v507 = vpop.f32.mrb[0].mxu0
    %508 = vmatprep.mubr.bf16.mxu0 0
    %509 = vmatmul.mubr.bf16.gmra.mrb[0].mxu0 %v266
    %v510 = vpop.f32.mrb[0].mxu0
    %v511 = vadd.f32 0.0, %v510
    %v512 = vpop.f32.mrb[0].mxu0
    %v513 = vpop.f32.mrb[0].mxu0
    %v514 = vadd.f32 0.0, %v513
    %v515 = vpop.f32.mrb[0].mxu0
    %516 = vmatprep.mubr.bf16.mxu0 0
    %517 = vmatmul.mubr.bf16.gmra.mrb[0].mxu0 %v267
    %v518 = vpop.f32.mrb[0].mxu0
    %v519 = vadd.f32 0.0, %v518
    %v520 = vpop.f32.mrb[0].mxu0
    %v521 = vpop.f32.mrb[0].mxu0
    %v522 = vadd.f32 0.0, %v521
    %v523 = vpop.f32.mrb[0].mxu0
    %524 = vmatprep.mubr.bf16.mxu0 0
    %525 = vmatmul.mubr.bf16.gmra.mrb[0].mxu0 %v268
    %v526 = vpop.f32.mrb[0].mxu0
    %v527 = vadd.f32 0.0, %v526
    %v528 = vpop.f32.mrb[0].mxu0
    %v529 = vpop.f32.mrb[0].mxu0
    %v530 = vadd.f32 0.0, %v529
    %v531 = vpop.f32.mrb[0].mxu0
    %532 = vmatprep.mubr.bf16.mxu0 0
    %533 = vmatmul.mubr.bf16.gmra.mrb[0].mxu0 %v269
    %v534 = vpop.f32.mrb[0].mxu0
    %v535 = vadd.f32 0.0, %v534
    %v536 = vpop.f32.mrb[0].mxu0
    %v537 = vpop.f32.mrb[0].mxu0
    %v538 = vadd.f32 0.0, %v537
    %v539 = vpop.f32.mrb[0].mxu0
    %540 = vmatprep.mubr.bf16.mxu0 0
    %541 = vmatmul.mubr.bf16.gmra.mrb[0].mxu0 %v270
    %v542 = vpop.f32.mrb[0].mxu0
    %v543 = vadd.f32 0.0, %v542
    %v544 = vpop.f32.mrb[0].mxu0
    %v545 = vpop.f32.mrb[0].mxu0
    %v546 = vadd.f32 0.0, %v545
    %v547 = vpop.f32.mrb[0].mxu0
    %548 = vmatprep.mubr.bf16.mxu0 0
    %549 = vmatmul.mubr.bf16.gmra.mrb[0].mxu0 %v271
    %v550 = vpop.f32.mrb[0].mxu0
    %v551 = vadd.f32 0.0, %v550
    %v552 = vpop.f32.mrb[0].mxu0
    %v553 = vpop.f32.mrb[0].mxu0
    %v554 = vadd.f32 0.0, %v553
    %v555 = vpop.f32.mrb[0].mxu0
    %556 = vmatprep.mubr.bf16.mxu0 0
    %557 = vmatmul.mubr.bf16.gmra.mrb[0].mxu0 %v272
    %v558 = vpop.f32.mrb[0].mxu0
    %v559 = vadd.f32 0.0, %v558
    %v560 = vpop.f32.mrb[0].mxu0
    %v561 = vpop.f32.mrb[0].mxu0
    %v562 = vadd.f32 0.0, %v561
    %v563 = vpop.f32.mrb[0].mxu0
    %564 = vmatprep.mubr.bf16.mxu0 0
    %565 = vmatmul.mubr.bf16.gmra.mrb[0].mxu0 %v273
    %v566 = vpop.f32.mrb[0].mxu0
    %v567 = vadd.f32 0.0, %v566
    %v568 = vpop.f32.mrb[0].mxu0
    %v569 = vpop.f32.mrb[0].mxu0
    %v570 = vadd.f32 0.0, %v569
    %v571 = vpop.f32.mrb[0].mxu0
    %572 = vmatprep.mubr.bf16.mxu0 0
    %573 = vmatmul.mubr.bf16.gmra.mrb[0].mxu0 %v274
    %v574 = vpop.f32.mrb[0].mxu0
    %v575 = vadd.f32 0.0, %v574
    %v576 = vpop.f32.mrb[0].mxu0
    %v577 = vpop.f32.mrb[0].mxu0
    %v578 = vadd.f32 0.0, %v577
    %v579 = vpop.f32.mrb[0].mxu0
    %580 = vmatprep.mubr.bf16.mxu0 0
    %581 = vmatmul.mubr.bf16.gmra.mrb[0].mxu0 %v275
    %v582 = vpop.f32.mrb[0].mxu0
    %v583 = vadd.f32 0.0, %v582
    %v584 = vpop.f32.mrb[0].mxu0
    %v585 = vpop.f32.mrb[0].mxu0
    %v586 = vadd.f32 0.0, %v585
    %v587 = vpop.f32.mrb[0].mxu0
    %588 = vmatprep.mubr.bf16.mxu0 0
    %589 = vmatmul.mubr.bf16.gmra.mrb[0].mxu0 %v276
    %v590 = vpop.f32.mrb[0].mxu0
    %v591 = vadd.f32 0.0, %v590
    %v592 = vpop.f32.mrb[0].mxu0
    %v593 = vpop.f32.mrb[0].mxu0
    %v594 = vadd.f32 0.0, %v593
    %v595 = vpop.f32.mrb[0].mxu0
    %596 = vmatprep.mubr.bf16.mxu0 0
    %597 = vmatmul.mubr.bf16.gmra.mrb[0].mxu0 %v277
    %v598 = vpop.f32.mrb[0].mxu0
    %v599 = vadd.f32 0.0, %v598
    %v600 = vpop.f32.mrb[0].mxu0
    %v601 = vpop.f32.mrb[0].mxu0
    %v602 = vadd.f32 0.0, %v601
    %v603 = vpop.f32.mrb[0].mxu0
    %604 = vmatprep.mubr.bf16.mxu0 0
    %605 = vmatmul.mubr.bf16.gmra.mrb[0].mxu0 %v278
    %v606 = vpop.f32.mrb[0].mxu0
    %v607 = vadd.f32 0.0, %v606
    %v608 = vpop.f32.mrb[0].mxu0
    %v609 = vpop.f32.mrb[0].mxu0
    %v610 = vadd.f32 0.0, %v609
    %v611 = vpop.f32.mrb[0].mxu0
    %612 = vmatprep.mubr.bf16.mxu0 0
    %613 = vmatmul.mubr.bf16.gmra.mrb[0].mxu0 %v279
    %v614 = vpop.f32.mrb[0].mxu0
    %v615 = vadd.f32 0.0, %v614
    %v616 = vpop.f32.mrb[0].mxu0
    %v617 = vpop.f32.mrb[0].mxu0
    %v618 = vadd.f32 0.0, %v617
    %v619 = vpop.f32.mrb[0].mxu0
    %620 = vmatprep.mubr.bf16.mxu0 0
    %621 = vmatmul.mubr.bf16.gmra.mrb[0].mxu0 %v280
    %v622 = vpop.f32.mrb[0].mxu0
    %v623 = vadd.f32 0.0, %v622
    %v624 = vpop.f32.mrb[0].mxu0
    %v625 = vpop.f32.mrb[0].mxu0
    %v626 = vadd.f32 0.0, %v625
    %v627 = vpop.f32.mrb[0].mxu0
    %628 = vmatprep.mubr.bf16.mxu0 0
    %629 = vmatmul.mubr.bf16.gmra.mrb[0].mxu0 %v281
    %v630 = vpop.f32.mrb[0].mxu0
    %v631 = vadd.f32 0.0, %v630
    %v632 = vpop.f32.mrb[0].mxu0
    %v633 = vpop.f32.mrb[0].mxu0
    %v634 = vadd.f32 0.0, %v633
    %v635 = vpop.f32.mrb[0].mxu0
    %636 = vmatprep.mubr.bf16.mxu0 0
    %637 = vmatmul.mubr.bf16.gmra.mrb[0].mxu0 %v282
    %v638 = vpop.f32.mrb[0].mxu0
    %v639 = vadd.f32 0.0, %v638
    %v640 = vpop.f32.mrb[0].mxu0
    %v641 = vpop.f32.mrb[0].mxu0
    %v642 = vadd.f32 0.0, %v641
    %v643 = vpop.f32.mrb[0].mxu0
    %644 = vmatprep.mubr.bf16.mxu0 0
    %645 = vmatmul.mubr.bf16.gmra.mrb[0].mxu0 %v283
    %v646 = vpop.f32.mrb[0].mxu0
    %v647 = vadd.f32 0.0, %v646
    %v648 = vpop.f32.mrb[0].mxu0
    %v649 = vpop.f32.mrb[0].mxu0
    %v650 = vadd.f32 0.0, %v649
    %v651 = vpop.f32.mrb[0].mxu0
    %652 = vdwg.mxu0
    %v653 = vpack.c.bf16 %v402, %v399
    %v654 = vpack.c.bf16 %v410, %v407
    %v655 = vpack.c.bf16 %v418, %v415
    %v656 = vpack.c.bf16 %v426, %v423
    %v657 = vpack.c.bf16 %v434, %v431
    %v658 = vpack.c.bf16 %v442, %v439
    %v659 = vpack.c.bf16 %v450, %v447
    %v660 = vpack.c.bf16 %v458, %v455
    %v661 = vpack.c.bf16 %v466, %v463
    %v662 = vpack.c.bf16 %v474, %v471
    %v663 = vpack.c.bf16 %v482, %v479
    %v664 = vpack.c.bf16 %v490, %v487
    %v665 = vpack.c.bf16 %v498, %v495
    %v666 = vpack.c.bf16 %v506, %v503
    %v667 = vpack.c.bf16 %v514, %v511
    %v668 = vpack.c.bf16 %v522, %v519
    %v669 = vpack.c.bf16 %v530, %v527
    %v670 = vpack.c.bf16 %v538, %v535
    %v671 = vpack.c.bf16 %v546, %v543
    %v672 = vpack.c.bf16 %v554, %v551
    %v673 = vpack.c.bf16 %v562, %v559
    %v674 = vpack.c.bf16 %v570, %v567
    %v675 = vpack.c.bf16 %v578, %v575
    %v676 = vpack.c.bf16 %v586, %v583
    %v677 = vpack.c.bf16 %v594, %v591
    %v678 = vpack.c.bf16 %v602, %v599
    %v679 = vpack.c.bf16 %v610, %v607
    %v680 = vpack.c.bf16 %v618, %v615
    %v681 = vpack.c.bf16 %v626, %v623
    %v682 = vpack.c.bf16 %v634, %v631
    %v683 = vpack.c.bf16 %v642, %v639
    %v684 = vpack.c.bf16 %v650, %v647
    %v717 = vunpack.c.l.b16 %v653
    %v718 = vunpack.c.h.b16 %v653
    %v719 = vunpack.c.l.b16 %v654
    %v720 = vunpack.c.h.b16 %v654
    %v721 = vunpack.c.l.b16 %v655
    %v722 = vunpack.c.h.b16 %v655
    %v723 = vunpack.c.l.b16 %v656
    %v724 = vunpack.c.h.b16 %v656
    %v725 = vunpack.c.l.b16 %v657
    %v726 = vunpack.c.h.b16 %v657
    %v727 = vunpack.c.l.b16 %v658
    %v728 = vunpack.c.h.b16 %v658
    %v729 = vunpack.c.l.b16 %v659
    %v730 = vunpack.c.h.b16 %v659
    %v731 = vunpack.c.l.b16 %v660
    %v732 = vunpack.c.h.b16 %v660
    %v733 = vunpack.c.l.b16 %v661
    %v734 = vunpack.c.h.b16 %v661
    %v735 = vunpack.c.l.b16 %v662
    %v736 = vunpack.c.h.b16 %v662
    %v737 = vunpack.c.l.b16 %v663
    %v738 = vunpack.c.h.b16 %v663
    %v739 = vunpack.c.l.b16 %v664
    %v740 = vunpack.c.h.b16 %v664
    %v741 = vunpack.c.l.b16 %v665
    %v742 = vunpack.c.h.b16 %v665
    %v743 = vunpack.c.l.b16 %v666
    %v744 = vunpack.c.h.b16 %v666
    %v745 = vunpack.c.l.b16 %v667
    %v746 = vunpack.c.h.b16 %v667
    %v747 = vunpack.c.l.b16 %v668
    %v748 = vunpack.c.h.b16 %v668
    %v749 = vunpack.c.l.b16 %v669
    %v750 = vunpack.c.h.b16 %v669
    %v751 = vunpack.c.l.b16 %v670
    %v752 = vunpack.c.h.b16 %v670
    %v753 = vunpack.c.l.b16 %v671
    %v754 = vunpack.c.h.b16 %v671
    %v755 = vunpack.c.l.b16 %v672
    %v756 = vunpack.c.h.b16 %v672
    %v757 = vunpack.c.l.b16 %v673
    %v758 = vunpack.c.h.b16 %v673
    %v759 = vunpack.c.l.b16 %v674
    %v760 = vunpack.c.h.b16 %v674
    %v761 = vunpack.c.l.b16 %v675
    %v762 = vunpack.c.h.b16 %v675
    %v763 = vunpack.c.l.b16 %v676
    %v764 = vunpack.c.h.b16 %v676
    %v765 = vunpack.c.l.b16 %v677
    %v766 = vunpack.c.h.b16 %v677
    %v767 = vunpack.c.l.b16 %v678
    %v768 = vunpack.c.h.b16 %v678
    %v769 = vunpack.c.l.b16 %v679
    %v770 = vunpack.c.h.b16 %v679
    %v771 = vunpack.c.l.b16 %v680
    %v772 = vunpack.c.h.b16 %v680
    %v773 = vunpack.c.l.b16 %v681
    %v774 = vunpack.c.h.b16 %v681
    %v775 = vunpack.c.l.b16 %v682
    %v776 = vunpack.c.h.b16 %v682
    %v777 = vunpack.c.l.b16 %v683
    %v778 = vunpack.c.h.b16 %v683
    %v779 = vunpack.c.l.b16 %v684
    %v780 = vunpack.c.h.b16 %v684
    %v781 = vpack.c.b16 %v717, %v717
    %v782 = vpack.c.b16 %v718, %v718
    %v783 = vpack.c.b16 %v719, %v719
    %v784 = vpack.c.b16 %v720, %v720
    %v785 = vpack.c.b16 %v721, %v721
    %v786 = vpack.c.b16 %v722, %v722
    %v787 = vpack.c.b16 %v723, %v723
    %v788 = vpack.c.b16 %v724, %v724
    %v789 = vpack.c.b16 %v725, %v725
    %v790 = vpack.c.b16 %v726, %v726
    %v791 = vpack.c.b16 %v727, %v727
    %v792 = vpack.c.b16 %v728, %v728
    %v793 = vpack.c.b16 %v729, %v729
    %v794 = vpack.c.b16 %v730, %v730
    %v795 = vpack.c.b16 %v731, %v731
    %v796 = vpack.c.b16 %v732, %v732
    %v797 = vpack.c.b16 %v733, %v733
    %v798 = vpack.c.b16 %v734, %v734
    %v799 = vpack.c.b16 %v735, %v735
    %v800 = vpack.c.b16 %v736, %v736
    %v801 = vpack.c.b16 %v737, %v737
    %v802 = vpack.c.b16 %v738, %v738
    %v803 = vpack.c.b16 %v739, %v739
    %v804 = vpack.c.b16 %v740, %v740
    %v805 = vpack.c.b16 %v741, %v741
    %v806 = vpack.c.b16 %v742, %v742
    %v807 = vpack.c.b16 %v743, %v743
    %v808 = vpack.c.b16 %v744, %v744
    %v809 = vpack.c.b16 %v745, %v745
    %v810 = vpack.c.b16 %v746, %v746
    %v811 = vpack.c.b16 %v747, %v747
    %v812 = vpack.c.b16 %v748, %v748
    %v813 = vpack.c.b16 %v749, %v749
    %v814 = vpack.c.b16 %v750, %v750
    %v815 = vpack.c.b16 %v751, %v751
    %v816 = vpack.c.b16 %v752, %v752
    %v817 = vpack.c.b16 %v753, %v753
    %v818 = vpack.c.b16 %v754, %v754
    %v819 = vpack.c.b16 %v755, %v755
    %v820 = vpack.c.b16 %v756, %v756
    %v821 = vpack.c.b16 %v757, %v757
    %v822 = vpack.c.b16 %v758, %v758
    %v823 = vpack.c.b16 %v759, %v759
    %v824 = vpack.c.b16 %v760, %v760
    %v825 = vpack.c.b16 %v761, %v761
    %v826 = vpack.c.b16 %v762, %v762
    %v827 = vpack.c.b16 %v763, %v763
    %v828 = vpack.c.b16 %v764, %v764
    %v829 = vpack.c.b16 %v765, %v765
    %v830 = vpack.c.b16 %v766, %v766
    %v831 = vpack.c.b16 %v767, %v767
    %v832 = vpack.c.b16 %v768, %v768
    %v833 = vpack.c.b16 %v769, %v769
    %v834 = vpack.c.b16 %v770, %v770
    %v835 = vpack.c.b16 %v771, %v771
    %v836 = vpack.c.b16 %v772, %v772
    %v837 = vpack.c.b16 %v773, %v773
    %v838 = vpack.c.b16 %v774, %v774
    %v839 = vpack.c.b16 %v775, %v775
    %v840 = vpack.c.b16 %v776, %v776
    %v841 = vpack.c.b16 %v777, %v777
    %v842 = vpack.c.b16 %v778, %v778
    %v843 = vpack.c.b16 %v779, %v779
    %v844 = vpack.c.b16 %v780, %v780
    %909 = vst [vmem:[#allocation7] sm:$0xf] %v781
    %910 = vst [vmem:[#allocation7 + $0x4] sm:$0xf] %v782
    %911 = vst [vmem:[#allocation7 + $0x8] sm:$0xf] %v783
    %912 = vst [vmem:[#allocation7 + $0xc] sm:$0xf] %v784
    %913 = vst [vmem:[#allocation7 + $0x10] sm:$0xf] %v785
    %914 = vst [vmem:[#allocation7 + $0x14] sm:$0xf] %v786
    %915 = vst [vmem:[#allocation7 + $0x18] sm:$0xf] %v787
    %916 = vst [vmem:[#allocation7 + $0x1c] sm:$0xf] %v788
    %917 = vst [vmem:[#allocation7 + $0x20] sm:$0xf] %v789
    %918 = vst [vmem:[#allocation7 + $0x24] sm:$0xf] %v790
    %919 = vst [vmem:[#allocation7 + $0x28] sm:$0xf] %v791
    %920 = vst [vmem:[#allocation7 + $0x2c] sm:$0xf] %v792
    %921 = vst [vmem:[#allocation7 + $0x30] sm:$0xf] %v793
    %922 = vst [vmem:[#allocation7 + $0x34] sm:$0xf] %v794
    %923 = vst [vmem:[#allocation7 + $0x38] sm:$0xf] %v795
    %924 = vst [vmem:[#allocation7 + $0x3c] sm:$0xf] %v796
    %925 = vst [vmem:[#allocation7 + $0x40] sm:$0xf] %v797
    %926 = vst [vmem:[#allocation7 + $0x44] sm:$0xf] %v798
    %927 = vst [vmem:[#allocation7 + $0x48] sm:$0xf] %v799
    %928 = vst [vmem:[#allocation7 + $0x4c] sm:$0xf] %v800
    %929 = vst [vmem:[#allocation7 + $0x50] sm:$0xf] %v801
    %930 = vst [vmem:[#allocation7 + $0x54] sm:$0xf] %v802
    %931 = vst [vmem:[#allocation7 + $0x58] sm:$0xf] %v803
    %932 = vst [vmem:[#allocation7 + $0x5c] sm:$0xf] %v804
    %933 = vst [vmem:[#allocation7 + $0x60] sm:$0xf] %v805
    %934 = vst [vmem:[#allocation7 + $0x64] sm:$0xf] %v806
    %935 = vst [vmem:[#allocation7 + $0x68] sm:$0xf] %v807
    %936 = vst [vmem:[#allocation7 + $0x6c] sm:$0xf] %v808
    %937 = vst [vmem:[#allocation7 + $0x70] sm:$0xf] %v809
    %938 = vst [vmem:[#allocation7 + $0x74] sm:$0xf] %v810
    %939 = vst [vmem:[#allocation7 + $0x78] sm:$0xf] %v811
    %940 = vst [vmem:[#allocation7 + $0x7c] sm:$0xf] %v812
    %941 = vst [vmem:[#allocation7 + $0x80] sm:$0xf] %v813
    %942 = vst [vmem:[#allocation7 + $0x84] sm:$0xf] %v814
    %943 = vst [vmem:[#allocation7 + $0x88] sm:$0xf] %v815
    %944 = vst [vmem:[#allocation7 + $0x8c] sm:$0xf] %v816
    %945 = vst [vmem:[#allocation7 + $0x90] sm:$0xf] %v817
    %946 = vst [vmem:[#allocation7 + $0x94] sm:$0xf] %v818
    %947 = vst [vmem:[#allocation7 + $0x98] sm:$0xf] %v819
    %948 = vst [vmem:[#allocation7 + $0x9c] sm:$0xf] %v820
    %949 = vst [vmem:[#allocation7 + $0xa0] sm:$0xf] %v821
    %950 = vst [vmem:[#allocation7 + $0xa4] sm:$0xf] %v822
    %951 = vst [vmem:[#allocation7 + $0xa8] sm:$0xf] %v823
    %952 = vst [vmem:[#allocation7 + $0xac] sm:$0xf] %v824
    %953 = vst [vmem:[#allocation7 + $0xb0] sm:$0xf] %v825
    %954 = vst [vmem:[#allocation7 + $0xb4] sm:$0xf] %v826
    %955 = vst [vmem:[#allocation7 + $0xb8] sm:$0xf] %v827
    %956 = vst [vmem:[#allocation7 + $0xbc] sm:$0xf] %v828
    %957 = vst [vmem:[#allocation7 + $0xc0] sm:$0xf] %v829
    %958 = vst [vmem:[#allocation7 + $0xc4] sm:$0xf] %v830
    %959 = vst [vmem:[#allocation7 + $0xc8] sm:$0xf] %v831
    %960 = vst [vmem:[#allocation7 + $0xcc] sm:$0xf] %v832
    %961 = vst [vmem:[#allocation7 + $0xd0] sm:$0xf] %v833
    %962 = vst [vmem:[#allocation7 + $0xd4] sm:$0xf] %v834
    %963 = vst [vmem:[#allocation7 + $0xd8] sm:$0xf] %v835
    %964 = vst [vmem:[#allocation7 + $0xdc] sm:$0xf] %v836
    %965 = vst [vmem:[#allocation7 + $0xe0] sm:$0xf] %v837
    %966 = vst [vmem:[#allocation7 + $0xe4] sm:$0xf] %v838
    %967 = vst [vmem:[#allocation7 + $0xe8] sm:$0xf] %v839
    %968 = vst [vmem:[#allocation7 + $0xec] sm:$0xf] %v840
    %969 = vst [vmem:[#allocation7 + $0xf0] sm:$0xf] %v841
    %970 = vst [vmem:[#allocation7 + $0xf4] sm:$0xf] %v842
    %971 = vst [vmem:[#allocation7 + $0xf8] sm:$0xf] %v843
    %972 = vst [vmem:[#allocation7 + $0xfc] sm:$0xf] %v844
    %v973 = vadd.f32 %v399, %v402
    %v974 = vadd.f32 %v973, %v407
    %v975 = vadd.f32 %v974, %v410
    %v976 = vadd.f32 %v975, %v415
    %v977 = vadd.f32 %v976, %v418
    %v978 = vadd.f32 %v977, %v423
    %v979 = vadd.f32 %v978, %v426
    %v980 = vadd.f32 %v979, %v431
    %v981 = vadd.f32 %v980, %v434
    %v982 = vadd.f32 %v981, %v439
    %v983 = vadd.f32 %v982, %v442
    %v984 = vadd.f32 %v983, %v447
    %v985 = vadd.f32 %v984, %v450
    %v986 = vadd.f32 %v985, %v455
    %v987 = vadd.f32 %v986, %v458
    %v988 = vadd.f32 %v987, %v463
    %v989 = vadd.f32 %v988, %v466
    %v990 = vadd.f32 %v989, %v471
    %v991 = vadd.f32 %v990, %v474
    %v992 = vadd.f32 %v991, %v479
    %v993 = vadd.f32 %v992, %v482
    %v994 = vadd.f32 %v993, %v487
    %v995 = vadd.f32 %v994, %v490
    %v996 = vadd.f32 %v995, %v495
    %v997 = vadd.f32 %v996, %v498
    %v998 = vadd.f32 %v997, %v503
    %v999 = vadd.f32 %v998, %v506
    %v1000 = vadd.f32 %v999, %v511
    %v1001 = vadd.f32 %v1000, %v514
    %v1002 = vadd.f32 %v1001, %v519
    %v1003 = vadd.f32 %v1002, %v522
    %v1004 = vadd.f32 %v1003, %v527
    %v1005 = vadd.f32 %v1004, %v530
    %v1006 = vadd.f32 %v1005, %v535
    %v1007 = vadd.f32 %v1006, %v538
    %v1008 = vadd.f32 %v1007, %v543
    %v1009 = vadd.f32 %v1008, %v546
    %v1010 = vadd.f32 %v1009, %v551
    %v1011 = vadd.f32 %v1010, %v554
    %v1012 = vadd.f32 %v1011, %v559
    %v1013 = vadd.f32 %v1012, %v562
    %v1014 = vadd.f32 %v1013, %v567
    %v1015 = vadd.f32 %v1014, %v570
    %v1016 = vadd.f32 %v1015, %v575
    %v1017 = vadd.f32 %v1016, %v578
    %v1018 = vadd.f32 %v1017, %v583
    %v1019 = vadd.f32 %v1018, %v586
    %v1020 = vadd.f32 %v1019, %v591
    %v1021 = vadd.f32 %v1020, %v594
    %v1022 = vadd.f32 %v1021, %v599
    %v1023 = vadd.f32 %v1022, %v602
    %v1024 = vadd.f32 %v1023, %v607
    %v1025 = vadd.f32 %v1024, %v610
    %v1026 = vadd.f32 %v1025, %v615
    %v1027 = vadd.f32 %v1026, %v618
    %v1028 = vadd.f32 %v1027, %v623
    %v1029 = vadd.f32 %v1028, %v626
    %v1030 = vadd.f32 %v1029, %v631
    %v1031 = vadd.f32 %v1030, %v634
    %v1032 = vadd.f32 %v1031, %v639
    %v1033 = vadd.f32 %v1032, %v642
    %v1034 = vadd.f32 %v1033, %v647
    %v1035 = vadd.f32 %v1034, %v650
    %v1036 = vrot.slane %v1035, 4
    %v1037 = vadd.f32 %v1035, %v1036
    %v1038 = vrot.slane %v1037, 2
    %v1039 = vadd.f32 %v1037, %v1038
    %v1040 = vrot.slane %v1039, 1
    %v1041 = vadd.f32 %v1039, %v1040
    %v1042 = vmul.f32 %v399, %v399
    %v1043 = vmul.f32 %v402, %v402
    %v1044 = vmul.f32 %v407, %v407
    %v1045 = vmul.f32 %v410, %v410
    %v1046 = vmul.f32 %v415, %v415
    %v1047 = vmul.f32 %v418, %v418
    %v1048 = vmul.f32 %v423, %v423
    %v1049 = vmul.f32 %v426, %v426
    %v1050 = vmul.f32 %v431, %v431
    %v1051 = vmul.f32 %v434, %v434
    %v1052 = vmul.f32 %v439, %v439
    %v1053 = vmul.f32 %v442, %v442
    %v1054 = vmul.f32 %v447, %v447
    %v1055 = vmul.f32 %v450, %v450
    %v1056 = vmul.f32 %v455, %v455
    %v1057 = vmul.f32 %v458, %v458
    %v1058 = vmul.f32 %v463, %v463
    %v1059 = vmul.f32 %v466, %v466
    %v1060 = vmul.f32 %v471, %v471
    %v1061 = vmul.f32 %v474, %v474
    %v1062 = vmul.f32 %v479, %v479
    %v1063 = vmul.f32 %v482, %v482
    %v1064 = vmul.f32 %v487, %v487
    %v1065 = vmul.f32 %v490, %v490
    %v1066 = vmul.f32 %v495, %v495
    %v1067 = vmul.f32 %v498, %v498
    %v1068 = vmul.f32 %v503, %v503
    %v1069 = vmul.f32 %v506, %v506
    %v1070 = vmul.f32 %v511, %v511
    %v1071 = vmul.f32 %v514, %v514
    %v1072 = vmul.f32 %v519, %v519
    %v1073 = vmul.f32 %v522, %v522
    %v1074 = vmul.f32 %v527, %v527
    %v1075 = vmul.f32 %v530, %v530
    %v1076 = vmul.f32 %v535, %v535
    %v1077 = vmul.f32 %v538, %v538
    %v1078 = vmul.f32 %v543, %v543
    %v1079 = vmul.f32 %v546, %v546
    %v1080 = vmul.f32 %v551, %v551
    %v1081 = vmul.f32 %v554, %v554
    %v1082 = vmul.f32 %v559, %v559
    %v1083 = vmul.f32 %v562, %v562
    %v1084 = vmul.f32 %v567, %v567
    %v1085 = vmul.f32 %v570, %v570
    %v1086 = vmul.f32 %v575, %v575
    %v1087 = vmul.f32 %v578, %v578
    %v1088 = vmul.f32 %v583, %v583
    %v1089 = vmul.f32 %v586, %v586
    %v1090 = vmul.f32 %v591, %v591
    %v1091 = vmul.f32 %v594, %v594
    %v1092 = vmul.f32 %v599, %v599
    %v1093 = vmul.f32 %v602, %v602
    %v1094 = vmul.f32 %v607, %v607
    %v1095 = vmul.f32 %v610, %v610
    %v1096 = vmul.f32 %v615, %v615
    %v1097 = vmul.f32 %v618, %v618
    %v1098 = vmul.f32 %v623, %v623
    %v1099 = vmul.f32 %v626, %v626
    %v1100 = vmul.f32 %v631, %v631
    %v1101 = vmul.f32 %v634, %v634
    %v1102 = vmul.f32 %v639, %v639
    %v1103 = vmul.f32 %v642, %v642
    %v1104 = vmul.f32 %v647, %v647
    %v1105 = vmul.f32 %v650, %v650
    %v1106 = vadd.f32 %v1042, %v1043
    %v1107 = vadd.f32 %v1106, %v1044
    %v1108 = vadd.f32 %v1107, %v1045
    %v1109 = vadd.f32 %v1108, %v1046
    %v1110 = vadd.f32 %v1109, %v1047
    %v1111 = vadd.f32 %v1110, %v1048
    %v1112 = vadd.f32 %v1111, %v1049
    %v1113 = vadd.f32 %v1112, %v1050
    %v1114 = vadd.f32 %v1113, %v1051
    %v1115 = vadd.f32 %v1114, %v1052
    %v1116 = vadd.f32 %v1115, %v1053
    %v1117 = vadd.f32 %v1116, %v1054
    %v1118 = vadd.f32 %v1117, %v1055
    %v1119 = vadd.f32 %v1118, %v1056
    %v1120 = vadd.f32 %v1119, %v1057
    %v1121 = vadd.f32 %v1120, %v1058
    %v1122 = vadd.f32 %v1121, %v1059
    %v1123 = vadd.f32 %v1122, %v1060
    %v1124 = vadd.f32 %v1123, %v1061
    %v1125 = vadd.f32 %v1124, %v1062
    %v1126 = vadd.f32 %v1125, %v1063
    %v1127 = vadd.f32 %v1126, %v1064
    %v1128 = vadd.f32 %v1127, %v1065
    %v1129 = vadd.f32 %v1128, %v1066
    %v1130 = vadd.f32 %v1129, %v1067
    %v1131 = vadd.f32 %v1130, %v1068
    %v1132 = vadd.f32 %v1131, %v1069
    %v1133 = vadd.f32 %v1132, %v1070
    %v1134 = vadd.f32 %v1133, %v1071
    %v1135 = vadd.f32 %v1134, %v1072
    %v1136 = vadd.f32 %v1135, %v1073
    %v1137 = vadd.f32 %v1136, %v1074
    %v1138 = vadd.f32 %v1137, %v1075
    %v1139 = vadd.f32 %v1138, %v1076
    %v1140 = vadd.f32 %v1139, %v1077
    %v1141 = vadd.f32 %v1140, %v1078
    %v1142 = vadd.f32 %v1141, %v1079
    %v1143 = vadd.f32 %v1142, %v1080
    %v1144 = vadd.f32 %v1143, %v1081
    %v1145 = vadd.f32 %v1144, %v1082
    %v1146 = vadd.f32 %v1145, %v1083
    %v1147 = vadd.f32 %v1146, %v1084
    %v1148 = vadd.f32 %v1147, %v1085
    %v1149 = vadd.f32 %v1148, %v1086
    %v1150 = vadd.f32 %v1149, %v1087
    %v1151 = vadd.f32 %v1150, %v1088
    %v1152 = vadd.f32 %v1151, %v1089
    %v1153 = vadd.f32 %v1152, %v1090
    %v1154 = vadd.f32 %v1153, %v1091
    %v1155 = vadd.f32 %v1154, %v1092
    %v1156 = vadd.f32 %v1155, %v1093
    %v1157 = vadd.f32 %v1156, %v1094
    %v1158 = vadd.f32 %v1157, %v1095
    %v1159 = vadd.f32 %v1158, %v1096
    %v1160 = vadd.f32 %v1159, %v1097
    %v1161 = vadd.f32 %v1160, %v1098
    %v1162 = vadd.f32 %v1161, %v1099
    %v1163 = vadd.f32 %v1162, %v1100
    %v1164 = vadd.f32 %v1163, %v1101
    %v1165 = vadd.f32 %v1164, %v1102
    %v1166 = vadd.f32 %v1165, %v1103
    %v1167 = vadd.f32 %v1166, %v1104
    %v1168 = vadd.f32 %v1167, %v1105
    %v1169 = vrot.slane %v1168, 4
    %v1170 = vadd.f32 %v1168, %v1169
    %v1171 = vrot.slane %v1170, 2
    %v1172 = vadd.f32 %v1170, %v1171
    %v1173 = vrot.slane %v1172, 1
    %v1174 = vadd.f32 %v1172, %v1173
    %vm1175 = vcmask 1040384
    %v1176 = vsel %vm1175, %v1041, %v1174
    %1177 = vst [vmem:[#allocation8] sm:$0x3] %v1176
    // Predicated region
    $region18: #{bottleneck_block.4} parent=1 // pred_check
      _
    $region19: #{bottleneck_block.4} parent=1 // pred_check_branch
      %1179 = sbr.rel (0) target = $region21
    $region20: #{bottleneck_block.4} parent=1 // pred_region
      %s1181 = ssub.s32 4096, 4096
      %1182 = vsyncadd [#allocation4], %s1181
      %s1183 = sshll.u32 [#allocation7], 4
      %s1184 = int_to_ptr.vmem [resolvable:$true] %s1183
      %1189 = dma.vmem_to_hbm [thread:$0]  %s1184, 4096, %s2, [#allocation4], 64, 64, 4
    $region21: #{bottleneck_block.4} parent=1 // pred_fallthru
      _
    // Predicated region
    $region22: #{bottleneck_block.4} parent=1 // pred_check
      _
    $region23: #{bottleneck_block.4} parent=1 // pred_check_branch
      %1191 = sbr.rel (0) target = $region25
    $region24: #{bottleneck_block.4} parent=1 // pred_region
      %s1193 = ssub.s32 32, 32
      %1194 = vsyncadd [#allocation9], %s1193
      %s1196 = sshll.u32 [#allocation8], 4
      %s1197 = int_to_ptr.vmem [resolvable:$true] %s1196
      %1199 = dma.vmem_to_hbm [thread:$0]  %s1197, 32, %s3, [#allocation9]
    $region25: #{bottleneck_block.4} parent=1 // pred_fallthru
      _
    // Predicated region
    $region26: #{bottleneck_block.4} parent=1 // pred_check
      _
    $region27: #{bottleneck_block.4} parent=1 // pred_check_branch
      %1201 = sbr.rel (0) target = $region29
    $region28: #{bottleneck_block.4} parent=1 // pred_region
      %1202 = dma.done [#allocation4], 4096
    $region29: #{bottleneck_block.4} parent=1 // pred_fallthru
      _
    // Predicated region
    $region30: #{bottleneck_block.4} parent=1 // pred_check
      _
    $region31: #{bottleneck_block.4} parent=1 // pred_check_branch
      %1204 = sbr.rel (0) target = $region33
    $region32: #{bottleneck_block.4} parent=1 // pred_region
      %1205 = dma.done [#allocation9], 32
    $region33: #{bottleneck_block.4} parent=1 // pred_fallthru
      _
    %1206 = vsyncpa [#allocation3], 1
    %1207 = vsyncpa [#allocation6], 1
    %1208 = vsyncpa [#allocation4], 1
    %1209 = vsyncpa [#allocation9], 1

// kernel: bottleneck_block.7
$region0: #{bottleneck_block.7}
  #allocation0 [shape = 'u32[]', space=smem, size = 0x4, offset = 0x4, fixed_abs, tag = 'smem constant byte address 0x4 - core index']
  #allocation1 [shape = 'u32[144,128]{1,0:T(1,128)}', space=vmem, size = 0x12000, scoped, tag = 'internal scratch']
  %s0 = inlined_call_operand.hbm [shape: bf16[512,128], index: 0, kind: input, shape index: {}]
  %s1 = inlined_call_operand.hbm [shape: bf16[512,128], index: 1, kind: input, shape index: {}]
  %s2 = inlined_call_operand.hbm [shape: f32[1,128], index: 2, kind: input, shape index: {}]
  %s3 = inlined_call_operand.hbm [shape: f32[1,128], index: 3, kind: input, shape index: {}]
  %s4 = inlined_call_operand.hbm [shape: f32[512,128], index: 4, kind: output, shape index: {}]
  %s5 = sld [smem:[#allocation0]]
  $region42: #{bottleneck_block.7} parent=0
    _
  %s7 = ssub.s32 1, %s5
  %s8 = scalar_select 0, %s7, %s5
  $region1: #{bottleneck_block.7} parent=0
    #allocation2 [shape = 'u8[131072]{0}', space=vmem, size = 0x20000, scoped, tag = 'input window, operand 0, single buffered']
    #allocation3 [shape = 's32[1]{0}', space=sflag, size = 0x4, scoped, tag = 'scoped memory for bottleneck_block.7']
    #allocation4 [shape = 's32[1]{0}', space=sflag, size = 0x4, scoped, tag = 'scoped memory for bottleneck_block.7']
    #allocation5 [shape = 'u8[131072]{0}', space=vmem, size = 0x20000, scoped, tag = 'input window, operand 1, single buffered']
    #allocation6 [shape = 's32[1]{0}', space=sflag, size = 0x4, scoped, tag = 'scoped memory for bottleneck_block.7']
    #allocation7 [shape = 'u8[512]{0}', space=vmem, size = 0x400, scoped, tag = 'input window, operand 2, single buffered']
    #allocation8 [shape = 'u8[512]{0}', space=vmem, size = 0x400, scoped, tag = 'input window, operand 3, single buffered']
    #allocation9 [shape = 's32[1]{0}', space=sflag, size = 0x4, scoped, tag = 'scoped memory for bottleneck_block.7']
    #allocation10 [shape = 'u8[262144]{0}', space=vmem, size = 0x40000, scoped, tag = 'output window, operand 0, single buffered']
    %9 = vsyncpa [#allocation3], 0
    %10 = vsyncpa [#allocation6], 0
    %11 = vsyncpa [#allocation9], 0
    %12 = vsyncpa [#allocation4], 0
    // Predicated region
    $region2: #{bottleneck_block.7} parent=1 // pred_check
      _
    $region3: #{bottleneck_block.7} parent=1 // pred_check_branch
      %14 = sbr.rel (0) target = $region5
    $region4: #{bottleneck_block.7} parent=1 // pred_region
      %s16 = ssub.s32 4096, 4096
      %17 = vsyncadd [#allocation3], %s16
      %s18 = sshll.u32 [#allocation2], 4
      %s19 = int_to_ptr.vmem [resolvable:$true] %s18
      %24 = dma.hbm_to_vmem [thread:$0]  %s0, 4096, %s19, [#allocation3], 64, 64, 4
    $region5: #{bottleneck_block.7} parent=1 // pred_fallthru
      _
    // Predicated region
    $region6: #{bottleneck_block.7} parent=1 // pred_check
      _
    $region7: #{bottleneck_block.7} parent=1 // pred_check_branch
      %26 = sbr.rel (0) target = $region9
    $region8: #{bottleneck_block.7} parent=1 // pred_region
      %s28 = ssub.s32 4096, 4096
      %29 = vsyncadd [#allocation6], %s28
      %s30 = sshll.u32 [#allocation5], 4
      %s31 = int_to_ptr.vmem [resolvable:$true] %s30
      %36 = dma.hbm_to_vmem [thread:$0]  %s1, 4096, %s31, [#allocation6], 64, 64, 4
    $region9: #{bottleneck_block.7} parent=1 // pred_fallthru
      _
    // Predicated region
    $region10: #{bottleneck_block.7} parent=1 // pred_check
      _
    $region11: #{bottleneck_block.7} parent=1 // pred_check_branch
      %38 = sbr.rel (0) target = $region13
    $region12: #{bottleneck_block.7} parent=1 // pred_region
      %s40 = ssub.s32 16, 16
      %41 = vsyncadd [#allocation6], %s40
      %s43 = sshll.u32 [#allocation7], 4
      %s44 = int_to_ptr.vmem [resolvable:$true] %s43
      %46 = dma.hbm_to_vmem [thread:$0]  %s2, 16, %s44, [#allocation6]
    $region13: #{bottleneck_block.7} parent=1 // pred_fallthru
      _
    // Predicated region
    $region14: #{bottleneck_block.7} parent=1 // pred_check
      _
    $region15: #{bottleneck_block.7} parent=1 // pred_check_branch
      %48 = sbr.rel (0) target = $region17
    $region16: #{bottleneck_block.7} parent=1 // pred_region
      %s50 = ssub.s32 16, 16
      %51 = vsyncadd [#allocation9], %s50
      %s53 = sshll.u32 [#allocation8], 4
      %s54 = int_to_ptr.vmem [resolvable:$true] %s53
      %56 = dma.hbm_to_vmem [thread:$0]  %s3, 16, %s54, [#allocation9]
    $region17: #{bottleneck_block.7} parent=1 // pred_fallthru
      _
    // Predicated region
    $region18: #{bottleneck_block.7} parent=1 // pred_check
      _
    $region19: #{bottleneck_block.7} parent=1 // pred_check_branch
      %58 = sbr.rel (0) target = $region21
    $region20: #{bottleneck_block.7} parent=1 // pred_region
      %59 = dma.done [#allocation3], 4096
    $region21: #{bottleneck_block.7} parent=1 // pred_fallthru
      _
    // Predicated region
    $region22: #{bottleneck_block.7} parent=1 // pred_check
      _
    $region23: #{bottleneck_block.7} parent=1 // pred_check_branch
      %61 = sbr.rel (0) target = $region25
    $region24: #{bottleneck_block.7} parent=1 // pred_region
      %62 = dma.done [#allocation6], 4096
    $region25: #{bottleneck_block.7} parent=1 // pred_fallthru
      _
    // Predicated region
    $region26: #{bottleneck_block.7} parent=1 // pred_check
      _
    $region27: #{bottleneck_block.7} parent=1 // pred_check_branch
      %64 = sbr.rel (0) target = $region29
    $region28: #{bottleneck_block.7} parent=1 // pred_region
      %65 = dma.done [#allocation6], 16
    $region29: #{bottleneck_block.7} parent=1 // pred_fallthru
      _
    // Predicated region
    $region30: #{bottleneck_block.7} parent=1 // pred_check
      _
    $region31: #{bottleneck_block.7} parent=1 // pred_check_branch
      %67 = sbr.rel (0) target = $region33
    $region32: #{bottleneck_block.7} parent=1 // pred_region
      %68 = dma.done [#allocation9], 16
    $region33: #{bottleneck_block.7} parent=1 // pred_fallthru
      _
    %v69 = vld [vmem:[#allocation2] sm:$0xf]
    %v70 = vld [vmem:[#allocation2 + $0x4] sm:$0xf]
    %v71 = vld [vmem:[#allocation2 + $0x8] sm:$0xf]
    %v72 = vld [vmem:[#allocation2 + $0xc] sm:$0xf]
    %v73 = vld [vmem:[#allocation2 + $0x10] sm:$0xf]
    %v74 = vld [vmem:[#allocation2 + $0x14] sm:$0xf]
    %v75 = vld [vmem:[#allocation2 + $0x18] sm:$0xf]
    %v76 = vld [vmem:[#allocation2 + $0x1c] sm:$0xf]
    %v77 = vld [vmem:[#allocation2 + $0x20] sm:$0xf]
    %v78 = vld [vmem:[#allocation2 + $0x24] sm:$0xf]
    %v79 = vld [vmem:[#allocation2 + $0x28] sm:$0xf]
    %v80 = vld [vmem:[#allocation2 + $0x2c] sm:$0xf]
    %v81 = vld [vmem:[#allocation2 + $0x30] sm:$0xf]
    %v82 = vld [vmem:[#allocation2 + $0x34] sm:$0xf]
    %v83 = vld [vmem:[#allocation2 + $0x38] sm:$0xf]
    %v84 = vld [vmem:[#allocation2 + $0x3c] sm:$0xf]
    %v85 = vld [vmem:[#allocation2 + $0x40] sm:$0xf]
    %v86 = vld [vmem:[#allocation2 + $0x44] sm:$0xf]
    %v87 = vld [vmem:[#allocation2 + $0x48] sm:$0xf]
    %v88 = vld [vmem:[#allocation2 + $0x4c] sm:$0xf]
    %v89 = vld [vmem:[#allocation2 + $0x50] sm:$0xf]
    %v90 = vld [vmem:[#allocation2 + $0x54] sm:$0xf]
    %v91 = vld [vmem:[#allocation2 + $0x58] sm:$0xf]
    %v92 = vld [vmem:[#allocation2 + $0x5c] sm:$0xf]
    %v93 = vld [vmem:[#allocation2 + $0x60] sm:$0xf]
    %v94 = vld [vmem:[#allocation2 + $0x64] sm:$0xf]
    %v95 = vld [vmem:[#allocation2 + $0x68] sm:$0xf]
    %v96 = vld [vmem:[#allocation2 + $0x6c] sm:$0xf]
    %v97 = vld [vmem:[#allocation2 + $0x70] sm:$0xf]
    %v98 = vld [vmem:[#allocation2 + $0x74] sm:$0xf]
    %v99 = vld [vmem:[#allocation2 + $0x78] sm:$0xf]
    %v100 = vld [vmem:[#allocation2 + $0x7c] sm:$0xf]
    %v101 = vld [vmem:[#allocation2 + $0x80] sm:$0xf]
    %v102 = vld [vmem:[#allocation2 + $0x84] sm:$0xf]
    %v103 = vld [vmem:[#allocation2 + $0x88] sm:$0xf]
    %v104 = vld [vmem:[#allocation2 + $0x8c] sm:$0xf]
    %v105 = vld [vmem:[#allocation2 + $0x90] sm:$0xf]
    %v106 = vld [vmem:[#allocation2 + $0x94] sm:$0xf]
    %v107 = vld [vmem:[#allocation2 + $0x98] sm:$0xf]
    %v108 = vld [vmem:[#allocation2 + $0x9c] sm:$0xf]
    %v109 = vld [vmem:[#allocation2 + $0xa0] sm:$0xf]
    %v110 = vld [vmem:[#allocation2 + $0xa4] sm:$0xf]
    %v111 = vld [vmem:[#allocation2 + $0xa8] sm:$0xf]
    %v112 = vld [vmem:[#allocation2 + $0xac] sm:$0xf]
    %v113 = vld [vmem:[#allocation2 + $0xb0] sm:$0xf]
    %v114 = vld [vmem:[#allocation2 + $0xb4] sm:$0xf]
    %v115 = vld [vmem:[#allocation2 + $0xb8] sm:$0xf]
    %v116 = vld [vmem:[#allocation2 + $0xbc] sm:$0xf]
    %v117 = vld [vmem:[#allocation2 + $0xc0] sm:$0xf]
    %v118 = vld [vmem:[#allocation2 + $0xc4] sm:$0xf]
    %v119 = vld [vmem:[#allocation2 + $0xc8] sm:$0xf]
    %v120 = vld [vmem:[#allocation2 + $0xcc] sm:$0xf]
    %v121 = vld [vmem:[#allocation2 + $0xd0] sm:$0xf]
    %v122 = vld [vmem:[#allocation2 + $0xd4] sm:$0xf]
    %v123 = vld [vmem:[#allocation2 + $0xd8] sm:$0xf]
    %v124 = vld [vmem:[#allocation2 + $0xdc] sm:$0xf]
    %v125 = vld [vmem:[#allocation2 + $0xe0] sm:$0xf]
    %v126 = vld [vmem:[#allocation2 + $0xe4] sm:$0xf]
    %v127 = vld [vmem:[#allocation2 + $0xe8] sm:$0xf]
    %v128 = vld [vmem:[#allocation2 + $0xec] sm:$0xf]
    %v129 = vld [vmem:[#allocation2 + $0xf0] sm:$0xf]
    %v130 = vld [vmem:[#allocation2 + $0xf4] sm:$0xf]
    %v131 = vld [vmem:[#allocation2 + $0xf8] sm:$0xf]
    %v132 = vld [vmem:[#allocation2 + $0xfc] sm:$0xf]
    %v133 = vunpack.c.l.bf16 %v69
    %v134 = vunpack.c.l.bf16 %v70
    %v135 = vunpack.c.l.bf16 %v71
    %v136 = vunpack.c.l.bf16 %v72
    %v137 = vunpack.c.l.bf16 %v73
    %v138 = vunpack.c.l.bf16 %v74
    %v139 = vunpack.c.l.bf16 %v75
    %v140 = vunpack.c.l.bf16 %v76
    %v141 = vunpack.c.l.bf16 %v77
    %v142 = vunpack.c.l.bf16 %v78
    %v143 = vunpack.c.l.bf16 %v79
    %v144 = vunpack.c.l.bf16 %v80
    %v145 = vunpack.c.l.bf16 %v81
    %v146 = vunpack.c.l.bf16 %v82
    %v147 = vunpack.c.l.bf16 %v83
    %v148 = vunpack.c.l.bf16 %v84
    %v149 = vunpack.c.l.bf16 %v85
    %v150 = vunpack.c.l.bf16 %v86
    %v151 = vunpack.c.l.bf16 %v87
    %v152 = vunpack.c.l.bf16 %v88
    %v153 = vunpack.c.l.bf16 %v89
    %v154 = vunpack.c.l.bf16 %v90
    %v155 = vunpack.c.l.bf16 %v91
    %v156 = vunpack.c.l.bf16 %v92
    %v157 = vunpack.c.l.bf16 %v93
    %v158 = vunpack.c.l.bf16 %v94
    %v159 = vunpack.c.l.bf16 %v95
    %v160 = vunpack.c.l.bf16 %v96
    %v161 = vunpack.c.l.bf16 %v97
    %v162 = vunpack.c.l.bf16 %v98
    %v163 = vunpack.c.l.bf16 %v99
    %v164 = vunpack.c.l.bf16 %v100
    %v165 = vunpack.c.l.bf16 %v101
    %v166 = vunpack.c.l.bf16 %v102
    %v167 = vunpack.c.l.bf16 %v103
    %v168 = vunpack.c.l.bf16 %v104
    %v169 = vunpack.c.l.bf16 %v105
    %v170 = vunpack.c.l.bf16 %v106
    %v171 = vunpack.c.l.bf16 %v107
    %v172 = vunpack.c.l.bf16 %v108
    %v173 = vunpack.c.l.bf16 %v109
    %v174 = vunpack.c.l.bf16 %v110
    %v175 = vunpack.c.l.bf16 %v111
    %v176 = vunpack.c.l.bf16 %v112
    %v177 = vunpack.c.l.bf16 %v113
    %v178 = vunpack.c.l.bf16 %v114
    %v179 = vunpack.c.l.bf16 %v115
    %v180 = vunpack.c.l.bf16 %v116
    %v181 = vunpack.c.l.bf16 %v117
    %v182 = vunpack.c.l.bf16 %v118
    %v183 = vunpack.c.l.bf16 %v119
    %v184 = vunpack.c.l.bf16 %v120
    %v185 = vunpack.c.l.bf16 %v121
    %v186 = vunpack.c.l.bf16 %v122
    %v187 = vunpack.c.l.bf16 %v123
    %v188 = vunpack.c.l.bf16 %v124
    %v189 = vunpack.c.l.bf16 %v125
    %v190 = vunpack.c.l.bf16 %v126
    %v191 = vunpack.c.l.bf16 %v127
    %v192 = vunpack.c.l.bf16 %v128
    %v193 = vunpack.c.l.bf16 %v129
    %v194 = vunpack.c.l.bf16 %v130
    %v195 = vunpack.c.l.bf16 %v131
    %v196 = vunpack.c.l.bf16 %v132
    %v197 = vld [vmem:[#allocation7] sm:$0x1]
    %v199 = vlaneseq
    %v200 = vshrl.u32 %v199, 7
    %v201 = vsub.s32 0, %v200
    %v202 = vrot.slane %v197, %v201
    %v204 = vmul.f32 %v133, %v202
    %v205 = vmul.f32 %v134, %v202
    %v206 = vmul.f32 %v135, %v202
    %v207 = vmul.f32 %v136, %v202
    %v208 = vmul.f32 %v137, %v202
    %v209 = vmul.f32 %v138, %v202
    %v210 = vmul.f32 %v139, %v202
    %v211 = vmul.f32 %v140, %v202
    %v212 = vmul.f32 %v141, %v202
    %v213 = vmul.f32 %v142, %v202
    %v214 = vmul.f32 %v143, %v202
    %v215 = vmul.f32 %v144, %v202
    %v216 = vmul.f32 %v145, %v202
    %v217 = vmul.f32 %v146, %v202
    %v218 = vmul.f32 %v147, %v202
    %v219 = vmul.f32 %v148, %v202
    %v220 = vmul.f32 %v149, %v202
    %v221 = vmul.f32 %v150, %v202
    %v222 = vmul.f32 %v151, %v202
    %v223 = vmul.f32 %v152, %v202
    %v224 = vmul.f32 %v153, %v202
    %v225 = vmul.f32 %v154, %v202
    %v226 = vmul.f32 %v155, %v202
    %v227 = vmul.f32 %v156, %v202
    %v228 = vmul.f32 %v157, %v202
    %v229 = vmul.f32 %v158, %v202
    %v230 = vmul.f32 %v159, %v202
    %v231 = vmul.f32 %v160, %v202
    %v232 = vmul.f32 %v161, %v202
    %v233 = vmul.f32 %v162, %v202
    %v234 = vmul.f32 %v163, %v202
    %v235 = vmul.f32 %v164, %v202
    %v236 = vmul.f32 %v165, %v202
    %v237 = vmul.f32 %v166, %v202
    %v238 = vmul.f32 %v167, %v202
    %v239 = vmul.f32 %v168, %v202
    %v240 = vmul.f32 %v169, %v202
    %v241 = vmul.f32 %v170, %v202
    %v242 = vmul.f32 %v171, %v202
    %v243 = vmul.f32 %v172, %v202
    %v244 = vmul.f32 %v173, %v202
    %v245 = vmul.f32 %v174, %v202
    %v246 = vmul.f32 %v175, %v202
    %v247 = vmul.f32 %v176, %v202
    %v248 = vmul.f32 %v177, %v202
    %v249 = vmul.f32 %v178, %v202
    %v250 = vmul.f32 %v179, %v202
    %v251 = vmul.f32 %v180, %v202
    %v252 = vmul.f32 %v181, %v202
    %v253 = vmul.f32 %v182, %v202
    %v254 = vmul.f32 %v183, %v202
    %v255 = vmul.f32 %v184, %v202
    %v256 = vmul.f32 %v185, %v202
    %v257 = vmul.f32 %v186, %v202
    %v258 = vmul.f32 %v187, %v202
    %v259 = vmul.f32 %v188, %v202
    %v260 = vmul.f32 %v189, %v202
    %v261 = vmul.f32 %v190, %v202
    %v262 = vmul.f32 %v191, %v202
    %v263 = vmul.f32 %v192, %v202
    %v264 = vmul.f32 %v193, %v202
    %v265 = vmul.f32 %v194, %v202
    %v266 = vmul.f32 %v195, %v202
    %v267 = vmul.f32 %v196, %v202
    %v268 = vld [vmem:[#allocation8] sm:$0x1]
    %v270 = vlaneseq
    %v271 = vshrl.u32 %v270, 7
    %v272 = vsub.s32 0, %v271
    %v273 = vrot.slane %v268, %v272
    %v275 = vadd.f32 %v204, %v273
    %v276 = vadd.f32 %v205, %v273
    %v277 = vadd.f32 %v206, %v273
    %v278 = vadd.f32 %v207, %v273
    %v279 = vadd.f32 %v208, %v273
    %v280 = vadd.f32 %v209, %v273
    %v281 = vadd.f32 %v210, %v273
    %v282 = vadd.f32 %v211, %v273
    %v283 = vadd.f32 %v212, %v273
    %v284 = vadd.f32 %v213, %v273
    %v285 = vadd.f32 %v214, %v273
    %v286 = vadd.f32 %v215, %v273
    %v287 = vadd.f32 %v216, %v273
    %v288 = vadd.f32 %v217, %v273
    %v289 = vadd.f32 %v218, %v273
    %v290 = vadd.f32 %v219, %v273
    %v291 = vadd.f32 %v220, %v273
    %v292 = vadd.f32 %v221, %v273
    %v293 = vadd.f32 %v222, %v273
    %v294 = vadd.f32 %v223, %v273
    %v295 = vadd.f32 %v224, %v273
    %v296 = vadd.f32 %v225, %v273
    %v297 = vadd.f32 %v226, %v273
    %v298 = vadd.f32 %v227, %v273
    %v299 = vadd.f32 %v228, %v273
    %v300 = vadd.f32 %v229, %v273
    %v301 = vadd.f32 %v230, %v273
    %v302 = vadd.f32 %v231, %v273
    %v303 = vadd.f32 %v232, %v273
    %v304 = vadd.f32 %v233, %v273
    %v305 = vadd.f32 %v234, %v273
    %v306 = vadd.f32 %v235, %v273
    %v307 = vadd.f32 %v236, %v273
    %v308 = vadd.f32 %v237, %v273
    %v309 = vadd.f32 %v238, %v273
    %v310 = vadd.f32 %v239, %v273
    %v311 = vadd.f32 %v240, %v273
    %v312 = vadd.f32 %v241, %v273
    %v313 = vadd.f32 %v242, %v273
    %v314 = vadd.f32 %v243, %v273
    %v315 = vadd.f32 %v244, %v273
    %v316 = vadd.f32 %v245, %v273
    %v317 = vadd.f32 %v246, %v273
    %v318 = vadd.f32 %v247, %v273
    %v319 = vadd.f32 %v248, %v273
    %v320 = vadd.f32 %v249, %v273
    %v321 = vadd.f32 %v250, %v273
    %v322 = vadd.f32 %v251, %v273
    %v323 = vadd.f32 %v252, %v273
    %v324 = vadd.f32 %v253, %v273
    %v325 = vadd.f32 %v254, %v273
    %v326 = vadd.f32 %v255, %v273
    %v327 = vadd.f32 %v256, %v273
    %v328 = vadd.f32 %v257, %v273
    %v329 = vadd.f32 %v258, %v273
    %v330 = vadd.f32 %v259, %v273
    %v331 = vadd.f32 %v260, %v273
    %v332 = vadd.f32 %v261, %v273
    %v333 = vadd.f32 %v262, %v273
    %v334 = vadd.f32 %v263, %v273
    %v335 = vadd.f32 %v264, %v273
    %v336 = vadd.f32 %v265, %v273
    %v337 = vadd.f32 %v266, %v273
    %v338 = vadd.f32 %v267, %v273
    %v339 = vld [vmem:[#allocation5] sm:$0xf]
    %v340 = vld [vmem:[#allocation5 + $0x4] sm:$0xf]
    %v341 = vld [vmem:[#allocation5 + $0x8] sm:$0xf]
    %v342 = vld [vmem:[#allocation5 + $0xc] sm:$0xf]
    %v343 = vld [vmem:[#allocation5 + $0x10] sm:$0xf]
    %v344 = vld [vmem:[#allocation5 + $0x14] sm:$0xf]
    %v345 = vld [vmem:[#allocation5 + $0x18] sm:$0xf]
    %v346 = vld [vmem:[#allocation5 + $0x1c] sm:$0xf]
    %v347 = vld [vmem:[#allocation5 + $0x20] sm:$0xf]
    %v348 = vld [vmem:[#allocation5 + $0x24] sm:$0xf]
    %v349 = vld [vmem:[#allocation5 + $0x28] sm:$0xf]
    %v350 = vld [vmem:[#allocation5 + $0x2c] sm:$0xf]
    %v351 = vld [vmem:[#allocation5 + $0x30] sm:$0xf]
    %v352 = vld [vmem:[#allocation5 + $0x34] sm:$0xf]
    %v353 = vld [vmem:[#allocation5 + $0x38] sm:$0xf]
    %v354 = vld [vmem:[#allocation5 + $0x3c] sm:$0xf]
    %v355 = vld [vmem:[#allocation5 + $0x40] sm:$0xf]
    %v356 = vld [vmem:[#allocation5 + $0x44] sm:$0xf]
    %v357 = vld [vmem:[#allocation5 + $0x48] sm:$0xf]
    %v358 = vld [vmem:[#allocation5 + $0x4c] sm:$0xf]
    %v359 = vld [vmem:[#allocation5 + $0x50] sm:$0xf]
    %v360 = vld [vmem:[#allocation5 + $0x54] sm:$0xf]
    %v361 = vld [vmem:[#allocation5 + $0x58] sm:$0xf]
    %v362 = vld [vmem:[#allocation5 + $0x5c] sm:$0xf]
    %v363 = vld [vmem:[#allocation5 + $0x60] sm:$0xf]
    %v364 = vld [vmem:[#allocation5 + $0x64] sm:$0xf]
    %v365 = vld [vmem:[#allocation5 + $0x68] sm:$0xf]
    %v366 = vld [vmem:[#allocation5 + $0x6c] sm:$0xf]
    %v367 = vld [vmem:[#allocation5 + $0x70] sm:$0xf]
    %v368 = vld [vmem:[#allocation5 + $0x74] sm:$0xf]
    %v369 = vld [vmem:[#allocation5 + $0x78] sm:$0xf]
    %v370 = vld [vmem:[#allocation5 + $0x7c] sm:$0xf]
    %v371 = vld [vmem:[#allocation5 + $0x80] sm:$0xf]
    %v372 = vld [vmem:[#allocation5 + $0x84] sm:$0xf]
    %v373 = vld [vmem:[#allocation5 + $0x88] sm:$0xf]
    %v374 = vld [vmem:[#allocation5 + $0x8c] sm:$0xf]
    %v375 = vld [vmem:[#allocation5 + $0x90] sm:$0xf]
    %v376 = vld [vmem:[#allocation5 + $0x94] sm:$0xf]
    %v377 = vld [vmem:[#allocation5 + $0x98] sm:$0xf]
    %v378 = vld [vmem:[#allocation5 + $0x9c] sm:$0xf]
    %v379 = vld [vmem:[#allocation5 + $0xa0] sm:$0xf]
    %v380 = vld [vmem:[#allocation5 + $0xa4] sm:$0xf]
    %v381 = vld [vmem:[#allocation5 + $0xa8] sm:$0xf]
    %v382 = vld [vmem:[#allocation5 + $0xac] sm:$0xf]
    %v383 = vld [vmem:[#allocation5 + $0xb0] sm:$0xf]
    %v384 = vld [vmem:[#allocation5 + $0xb4] sm:$0xf]
    %v385 = vld [vmem:[#allocation5 + $0xb8] sm:$0xf]
    %v386 = vld [vmem:[#allocation5 + $0xbc] sm:$0xf]
    %v387 = vld [vmem:[#allocation5 + $0xc0] sm:$0xf]
    %v388 = vld [vmem:[#allocation5 + $0xc4] sm:$0xf]
    %v389 = vld [vmem:[#allocation5 + $0xc8] sm:$0xf]
    %v390 = vld [vmem:[#allocation5 + $0xcc] sm:$0xf]
    %v391 = vld [vmem:[#allocation5 + $0xd0] sm:$0xf]
    %v392 = vld [vmem:[#allocation5 + $0xd4] sm:$0xf]
    %v393 = vld [vmem:[#allocation5 + $0xd8] sm:$0xf]
    %v394 = vld [vmem:[#allocation5 + $0xdc] sm:$0xf]
    %v395 = vld [vmem:[#allocation5 + $0xe0] sm:$0xf]
    %v396 = vld [vmem:[#allocation5 + $0xe4] sm:$0xf]
    %v397 = vld [vmem:[#allocation5 + $0xe8] sm:$0xf]
    %v398 = vld [vmem:[#allocation5 + $0xec] sm:$0xf]
    %v399 = vld [vmem:[#allocation5 + $0xf0] sm:$0xf]
    %v400 = vld [vmem:[#allocation5 + $0xf4] sm:$0xf]
    %v401 = vld [vmem:[#allocation5 + $0xf8] sm:$0xf]
    %v402 = vld [vmem:[#allocation5 + $0xfc] sm:$0xf]
    %v403 = vunpack.c.l.bf16 %v339
    %v404 = vunpack.c.l.bf16 %v340
    %v405 = vunpack.c.l.bf16 %v341
    %v406 = vunpack.c.l.bf16 %v342
    %v407 = vunpack.c.l.bf16 %v343
    %v408 = vunpack.c.l.bf16 %v344
    %v409 = vunpack.c.l.bf16 %v345
    %v410 = vunpack.c.l.bf16 %v346
    %v411 = vunpack.c.l.bf16 %v347
    %v412 = vunpack.c.l.bf16 %v348
    %v413 = vunpack.c.l.bf16 %v349
    %v414 = vunpack.c.l.bf16 %v350
    %v415 = vunpack.c.l.bf16 %v351
    %v416 = vunpack.c.l.bf16 %v352
    %v417 = vunpack.c.l.bf16 %v353
    %v418 = vunpack.c.l.bf16 %v354
    %v419 = vunpack.c.l.bf16 %v355
    %v420 = vunpack.c.l.bf16 %v356
    %v421 = vunpack.c.l.bf16 %v357
    %v422 = vunpack.c.l.bf16 %v358
    %v423 = vunpack.c.l.bf16 %v359
    %v424 = vunpack.c.l.bf16 %v360
    %v425 = vunpack.c.l.bf16 %v361
    %v426 = vunpack.c.l.bf16 %v362
    %v427 = vunpack.c.l.bf16 %v363
    %v428 = vunpack.c.l.bf16 %v364
    %v429 = vunpack.c.l.bf16 %v365
    %v430 = vunpack.c.l.bf16 %v366
    %v431 = vunpack.c.l.bf16 %v367
    %v432 = vunpack.c.l.bf16 %v368
    %v433 = vunpack.c.l.bf16 %v369
    %v434 = vunpack.c.l.bf16 %v370
    %v435 = vunpack.c.l.bf16 %v371
    %v436 = vunpack.c.l.bf16 %v372
    %v437 = vunpack.c.l.bf16 %v373
    %v438 = vunpack.c.l.bf16 %v374
    %v439 = vunpack.c.l.bf16 %v375
    %v440 = vunpack.c.l.bf16 %v376
    %v441 = vunpack.c.l.bf16 %v377
    %v442 = vunpack.c.l.bf16 %v378
    %v443 = vunpack.c.l.bf16 %v379
    %v444 = vunpack.c.l.bf16 %v380
    %v445 = vunpack.c.l.bf16 %v381
    %v446 = vunpack.c.l.bf16 %v382
    %v447 = vunpack.c.l.bf16 %v383
    %v448 = vunpack.c.l.bf16 %v384
    %v449 = vunpack.c.l.bf16 %v385
    %v450 = vunpack.c.l.bf16 %v386
    %v451 = vunpack.c.l.bf16 %v387
    %v452 = vunpack.c.l.bf16 %v388
    %v453 = vunpack.c.l.bf16 %v389
    %v454 = vunpack.c.l.bf16 %v390
    %v455 = vunpack.c.l.bf16 %v391
    %v456 = vunpack.c.l.bf16 %v392
    %v457 = vunpack.c.l.bf16 %v393
    %v458 = vunpack.c.l.bf16 %v394
    %v459 = vunpack.c.l.bf16 %v395
    %v460 = vunpack.c.l.bf16 %v396
    %v461 = vunpack.c.l.bf16 %v397
    %v462 = vunpack.c.l.bf16 %v398
    %v463 = vunpack.c.l.bf16 %v399
    %v464 = vunpack.c.l.bf16 %v400
    %v465 = vunpack.c.l.bf16 %v401
    %v466 = vunpack.c.l.bf16 %v402
    %v467 = vadd.f32 %v275, %v403
    %v468 = vadd.f32 %v276, %v404
    %v469 = vadd.f32 %v277, %v405
    %v470 = vadd.f32 %v278, %v406
    %v471 = vadd.f32 %v279, %v407
    %v472 = vadd.f32 %v280, %v408
    %v473 = vadd.f32 %v281, %v409
    %v474 = vadd.f32 %v282, %v410
    %v475 = vadd.f32 %v283, %v411
    %v476 = vadd.f32 %v284, %v412
    %v477 = vadd.f32 %v285, %v413
    %v478 = vadd.f32 %v286, %v414
    %v479 = vadd.f32 %v287, %v415
    %v480 = vadd.f32 %v288, %v416
    %v481 = vadd.f32 %v289, %v417
    %v482 = vadd.f32 %v290, %v418
    %v483 = vadd.f32 %v291, %v419
    %v484 = vadd.f32 %v292, %v420
    %v485 = vadd.f32 %v293, %v421
    %v486 = vadd.f32 %v294, %v422
    %v487 = vadd.f32 %v295, %v423
    %v488 = vadd.f32 %v296, %v424
    %v489 = vadd.f32 %v297, %v425
    %v490 = vadd.f32 %v298, %v426
    %v491 = vadd.f32 %v299, %v427
    %v492 = vadd.f32 %v300, %v428
    %v493 = vadd.f32 %v301, %v429
    %v494 = vadd.f32 %v302, %v430
    %v495 = vadd.f32 %v303, %v431
    %v496 = vadd.f32 %v304, %v432
    %v497 = vadd.f32 %v305, %v433
    %v498 = vadd.f32 %v306, %v434
    %v499 = vadd.f32 %v307, %v435
    %v500 = vadd.f32 %v308, %v436
    %v501 = vadd.f32 %v309, %v437
    %v502 = vadd.f32 %v310, %v438
    %v503 = vadd.f32 %v311, %v439
    %v504 = vadd.f32 %v312, %v440
    %v505 = vadd.f32 %v313, %v441
    %v506 = vadd.f32 %v314, %v442
    %v507 = vadd.f32 %v315, %v443
    %v508 = vadd.f32 %v316, %v444
    %v509 = vadd.f32 %v317, %v445
    %v510 = vadd.f32 %v318, %v446
    %v511 = vadd.f32 %v319, %v447
    %v512 = vadd.f32 %v320, %v448
    %v513 = vadd.f32 %v321, %v449
    %v514 = vadd.f32 %v322, %v450
    %v515 = vadd.f32 %v323, %v451
    %v516 = vadd.f32 %v324, %v452
    %v517 = vadd.f32 %v325, %v453
    %v518 = vadd.f32 %v326, %v454
    %v519 = vadd.f32 %v327, %v455
    %v520 = vadd.f32 %v328, %v456
    %v521 = vadd.f32 %v329, %v457
    %v522 = vadd.f32 %v330, %v458
    %v523 = vadd.f32 %v331, %v459
    %v524 = vadd.f32 %v332, %v460
    %v525 = vadd.f32 %v333, %v461
    %v526 = vadd.f32 %v334, %v462
    %v527 = vadd.f32 %v335, %v463
    %v528 = vadd.f32 %v336, %v464
    %v529 = vadd.f32 %v337, %v465
    %v530 = vadd.f32 %v338, %v466
    %v531 = vmax.f32 %v467, 0.0
    %v532 = vmax.f32 %v468, 0.0
    %v533 = vmax.f32 %v469, 0.0
    %v534 = vmax.f32 %v470, 0.0
    %v535 = vmax.f32 %v471, 0.0
    %v536 = vmax.f32 %v472, 0.0
    %v537 = vmax.f32 %v473, 0.0
    %v538 = vmax.f32 %v474, 0.0
    %v539 = vmax.f32 %v475, 0.0
    %v540 = vmax.f32 %v476, 0.0
    %v541 = vmax.f32 %v477, 0.0
    %v542 = vmax.f32 %v478, 0.0
    %v543 = vmax.f32 %v479, 0.0
    %v544 = vmax.f32 %v480, 0.0
    %v545 = vmax.f32 %v481, 0.0
    %v546 = vmax.f32 %v482, 0.0
    %v547 = vmax.f32 %v483, 0.0
    %v548 = vmax.f32 %v484, 0.0
    %v549 = vmax.f32 %v485, 0.0
    %v550 = vmax.f32 %v486, 0.0
    %v551 = vmax.f32 %v487, 0.0
    %v552 = vmax.f32 %v488, 0.0
    %v553 = vmax.f32 %v489, 0.0
    %v554 = vmax.f32 %v490, 0.0
    %v555 = vmax.f32 %v491, 0.0
    %v556 = vmax.f32 %v492, 0.0
    %v557 = vmax.f32 %v493, 0.0
    %v558 = vmax.f32 %v494, 0.0
    %v559 = vmax.f32 %v495, 0.0
    %v560 = vmax.f32 %v496, 0.0
    %v561 = vmax.f32 %v497, 0.0
    %v562 = vmax.f32 %v498, 0.0
    %v563 = vmax.f32 %v499, 0.0
    %v564 = vmax.f32 %v500, 0.0
    %v565 = vmax.f32 %v501, 0.0
    %v566 = vmax.f32 %v502, 0.0
    %v567 = vmax.f32 %v503, 0.0
    %v568 = vmax.f32 %v504, 0.0
    %v569 = vmax.f32 %v505, 0.0
    %v570 = vmax.f32 %v506, 0.0
    %v571 = vmax.f32 %v507, 0.0
    %v572 = vmax.f32 %v508, 0.0
    %v573 = vmax.f32 %v509, 0.0
    %v574 = vmax.f32 %v510, 0.0
    %v575 = vmax.f32 %v511, 0.0
    %v576 = vmax.f32 %v512, 0.0
    %v577 = vmax.f32 %v513, 0.0
    %v578 = vmax.f32 %v514, 0.0
    %v579 = vmax.f32 %v515, 0.0
    %v580 = vmax.f32 %v516, 0.0
    %v581 = vmax.f32 %v517, 0.0
    %v582 = vmax.f32 %v518, 0.0
    %v583 = vmax.f32 %v519, 0.0
    %v584 = vmax.f32 %v520, 0.0
    %v585 = vmax.f32 %v521, 0.0
    %v586 = vmax.f32 %v522, 0.0
    %v587 = vmax.f32 %v523, 0.0
    %v588 = vmax.f32 %v524, 0.0
    %v589 = vmax.f32 %v525, 0.0
    %v590 = vmax.f32 %v526, 0.0
    %v591 = vmax.f32 %v527, 0.0
    %v592 = vmax.f32 %v528, 0.0
    %v593 = vmax.f32 %v529, 0.0
    %v594 = vmax.f32 %v530, 0.0
    %595 = vst [vmem:[#allocation10] sm:$0xff] %v531
    %596 = vst [vmem:[#allocation10 + $0x8] sm:$0xff] %v532
    %597 = vst [vmem:[#allocation10 + $0x10] sm:$0xff] %v533
    %598 = vst [vmem:[#allocation10 + $0x18] sm:$0xff] %v534
    %599 = vst [vmem:[#allocation10 + $0x20] sm:$0xff] %v535
    %600 = vst [vmem:[#allocation10 + $0x28] sm:$0xff] %v536
    %601 = vst [vmem:[#allocation10 + $0x30] sm:$0xff] %v537
    %602 = vst [vmem:[#allocation10 + $0x38] sm:$0xff] %v538
    %603 = vst [vmem:[#allocation10 + $0x40] sm:$0xff] %v539
    %604 = vst [vmem:[#allocation10 + $0x48] sm:$0xff] %v540
    %605 = vst [vmem:[#allocation10 + $0x50] sm:$0xff] %v541
    %606 = vst [vmem:[#allocation10 + $0x58] sm:$0xff] %v542
    %607 = vst [vmem:[#allocation10 + $0x60] sm:$0xff] %v543
    %608 = vst [vmem:[#allocation10 + $0x68] sm:$0xff] %v544
    %609 = vst [vmem:[#allocation10 + $0x70] sm:$0xff] %v545
    %610 = vst [vmem:[#allocation10 + $0x78] sm:$0xff] %v546
    %611 = vst [vmem:[#allocation10 + $0x80] sm:$0xff] %v547
    %612 = vst [vmem:[#allocation10 + $0x88] sm:$0xff] %v548
    %613 = vst [vmem:[#allocation10 + $0x90] sm:$0xff] %v549
    %614 = vst [vmem:[#allocation10 + $0x98] sm:$0xff] %v550
    %615 = vst [vmem:[#allocation10 + $0xa0] sm:$0xff] %v551
    %616 = vst [vmem:[#allocation10 + $0xa8] sm:$0xff] %v552
    %617 = vst [vmem:[#allocation10 + $0xb0] sm:$0xff] %v553
    %618 = vst [vmem:[#allocation10 + $0xb8] sm:$0xff] %v554
    %619 = vst [vmem:[#allocation10 + $0xc0] sm:$0xff] %v555
    %620 = vst [vmem:[#allocation10 + $0xc8] sm:$0xff] %v556
    %621 = vst [vmem:[#allocation10 + $0xd0] sm:$0xff] %v557
    %622 = vst [vmem:[#allocation10 + $0xd8] sm:$0xff] %v558
    %623 = vst [vmem:[#allocation10 + $0xe0] sm:$0xff] %v559
    %624 = vst [vmem:[#allocation10 + $0xe8] sm:$0xff] %v560
    %625 = vst [vmem:[#allocation10 + $0xf0] sm:$0xff] %v561
    %626 = vst [vmem:[#allocation10 + $0xf8] sm:$0xff] %v562
    %627 = vst [vmem:[#allocation10 + $0x100] sm:$0xff] %v563
    %628 = vst [vmem:[#allocation10 + $0x108] sm:$0xff] %v564
    %629 = vst [vmem:[#allocation10 + $0x110] sm:$0xff] %v565
    %630 = vst [vmem:[#allocation10 + $0x118] sm:$0xff] %v566
    %631 = vst [vmem:[#allocation10 + $0x120] sm:$0xff] %v567
    %632 = vst [vmem:[#allocation10 + $0x128] sm:$0xff] %v568
    %633 = vst [vmem:[#allocation10 + $0x130] sm:$0xff] %v569
    %634 = vst [vmem:[#allocation10 + $0x138] sm:$0xff] %v570
    %635 = vst [vmem:[#allocation10 + $0x140] sm:$0xff] %v571
    %636 = vst [vmem:[#allocation10 + $0x148] sm:$0xff] %v572
    %637 = vst [vmem:[#allocation10 + $0x150] sm:$0xff] %v573
    %638 = vst [vmem:[#allocation10 + $0x158] sm:$0xff] %v574
    %639 = vst [vmem:[#allocation10 + $0x160] sm:$0xff] %v575
    %640 = vst [vmem:[#allocation10 + $0x168] sm:$0xff] %v576
    %641 = vst [vmem:[#allocation10 + $0x170] sm:$0xff] %v577
    %642 = vst [vmem:[#allocation10 + $0x178] sm:$0xff] %v578
    %643 = vst [vmem:[#allocation10 + $0x180] sm:$0xff] %v579
    %644 = vst [vmem:[#allocation10 + $0x188] sm:$0xff] %v580
    %645 = vst [vmem:[#allocation10 + $0x190] sm:$0xff] %v581
    %646 = vst [vmem:[#allocation10 + $0x198] sm:$0xff] %v582
    %647 = vst [vmem:[#allocation10 + $0x1a0] sm:$0xff] %v583
    %648 = vst [vmem:[#allocation10 + $0x1a8] sm:$0xff] %v584
    %649 = vst [vmem:[#allocation10 + $0x1b0] sm:$0xff] %v585
    %650 = vst [vmem:[#allocation10 + $0x1b8] sm:$0xff] %v586
    %651 = vst [vmem:[#allocation10 + $0x1c0] sm:$0xff] %v587
    %652 = vst [vmem:[#allocation10 + $0x1c8] sm:$0xff] %v588
    %653 = vst [vmem:[#allocation10 + $0x1d0] sm:$0xff] %v589
    %654 = vst [vmem:[#allocation10 + $0x1d8] sm:$0xff] %v590
    %655 = vst [vmem:[#allocation10 + $0x1e0] sm:$0xff] %v591
    %656 = vst [vmem:[#allocation10 + $0x1e8] sm:$0xff] %v592
    %657 = vst [vmem:[#allocation10 + $0x1f0] sm:$0xff] %v593
    %658 = vst [vmem:[#allocation10 + $0x1f8] sm:$0xff] %v594
    // Predicated region
    $region34: #{bottleneck_block.7} parent=1 // pred_check
      _
    $region35: #{bottleneck_block.7} parent=1 // pred_check_branch
      %660 = sbr.rel (0) target = $region37
    $region36: #{bottleneck_block.7} parent=1 // pred_region
      %s662 = ssub.s32 8192, 8192
      %663 = vsyncadd [#allocation4], %s662
      %s664 = sshll.u32 [#allocation10], 4
      %s665 = int_to_ptr.vmem [resolvable:$true] %s664
      %670 = dma.vmem_to_hbm [thread:$0]  %s665, 8192, %s4, [#allocation4], 128, 128, 8
    $region37: #{bottleneck_block.7} parent=1 // pred_fallthru
      _
    // Predicated region
    $region38: #{bottleneck_block.7} parent=1 // pred_check
      _
    $region39: #{bottleneck_block.7} parent=1 // pred_check_branch
      %672 = sbr.rel (0) target = $region41
    $region40: #{bottleneck_block.7} parent=1 // pred_region
      %673 = dma.done [#allocation4], 8192
    $region41: #{bottleneck_block.7} parent=1 // pred_fallthru
      _
    %674 = vsyncpa [#allocation3], 1
    %675 = vsyncpa [#allocation6], 1
    %676 = vsyncpa [#allocation9], 1
    %677 = vsyncpa [#allocation4], 1

// kernel: bottleneck_block.5
$region0: #{bottleneck_block.5}
  #allocation0 [shape = 'u32[]', space=smem, size = 0x4, offset = 0x4, fixed_abs, tag = 'smem constant byte address 0x4 - core index']
  #allocation1 [shape = 'u32[144,128]{1,0:T(1,128)}', space=vmem, size = 0x12000, scoped, tag = 'internal scratch']
  #allocation2 [shape = 'bf16[18,16,384]{2,1,0:T(16,128)(2,1)}', space=vmem, size = 0x36000, scoped, tag = 'scratch operand']
  %s0 = inlined_call_operand.hbm [shape: bf16[2,256,128], index: 0, kind: input, shape index: {}]
  %s1 = inlined_call_operand.hbm [shape: f32[1,128], index: 1, kind: input, shape index: {}]
  %s2 = inlined_call_operand.hbm [shape: f32[1,128], index: 2, kind: input, shape index: {}]
  %s3 = inlined_call_operand.hbm [shape: bf16[1152,128], index: 3, kind: input, shape index: {}]
  %s4 = inlined_call_operand.hbm [shape: bf16[2,256,128], index: 4, kind: output, shape index: {0}]
  %s5 = inlined_call_operand.hbm [shape: f32[2,2,128], index: 5, kind: output, shape index: {1}]
  %6 = xla_tuple %s4, %s5
  %s7 = sld [smem:[#allocation0]]
  $region73: #{bottleneck_block.5} parent=0
    _
  %s9 = ssub.s32 1, %s7
  %s10 = scalar_select 0, %s9, %s7
  $region1: #{bottleneck_block.5} parent=0
    #allocation3 [shape = 'u8[131072]{0}', space=vmem, size = 0x20000, scoped, tag = 'input window, operand 0']
    #allocation4 [shape = 's32[2]{0}', space=sflag, size = 0x8, scoped, tag = 'scoped memory for bottleneck_block.5']
    #allocation5 [shape = 's32[2]{0}', space=sflag, size = 0x8, scoped, tag = 'scoped memory for bottleneck_block.5']
    #allocation6 [shape = 'u8[512]{0}', space=vmem, size = 0x400, scoped, tag = 'input window, operand 1, single buffered']
    #allocation7 [shape = 's32[1]{0}', space=sflag, size = 0x4, scoped, tag = 'scoped memory for bottleneck_block.5']
    #allocation8 [shape = 'u8[512]{0}', space=vmem, size = 0x400, scoped, tag = 'input window, operand 2, single buffered']
    #allocation9 [shape = 'u8[294912]{0}', space=vmem, size = 0x48000, scoped, tag = 'input window, operand 3, single buffered']
    #allocation10 [shape = 's32[1]{0}', space=sflag, size = 0x4, scoped, tag = 'scoped memory for bottleneck_block.5']
    #allocation11 [shape = 'u8[131072]{0}', space=vmem, size = 0x20000, scoped, tag = 'output window, operand 0']
    #allocation12 [shape = 'u8[2048]{0}', space=vmem, size = 0x800, scoped, tag = 'output window, operand 1']
    #allocation13 [shape = 's32[2]{0}', space=sflag, size = 0x8, scoped, tag = 'scoped memory for bottleneck_block.5']
    %11 = vsyncpa [#allocation4], 0
    %s12 = scalar_lea.sflag [#allocation4], 1
    %13 = vsyncpa %s12, 0
    %14 = vsyncpa [#allocation7], 0
    %15 = vsyncpa [#allocation10], 0
    %16 = vsyncpa [#allocation5], 0
    %s17 = scalar_lea.sflag [#allocation5], 1
    %18 = vsyncpa %s17, 0
    %19 = vsyncpa [#allocation13], 0
    %s20 = scalar_lea.sflag [#allocation13], 1
    %21 = vsyncpa %s20, 0
    loop: start=0, step=1, limit=4
    $region2: #{bottleneck_block.5} parent=1 // loop_pre_header
      _
    $region3: #{bottleneck_block.5} parent=1 // loop_header
      %s23 = sphi 0, %s27
      %p24 = scmp.ge.s32.totalorder %s23, 4
      %s33 = sphi 0, %s35
      %s36 = sphi 0, %s33
      %s37 = sphi 0, %s36
      %s53 = sphi 0, %s37
      %s57 = sphi 0, %s57
      %s59 = sphi 0, %s57
      %s60 = sphi 0, %s59
      %s74 = sphi 0, %s60
      %s78 = sphi 0, %s78
      %s80 = sphi 0, %s78
      %s81 = sphi 0, %s80
      %s95 = sphi 0, %s81
      %s99 = sphi 0, %s99
      %s101 = sphi 0, %s99
      %s102 = sphi 0, %s101
      %s116 = sphi 0, %s102
      %s122 = sphi 0, %s124
      %s125 = sphi 0, %s122
      %s126 = sphi 0, %s125
      %s142 = sphi 0, %s126
      %s148 = sphi 0, %s150
      %s151 = sphi 0, %s148
      %s152 = sphi 0, %s151
      %s168 = sphi 0, %s152
    $region4: #{bottleneck_block.5} parent=1 // loop_header_branch
      %26 = sbr.rel (%p24) target = $region8
    $region5: #{bottleneck_block.5} parent=1 // loop_body
      %s28 = ssub.s32 %s23, 1
      %s29 = ssub.s32 %s23, 2
      %s30 = sadd.s32 %s23, 1
      %s31 = ssub.s32 %s23, %s30
      %p32 = scmp.eq.s32.totalorder %s31, 0
      %s34 = sadd.s32 %s33, 1
      %s35 = scalar_select %p32, %s33, %s34
      %p38 = pneg %p32
      %p39 = scmp.eq.s32.totalorder %s23, 1
      %p40 = por %p38, %p39
      %p41 = scmp.ne.s32.totalorder %s33, %s36
      %p42 = scmp.eq.s32.totalorder %s23, 0
      %p43 = por %p41, %p42
      %p44 = scmp.ne.s32.totalorder %s33, %s36
      %p45 = scmp.eq.s32.totalorder %s28, 1
      %p46 = por %p44, %p45
      %p47 = scmp.ne.s32.totalorder %s36, %s37
      %p48 = scmp.eq.s32.totalorder %s28, 0
      %p49 = por %p47, %p48
      %p50 = scmp.ne.s32.totalorder %s36, %s37
      %p51 = scmp.eq.s32.totalorder %s29, 1
      %p52 = por %p50, %p51
      %p54 = scmp.ne.s32.totalorder %s37, %s53
      %p55 = scmp.eq.s32.totalorder %s29, 0
      %p56 = por %p54, %p55
      %s58 = sadd.s32 %s57, 1
      %p61 = scmp.eq.s32.totalorder %s23, 1
      %p62 = scmp.ne.s32.totalorder %s57, %s59
      %p63 = scmp.eq.s32.totalorder %s23, 0
      %p64 = por %p62, %p63
      %p65 = scmp.ne.s32.totalorder %s57, %s59
      %p66 = scmp.eq.s32.totalorder %s28, 1
      %p67 = por %p65, %p66
      %p68 = scmp.ne.s32.totalorder %s59, %s60
      %p69 = scmp.eq.s32.totalorder %s28, 0
      %p70 = por %p68, %p69
      %p71 = scmp.ne.s32.totalorder %s59, %s60
      %p72 = scmp.eq.s32.totalorder %s29, 1
      %p73 = por %p71, %p72
      %p75 = scmp.ne.s32.totalorder %s60, %s74
      %p76 = scmp.eq.s32.totalorder %s29, 0
      %p77 = por %p75, %p76
      %s79 = sadd.s32 %s78, 1
      %p82 = scmp.eq.s32.totalorder %s23, 1
      %p83 = scmp.ne.s32.totalorder %s78, %s80
      %p84 = scmp.eq.s32.totalorder %s23, 0
      %p85 = por %p83, %p84
      %p86 = scmp.ne.s32.totalorder %s78, %s80
      %p87 = scmp.eq.s32.totalorder %s28, 1
      %p88 = por %p86, %p87
      %p89 = scmp.ne.s32.totalorder %s80, %s81
      %p90 = scmp.eq.s32.totalorder %s28, 0
      %p91 = por %p89, %p90
      %p92 = scmp.ne.s32.totalorder %s80, %s81
      %p93 = scmp.eq.s32.totalorder %s29, 1
      %p94 = por %p92, %p93
      %p96 = scmp.ne.s32.totalorder %s81, %s95
      %p97 = scmp.eq.s32.totalorder %s29, 0
      %p98 = por %p96, %p97
      %s100 = sadd.s32 %s99, 1
      %p103 = scmp.eq.s32.totalorder %s23, 1
      %p104 = scmp.ne.s32.totalorder %s99, %s101
      %p105 = scmp.eq.s32.totalorder %s23, 0
      %p106 = por %p104, %p105
      %p107 = scmp.ne.s32.totalorder %s99, %s101
      %p108 = scmp.eq.s32.totalorder %s28, 1
      %p109 = por %p107, %p108
      %p110 = scmp.ne.s32.totalorder %s101, %s102
      %p111 = scmp.eq.s32.totalorder %s28, 0
      %p112 = por %p110, %p111
      %p113 = scmp.ne.s32.totalorder %s101, %s102
      %p114 = scmp.eq.s32.totalorder %s29, 1
      %p115 = por %p113, %p114
      %p117 = scmp.ne.s32.totalorder %s102, %s116
      %p118 = scmp.eq.s32.totalorder %s29, 0
      %p119 = por %p117, %p118
      %s120 = ssub.s32 %s23, %s30
      %p121 = scmp.eq.s32.totalorder %s120, 0
      %s123 = sadd.s32 %s122, 1
      %s124 = scalar_select %p121, %s122, %s123
      %p127 = pneg %p121
      %p128 = scmp.eq.s32.totalorder %s23, 1
      %p129 = por %p127, %p128
      %p130 = scmp.ne.s32.totalorder %s122, %s125
      %p131 = scmp.eq.s32.totalorder %s23, 0
      %p132 = por %p130, %p131
      %p133 = scmp.ne.s32.totalorder %s122, %s125
      %p134 = scmp.eq.s32.totalorder %s28, 1
      %p135 = por %p133, %p134
      %p136 = scmp.ne.s32.totalorder %s125, %s126
      %p137 = scmp.eq.s32.totalorder %s28, 0
      %p138 = por %p136, %p137
      %p139 = scmp.ne.s32.totalorder %s125, %s126
      %p140 = scmp.eq.s32.totalorder %s29, 1
      %p141 = por %p139, %p140
      %p143 = scmp.ne.s32.totalorder %s126, %s142
      %p144 = scmp.eq.s32.totalorder %s29, 0
      %p145 = por %p143, %p144
      %s146 = ssub.s32 %s23, %s30
      %p147 = scmp.eq.s32.totalorder %s146, 0
      %s149 = sadd.s32 %s148, 1
      %s150 = scalar_select %p147, %s148, %s149
      %p153 = pneg %p147
      %p154 = scmp.eq.s32.totalorder %s23, 1
      %p155 = por %p153, %p154
      %p156 = scmp.ne.s32.totalorder %s148, %s151
      %p157 = scmp.eq.s32.totalorder %s23, 0
      %p158 = por %p156, %p157
      %p159 = scmp.ne.s32.totalorder %s148, %s151
      %p160 = scmp.eq.s32.totalorder %s28, 1
      %p161 = por %p159, %p160
      %p162 = scmp.ne.s32.totalorder %s151, %s152
      %p163 = scmp.eq.s32.totalorder %s28, 0
      %p164 = por %p162, %p163
      %p165 = scmp.ne.s32.totalorder %s151, %s152
      %p166 = scmp.eq.s32.totalorder %s29, 1
      %p167 = por %p165, %p166
      %p169 = scmp.ne.s32.totalorder %s152, %s168
      %p170 = scmp.eq.s32.totalorder %s29, 0
      %p171 = por %p169, %p170
      %p172 = scmp.le.s32.totalorder 1, %s23
      %p173 = scmp.lt.s32.totalorder %s23, 3
      %p174 = pnand %p172, %p173
      %p175 = pneg %p174
      // Predicated region
      $region9: #{bottleneck_block.5} parent=5 // pred_check
        _
      $region10: #{bottleneck_block.5} parent=5 // pred_check_branch
        %177 = sbr.rel (%p174) target = $region12
      $region11: #{bottleneck_block.5} parent=5 // pred_region
        %s178 = ssub.s32 %s23, 1
        // Predicated region
        $region13: #{bottleneck_block.5} parent=11 // pred_check
          %p179 = pneg %p70
        $region14: #{bottleneck_block.5} parent=11 // pred_check_branch
          %181 = sbr.rel (%p179) target = $region16
        $region15: #{bottleneck_block.5} parent=11 // pred_region
          %s183 = ssub.s32 16, 16
          %184 = vsyncadd [#allocation7], %s183
          %s186 = sshll.u32 [#allocation6], 4
          %s187 = int_to_ptr.vmem [resolvable:$true] %s186
          %189 = dma.hbm_to_vmem [thread:$0]  %s1, 16, %s187, [#allocation7]
        $region16: #{bottleneck_block.5} parent=11 // pred_fallthru
          _
        // Predicated region
        $region17: #{bottleneck_block.5} parent=11 // pred_check
          %p190 = pneg %p91
        $region18: #{bottleneck_block.5} parent=11 // pred_check_branch
          %192 = sbr.rel (%p190) target = $region20
        $region19: #{bottleneck_block.5} parent=11 // pred_region
          %s194 = ssub.s32 16, 16
          %195 = vsyncadd [#allocation7], %s194
          %s197 = sshll.u32 [#allocation8], 4
          %s198 = int_to_ptr.vmem [resolvable:$true] %s197
          %200 = dma.hbm_to_vmem [thread:$0]  %s2, 16, %s198, [#allocation7]
        $region20: #{bottleneck_block.5} parent=11 // pred_fallthru
          _
        // Predicated region
        $region21: #{bottleneck_block.5} parent=11 // pred_check
          %p201 = pneg %p112
        $region22: #{bottleneck_block.5} parent=11 // pred_check_branch
          %203 = sbr.rel (%p201) target = $region24
        $region23: #{bottleneck_block.5} parent=11 // pred_region
          %s205 = ssub.s32 9216, 9216
          %206 = vsyncadd [#allocation10], %s205
          %s207 = sshll.u32 [#allocation9], 4
          %s208 = int_to_ptr.vmem [resolvable:$true] %s207
          %213 = dma.hbm_to_vmem [thread:$0]  %s3, 9216, %s208, [#allocation10], 64, 64, 4
        $region24: #{bottleneck_block.5} parent=11 // pred_fallthru
          _
      $region12: #{bottleneck_block.5} parent=5 // pred_fallthru
        _
      %p214 = scmp.lt.s32.totalorder %s23, 2
      // Predicated region
      $region25: #{bottleneck_block.5} parent=5 // pred_check
        %p215 = pneg %p214
      $region26: #{bottleneck_block.5} parent=5 // pred_check_branch
        %217 = sbr.rel (%p215) target = $region28
      $region27: #{bottleneck_block.5} parent=5 // pred_region
        // Predicated region
        $region29: #{bottleneck_block.5} parent=27 // pred_check
          %p218 = pneg %p43
        $region30: #{bottleneck_block.5} parent=27 // pred_check_branch
          %220 = sbr.rel (%p218) target = $region32
        $region31: #{bottleneck_block.5} parent=27 // pred_region
          %s221 = sand.u32 %s33, 1
          %s222 = scalar_lea.sflag [#allocation4], %s221
          %s223 = sand.u32 %s33, 1
          %s224 = smul.addr %s223, 128
          %s225 = scalar_lea.vmem [#allocation3], %s224
          %s227 = ssub.s32 2048, 2048
          %228 = vsyncadd %s222, %s227
          %s229 = smul.addr %s23, 32
          %s230 = smul.addr %s229, 64
          %s231 = scalar_lea.hbm %s0, %s230
          %s232 = sshll.u32 %s225, 4
          %s233 = int_to_ptr.vmem [resolvable:$true] %s232
          %238 = dma.hbm_to_vmem [thread:$0]  %s231, 2048, %s233, %s222, 64, 64, 4
        $region32: #{bottleneck_block.5} parent=27 // pred_fallthru
          _
      $region28: #{bottleneck_block.5} parent=5 // pred_fallthru
        _
      %p239 = scmp.le.s32.totalorder 1, %s23
      %p240 = scmp.lt.s32.totalorder %s23, 3
      %p241 = pnand %p239, %p240
      %p242 = pneg %p241
      // Predicated region
      $region33: #{bottleneck_block.5} parent=5 // pred_check
        _
      $region34: #{bottleneck_block.5} parent=5 // pred_check_branch
        %244 = sbr.rel (%p241) target = $region36
      $region35: #{bottleneck_block.5} parent=5 // pred_region
        %s245 = ssub.s32 %s23, 1
        %s246 = sand.u32 %s36, 1
        %s247 = scalar_lea.sflag [#allocation4], %s246
        %s248 = sand.u32 %s36, 1
        %s249 = smul.addr %s248, 128
        %s250 = scalar_lea.vmem [#allocation3], %s249
        // Predicated region
        $region37: #{bottleneck_block.5} parent=35 // pred_check
          %p251 = pneg %p49
        $region38: #{bottleneck_block.5} parent=35 // pred_check_branch
          %253 = sbr.rel (%p251) target = $region40
        $region39: #{bottleneck_block.5} parent=35 // pred_region
          %254 = dma.done %s247, 2048
        $region40: #{bottleneck_block.5} parent=35 // pred_fallthru
          _
        // Predicated region
        $region41: #{bottleneck_block.5} parent=35 // pred_check
          %p255 = pneg %p70
        $region42: #{bottleneck_block.5} parent=35 // pred_check_branch
          %257 = sbr.rel (%p255) target = $region44
        $region43: #{bottleneck_block.5} parent=35 // pred_region
          %258 = dma.done [#allocation7], 16
        $region44: #{bottleneck_block.5} parent=35 // pred_fallthru
          _
        // Predicated region
        $region45: #{bottleneck_block.5} parent=35 // pred_check
          %p259 = pneg %p91
        $region46: #{bottleneck_block.5} parent=35 // pred_check_branch
          %261 = sbr.rel (%p259) target = $region48
        $region47: #{bottleneck_block.5} parent=35 // pred_region
          %262 = dma.done [#allocation7], 16
        $region48: #{bottleneck_block.5} parent=35 // pred_fallthru
          _
        // Predicated region
        $region49: #{bottleneck_block.5} parent=35 // pred_check
          %p263 = pneg %p112
        $region50: #{bottleneck_block.5} parent=35 // pred_check_branch
          %265 = sbr.rel (%p263) target = $region52
        $region51: #{bottleneck_block.5} parent=35 // pred_region
          %266 = dma.done [#allocation10], 9216
        $region52: #{bottleneck_block.5} parent=35 // pred_fallthru
          _
        %s267 = sand.u32 %s36, 1
        %s268 = scalar_lea.sflag [#allocation4], %s267
        %s269 = sand.u32 %s36, 1
        %s270 = smul.addr %s269, 128
        %s271 = scalar_lea.vmem [#allocation3], %s270
        %p272 = pneg %p49
        %p273 = pneg %p46
        %p274 = pneg %p70
        %p275 = pneg %p67
        %p276 = pneg %p91
        %p277 = pneg %p88
        %p278 = pneg %p112
        %p279 = pneg %p109
        %p280 = pneg %p138
        %p281 = pneg %p135
        %s282 = sand.u32 %s125, 1
        %s283 = scalar_lea.sflag [#allocation5], %s282
        %s284 = sand.u32 %s125, 1
        %s285 = smul.addr %s284, 128
        %s286 = scalar_lea.vmem [#allocation11], %s285
        %p287 = pneg %p164
        %p288 = pneg %p161
        %s289 = sand.u32 %s151, 1
        %s290 = scalar_lea.sflag [#allocation13], %s289
        %s291 = sand.u32 %s151, 1
        %s292 = smul.addr %s291, 2
        %s293 = scalar_lea.vmem [#allocation12], %s292
        %v295 = vld [vmem:[%s250] sm:$0xf]
        %v296 = vld [vmem:[%s250 + $0x4] sm:$0xf]
        %v297 = vld [vmem:[%s250 + $0x8] sm:$0xf]
        %v298 = vld [vmem:[%s250 + $0xc] sm:$0xf]
        %v299 = vld [vmem:[%s250 + $0x10] sm:$0xf]
        %v300 = vld [vmem:[%s250 + $0x14] sm:$0xf]
        %v301 = vld [vmem:[%s250 + $0x18] sm:$0xf]
        %v302 = vld [vmem:[%s250 + $0x1c] sm:$0xf]
        %v303 = vld [vmem:[%s250 + $0x20] sm:$0xf]
        %v304 = vld [vmem:[%s250 + $0x24] sm:$0xf]
        %v305 = vld [vmem:[%s250 + $0x28] sm:$0xf]
        %v306 = vld [vmem:[%s250 + $0x2c] sm:$0xf]
        %v307 = vld [vmem:[%s250 + $0x30] sm:$0xf]
        %v308 = vld [vmem:[%s250 + $0x34] sm:$0xf]
        %v309 = vld [vmem:[%s250 + $0x38] sm:$0xf]
        %v310 = vld [vmem:[%s250 + $0x3c] sm:$0xf]
        %v311 = vld [vmem:[%s250 + $0x40] sm:$0xf]
        %v312 = vld [vmem:[%s250 + $0x44] sm:$0xf]
        %v313 = vld [vmem:[%s250 + $0x48] sm:$0xf]
        %v314 = vld [vmem:[%s250 + $0x4c] sm:$0xf]
        %v315 = vld [vmem:[%s250 + $0x50] sm:$0xf]
        %v316 = vld [vmem:[%s250 + $0x54] sm:$0xf]
        %v317 = vld [vmem:[%s250 + $0x58] sm:$0xf]
        %v318 = vld [vmem:[%s250 + $0x5c] sm:$0xf]
        %v319 = vld [vmem:[%s250 + $0x60] sm:$0xf]
        %v320 = vld [vmem:[%s250 + $0x64] sm:$0xf]
        %v321 = vld [vmem:[%s250 + $0x68] sm:$0xf]
        %v322 = vld [vmem:[%s250 + $0x6c] sm:$0xf]
        %v323 = vld [vmem:[%s250 + $0x70] sm:$0xf]
        %v324 = vld [vmem:[%s250 + $0x74] sm:$0xf]
        %v325 = vld [vmem:[%s250 + $0x78] sm:$0xf]
        %v326 = vld [vmem:[%s250 + $0x7c] sm:$0xf]
        %v327 = vunpack.c.l.bf16 %v295
        %v328 = vunpack.c.l.bf16 %v296
        %v329 = vunpack.c.l.bf16 %v297
        %v330 = vunpack.c.l.bf16 %v298
        %v331 = vunpack.c.l.bf16 %v299
        %v332 = vunpack.c.l.bf16 %v300
        %v333 = vunpack.c.l.bf16 %v301
        %v334 = vunpack.c.l.bf16 %v302
        %v335 = vunpack.c.l.bf16 %v303
        %v336 = vunpack.c.l.bf16 %v304
        %v337 = vunpack.c.l.bf16 %v305
        %v338 = vunpack.c.l.bf16 %v306
        %v339 = vunpack.c.l.bf16 %v307
        %v340 = vunpack.c.l.bf16 %v308
        %v341 = vunpack.c.l.bf16 %v309
        %v342 = vunpack.c.l.bf16 %v310
        %v343 = vunpack.c.l.bf16 %v311
        %v344 = vunpack.c.l.bf16 %v312
        %v345 = vunpack.c.l.bf16 %v313
        %v346 = vunpack.c.l.bf16 %v314
        %v347 = vunpack.c.l.bf16 %v315
        %v348 = vunpack.c.l.bf16 %v316
        %v349 = vunpack.c.l.bf16 %v317
        %v350 = vunpack.c.l.bf16 %v318
        %v351 = vunpack.c.l.bf16 %v319
        %v352 = vunpack.c.l.bf16 %v320
        %v353 = vunpack.c.l.bf16 %v321
        %v354 = vunpack.c.l.bf16 %v322
        %v355 = vunpack.c.l.bf16 %v323
        %v356 = vunpack.c.l.bf16 %v324
        %v357 = vunpack.c.l.bf16 %v325
        %v358 = vunpack.c.l.bf16 %v326
        %v359 = vld [vmem:[#allocation6] sm:$0x1]
        %v361 = vlaneseq
        %v362 = vshrl.u32 %v361, 7
        %v363 = vsub.s32 0, %v362
        %v364 = vrot.slane %v359, %v363
        %v366 = vmul.f32 %v327, %v364
        %v367 = vmul.f32 %v328, %v364
        %v368 = vmul.f32 %v329, %v364
        %v369 = vmul.f32 %v330, %v364
        %v370 = vmul.f32 %v331, %v364
        %v371 = vmul.f32 %v332, %v364
        %v372 = vmul.f32 %v333, %v364
        %v373 = vmul.f32 %v334, %v364
        %v374 = vmul.f32 %v335, %v364
        %v375 = vmul.f32 %v336, %v364
        %v376 = vmul.f32 %v337, %v364
        %v377 = vmul.f32 %v338, %v364
        %v378 = vmul.f32 %v339, %v364
        %v379 = vmul.f32 %v340, %v364
        %v380 = vmul.f32 %v341, %v364
        %v381 = vmul.f32 %v342, %v364
        %v382 = vmul.f32 %v343, %v364
        %v383 = vmul.f32 %v344, %v364
        %v384 = vmul.f32 %v345, %v364
        %v385 = vmul.f32 %v346, %v364
        %v386 = vmul.f32 %v347, %v364
        %v387 = vmul.f32 %v348, %v364
        %v388 = vmul.f32 %v349, %v364
        %v389 = vmul.f32 %v350, %v364
        %v390 = vmul.f32 %v351, %v364
        %v391 = vmul.f32 %v352, %v364
        %v392 = vmul.f32 %v353, %v364
        %v393 = vmul.f32 %v354, %v364
        %v394 = vmul.f32 %v355, %v364
        %v395 = vmul.f32 %v356, %v364
        %v396 = vmul.f32 %v357, %v364
        %v397 = vmul.f32 %v358, %v364
        %v398 = vld [vmem:[#allocation8] sm:$0x1]
        %v400 = vlaneseq
        %v401 = vshrl.u32 %v400, 7
        %v402 = vsub.s32 0, %v401
        %v403 = vrot.slane %v398, %v402
        %v405 = vadd.f32 %v366, %v403
        %v406 = vadd.f32 %v367, %v403
        %v407 = vadd.f32 %v368, %v403
        %v408 = vadd.f32 %v369, %v403
        %v409 = vadd.f32 %v370, %v403
        %v410 = vadd.f32 %v371, %v403
        %v411 = vadd.f32 %v372, %v403
        %v412 = vadd.f32 %v373, %v403
        %v413 = vadd.f32 %v374, %v403
        %v414 = vadd.f32 %v375, %v403
        %v415 = vadd.f32 %v376, %v403
        %v416 = vadd.f32 %v377, %v403
        %v417 = vadd.f32 %v378, %v403
        %v418 = vadd.f32 %v379, %v403
        %v419 = vadd.f32 %v380, %v403
        %v420 = vadd.f32 %v381, %v403
        %v421 = vadd.f32 %v382, %v403
        %v422 = vadd.f32 %v383, %v403
        %v423 = vadd.f32 %v384, %v403
        %v424 = vadd.f32 %v385, %v403
        %v425 = vadd.f32 %v386, %v403
        %v426 = vadd.f32 %v387, %v403
        %v427 = vadd.f32 %v388, %v403
        %v428 = vadd.f32 %v389, %v403
        %v429 = vadd.f32 %v390, %v403
        %v430 = vadd.f32 %v391, %v403
        %v431 = vadd.f32 %v392, %v403
        %v432 = vadd.f32 %v393, %v403
        %v433 = vadd.f32 %v394, %v403
        %v434 = vadd.f32 %v395, %v403
        %v435 = vadd.f32 %v396, %v403
        %v436 = vadd.f32 %v397, %v403
        %v437 = vmax.f32 %v405, 0.0
        %v438 = vmax.f32 %v406, 0.0
        %v439 = vmax.f32 %v407, 0.0
        %v440 = vmax.f32 %v408, 0.0
        %v441 = vmax.f32 %v409, 0.0
        %v442 = vmax.f32 %v410, 0.0
        %v443 = vmax.f32 %v411, 0.0
        %v444 = vmax.f32 %v412, 0.0
        %v445 = vmax.f32 %v413, 0.0
        %v446 = vmax.f32 %v414, 0.0
        %v447 = vmax.f32 %v415, 0.0
        %v448 = vmax.f32 %v416, 0.0
        %v449 = vmax.f32 %v417, 0.0
        %v450 = vmax.f32 %v418, 0.0
        %v451 = vmax.f32 %v419, 0.0
        %v452 = vmax.f32 %v420, 0.0
        %v453 = vmax.f32 %v421, 0.0
        %v454 = vmax.f32 %v422, 0.0
        %v455 = vmax.f32 %v423, 0.0
        %v456 = vmax.f32 %v424, 0.0
        %v457 = vmax.f32 %v425, 0.0
        %v458 = vmax.f32 %v426, 0.0
        %v459 = vmax.f32 %v427, 0.0
        %v460 = vmax.f32 %v428, 0.0
        %v461 = vmax.f32 %v429, 0.0
        %v462 = vmax.f32 %v430, 0.0
        %v463 = vmax.f32 %v431, 0.0
        %v464 = vmax.f32 %v432, 0.0
        %v465 = vmax.f32 %v433, 0.0
        %v466 = vmax.f32 %v434, 0.0
        %v467 = vmax.f32 %v435, 0.0
        %v468 = vmax.f32 %v436, 0.0
        %v469 = vpack.c.bf16 %v438, %v437
        %v470 = vpack.c.bf16 %v440, %v439
        %v471 = vpack.c.bf16 %v442, %v441
        %v472 = vpack.c.bf16 %v444, %v443
        %v473 = vpack.c.bf16 %v446, %v445
        %v474 = vpack.c.bf16 %v448, %v447
        %v475 = vpack.c.bf16 %v450, %v449
        %v476 = vpack.c.bf16 %v452, %v451
        %v477 = vpack.c.bf16 %v454, %v453
        %v478 = vpack.c.bf16 %v456, %v455
        %v479 = vpack.c.bf16 %v458, %v457
        %v480 = vpack.c.bf16 %v460, %v459
        %v481 = vpack.c.bf16 %v462, %v461
        %v482 = vpack.c.bf16 %v464, %v463
        %v483 = vpack.c.bf16 %v466, %v465
        %v484 = vpack.c.bf16 %v468, %v467
        %485 = vst [vmem:[#allocation2] sm:$0xff] 0
        %486 = vst [vmem:[#allocation2 + $0x8] sm:$0xff] 0
        %487 = vst [vmem:[#allocation2 + $0x10] sm:$0xff] 0
        %s488 = scalar_lea.vmem [#allocation2], 408
        %489 = vst [vmem:[%s488] sm:$0xff] 0
        %490 = vst [vmem:[%s488 + $0x8] sm:$0xff] 0
        %491 = vst [vmem:[%s488 + $0x10] sm:$0xff] 0
        %s492 = scalar_lea.vmem [#allocation2], 24
        %493 = vst [vmem:[%s492 + $0x8] sm:$0xff] %v469
        %494 = vst [vmem:[%s492 + $0x20] sm:$0xff] %v470
        %495 = vst [vmem:[%s492 + $0x38] sm:$0xff] %v471
        %496 = vst [vmem:[%s492 + $0x50] sm:$0xff] %v472
        %497 = vst [vmem:[%s492 + $0x68] sm:$0xff] %v473
        %498 = vst [vmem:[%s492 + $0x80] sm:$0xff] %v474
        %499 = vst [vmem:[%s492 + $0x98] sm:$0xff] %v475
        %500 = vst [vmem:[%s492 + $0xb0] sm:$0xff] %v476
        %501 = vst [vmem:[%s492 + $0xc8] sm:$0xff] %v477
        %502 = vst [vmem:[%s492 + $0xe0] sm:$0xff] %v478
        %503 = vst [vmem:[%s492 + $0xf8] sm:$0xff] %v479
        %504 = vst [vmem:[%s492 + $0x110] sm:$0xff] %v480
        %505 = vst [vmem:[%s492 + $0x128] sm:$0xff] %v481
        %506 = vst [vmem:[%s492 + $0x140] sm:$0xff] %v482
        %507 = vst [vmem:[%s492 + $0x158] sm:$0xff] %v483
        %508 = vst [vmem:[%s492 + $0x170] sm:$0xff] %v484
        %vm509 = vcmask 1040384
        %vm510 = vsmask.f32 256
        %vm511 = vmand %vm509, %vm510
        %v512 = vld [vmem:[%s492] sm:$0x1]
        %v513 = vsel %vm511, 0, %v512
        %514 = vst [vmem:[%s492] sm:$0x1] %v513
        %v515 = vld [vmem:[%s492 + $0x18] sm:$0x1]
        %v516 = vsel %vm511, 0, %v515
        %517 = vst [vmem:[%s492 + $0x18] sm:$0x1] %v516
        %v518 = vld [vmem:[%s492 + $0x30] sm:$0x1]
        %v519 = vsel %vm511, 0, %v518
        %520 = vst [vmem:[%s492 + $0x30] sm:$0x1] %v519
        %v521 = vld [vmem:[%s492 + $0x48] sm:$0x1]
        %v522 = vsel %vm511, 0, %v521
        %523 = vst [vmem:[%s492 + $0x48] sm:$0x1] %v522
        %v524 = vld [vmem:[%s492 + $0x60] sm:$0x1]
        %v525 = vsel %vm511, 0, %v524
        %526 = vst [vmem:[%s492 + $0x60] sm:$0x1] %v525
        %v527 = vld [vmem:[%s492 + $0x78] sm:$0x1]
        %v528 = vsel %vm511, 0, %v527
        %529 = vst [vmem:[%s492 + $0x78] sm:$0x1] %v528
        %v530 = vld [vmem:[%s492 + $0x90] sm:$0x1]
        %v531 = vsel %vm511, 0, %v530
        %532 = vst [vmem:[%s492 + $0x90] sm:$0x1] %v531
        %v533 = vld [vmem:[%s492 + $0xa8] sm:$0x1]
        %v534 = vsel %vm511, 0, %v533
        %535 = vst [vmem:[%s492 + $0xa8] sm:$0x1] %v534
        %v536 = vld [vmem:[%s492 + $0xc0] sm:$0x1]
        %v537 = vsel %vm511, 0, %v536
        %538 = vst [vmem:[%s492 + $0xc0] sm:$0x1] %v537
        %v539 = vld [vmem:[%s492 + $0xd8] sm:$0x1]
        %v540 = vsel %vm511, 0, %v539
        %541 = vst [vmem:[%s492 + $0xd8] sm:$0x1] %v540
        %v542 = vld [vmem:[%s492 + $0xf0] sm:$0x1]
        %v543 = vsel %vm511, 0, %v542
        %544 = vst [vmem:[%s492 + $0xf0] sm:$0x1] %v543
        %v545 = vld [vmem:[%s492 + $0x108] sm:$0x1]
        %v546 = vsel %vm511, 0, %v545
        %547 = vst [vmem:[%s492 + $0x108] sm:$0x1] %v546
        %v548 = vld [vmem:[%s492 + $0x120] sm:$0x1]
        %v549 = vsel %vm511, 0, %v548
        %550 = vst [vmem:[%s492 + $0x120] sm:$0x1] %v549
        %v551 = vld [vmem:[%s492 + $0x138] sm:$0x1]
        %v552 = vsel %vm511, 0, %v551
        %553 = vst [vmem:[%s492 + $0x138] sm:$0x1] %v552
        %v554 = vld [vmem:[%s492 + $0x150] sm:$0x1]
        %v555 = vsel %vm511, 0, %v554
        %556 = vst [vmem:[%s492 + $0x150] sm:$0x1] %v555
        %v557 = vld [vmem:[%s492 + $0x168] sm:$0x1]
        %v558 = vsel %vm511, 0, %v557
        %559 = vst [vmem:[%s492 + $0x168] sm:$0x1] %v558
        %v561 = vshrl.u32 %v469, 16
        %v563 = vrot.slane %v561, 7
        %v564 = vshll.u32 %v469, 16
        %v566 = vor.u32 %v563, %v564
        %v568 = vshrl.u32 %v470, 16
        %v570 = vrot.slane %v568, 7
        %v571 = vshll.u32 %v470, 16
        %v573 = vor.u32 %v570, %v571
        %v575 = vshrl.u32 %v471, 16
        %v577 = vrot.slane %v575, 7
        %v578 = vshll.u32 %v471, 16
        %v580 = vor.u32 %v577, %v578
        %v582 = vshrl.u32 %v472, 16
        %v584 = vrot.slane %v582, 7
        %v585 = vshll.u32 %v472, 16
        %v587 = vor.u32 %v584, %v585
        %v589 = vshrl.u32 %v473, 16
        %v591 = vrot.slane %v589, 7
        %v592 = vshll.u32 %v473, 16
        %v594 = vor.u32 %v591, %v592
        %v596 = vshrl.u32 %v474, 16
        %v598 = vrot.slane %v596, 7
        %v599 = vshll.u32 %v474, 16
        %v601 = vor.u32 %v598, %v599
        %v603 = vshrl.u32 %v475, 16
        %v605 = vrot.slane %v603, 7
        %v606 = vshll.u32 %v475, 16
        %v608 = vor.u32 %v605, %v606
        %v610 = vshrl.u32 %v476, 16
        %v612 = vrot.slane %v610, 7
        %v613 = vshll.u32 %v476, 16
        %v615 = vor.u32 %v612, %v613
        %v617 = vshrl.u32 %v477, 16
        %v619 = vrot.slane %v617, 7
        %v620 = vshll.u32 %v477, 16
        %v622 = vor.u32 %v619, %v620
        %v624 = vshrl.u32 %v478, 16
        %v626 = vrot.slane %v624, 7
        %v627 = vshll.u32 %v478, 16
        %v629 = vor.u32 %v626, %v627
        %v631 = vshrl.u32 %v479, 16
        %v633 = vrot.slane %v631, 7
        %v634 = vshll.u32 %v479, 16
        %v636 = vor.u32 %v633, %v634
        %v638 = vshrl.u32 %v480, 16
        %v640 = vrot.slane %v638, 7
        %v641 = vshll.u32 %v480, 16
        %v643 = vor.u32 %v640, %v641
        %v645 = vshrl.u32 %v481, 16
        %v647 = vrot.slane %v645, 7
        %v648 = vshll.u32 %v481, 16
        %v650 = vor.u32 %v647, %v648
        %v652 = vshrl.u32 %v482, 16
        %v654 = vrot.slane %v652, 7
        %v655 = vshll.u32 %v482, 16
        %v657 = vor.u32 %v654, %v655
        %v659 = vshrl.u32 %v483, 16
        %v661 = vrot.slane %v659, 7
        %v662 = vshll.u32 %v483, 16
        %v664 = vor.u32 %v661, %v662
        %v666 = vshrl.u32 %v484, 16
        %v668 = vrot.slane %v666, 7
        %v669 = vshll.u32 %v484, 16
        %v671 = vor.u32 %v668, %v669
        %vm688 = vcmask 1047552
        %vm689 = vsmask.f32 7938
        %vm690 = vmand %vm688, %vm689
        %v691 = vld [vmem:[%s492] sm:$0xff]
        %v692 = vsel %vm690, %v566, %v691
        %693 = vst [vmem:[%s492] sm:$0xff] %v692
        %v694 = vld [vmem:[%s492 + $0x18] sm:$0xff]
        %v695 = vsel %vm690, %v573, %v694
        %696 = vst [vmem:[%s492 + $0x18] sm:$0xff] %v695
        %v697 = vld [vmem:[%s492 + $0x30] sm:$0xff]
        %v698 = vsel %vm690, %v580, %v697
        %699 = vst [vmem:[%s492 + $0x30] sm:$0xff] %v698
        %v700 = vld [vmem:[%s492 + $0x48] sm:$0xff]
        %v701 = vsel %vm690, %v587, %v700
        %702 = vst [vmem:[%s492 + $0x48] sm:$0xff] %v701
        %v703 = vld [vmem:[%s492 + $0x60] sm:$0xff]
        %v704 = vsel %vm690, %v594, %v703
        %705 = vst [vmem:[%s492 + $0x60] sm:$0xff] %v704
        %v706 = vld [vmem:[%s492 + $0x78] sm:$0xff]
        %v707 = vsel %vm690, %v601, %v706
        %708 = vst [vmem:[%s492 + $0x78] sm:$0xff] %v707
        %v709 = vld [vmem:[%s492 + $0x90] sm:$0xff]
        %v710 = vsel %vm690, %v608, %v709
        %711 = vst [vmem:[%s492 + $0x90] sm:$0xff] %v710
        %v712 = vld [vmem:[%s492 + $0xa8] sm:$0xff]
        %v713 = vsel %vm690, %v615, %v712
        %714 = vst [vmem:[%s492 + $0xa8] sm:$0xff] %v713
        %v715 = vld [vmem:[%s492 + $0xc0] sm:$0xff]
        %v716 = vsel %vm690, %v622, %v715
        %717 = vst [vmem:[%s492 + $0xc0] sm:$0xff] %v716
        %v718 = vld [vmem:[%s492 + $0xd8] sm:$0xff]
        %v719 = vsel %vm690, %v629, %v718
        %720 = vst [vmem:[%s492 + $0xd8] sm:$0xff] %v719
        %v721 = vld [vmem:[%s492 + $0xf0] sm:$0xff]
        %v722 = vsel %vm690, %v636, %v721
        %723 = vst [vmem:[%s492 + $0xf0] sm:$0xff] %v722
        %v724 = vld [vmem:[%s492 + $0x108] sm:$0xff]
        %v725 = vsel %vm690, %v643, %v724
        %726 = vst [vmem:[%s492 + $0x108] sm:$0xff] %v725
        %v727 = vld [vmem:[%s492 + $0x120] sm:$0xff]
        %v728 = vsel %vm690, %v650, %v727
        %729 = vst [vmem:[%s492 + $0x120] sm:$0xff] %v728
        %v730 = vld [vmem:[%s492 + $0x138] sm:$0xff]
        %v731 = vsel %vm690, %v657, %v730
        %732 = vst [vmem:[%s492 + $0x138] sm:$0xff] %v731
        %v733 = vld [vmem:[%s492 + $0x150] sm:$0xff]
        %v734 = vsel %vm690, %v664, %v733
        %735 = vst [vmem:[%s492 + $0x150] sm:$0xff] %v734
        %v736 = vld [vmem:[%s492 + $0x168] sm:$0xff]
        %v737 = vsel %vm690, %v671, %v736
        %738 = vst [vmem:[%s492 + $0x168] sm:$0xff] %v737
        %vm739 = vcmask 1047559
        %vm740 = vsmask.f32 7966
        %vm741 = vmand %vm739, %vm740
        %v742 = vld [vmem:[%s492 + $0x10] sm:$0x80]
        %v743 = vsel %vm741, 0, %v742
        %744 = vst [vmem:[%s492 + $0x10] sm:$0x80] %v743
        %v745 = vld [vmem:[%s492 + $0x28] sm:$0x80]
        %v746 = vsel %vm741, 0, %v745
        %747 = vst [vmem:[%s492 + $0x28] sm:$0x80] %v746
        %v748 = vld [vmem:[%s492 + $0x40] sm:$0x80]
        %v749 = vsel %vm741, 0, %v748
        %750 = vst [vmem:[%s492 + $0x40] sm:$0x80] %v749
        %v751 = vld [vmem:[%s492 + $0x58] sm:$0x80]
        %v752 = vsel %vm741, 0, %v751
        %753 = vst [vmem:[%s492 + $0x58] sm:$0x80] %v752
        %v754 = vld [vmem:[%s492 + $0x70] sm:$0x80]
        %v755 = vsel %vm741, 0, %v754
        %756 = vst [vmem:[%s492 + $0x70] sm:$0x80] %v755
        %v757 = vld [vmem:[%s492 + $0x88] sm:$0x80]
        %v758 = vsel %vm741, 0, %v757
        %759 = vst [vmem:[%s492 + $0x88] sm:$0x80] %v758
        %v760 = vld [vmem:[%s492 + $0xa0] sm:$0x80]
        %v761 = vsel %vm741, 0, %v760
        %762 = vst [vmem:[%s492 + $0xa0] sm:$0x80] %v761
        %v763 = vld [vmem:[%s492 + $0xb8] sm:$0x80]
        %v764 = vsel %vm741, 0, %v763
        %765 = vst [vmem:[%s492 + $0xb8] sm:$0x80] %v764
        %v766 = vld [vmem:[%s492 + $0xd0] sm:$0x80]
        %v767 = vsel %vm741, 0, %v766
        %768 = vst [vmem:[%s492 + $0xd0] sm:$0x80] %v767
        %v769 = vld [vmem:[%s492 + $0xe8] sm:$0x80]
        %v770 = vsel %vm741, 0, %v769
        %771 = vst [vmem:[%s492 + $0xe8] sm:$0x80] %v770
        %v772 = vld [vmem:[%s492 + $0x100] sm:$0x80]
        %v773 = vsel %vm741, 0, %v772
        %774 = vst [vmem:[%s492 + $0x100] sm:$0x80] %v773
        %v775 = vld [vmem:[%s492 + $0x118] sm:$0x80]
        %v776 = vsel %vm741, 0, %v775
        %777 = vst [vmem:[%s492 + $0x118] sm:$0x80] %v776
        %v778 = vld [vmem:[%s492 + $0x130] sm:$0x80]
        %v779 = vsel %vm741, 0, %v778
        %780 = vst [vmem:[%s492 + $0x130] sm:$0x80] %v779
        %v781 = vld [vmem:[%s492 + $0x148] sm:$0x80]
        %v782 = vsel %vm741, 0, %v781
        %783 = vst [vmem:[%s492 + $0x148] sm:$0x80] %v782
        %v784 = vld [vmem:[%s492 + $0x160] sm:$0x80]
        %v785 = vsel %vm741, 0, %v784
        %786 = vst [vmem:[%s492 + $0x160] sm:$0x80] %v785
        %v787 = vld [vmem:[%s492 + $0x178] sm:$0x80]
        %v788 = vsel %vm741, 0, %v787
        %789 = vst [vmem:[%s492 + $0x178] sm:$0x80] %v788
        %v790 = vrot.slane %v564, 1
        %v791 = vor.u32 %v561, %v790
        %v792 = vrot.slane %v571, 1
        %v793 = vor.u32 %v568, %v792
        %v794 = vrot.slane %v578, 1
        %v795 = vor.u32 %v575, %v794
        %v796 = vrot.slane %v585, 1
        %v797 = vor.u32 %v582, %v796
        %v798 = vrot.slane %v592, 1
        %v799 = vor.u32 %v589, %v798
        %v800 = vrot.slane %v599, 1
        %v801 = vor.u32 %v596, %v800
        %v802 = vrot.slane %v606, 1
        %v803 = vor.u32 %v603, %v802
        %v804 = vrot.slane %v613, 1
        %v805 = vor.u32 %v610, %v804
        %v806 = vrot.slane %v620, 1
        %v807 = vor.u32 %v617, %v806
        %v808 = vrot.slane %v627, 1
        %v809 = vor.u32 %v624, %v808
        %v810 = vrot.slane %v634, 1
        %v811 = vor.u32 %v631, %v810
        %v812 = vrot.slane %v641, 1
        %v813 = vor.u32 %v638, %v812
        %v814 = vrot.slane %v648, 1
        %v815 = vor.u32 %v645, %v814
        %v816 = vrot.slane %v655, 1
        %v817 = vor.u32 %v652, %v816
        %v818 = vrot.slane %v662, 1
        %v819 = vor.u32 %v659, %v818
        %v820 = vrot.slane %v669, 1
        %v821 = vor.u32 %v666, %v820
        %vm838 = vsmask.f32 7424
        %vm839 = vmand %vm688, %vm838
        %v840 = vld [vmem:[%s492 + $0x10] sm:$0xff]
        %v841 = vsel %vm839, %v791, %v840
        %842 = vst [vmem:[%s492 + $0x10] sm:$0xff] %v841
        %v843 = vld [vmem:[%s492 + $0x28] sm:$0xff]
        %v844 = vsel %vm839, %v793, %v843
        %845 = vst [vmem:[%s492 + $0x28] sm:$0xff] %v844
        %v846 = vld [vmem:[%s492 + $0x40] sm:$0xff]
        %v847 = vsel %vm839, %v795, %v846
        %848 = vst [vmem:[%s492 + $0x40] sm:$0xff] %v847
        %v849 = vld [vmem:[%s492 + $0x58] sm:$0xff]
        %v850 = vsel %vm839, %v797, %v849
        %851 = vst [vmem:[%s492 + $0x58] sm:$0xff] %v850
        %v852 = vld [vmem:[%s492 + $0x70] sm:$0xff]
        %v853 = vsel %vm839, %v799, %v852
        %854 = vst [vmem:[%s492 + $0x70] sm:$0xff] %v853
        %v855 = vld [vmem:[%s492 + $0x88] sm:$0xff]
        %v856 = vsel %vm839, %v801, %v855
        %857 = vst [vmem:[%s492 + $0x88] sm:$0xff] %v856
        %v858 = vld [vmem:[%s492 + $0xa0] sm:$0xff]
        %v859 = vsel %vm839, %v803, %v858
        %860 = vst [vmem:[%s492 + $0xa0] sm:$0xff] %v859
        %v861 = vld [vmem:[%s492 + $0xb8] sm:$0xff]
        %v862 = vsel %vm839, %v805, %v861
        %863 = vst [vmem:[%s492 + $0xb8] sm:$0xff] %v862
        %v864 = vld [vmem:[%s492 + $0xd0] sm:$0xff]
        %v865 = vsel %vm839, %v807, %v864
        %866 = vst [vmem:[%s492 + $0xd0] sm:$0xff] %v865
        %v867 = vld [vmem:[%s492 + $0xe8] sm:$0xff]
        %v868 = vsel %vm839, %v809, %v867
        %869 = vst [vmem:[%s492 + $0xe8] sm:$0xff] %v868
        %v870 = vld [vmem:[%s492 + $0x100] sm:$0xff]
        %v871 = vsel %vm839, %v811, %v870
        %872 = vst [vmem:[%s492 + $0x100] sm:$0xff] %v871
        %v873 = vld [vmem:[%s492 + $0x118] sm:$0xff]
        %v874 = vsel %vm839, %v813, %v873
        %875 = vst [vmem:[%s492 + $0x118] sm:$0xff] %v874
        %v876 = vld [vmem:[%s492 + $0x130] sm:$0xff]
        %v877 = vsel %vm839, %v815, %v876
        %878 = vst [vmem:[%s492 + $0x130] sm:$0xff] %v877
        %v879 = vld [vmem:[%s492 + $0x148] sm:$0xff]
        %v880 = vsel %vm839, %v817, %v879
        %881 = vst [vmem:[%s492 + $0x148] sm:$0xff] %v880
        %v882 = vld [vmem:[%s492 + $0x160] sm:$0xff]
        %v883 = vsel %vm839, %v819, %v882
        %884 = vst [vmem:[%s492 + $0x160] sm:$0xff] %v883
        %v885 = vld [vmem:[%s492 + $0x178] sm:$0xff]
        %v886 = vsel %vm839, %v821, %v885
        %887 = vst [vmem:[%s492 + $0x178] sm:$0xff] %v886
        %v888 = vld [vmem:[#allocation2] sm:$0xff]
        %v889 = vld [vmem:[#allocation2 + $0x8] sm:$0xff]
        %v890 = vld [vmem:[#allocation2 + $0x10] sm:$0xff]
        %v891 = vld [vmem:[#allocation2 + $0x18] sm:$0xff]
        %v892 = vld [vmem:[#allocation2 + $0x20] sm:$0xff]
        %v893 = vld [vmem:[#allocation2 + $0x28] sm:$0xff]
        %v894 = vld [vmem:[#allocation2 + $0x30] sm:$0xff]
        %v895 = vld [vmem:[#allocation2 + $0x38] sm:$0xff]
        %v896 = vld [vmem:[#allocation2 + $0x40] sm:$0xff]
        %v897 = vld [vmem:[#allocation2 + $0x48] sm:$0xff]
        %v898 = vld [vmem:[#allocation2 + $0x50] sm:$0xff]
        %v899 = vld [vmem:[#allocation2 + $0x58] sm:$0xff]
        %v900 = vld [vmem:[#allocation2 + $0x60] sm:$0xff]
        %v901 = vld [vmem:[#allocation2 + $0x68] sm:$0xff]
        %v902 = vld [vmem:[#allocation2 + $0x70] sm:$0xff]
        %v903 = vld [vmem:[#allocation2 + $0x78] sm:$0xff]
        %v904 = vld [vmem:[#allocation2 + $0x80] sm:$0xff]
        %v905 = vld [vmem:[#allocation2 + $0x88] sm:$0xff]
        %v906 = vld [vmem:[#allocation2 + $0x90] sm:$0xff]
        %v907 = vld [vmem:[#allocation2 + $0x98] sm:$0xff]
        %v908 = vld [vmem:[#allocation2 + $0xa0] sm:$0xff]
        %v909 = vld [vmem:[#allocation2 + $0xa8] sm:$0xff]
        %v910 = vld [vmem:[#allocation2 + $0xb0] sm:$0xff]
        %v911 = vld [vmem:[#allocation2 + $0xb8] sm:$0xff]
        %v912 = vld [vmem:[#allocation2 + $0xc0] sm:$0xff]
        %v913 = vld [vmem:[#allocation2 + $0xc8] sm:$0xff]
        %v914 = vld [vmem:[#allocation2 + $0xd0] sm:$0xff]
        %v915 = vld [vmem:[#allocation2 + $0xd8] sm:$0xff]
        %v916 = vld [vmem:[#allocation2 + $0xe0] sm:$0xff]
        %v917 = vld [vmem:[#allocation2 + $0xe8] sm:$0xff]
        %v918 = vld [vmem:[#allocation2 + $0xf0] sm:$0xff]
        %v919 = vld [vmem:[#allocation2 + $0xf8] sm:$0xff]
        %v920 = vld [vmem:[#allocation2 + $0x100] sm:$0xff]
        %v921 = vld [vmem:[#allocation2 + $0x108] sm:$0xff]
        %v922 = vld [vmem:[#allocation2 + $0x110] sm:$0xff]
        %v923 = vld [vmem:[#allocation2 + $0x118] sm:$0xff]
        %v924 = vld [vmem:[#allocation2 + $0x120] sm:$0xff]
        %v925 = vld [vmem:[#allocation2 + $0x128] sm:$0xff]
        %v926 = vld [vmem:[#allocation2 + $0x130] sm:$0xff]
        %v927 = vld [vmem:[#allocation2 + $0x138] sm:$0xff]
        %v928 = vld [vmem:[#allocation2 + $0x140] sm:$0xff]
        %v929 = vld [vmem:[#allocation2 + $0x148] sm:$0xff]
        %v930 = vld [vmem:[#allocation2 + $0x150] sm:$0xff]
        %v931 = vld [vmem:[#allocation2 + $0x158] sm:$0xff]
        %v932 = vld [vmem:[#allocation2 + $0x160] sm:$0xff]
        %v933 = vld [vmem:[#allocation2 + $0x168] sm:$0xff]
        %v934 = vld [vmem:[#allocation2 + $0x170] sm:$0xff]
        %v935 = vld [vmem:[#allocation2 + $0x178] sm:$0xff]
        %v936 = vld [vmem:[#allocation9] sm:$0xf]
        %v937 = vld [vmem:[#allocation9 + $0x4] sm:$0xf]
        %v938 = vld [vmem:[#allocation9 + $0x8] sm:$0xf]
        %v939 = vld [vmem:[#allocation9 + $0xc] sm:$0xf]
        %v940 = vld [vmem:[#allocation9 + $0x10] sm:$0xf]
        %v941 = vld [vmem:[#allocation9 + $0x14] sm:$0xf]
        %v942 = vld [vmem:[#allocation9 + $0x18] sm:$0xf]
        %v943 = vld [vmem:[#allocation9 + $0x1c] sm:$0xf]
        %v944 = vld [vmem:[#allocation9 + $0x20] sm:$0xf]
        %v945 = vld [vmem:[#allocation9 + $0x24] sm:$0xf]
        %v946 = vld [vmem:[#allocation9 + $0x28] sm:$0xf]
        %v947 = vld [vmem:[#allocation9 + $0x2c] sm:$0xf]
        %v948 = vld [vmem:[#allocation9 + $0x30] sm:$0xf]
        %v949 = vld [vmem:[#allocation9 + $0x34] sm:$0xf]
        %v950 = vld [vmem:[#allocation9 + $0x38] sm:$0xf]
        %v951 = vld [vmem:[#allocation9 + $0x3c] sm:$0xf]
        %v952 = vld [vmem:[#allocation9 + $0x40] sm:$0xf]
        %v953 = vld [vmem:[#allocation9 + $0x44] sm:$0xf]
        %v954 = vld [vmem:[#allocation9 + $0x48] sm:$0xf]
        %v955 = vld [vmem:[#allocation9 + $0x4c] sm:$0xf]
        %v956 = vld [vmem:[#allocation9 + $0x50] sm:$0xf]
        %v957 = vld [vmem:[#allocation9 + $0x54] sm:$0xf]
        %v958 = vld [vmem:[#allocation9 + $0x58] sm:$0xf]
        %v959 = vld [vmem:[#allocation9 + $0x5c] sm:$0xf]
        %v960 = vld [vmem:[#allocation9 + $0x60] sm:$0xf]
        %v961 = vld [vmem:[#allocation9 + $0x64] sm:$0xf]
        %v962 = vld [vmem:[#allocation9 + $0x68] sm:$0xf]
        %v963 = vld [vmem:[#allocation9 + $0x6c] sm:$0xf]
        %v964 = vld [vmem:[#allocation9 + $0x70] sm:$0xf]
        %v965 = vld [vmem:[#allocation9 + $0x74] sm:$0xf]
        %v966 = vld [vmem:[#allocation9 + $0x78] sm:$0xf]
        %v967 = vld [vmem:[#allocation9 + $0x7c] sm:$0xf]
        %v968 = vld [vmem:[#allocation9 + $0x80] sm:$0xf]
        %v969 = vld [vmem:[#allocation9 + $0x84] sm:$0xf]
        %v970 = vld [vmem:[#allocation9 + $0x88] sm:$0xf]
        %v971 = vld [vmem:[#allocation9 + $0x8c] sm:$0xf]
        %v972 = vld [vmem:[#allocation9 + $0x90] sm:$0xf]
        %v973 = vld [vmem:[#allocation9 + $0x94] sm:$0xf]
        %v974 = vld [vmem:[#allocation9 + $0x98] sm:$0xf]
        %v975 = vld [vmem:[#allocation9 + $0x9c] sm:$0xf]
        %v976 = vld [vmem:[#allocation9 + $0xa0] sm:$0xf]
        %v977 = vld [vmem:[#allocation9 + $0xa4] sm:$0xf]
        %v978 = vld [vmem:[#allocation9 + $0xa8] sm:$0xf]
        %v979 = vld [vmem:[#allocation9 + $0xac] sm:$0xf]
        %v980 = vld [vmem:[#allocation9 + $0xb0] sm:$0xf]
        %v981 = vld [vmem:[#allocation9 + $0xb4] sm:$0xf]
        %v982 = vld [vmem:[#allocation9 + $0xb8] sm:$0xf]
        %v983 = vld [vmem:[#allocation9 + $0xbc] sm:$0xf]
        %v984 = vld [vmem:[%s492] sm:$0xff]
        %v985 = vld [vmem:[%s492 + $0x8] sm:$0xff]
        %v986 = vld [vmem:[%s492 + $0x10] sm:$0xff]
        %v987 = vld [vmem:[%s492 + $0x18] sm:$0xff]
        %v988 = vld [vmem:[%s492 + $0x20] sm:$0xff]
        %v989 = vld [vmem:[%s492 + $0x28] sm:$0xff]
        %v990 = vld [vmem:[%s492 + $0x30] sm:$0xff]
        %v991 = vld [vmem:[%s492 + $0x38] sm:$0xff]
        %v992 = vld [vmem:[%s492 + $0x40] sm:$0xff]
        %v993 = vld [vmem:[%s492 + $0x48] sm:$0xff]
        %v994 = vld [vmem:[%s492 + $0x50] sm:$0xff]
        %v995 = vld [vmem:[%s492 + $0x58] sm:$0xff]
        %v996 = vld [vmem:[%s492 + $0x60] sm:$0xff]
        %v997 = vld [vmem:[%s492 + $0x68] sm:$0xff]
        %v998 = vld [vmem:[%s492 + $0x70] sm:$0xff]
        %v999 = vld [vmem:[%s492 + $0x78] sm:$0xff]
        %v1000 = vld [vmem:[%s492 + $0x80] sm:$0xff]
        %v1001 = vld [vmem:[%s492 + $0x88] sm:$0xff]
        %v1002 = vld [vmem:[%s492 + $0x90] sm:$0xff]
        %v1003 = vld [vmem:[%s492 + $0x98] sm:$0xff]
        %v1004 = vld [vmem:[%s492 + $0xa0] sm:$0xff]
        %v1005 = vld [vmem:[%s492 + $0xa8] sm:$0xff]
        %v1006 = vld [vmem:[%s492 + $0xb0] sm:$0xff]
        %v1007 = vld [vmem:[%s492 + $0xb8] sm:$0xff]
        %v1008 = vld [vmem:[%s492 + $0xc0] sm:$0xff]
        %v1009 = vld [vmem:[%s492 + $0xc8] sm:$0xff]
        %v1010 = vld [vmem:[%s492 + $0xd0] sm:$0xff]
        %v1011 = vld [vmem:[%s492 + $0xd8] sm:$0xff]
        %v1012 = vld [vmem:[%s492 + $0xe0] sm:$0xff]
        %v1013 = vld [vmem:[%s492 + $0xe8] sm:$0xff]
        %v1014 = vld [vmem:[%s492 + $0xf0] sm:$0xff]
        %v1015 = vld [vmem:[%s492 + $0xf8] sm:$0xff]
        %v1016 = vld [vmem:[%s492 + $0x100] sm:$0xff]
        %v1017 = vld [vmem:[%s492 + $0x108] sm:$0xff]
        %v1018 = vld [vmem:[%s492 + $0x110] sm:$0xff]
        %v1019 = vld [vmem:[%s492 + $0x118] sm:$0xff]
        %v1020 = vld [vmem:[%s492 + $0x120] sm:$0xff]
        %v1021 = vld [vmem:[%s492 + $0x128] sm:$0xff]
        %v1022 = vld [vmem:[%s492 + $0x130] sm:$0xff]
        %v1023 = vld [vmem:[%s492 + $0x138] sm:$0xff]
        %v1024 = vld [vmem:[%s492 + $0x140] sm:$0xff]
        %v1025 = vld [vmem:[%s492 + $0x148] sm:$0xff]
        %v1026 = vld [vmem:[%s492 + $0x150] sm:$0xff]
        %v1027 = vld [vmem:[%s492 + $0x158] sm:$0xff]
        %v1028 = vld [vmem:[%s492 + $0x160] sm:$0xff]
        %v1029 = vld [vmem:[%s492 + $0x168] sm:$0xff]
        %v1030 = vld [vmem:[%s492 + $0x170] sm:$0xff]
        %v1031 = vld [vmem:[%s492 + $0x178] sm:$0xff]
        %v1032 = vld [vmem:[#allocation9 + $0xc0] sm:$0xf]
        %v1033 = vld [vmem:[#allocation9 + $0xc4] sm:$0xf]
        %v1034 = vld [vmem:[#allocation9 + $0xc8] sm:$0xf]
        %v1035 = vld [vmem:[#allocation9 + $0xcc] sm:$0xf]
        %v1036 = vld [vmem:[#allocation9 + $0xd0] sm:$0xf]
        %v1037 = vld [vmem:[#allocation9 + $0xd4] sm:$0xf]
        %v1038 = vld [vmem:[#allocation9 + $0xd8] sm:$0xf]
        %v1039 = vld [vmem:[#allocation9 + $0xdc] sm:$0xf]
        %v1040 = vld [vmem:[#allocation9 + $0xe0] sm:$0xf]
        %v1041 = vld [vmem:[#allocation9 + $0xe4] sm:$0xf]
        %v1042 = vld [vmem:[#allocation9 + $0xe8] sm:$0xf]
        %v1043 = vld [vmem:[#allocation9 + $0xec] sm:$0xf]
        %v1044 = vld [vmem:[#allocation9 + $0xf0] sm:$0xf]
        %v1045 = vld [vmem:[#allocation9 + $0xf4] sm:$0xf]
        %v1046 = vld [vmem:[#allocation9 + $0xf8] sm:$0xf]
        %v1047 = vld [vmem:[#allocation9 + $0xfc] sm:$0xf]
        %v1048 = vld [vmem:[#allocation9 + $0x100] sm:$0xf]
        %v1049 = vld [vmem:[#allocation9 + $0x104] sm:$0xf]
        %v1050 = vld [vmem:[#allocation9 + $0x108] sm:$0xf]
        %v1051 = vld [vmem:[#allocation9 + $0x10c] sm:$0xf]
        %v1052 = vld [vmem:[#allocation9 + $0x110] sm:$0xf]
        %v1053 = vld [vmem:[#allocation9 + $0x114] sm:$0xf]
        %v1054 = vld [vmem:[#allocation9 + $0x118] sm:$0xf]
        %v1055 = vld [vmem:[#allocation9 + $0x11c] sm:$0xf]
        %v1056 = vld [vmem:[#allocation9 + $0x120] sm:$0xf]
        %v1057 = vld [vmem:[#allocation9 + $0x124] sm:$0xf]
        %v1058 = vld [vmem:[#allocation9 + $0x128] sm:$0xf]
        %v1059 = vld [vmem:[#allocation9 + $0x12c] sm:$0xf]
        %v1060 = vld [vmem:[#allocation9 + $0x130] sm:$0xf]
        %v1061 = vld [vmem:[#allocation9 + $0x134] sm:$0xf]
        %v1062 = vld [vmem:[#allocation9 + $0x138] sm:$0xf]
        %v1063 = vld [vmem:[#allocation9 + $0x13c] sm:$0xf]
        %v1064 = vld [vmem:[#allocation9 + $0x140] sm:$0xf]
        %v1065 = vld [vmem:[#allocation9 + $0x144] sm:$0xf]
        %v1066 = vld [vmem:[#allocation9 + $0x148] sm:$0xf]
        %v1067 = vld [vmem:[#allocation9 + $0x14c] sm:$0xf]
        %v1068 = vld [vmem:[#allocation9 + $0x150] sm:$0xf]
        %v1069 = vld [vmem:[#allocation9 + $0x154] sm:$0xf]
        %v1070 = vld [vmem:[#allocation9 + $0x158] sm:$0xf]
        %v1071 = vld [vmem:[#allocation9 + $0x15c] sm:$0xf]
        %v1072 = vld [vmem:[#allocation9 + $0x160] sm:$0xf]
        %v1073 = vld [vmem:[#allocation9 + $0x164] sm:$0xf]
        %v1074 = vld [vmem:[#allocation9 + $0x168] sm:$0xf]
        %v1075 = vld [vmem:[#allocation9 + $0x16c] sm:$0xf]
        %v1076 = vld [vmem:[#allocation9 + $0x170] sm:$0xf]
        %v1077 = vld [vmem:[#allocation9 + $0x174] sm:$0xf]
        %v1078 = vld [vmem:[#allocation9 + $0x178] sm:$0xf]
        %v1079 = vld [vmem:[#allocation9 + $0x17c] sm:$0xf]
        %v1128 = vunpack.c.l.b16 %v1032
        %v1129 = vunpack.c.l.b16 %v1033
        %v1130 = vunpack.c.l.b16 %v1034
        %v1131 = vunpack.c.l.b16 %v1035
        %v1132 = vunpack.c.l.b16 %v1036
        %v1133 = vunpack.c.l.b16 %v1037
        %v1134 = vunpack.c.l.b16 %v1038
        %v1135 = vunpack.c.l.b16 %v1039
        %v1136 = vunpack.c.l.b16 %v1040
        %v1137 = vunpack.c.l.b16 %v1041
        %v1138 = vunpack.c.l.b16 %v1042
        %v1139 = vunpack.c.l.b16 %v1043
        %v1140 = vunpack.c.l.b16 %v1044
        %v1141 = vunpack.c.l.b16 %v1045
        %v1142 = vunpack.c.l.b16 %v1046
        %v1143 = vunpack.c.l.b16 %v1047
        %v1144 = vunpack.c.l.b16 %v1048
        %v1145 = vunpack.c.l.b16 %v1049
        %v1146 = vunpack.c.l.b16 %v1050
        %v1147 = vunpack.c.l.b16 %v1051
        %v1148 = vunpack.c.l.b16 %v1052
        %v1149 = vunpack.c.l.b16 %v1053
        %v1150 = vunpack.c.l.b16 %v1054
        %v1151 = vunpack.c.l.b16 %v1055
        %v1152 = vunpack.c.l.b16 %v1056
        %v1153 = vunpack.c.l.b16 %v1057
        %v1154 = vunpack.c.l.b16 %v1058
        %v1155 = vunpack.c.l.b16 %v1059
        %v1156 = vunpack.c.l.b16 %v1060
        %v1157 = vunpack.c.l.b16 %v1061
        %v1158 = vunpack.c.l.b16 %v1062
        %v1159 = vunpack.c.l.b16 %v1063
        %v1160 = vunpack.c.l.b16 %v1064
        %v1161 = vunpack.c.l.b16 %v1065
        %v1162 = vunpack.c.l.b16 %v1066
        %v1163 = vunpack.c.l.b16 %v1067
        %v1164 = vunpack.c.l.b16 %v1068
        %v1165 = vunpack.c.l.b16 %v1069
        %v1166 = vunpack.c.l.b16 %v1070
        %v1167 = vunpack.c.l.b16 %v1071
        %v1168 = vunpack.c.l.b16 %v1072
        %v1169 = vunpack.c.l.b16 %v1073
        %v1170 = vunpack.c.l.b16 %v1074
        %v1171 = vunpack.c.l.b16 %v1075
        %v1172 = vunpack.c.l.b16 %v1076
        %v1173 = vunpack.c.l.b16 %v1077
        %v1174 = vunpack.c.l.b16 %v1078
        %v1175 = vunpack.c.l.b16 %v1079
        %v1176 = vpack.c.b16 %v1129, %v1128
        %v1177 = vpack.c.b16 %v1131, %v1130
        %v1178 = vpack.c.b16 %v1133, %v1132
        %v1179 = vpack.c.b16 %v1135, %v1134
        %v1180 = vpack.c.b16 %v1137, %v1136
        %v1181 = vpack.c.b16 %v1139, %v1138
        %v1182 = vpack.c.b16 %v1141, %v1140
        %v1183 = vpack.c.b16 %v1143, %v1142
        %v1184 = vpack.c.b16 %v1145, %v1144
        %v1185 = vpack.c.b16 %v1147, %v1146
        %v1186 = vpack.c.b16 %v1149, %v1148
        %v1187 = vpack.c.b16 %v1151, %v1150
        %v1188 = vpack.c.b16 %v1153, %v1152
        %v1189 = vpack.c.b16 %v1155, %v1154
        %v1190 = vpack.c.b16 %v1157, %v1156
        %v1191 = vpack.c.b16 %v1159, %v1158
        %v1192 = vpack.c.b16 %v1161, %v1160
        %v1193 = vpack.c.b16 %v1163, %v1162
        %v1194 = vpack.c.b16 %v1165, %v1164
        %v1195 = vpack.c.b16 %v1167, %v1166
        %v1196 = vpack.c.b16 %v1169, %v1168
        %v1197 = vpack.c.b16 %v1171, %v1170
        %v1198 = vpack.c.b16 %v1173, %v1172
        %v1199 = vpack.c.b16 %v1175, %v1174
        %1224 = vmatprep.subr.bf16.mxu0 0
        %1225 = vmatpush1.bf16.msra.mxu0 %v1176
        %1226 = vmatprep.subr.bf16.mxu0 0
        %1227 = vmatpush1.bf16.msra.mxu0 %v1177
        %1228 = vmatprep.subr.bf16.mxu0 0
        %1229 = vmatpush1.bf16.msra.mxu0 %v1178
        %1230 = vmatprep.subr.bf16.mxu0 0
        %1231 = vmatpush1.bf16.msra.mxu0 %v1179
        %1232 = vmatprep.subr.bf16.mxu0 0
        %1233 = vmatpush1.bf16.msra.mxu0 %v1180
        %1234 = vmatprep.subr.bf16.mxu0 0
        %1235 = vmatpush1.bf16.msra.mxu0 %v1181
        %1236 = vmatprep.subr.bf16.mxu0 0
        %1237 = vmatpush1.bf16.msra.mxu0 %v1182
        %1238 = vmatprep.subr.bf16.mxu0 0
        %1239 = vmatpush1.bf16.msra.mxu0 %v1183
        %1240 = vmatprep.subr.bf16.mxu0 0
        %1241 = vmatpush1.bf16.msra.mxu0 %v1184
        %1242 = vmatprep.subr.bf16.mxu0 0
        %1243 = vmatpush1.bf16.msra.mxu0 %v1185
        %1244 = vmatprep.subr.bf16.mxu0 0
        %1245 = vmatpush1.bf16.msra.mxu0 %v1186
        %1246 = vmatprep.subr.bf16.mxu0 0
        %1247 = vmatpush1.bf16.msra.mxu0 %v1187
        %1248 = vmatprep.subr.bf16.mxu0 0
        %1249 = vmatpush1.bf16.msra.mxu0 %v1188
        %1250 = vmatprep.subr.bf16.mxu0 0
        %1251 = vmatpush1.bf16.msra.mxu0 %v1189
        %1252 = vmatprep.subr.bf16.mxu0 0
        %1253 = vmatpush1.bf16.msra.mxu0 %v1190
        %1254 = vmatprep.subr.bf16.mxu0 0
        %1255 = vmatpush1.bf16.msra.mxu0 %v1191
        %1256 = vmatprep.mubr.bf16.mxu0 %v985
        %1257 = vmatmul.mubr.bf16.gmra.mrb[0].mxu0 %v984
        %v1258 = vpop.f32.mrb[0].mxu0
        %v1259 = vadd.f32 0.0, %v1258
        %v1260 = vpop.f32.mrb[0].mxu0
        %v1261 = vpop.f32.mrb[0].mxu0
        %v1262 = vadd.f32 0.0, %v1261
        %v1263 = vpop.f32.mrb[0].mxu0
        %1264 = vmatprep.mubr.bf16.mxu0 %v988
        %1265 = vmatmul.mubr.bf16.gmra.mrb[0].mxu0 %v987
        %v1266 = vpop.f32.mrb[0].mxu0
        %v1267 = vadd.f32 0.0, %v1266
        %v1268 = vpop.f32.mrb[0].mxu0
        %v1269 = vpop.f32.mrb[0].mxu0
        %v1270 = vadd.f32 0.0, %v1269
        %v1271 = vpop.f32.mrb[0].mxu0
        %1272 = vmatprep.mubr.bf16.mxu0 %v991
        %1273 = vmatmul.mubr.bf16.gmra.mrb[0].mxu0 %v990
        %v1274 = vpop.f32.mrb[0].mxu0
        %v1275 = vadd.f32 0.0, %v1274
        %v1276 = vpop.f32.mrb[0].mxu0
        %v1277 = vpop.f32.mrb[0].mxu0
        %v1278 = vadd.f32 0.0, %v1277
        %v1279 = vpop.f32.mrb[0].mxu0
        %1280 = vmatprep.mubr.bf16.mxu0 %v994
        %1281 = vmatmul.mubr.bf16.gmra.mrb[0].mxu0 %v993
        %v1282 = vpop.f32.mrb[0].mxu0
        %v1283 = vadd.f32 0.0, %v1282
        %v1284 = vpop.f32.mrb[0].mxu0
        %v1285 = vpop.f32.mrb[0].mxu0
        %v1286 = vadd.f32 0.0, %v1285
        %v1287 = vpop.f32.mrb[0].mxu0
        %1288 = vmatprep.mubr.bf16.mxu0 %v997
        %1289 = vmatmul.mubr.bf16.gmra.mrb[0].mxu0 %v996
        %v1290 = vpop.f32.mrb[0].mxu0
        %v1291 = vadd.f32 0.0, %v1290
        %v1292 = vpop.f32.mrb[0].mxu0
        %v1293 = vpop.f32.mrb[0].mxu0
        %v1294 = vadd.f32 0.0, %v1293
        %v1295 = vpop.f32.mrb[0].mxu0
        %1296 = vmatprep.mubr.bf16.mxu0 %v1000
        %1297 = vmatmul.mubr.bf16.gmra.mrb[0].mxu0 %v999
        %v1298 = vpop.f32.mrb[0].mxu0
        %v1299 = vadd.f32 0.0, %v1298
        %v1300 = vpop.f32.mrb[0].mxu0
        %v1301 = vpop.f32.mrb[0].mxu0
        %v1302 = vadd.f32 0.0, %v1301
        %v1303 = vpop.f32.mrb[0].mxu0
        %1304 = vmatprep.mubr.bf16.mxu0 %v1003
        %1305 = vmatmul.mubr.bf16.gmra.mrb[0].mxu0 %v1002
        %v1306 = vpop.f32.mrb[0].mxu0
        %v1307 = vadd.f32 0.0, %v1306
        %v1308 = vpop.f32.mrb[0].mxu0
        %v1309 = vpop.f32.mrb[0].mxu0
        %v1310 = vadd.f32 0.0, %v1309
        %v1311 = vpop.f32.mrb[0].mxu0
        %1312 = vmatprep.mubr.bf16.mxu0 %v1006
        %1313 = vmatmul.mubr.bf16.gmra.mrb[0].mxu0 %v1005
        %v1314 = vpop.f32.mrb[0].mxu0
        %v1315 = vadd.f32 0.0, %v1314
        %v1316 = vpop.f32.mrb[0].mxu0
        %v1317 = vpop.f32.mrb[0].mxu0
        %v1318 = vadd.f32 0.0, %v1317
        %v1319 = vpop.f32.mrb[0].mxu0
        %1320 = vmatprep.mubr.bf16.mxu0 %v1009
        %1321 = vmatmul.mubr.bf16.gmra.mrb[0].mxu0 %v1008
        %v1322 = vpop.f32.mrb[0].mxu0
        %v1323 = vadd.f32 0.0, %v1322
        %v1324 = vpop.f32.mrb[0].mxu0
        %v1325 = vpop.f32.mrb[0].mxu0
        %v1326 = vadd.f32 0.0, %v1325
        %v1327 = vpop.f32.mrb[0].mxu0
        %1328 = vmatprep.mubr.bf16.mxu0 %v1012
        %1329 = vmatmul.mubr.bf16.gmra.mrb[0].mxu0 %v1011
        %v1330 = vpop.f32.mrb[0].mxu0
        %v1331 = vadd.f32 0.0, %v1330
        %v1332 = vpop.f32.mrb[0].mxu0
        %v1333 = vpop.f32.mrb[0].mxu0
        %v1334 = vadd.f32 0.0, %v1333
        %v1335 = vpop.f32.mrb[0].mxu0
        %1336 = vmatprep.mubr.bf16.mxu0 %v1015
        %1337 = vmatmul.mubr.bf16.gmra.mrb[0].mxu0 %v1014
        %v1338 = vpop.f32.mrb[0].mxu0
        %v1339 = vadd.f32 0.0, %v1338
        %v1340 = vpop.f32.mrb[0].mxu0
        %v1341 = vpop.f32.mrb[0].mxu0
        %v1342 = vadd.f32 0.0, %v1341
        %v1343 = vpop.f32.mrb[0].mxu0
        %1344 = vmatprep.mubr.bf16.mxu0 %v1018
        %1345 = vmatmul.mubr.bf16.gmra.mrb[0].mxu0 %v1017
        %v1346 = vpop.f32.mrb[0].mxu0
        %v1347 = vadd.f32 0.0, %v1346
        %v1348 = vpop.f32.mrb[0].mxu0
        %v1349 = vpop.f32.mrb[0].mxu0
        %v1350 = vadd.f32 0.0, %v1349
        %v1351 = vpop.f32.mrb[0].mxu0
        %1352 = vmatprep.mubr.bf16.mxu0 %v1021
        %1353 = vmatmul.mubr.bf16.gmra.mrb[0].mxu0 %v1020
        %v1354 = vpop.f32.mrb[0].mxu0
        %v1355 = vadd.f32 0.0, %v1354
        %v1356 = vpop.f32.mrb[0].mxu0
        %v1357 = vpop.f32.mrb[0].mxu0
        %v1358 = vadd.f32 0.0, %v1357
        %v1359 = vpop.f32.mrb[0].mxu0
        %1360 = vmatprep.mubr.bf16.mxu0 %v1024
        %1361 = vmatmul.mubr.bf16.gmra.mrb[0].mxu0 %v1023
        %v1362 = vpop.f32.mrb[0].mxu0
        %v1363 = vadd.f32 0.0, %v1362
        %v1364 = vpop.f32.mrb[0].mxu0
        %v1365 = vpop.f32.mrb[0].mxu0
        %v1366 = vadd.f32 0.0, %v1365
        %v1367 = vpop.f32.mrb[0].mxu0
        %1368 = vmatprep.mubr.bf16.mxu0 %v1027
        %1369 = vmatmul.mubr.bf16.gmra.mrb[0].mxu0 %v1026
        %v1370 = vpop.f32.mrb[0].mxu0
        %v1371 = vadd.f32 0.0, %v1370
        %v1372 = vpop.f32.mrb[0].mxu0
        %v1373 = vpop.f32.mrb[0].mxu0
        %v1374 = vadd.f32 0.0, %v1373
        %v1375 = vpop.f32.mrb[0].mxu0
        %1376 = vmatprep.mubr.bf16.mxu0 %v1030
        %1377 = vmatmul.mubr.bf16.gmra.mrb[0].mxu0 %v1029
        %v1378 = vpop.f32.mrb[0].mxu0
        %v1379 = vadd.f32 0.0, %v1378
        %v1380 = vpop.f32.mrb[0].mxu0
        %v1381 = vpop.f32.mrb[0].mxu0
        %v1382 = vadd.f32 0.0, %v1381
        %v1383 = vpop.f32.mrb[0].mxu0
        %1384 = vdwg.mxu0
        %1385 = vmatprep.subr.bf16.mxu0 0
        %1386 = vmatpush1.bf16.msra.mxu0 %v1192
        %1387 = vmatprep.subr.bf16.mxu0 0
        %1388 = vmatpush1.bf16.msra.mxu0 %v1193
        %1389 = vmatprep.subr.bf16.mxu0 0
        %1390 = vmatpush1.bf16.msra.mxu0 %v1194
        %1391 = vmatprep.subr.bf16.mxu0 0
        %1392 = vmatpush1.bf16.msra.mxu0 %v1195
        %1393 = vmatprep.subr.bf16.mxu0 0
        %1394 = vmatpush1.bf16.msra.mxu0 %v1196
        %1395 = vmatprep.subr.bf16.mxu0 0
        %1396 = vmatpush1.bf16.msra.mxu0 %v1197
        %1397 = vmatprep.subr.bf16.mxu0 0
        %1398 = vmatpush1.bf16.msra.mxu0 %v1198
        %1399 = vmatprep.subr.bf16.mxu0 0
        %1400 = vmatpush1.bf16.msra.mxu0 %v1199
        %1401 = vmatprep.subr.bf16.mxu0 0
        %1402 = vmatpush1.bf16.msra.mxu0 0
        %1403 = vmatprep.subr.bf16.mxu0 0
        %1404 = vmatpush1.bf16.msra.mxu0 0
        %1405 = vmatprep.subr.bf16.mxu0 0
        %1406 = vmatpush1.bf16.msra.mxu0 0
        %1407 = vmatprep.subr.bf16.mxu0 0
        %1408 = vmatpush1.bf16.msra.mxu0 0
        %1409 = vmatprep.subr.bf16.mxu0 0
        %1410 = vmatpush1.bf16.msra.mxu0 0
        %1411 = vmatprep.subr.bf16.mxu0 0
        %1412 = vmatpush1.bf16.msra.mxu0 0
        %1413 = vmatprep.subr.bf16.mxu0 0
        %1414 = vmatpush1.bf16.msra.mxu0 0
        %1415 = vmatprep.subr.bf16.mxu0 0
        %1416 = vmatpush1.bf16.msra.mxu0 0
        %1417 = vmatprep.mubr.bf16.mxu0 0
        %1418 = vmatmul.mubr.bf16.gmra.mrb[0].mxu0 %v986
        %v1419 = vpop.f32.mrb[0].mxu0
        %v1420 = vadd.f32 %v1259, %v1419
        %v1421 = vpop.f32.mrb[0].mxu0
        %v1422 = vpop.f32.mrb[0].mxu0
        %v1423 = vadd.f32 %v1262, %v1422
        %v1424 = vpop.f32.mrb[0].mxu0
        %1425 = vmatprep.mubr.bf16.mxu0 0
        %1426 = vmatmul.mubr.bf16.gmra.mrb[0].mxu0 %v989
        %v1427 = vpop.f32.mrb[0].mxu0
        %v1428 = vadd.f32 %v1267, %v1427
        %v1429 = vpop.f32.mrb[0].mxu0
        %v1430 = vpop.f32.mrb[0].mxu0
        %v1431 = vadd.f32 %v1270, %v1430
        %v1432 = vpop.f32.mrb[0].mxu0
        %1433 = vmatprep.mubr.bf16.mxu0 0
        %1434 = vmatmul.mubr.bf16.gmra.mrb[0].mxu0 %v992
        %v1435 = vpop.f32.mrb[0].mxu0
        %v1436 = vadd.f32 %v1275, %v1435
        %v1437 = vpop.f32.mrb[0].mxu0
        %v1438 = vpop.f32.mrb[0].mxu0
        %v1439 = vadd.f32 %v1278, %v1438
        %v1440 = vpop.f32.mrb[0].mxu0
        %1441 = vmatprep.mubr.bf16.mxu0 0
        %1442 = vmatmul.mubr.bf16.gmra.mrb[0].mxu0 %v995
        %v1443 = vpop.f32.mrb[0].mxu0
        %v1444 = vadd.f32 %v1283, %v1443
        %v1445 = vpop.f32.mrb[0].mxu0
        %v1446 = vpop.f32.mrb[0].mxu0
        %v1447 = vadd.f32 %v1286, %v1446
        %v1448 = vpop.f32.mrb[0].mxu0
        %1449 = vmatprep.mubr.bf16.mxu0 0
        %1450 = vmatmul.mubr.bf16.gmra.mrb[0].mxu0 %v998
        %v1451 = vpop.f32.mrb[0].mxu0
        %v1452 = vadd.f32 %v1291, %v1451
        %v1453 = vpop.f32.mrb[0].mxu0
        %v1454 = vpop.f32.mrb[0].mxu0
        %v1455 = vadd.f32 %v1294, %v1454
        %v1456 = vpop.f32.mrb[0].mxu0
        %1457 = vmatprep.mubr.bf16.mxu0 0
        %1458 = vmatmul.mubr.bf16.gmra.mrb[0].mxu0 %v1001
        %v1459 = vpop.f32.mrb[0].mxu0
        %v1460 = vadd.f32 %v1299, %v1459
        %v1461 = vpop.f32.mrb[0].mxu0
        %v1462 = vpop.f32.mrb[0].mxu0
        %v1463 = vadd.f32 %v1302, %v1462
        %v1464 = vpop.f32.mrb[0].mxu0
        %1465 = vmatprep.mubr.bf16.mxu0 0
        %1466 = vmatmul.mubr.bf16.gmra.mrb[0].mxu0 %v1004
        %v1467 = vpop.f32.mrb[0].mxu0
        %v1468 = vadd.f32 %v1307, %v1467
        %v1469 = vpop.f32.mrb[0].mxu0
        %v1470 = vpop.f32.mrb[0].mxu0
        %v1471 = vadd.f32 %v1310, %v1470
        %v1472 = vpop.f32.mrb[0].mxu0
        %1473 = vmatprep.mubr.bf16.mxu0 0
        %1474 = vmatmul.mubr.bf16.gmra.mrb[0].mxu0 %v1007
        %v1475 = vpop.f32.mrb[0].mxu0
        %v1476 = vadd.f32 %v1315, %v1475
        %v1477 = vpop.f32.mrb[0].mxu0
        %v1478 = vpop.f32.mrb[0].mxu0
        %v1479 = vadd.f32 %v1318, %v1478
        %v1480 = vpop.f32.mrb[0].mxu0
        %1481 = vmatprep.mubr.bf16.mxu0 0
        %1482 = vmatmul.mubr.bf16.gmra.mrb[0].mxu0 %v1010
        %v1483 = vpop.f32.mrb[0].mxu0
        %v1484 = vadd.f32 %v1323, %v1483
        %v1485 = vpop.f32.mrb[0].mxu0
        %v1486 = vpop.f32.mrb[0].mxu0
        %v1487 = vadd.f32 %v1326, %v1486
        %v1488 = vpop.f32.mrb[0].mxu0
        %1489 = vmatprep.mubr.bf16.mxu0 0
        %1490 = vmatmul.mubr.bf16.gmra.mrb[0].mxu0 %v1013
        %v1491 = vpop.f32.mrb[0].mxu0
        %v1492 = vadd.f32 %v1331, %v1491
        %v1493 = vpop.f32.mrb[0].mxu0
        %v1494 = vpop.f32.mrb[0].mxu0
        %v1495 = vadd.f32 %v1334, %v1494
        %v1496 = vpop.f32.mrb[0].mxu0
        %1497 = vmatprep.mubr.bf16.mxu0 0
        %1498 = vmatmul.mubr.bf16.gmra.mrb[0].mxu0 %v1016
        %v1499 = vpop.f32.mrb[0].mxu0
        %v1500 = vadd.f32 %v1339, %v1499
        %v1501 = vpop.f32.mrb[0].mxu0
        %v1502 = vpop.f32.mrb[0].mxu0
        %v1503 = vadd.f32 %v1342, %v1502
        %v1504 = vpop.f32.mrb[0].mxu0
        %1505 = vmatprep.mubr.bf16.mxu0 0
        %1506 = vmatmul.mubr.bf16.gmra.mrb[0].mxu0 %v1019
        %v1507 = vpop.f32.mrb[0].mxu0
        %v1508 = vadd.f32 %v1347, %v1507
        %v1509 = vpop.f32.mrb[0].mxu0
        %v1510 = vpop.f32.mrb[0].mxu0
        %v1511 = vadd.f32 %v1350, %v1510
        %v1512 = vpop.f32.mrb[0].mxu0
        %1513 = vmatprep.mubr.bf16.mxu0 0
        %1514 = vmatmul.mubr.bf16.gmra.mrb[0].mxu0 %v1022
        %v1515 = vpop.f32.mrb[0].mxu0
        %v1516 = vadd.f32 %v1355, %v1515
        %v1517 = vpop.f32.mrb[0].mxu0
        %v1518 = vpop.f32.mrb[0].mxu0
        %v1519 = vadd.f32 %v1358, %v1518
        %v1520 = vpop.f32.mrb[0].mxu0
        %1521 = vmatprep.mubr.bf16.mxu0 0
        %1522 = vmatmul.mubr.bf16.gmra.mrb[0].mxu0 %v1025
        %v1523 = vpop.f32.mrb[0].mxu0
        %v1524 = vadd.f32 %v1363, %v1523
        %v1525 = vpop.f32.mrb[0].mxu0
        %v1526 = vpop.f32.mrb[0].mxu0
        %v1527 = vadd.f32 %v1366, %v1526
        %v1528 = vpop.f32.mrb[0].mxu0
        %1529 = vmatprep.mubr.bf16.mxu0 0
        %1530 = vmatmul.mubr.bf16.gmra.mrb[0].mxu0 %v1028
        %v1531 = vpop.f32.mrb[0].mxu0
        %v1532 = vadd.f32 %v1371, %v1531
        %v1533 = vpop.f32.mrb[0].mxu0
        %v1534 = vpop.f32.mrb[0].mxu0
        %v1535 = vadd.f32 %v1374, %v1534
        %v1536 = vpop.f32.mrb[0].mxu0
        %1537 = vmatprep.mubr.bf16.mxu0 0
        %1538 = vmatmul.mubr.bf16.gmra.mrb[0].mxu0 %v1031
        %v1539 = vpop.f32.mrb[0].mxu0
        %v1540 = vadd.f32 %v1379, %v1539
        %v1541 = vpop.f32.mrb[0].mxu0
        %v1542 = vpop.f32.mrb[0].mxu0
        %v1543 = vadd.f32 %v1382, %v1542
        %v1544 = vpop.f32.mrb[0].mxu0
        %1545 = vdwg.mxu0
        %v1594 = vunpack.c.l.b16 %v936
        %v1595 = vunpack.c.l.b16 %v937
        %v1596 = vunpack.c.l.b16 %v938
        %v1597 = vunpack.c.l.b16 %v939
        %v1598 = vunpack.c.l.b16 %v940
        %v1599 = vunpack.c.l.b16 %v941
        %v1600 = vunpack.c.l.b16 %v942
        %v1601 = vunpack.c.l.b16 %v943
        %v1602 = vunpack.c.l.b16 %v944
        %v1603 = vunpack.c.l.b16 %v945
        %v1604 = vunpack.c.l.b16 %v946
        %v1605 = vunpack.c.l.b16 %v947
        %v1606 = vunpack.c.l.b16 %v948
        %v1607 = vunpack.c.l.b16 %v949
        %v1608 = vunpack.c.l.b16 %v950
        %v1609 = vunpack.c.l.b16 %v951
        %v1610 = vunpack.c.l.b16 %v952
        %v1611 = vunpack.c.l.b16 %v953
        %v1612 = vunpack.c.l.b16 %v954
        %v1613 = vunpack.c.l.b16 %v955
        %v1614 = vunpack.c.l.b16 %v956
        %v1615 = vunpack.c.l.b16 %v957
        %v1616 = vunpack.c.l.b16 %v958
        %v1617 = vunpack.c.l.b16 %v959
        %v1618 = vunpack.c.l.b16 %v960
        %v1619 = vunpack.c.l.b16 %v961
        %v1620 = vunpack.c.l.b16 %v962
        %v1621 = vunpack.c.l.b16 %v963
        %v1622 = vunpack.c.l.b16 %v964
        %v1623 = vunpack.c.l.b16 %v965
        %v1624 = vunpack.c.l.b16 %v966
        %v1625 = vunpack.c.l.b16 %v967
        %v1626 = vunpack.c.l.b16 %v968
        %v1627 = vunpack.c.l.b16 %v969
        %v1628 = vunpack.c.l.b16 %v970
        %v1629 = vunpack.c.l.b16 %v971
        %v1630 = vunpack.c.l.b16 %v972
        %v1631 = vunpack.c.l.b16 %v973
        %v1632 = vunpack.c.l.b16 %v974
        %v1633 = vunpack.c.l.b16 %v975
        %v1634 = vunpack.c.l.b16 %v976
        %v1635 = vunpack.c.l.b16 %v977
        %v1636 = vunpack.c.l.b16 %v978
        %v1637 = vunpack.c.l.b16 %v979
        %v1638 = vunpack.c.l.b16 %v980
        %v1639 = vunpack.c.l.b16 %v981
        %v1640 = vunpack.c.l.b16 %v982
        %v1641 = vunpack.c.l.b16 %v983
        %v1642 = vpack.c.b16 %v1595, %v1594
        %v1643 = vpack.c.b16 %v1597, %v1596
        %v1644 = vpack.c.b16 %v1599, %v1598
        %v1645 = vpack.c.b16 %v1601, %v1600
        %v1646 = vpack.c.b16 %v1603, %v1602
        %v1647 = vpack.c.b16 %v1605, %v1604
        %v1648 = vpack.c.b16 %v1607, %v1606
        %v1649 = vpack.c.b16 %v1609, %v1608
        %v1650 = vpack.c.b16 %v1611, %v1610
        %v1651 = vpack.c.b16 %v1613, %v1612
        %v1652 = vpack.c.b16 %v1615, %v1614
        %v1653 = vpack.c.b16 %v1617, %v1616
        %v1654 = vpack.c.b16 %v1619, %v1618
        %v1655 = vpack.c.b16 %v1621, %v1620
        %v1656 = vpack.c.b16 %v1623, %v1622
        %v1657 = vpack.c.b16 %v1625, %v1624
        %v1658 = vpack.c.b16 %v1627, %v1626
        %v1659 = vpack.c.b16 %v1629, %v1628
        %v1660 = vpack.c.b16 %v1631, %v1630
        %v1661 = vpack.c.b16 %v1633, %v1632
        %v1662 = vpack.c.b16 %v1635, %v1634
        %v1663 = vpack.c.b16 %v1637, %v1636
        %v1664 = vpack.c.b16 %v1639, %v1638
        %v1665 = vpack.c.b16 %v1641, %v1640
        %1690 = vmatprep.subr.bf16.mxu0 0
        %1691 = vmatpush1.bf16.msra.mxu0 %v1642
        %1692 = vmatprep.subr.bf16.mxu0 0
        %1693 = vmatpush1.bf16.msra.mxu0 %v1643
        %1694 = vmatprep.subr.bf16.mxu0 0
        %1695 = vmatpush1.bf16.msra.mxu0 %v1644
        %1696 = vmatprep.subr.bf16.mxu0 0
        %1697 = vmatpush1.bf16.msra.mxu0 %v1645
        %1698 = vmatprep.subr.bf16.mxu0 0
        %1699 = vmatpush1.bf16.msra.mxu0 %v1646
        %1700 = vmatprep.subr.bf16.mxu0 0
        %1701 = vmatpush1.bf16.msra.mxu0 %v1647
        %1702 = vmatprep.subr.bf16.mxu0 0
        %1703 = vmatpush1.bf16.msra.mxu0 %v1648
        %1704 = vmatprep.subr.bf16.mxu0 0
        %1705 = vmatpush1.bf16.msra.mxu0 %v1649
        %1706 = vmatprep.subr.bf16.mxu0 0
        %1707 = vmatpush1.bf16.msra.mxu0 %v1650
        %1708 = vmatprep.subr.bf16.mxu0 0
        %1709 = vmatpush1.bf16.msra.mxu0 %v1651
        %1710 = vmatprep.subr.bf16.mxu0 0
        %1711 = vmatpush1.bf16.msra.mxu0 %v1652
        %1712 = vmatprep.subr.bf16.mxu0 0
        %1713 = vmatpush1.bf16.msra.mxu0 %v1653
        %1714 = vmatprep.subr.bf16.mxu0 0
        %1715 = vmatpush1.bf16.msra.mxu0 %v1654
        %1716 = vmatprep.subr.bf16.mxu0 0
        %1717 = vmatpush1.bf16.msra.mxu0 %v1655
        %1718 = vmatprep.subr.bf16.mxu0 0
        %1719 = vmatpush1.bf16.msra.mxu0 %v1656
        %1720 = vmatprep.subr.bf16.mxu0 0
        %1721 = vmatpush1.bf16.msra.mxu0 %v1657
        %1722 = vmatprep.mubr.bf16.mxu0 %v889
        %1723 = vmatmul.mubr.bf16.gmra.mrb[0].mxu0 %v888
        %v1724 = vpop.f32.mrb[0].mxu0
        %v1725 = vadd.f32 %v1420, %v1724
        %v1726 = vpop.f32.mrb[0].mxu0
        %v1727 = vpop.f32.mrb[0].mxu0
        %v1728 = vadd.f32 %v1423, %v1727
        %v1729 = vpop.f32.mrb[0].mxu0
        %1730 = vmatprep.mubr.bf16.mxu0 %v892
        %1731 = vmatmul.mubr.bf16.gmra.mrb[0].mxu0 %v891
        %v1732 = vpop.f32.mrb[0].mxu0
        %v1733 = vadd.f32 %v1428, %v1732
        %v1734 = vpop.f32.mrb[0].mxu0
        %v1735 = vpop.f32.mrb[0].mxu0
        %v1736 = vadd.f32 %v1431, %v1735
        %v1737 = vpop.f32.mrb[0].mxu0
        %1738 = vmatprep.mubr.bf16.mxu0 %v895
        %1739 = vmatmul.mubr.bf16.gmra.mrb[0].mxu0 %v894
        %v1740 = vpop.f32.mrb[0].mxu0
        %v1741 = vadd.f32 %v1436, %v1740
        %v1742 = vpop.f32.mrb[0].mxu0
        %v1743 = vpop.f32.mrb[0].mxu0
        %v1744 = vadd.f32 %v1439, %v1743
        %v1745 = vpop.f32.mrb[0].mxu0
        %1746 = vmatprep.mubr.bf16.mxu0 %v898
        %1747 = vmatmul.mubr.bf16.gmra.mrb[0].mxu0 %v897
        %v1748 = vpop.f32.mrb[0].mxu0
        %v1749 = vadd.f32 %v1444, %v1748
        %v1750 = vpop.f32.mrb[0].mxu0
        %v1751 = vpop.f32.mrb[0].mxu0
        %v1752 = vadd.f32 %v1447, %v1751
        %v1753 = vpop.f32.mrb[0].mxu0
        %1754 = vmatprep.mubr.bf16.mxu0 %v901
        %1755 = vmatmul.mubr.bf16.gmra.mrb[0].mxu0 %v900
        %v1756 = vpop.f32.mrb[0].mxu0
        %v1757 = vadd.f32 %v1452, %v1756
        %v1758 = vpop.f32.mrb[0].mxu0
        %v1759 = vpop.f32.mrb[0].mxu0
        %v1760 = vadd.f32 %v1455, %v1759
        %v1761 = vpop.f32.mrb[0].mxu0
        %1762 = vmatprep.mubr.bf16.mxu0 %v904
        %1763 = vmatmul.mubr.bf16.gmra.mrb[0].mxu0 %v903
        %v1764 = vpop.f32.mrb[0].mxu0
        %v1765 = vadd.f32 %v1460, %v1764
        %v1766 = vpop.f32.mrb[0].mxu0
        %v1767 = vpop.f32.mrb[0].mxu0
        %v1768 = vadd.f32 %v1463, %v1767
        %v1769 = vpop.f32.mrb[0].mxu0
        %1770 = vmatprep.mubr.bf16.mxu0 %v907
        %1771 = vmatmul.mubr.bf16.gmra.mrb[0].mxu0 %v906
        %v1772 = vpop.f32.mrb[0].mxu0
        %v1773 = vadd.f32 %v1468, %v1772
        %v1774 = vpop.f32.mrb[0].mxu0
        %v1775 = vpop.f32.mrb[0].mxu0
        %v1776 = vadd.f32 %v1471, %v1775
        %v1777 = vpop.f32.mrb[0].mxu0
        %1778 = vmatprep.mubr.bf16.mxu0 %v910
        %1779 = vmatmul.mubr.bf16.gmra.mrb[0].mxu0 %v909
        %v1780 = vpop.f32.mrb[0].mxu0
        %v1781 = vadd.f32 %v1476, %v1780
        %v1782 = vpop.f32.mrb[0].mxu0
        %v1783 = vpop.f32.mrb[0].mxu0
        %v1784 = vadd.f32 %v1479, %v1783
        %v1785 = vpop.f32.mrb[0].mxu0
        %1786 = vmatprep.mubr.bf16.mxu0 %v913
        %1787 = vmatmul.mubr.bf16.gmra.mrb[0].mxu0 %v912
        %v1788 = vpop.f32.mrb[0].mxu0
        %v1789 = vadd.f32 %v1484, %v1788
        %v1790 = vpop.f32.mrb[0].mxu0
        %v1791 = vpop.f32.mrb[0].mxu0
        %v1792 = vadd.f32 %v1487, %v1791
        %v1793 = vpop.f32.mrb[0].mxu0
        %1794 = vmatprep.mubr.bf16.mxu0 %v916
        %1795 = vmatmul.mubr.bf16.gmra.mrb[0].mxu0 %v915
        %v1796 = vpop.f32.mrb[0].mxu0
        %v1797 = vadd.f32 %v1492, %v1796
        %v1798 = vpop.f32.mrb[0].mxu0
        %v1799 = vpop.f32.mrb[0].mxu0
        %v1800 = vadd.f32 %v1495, %v1799
        %v1801 = vpop.f32.mrb[0].mxu0
        %1802 = vmatprep.mubr.bf16.mxu0 %v919
        %1803 = vmatmul.mubr.bf16.gmra.mrb[0].mxu0 %v918
        %v1804 = vpop.f32.mrb[0].mxu0
        %v1805 = vadd.f32 %v1500, %v1804
        %v1806 = vpop.f32.mrb[0].mxu0
        %v1807 = vpop.f32.mrb[0].mxu0
        %v1808 = vadd.f32 %v1503, %v1807
        %v1809 = vpop.f32.mrb[0].mxu0
        %1810 = vmatprep.mubr.bf16.mxu0 %v922
        %1811 = vmatmul.mubr.bf16.gmra.mrb[0].mxu0 %v921
        %v1812 = vpop.f32.mrb[0].mxu0
        %v1813 = vadd.f32 %v1508, %v1812
        %v1814 = vpop.f32.mrb[0].mxu0
        %v1815 = vpop.f32.mrb[0].mxu0
        %v1816 = vadd.f32 %v1511, %v1815
        %v1817 = vpop.f32.mrb[0].mxu0
        %1818 = vmatprep.mubr.bf16.mxu0 %v925
        %1819 = vmatmul.mubr.bf16.gmra.mrb[0].mxu0 %v924
        %v1820 = vpop.f32.mrb[0].mxu0
        %v1821 = vadd.f32 %v1516, %v1820
        %v1822 = vpop.f32.mrb[0].mxu0
        %v1823 = vpop.f32.mrb[0].mxu0
        %v1824 = vadd.f32 %v1519, %v1823
        %v1825 = vpop.f32.mrb[0].mxu0
        %1826 = vmatprep.mubr.bf16.mxu0 %v928
        %1827 = vmatmul.mubr.bf16.gmra.mrb[0].mxu0 %v927
        %v1828 = vpop.f32.mrb[0].mxu0
        %v1829 = vadd.f32 %v1524, %v1828
        %v1830 = vpop.f32.mrb[0].mxu0
        %v1831 = vpop.f32.mrb[0].mxu0
        %v1832 = vadd.f32 %v1527, %v1831
        %v1833 = vpop.f32.mrb[0].mxu0
        %1834 = vmatprep.mubr.bf16.mxu0 %v931
        %1835 = vmatmul.mubr.bf16.gmra.mrb[0].mxu0 %v930
        %v1836 = vpop.f32.mrb[0].mxu0
        %v1837 = vadd.f32 %v1532, %v1836
        %v1838 = vpop.f32.mrb[0].mxu0
        %v1839 = vpop.f32.mrb[0].mxu0
        %v1840 = vadd.f32 %v1535, %v1839
        %v1841 = vpop.f32.mrb[0].mxu0
        %1842 = vmatprep.mubr.bf16.mxu0 %v934
        %1843 = vmatmul.mubr.bf16.gmra.mrb[0].mxu0 %v933
        %v1844 = vpop.f32.mrb[0].mxu0
        %v1845 = vadd.f32 %v1540, %v1844
        %v1846 = vpop.f32.mrb[0].mxu0
        %v1847 = vpop.f32.mrb[0].mxu0
        %v1848 = vadd.f32 %v1543, %v1847
        %v1849 = vpop.f32.mrb[0].mxu0
        %1850 = vdwg.mxu0
        %1851 = vmatprep.subr.bf16.mxu0 0
        %1852 = vmatpush1.bf16.msra.mxu0 %v1658
        %1853 = vmatprep.subr.bf16.mxu0 0
        %1854 = vmatpush1.bf16.msra.mxu0 %v1659
        %1855 = vmatprep.subr.bf16.mxu0 0
        %1856 = vmatpush1.bf16.msra.mxu0 %v1660
        %1857 = vmatprep.subr.bf16.mxu0 0
        %1858 = vmatpush1.bf16.msra.mxu0 %v1661
        %1859 = vmatprep.subr.bf16.mxu0 0
        %1860 = vmatpush1.bf16.msra.mxu0 %v1662
        %1861 = vmatprep.subr.bf16.mxu0 0
        %1862 = vmatpush1.bf16.msra.mxu0 %v1663
        %1863 = vmatprep.subr.bf16.mxu0 0
        %1864 = vmatpush1.bf16.msra.mxu0 %v1664
        %1865 = vmatprep.subr.bf16.mxu0 0
        %1866 = vmatpush1.bf16.msra.mxu0 %v1665
        %1867 = vmatprep.subr.bf16.mxu0 0
        %1868 = vmatpush1.bf16.msra.mxu0 0
        %1869 = vmatprep.subr.bf16.mxu0 0
        %1870 = vmatpush1.bf16.msra.mxu0 0
        %1871 = vmatprep.subr.bf16.mxu0 0
        %1872 = vmatpush1.bf16.msra.mxu0 0
        %1873 = vmatprep.subr.bf16.mxu0 0
        %1874 = vmatpush1.bf16.msra.mxu0 0
        %1875 = vmatprep.subr.bf16.mxu0 0
        %1876 = vmatpush1.bf16.msra.mxu0 0
        %1877 = vmatprep.subr.bf16.mxu0 0
        %1878 = vmatpush1.bf16.msra.mxu0 0
        %1879 = vmatprep.subr.bf16.mxu0 0
        %1880 = vmatpush1.bf16.msra.mxu0 0
        %1881 = vmatprep.subr.bf16.mxu0 0
        %1882 = vmatpush1.bf16.msra.mxu0 0
        %1883 = vmatprep.mubr.bf16.mxu0 0
        %1884 = vmatmul.mubr.bf16.gmra.mrb[0].mxu0 %v890
        %v1885 = vpop.f32.mrb[0].mxu0
        %v1886 = vadd.f32 %v1725, %v1885
        %v1887 = vpop.f32.mrb[0].mxu0
        %v1888 = vpop.f32.mrb[0].mxu0
        %v1889 = vadd.f32 %v1728, %v1888
        %v1890 = vpop.f32.mrb[0].mxu0
        %1891 = vmatprep.mubr.bf16.mxu0 0
        %1892 = vmatmul.mubr.bf16.gmra.mrb[0].mxu0 %v893
        %v1893 = vpop.f32.mrb[0].mxu0
        %v1894 = vadd.f32 %v1733, %v1893
        %v1895 = vpop.f32.mrb[0].mxu0
        %v1896 = vpop.f32.mrb[0].mxu0
        %v1897 = vadd.f32 %v1736, %v1896
        %v1898 = vpop.f32.mrb[0].mxu0
        %1899 = vmatprep.mubr.bf16.mxu0 0
        %1900 = vmatmul.mubr.bf16.gmra.mrb[0].mxu0 %v896
        %v1901 = vpop.f32.mrb[0].mxu0
        %v1902 = vadd.f32 %v1741, %v1901
        %v1903 = vpop.f32.mrb[0].mxu0
        %v1904 = vpop.f32.mrb[0].mxu0
        %v1905 = vadd.f32 %v1744, %v1904
        %v1906 = vpop.f32.mrb[0].mxu0
        %1907 = vmatprep.mubr.bf16.mxu0 0
        %1908 = vmatmul.mubr.bf16.gmra.mrb[0].mxu0 %v899
        %v1909 = vpop.f32.mrb[0].mxu0
        %v1910 = vadd.f32 %v1749, %v1909
        %v1911 = vpop.f32.mrb[0].mxu0
        %v1912 = vpop.f32.mrb[0].mxu0
        %v1913 = vadd.f32 %v1752, %v1912
        %v1914 = vpop.f32.mrb[0].mxu0
        %1915 = vmatprep.mubr.bf16.mxu0 0
        %1916 = vmatmul.mubr.bf16.gmra.mrb[0].mxu0 %v902
        %v1917 = vpop.f32.mrb[0].mxu0
        %v1918 = vadd.f32 %v1757, %v1917
        %v1919 = vpop.f32.mrb[0].mxu0
        %v1920 = vpop.f32.mrb[0].mxu0
        %v1921 = vadd.f32 %v1760, %v1920
        %v1922 = vpop.f32.mrb[0].mxu0
        %1923 = vmatprep.mubr.bf16.mxu0 0
        %1924 = vmatmul.mubr.bf16.gmra.mrb[0].mxu0 %v905
        %v1925 = vpop.f32.mrb[0].mxu0
        %v1926 = vadd.f32 %v1765, %v1925
        %v1927 = vpop.f32.mrb[0].mxu0
        %v1928 = vpop.f32.mrb[0].mxu0
        %v1929 = vadd.f32 %v1768, %v1928
        %v1930 = vpop.f32.mrb[0].mxu0
        %1931 = vmatprep.mubr.bf16.mxu0 0
        %1932 = vmatmul.mubr.bf16.gmra.mrb[0].mxu0 %v908
        %v1933 = vpop.f32.mrb[0].mxu0
        %v1934 = vadd.f32 %v1773, %v1933
        %v1935 = vpop.f32.mrb[0].mxu0
        %v1936 = vpop.f32.mrb[0].mxu0
        %v1937 = vadd.f32 %v1776, %v1936
        %v1938 = vpop.f32.mrb[0].mxu0
        %1939 = vmatprep.mubr.bf16.mxu0 0
        %1940 = vmatmul.mubr.bf16.gmra.mrb[0].mxu0 %v911
        %v1941 = vpop.f32.mrb[0].mxu0
        %v1942 = vadd.f32 %v1781, %v1941
        %v1943 = vpop.f32.mrb[0].mxu0
        %v1944 = vpop.f32.mrb[0].mxu0
        %v1945 = vadd.f32 %v1784, %v1944
        %v1946 = vpop.f32.mrb[0].mxu0
        %1947 = vmatprep.mubr.bf16.mxu0 0
        %1948 = vmatmul.mubr.bf16.gmra.mrb[0].mxu0 %v914
        %v1949 = vpop.f32.mrb[0].mxu0
        %v1950 = vadd.f32 %v1789, %v1949
        %v1951 = vpop.f32.mrb[0].mxu0
        %v1952 = vpop.f32.mrb[0].mxu0
        %v1953 = vadd.f32 %v1792, %v1952
        %v1954 = vpop.f32.mrb[0].mxu0
        %1955 = vmatprep.mubr.bf16.mxu0 0
        %1956 = vmatmul.mubr.bf16.gmra.mrb[0].mxu0 %v917
        %v1957 = vpop.f32.mrb[0].mxu0
        %v1958 = vadd.f32 %v1797, %v1957
        %v1959 = vpop.f32.mrb[0].mxu0
        %v1960 = vpop.f32.mrb[0].mxu0
        %v1961 = vadd.f32 %v1800, %v1960
        %v1962 = vpop.f32.mrb[0].mxu0
        %1963 = vmatprep.mubr.bf16.mxu0 0
        %1964 = vmatmul.mubr.bf16.gmra.mrb[0].mxu0 %v920
        %v1965 = vpop.f32.mrb[0].mxu0
        %v1966 = vadd.f32 %v1805, %v1965
        %v1967 = vpop.f32.mrb[0].mxu0
        %v1968 = vpop.f32.mrb[0].mxu0
        %v1969 = vadd.f32 %v1808, %v1968
        %v1970 = vpop.f32.mrb[0].mxu0
        %1971 = vmatprep.mubr.bf16.mxu0 0
        %1972 = vmatmul.mubr.bf16.gmra.mrb[0].mxu0 %v923
        %v1973 = vpop.f32.mrb[0].mxu0
        %v1974 = vadd.f32 %v1813, %v1973
        %v1975 = vpop.f32.mrb[0].mxu0
        %v1976 = vpop.f32.mrb[0].mxu0
        %v1977 = vadd.f32 %v1816, %v1976
        %v1978 = vpop.f32.mrb[0].mxu0
        %1979 = vmatprep.mubr.bf16.mxu0 0
        %1980 = vmatmul.mubr.bf16.gmra.mrb[0].mxu0 %v926
        %v1981 = vpop.f32.mrb[0].mxu0
        %v1982 = vadd.f32 %v1821, %v1981
        %v1983 = vpop.f32.mrb[0].mxu0
        %v1984 = vpop.f32.mrb[0].mxu0
        %v1985 = vadd.f32 %v1824, %v1984
        %v1986 = vpop.f32.mrb[0].mxu0
        %1987 = vmatprep.mubr.bf16.mxu0 0
        %1988 = vmatmul.mubr.bf16.gmra.mrb[0].mxu0 %v929
        %v1989 = vpop.f32.mrb[0].mxu0
        %v1990 = vadd.f32 %v1829, %v1989
        %v1991 = vpop.f32.mrb[0].mxu0
        %v1992 = vpop.f32.mrb[0].mxu0
        %v1993 = vadd.f32 %v1832, %v1992
        %v1994 = vpop.f32.mrb[0].mxu0
        %1995 = vmatprep.mubr.bf16.mxu0 0
        %1996 = vmatmul.mubr.bf16.gmra.mrb[0].mxu0 %v932
        %v1997 = vpop.f32.mrb[0].mxu0
        %v1998 = vadd.f32 %v1837, %v1997
        %v1999 = vpop.f32.mrb[0].mxu0
        %v2000 = vpop.f32.mrb[0].mxu0
        %v2001 = vadd.f32 %v1840, %v2000
        %v2002 = vpop.f32.mrb[0].mxu0
        %2003 = vmatprep.mubr.bf16.mxu0 0
        %2004 = vmatmul.mubr.bf16.gmra.mrb[0].mxu0 %v935
        %v2005 = vpop.f32.mrb[0].mxu0
        %v2006 = vadd.f32 %v1845, %v2005
        %v2007 = vpop.f32.mrb[0].mxu0
        %v2008 = vpop.f32.mrb[0].mxu0
        %v2009 = vadd.f32 %v1848, %v2008
        %v2010 = vpop.f32.mrb[0].mxu0
        %2011 = vdwg.mxu0
        %s2012 = scalar_lea.vmem [#allocation2], 48
        %v2013 = vld [vmem:[%s2012] sm:$0xff]
        %v2014 = vld [vmem:[%s2012 + $0x8] sm:$0xff]
        %v2015 = vld [vmem:[%s2012 + $0x10] sm:$0xff]
        %v2016 = vld [vmem:[%s2012 + $0x18] sm:$0xff]
        %v2017 = vld [vmem:[%s2012 + $0x20] sm:$0xff]
        %v2018 = vld [vmem:[%s2012 + $0x28] sm:$0xff]
        %v2019 = vld [vmem:[%s2012 + $0x30] sm:$0xff]
        %v2020 = vld [vmem:[%s2012 + $0x38] sm:$0xff]
        %v2021 = vld [vmem:[%s2012 + $0x40] sm:$0xff]
        %v2022 = vld [vmem:[%s2012 + $0x48] sm:$0xff]
        %v2023 = vld [vmem:[%s2012 + $0x50] sm:$0xff]
        %v2024 = vld [vmem:[%s2012 + $0x58] sm:$0xff]
        %v2025 = vld [vmem:[%s2012 + $0x60] sm:$0xff]
        %v2026 = vld [vmem:[%s2012 + $0x68] sm:$0xff]
        %v2027 = vld [vmem:[%s2012 + $0x70] sm:$0xff]
        %v2028 = vld [vmem:[%s2012 + $0x78] sm:$0xff]
        %v2029 = vld [vmem:[%s2012 + $0x80] sm:$0xff]
        %v2030 = vld [vmem:[%s2012 + $0x88] sm:$0xff]
        %v2031 = vld [vmem:[%s2012 + $0x90] sm:$0xff]
        %v2032 = vld [vmem:[%s2012 + $0x98] sm:$0xff]
        %v2033 = vld [vmem:[%s2012 + $0xa0] sm:$0xff]
        %v2034 = vld [vmem:[%s2012 + $0xa8] sm:$0xff]
        %v2035 = vld [vmem:[%s2012 + $0xb0] sm:$0xff]
        %v2036 = vld [vmem:[%s2012 + $0xb8] sm:$0xff]
        %v2037 = vld [vmem:[%s2012 + $0xc0] sm:$0xff]
        %v2038 = vld [vmem:[%s2012 + $0xc8] sm:$0xff]
        %v2039 = vld [vmem:[%s2012 + $0xd0] sm:$0xff]
        %v2040 = vld [vmem:[%s2012 + $0xd8] sm:$0xff]
        %v2041 = vld [vmem:[%s2012 + $0xe0] sm:$0xff]
        %v2042 = vld [vmem:[%s2012 + $0xe8] sm:$0xff]
        %v2043 = vld [vmem:[%s2012 + $0xf0] sm:$0xff]
        %v2044 = vld [vmem:[%s2012 + $0xf8] sm:$0xff]
        %v2045 = vld [vmem:[%s2012 + $0x100] sm:$0xff]
        %v2046 = vld [vmem:[%s2012 + $0x108] sm:$0xff]
        %v2047 = vld [vmem:[%s2012 + $0x110] sm:$0xff]
        %v2048 = vld [vmem:[%s2012 + $0x118] sm:$0xff]
        %v2049 = vld [vmem:[%s2012 + $0x120] sm:$0xff]
        %v2050 = vld [vmem:[%s2012 + $0x128] sm:$0xff]
        %v2051 = vld [vmem:[%s2012 + $0x130] sm:$0xff]
        %v2052 = vld [vmem:[%s2012 + $0x138] sm:$0xff]
        %v2053 = vld [vmem:[%s2012 + $0x140] sm:$0xff]
        %v2054 = vld [vmem:[%s2012 + $0x148] sm:$0xff]
        %v2055 = vld [vmem:[%s2012 + $0x150] sm:$0xff]
        %v2056 = vld [vmem:[%s2012 + $0x158] sm:$0xff]
        %v2057 = vld [vmem:[%s2012 + $0x160] sm:$0xff]
        %v2058 = vld [vmem:[%s2012 + $0x168] sm:$0xff]
        %v2059 = vld [vmem:[%s2012 + $0x170] sm:$0xff]
        %v2060 = vld [vmem:[%s2012 + $0x178] sm:$0xff]
        %v2061 = vld [vmem:[#allocation9 + $0x180] sm:$0xf]
        %v2062 = vld [vmem:[#allocation9 + $0x184] sm:$0xf]
        %v2063 = vld [vmem:[#allocation9 + $0x188] sm:$0xf]
        %v2064 = vld [vmem:[#allocation9 + $0x18c] sm:$0xf]
        %v2065 = vld [vmem:[#allocation9 + $0x190] sm:$0xf]
        %v2066 = vld [vmem:[#allocation9 + $0x194] sm:$0xf]
        %v2067 = vld [vmem:[#allocation9 + $0x198] sm:$0xf]
        %v2068 = vld [vmem:[#allocation9 + $0x19c] sm:$0xf]
        %v2069 = vld [vmem:[#allocation9 + $0x1a0] sm:$0xf]
        %v2070 = vld [vmem:[#allocation9 + $0x1a4] sm:$0xf]
        %v2071 = vld [vmem:[#allocation9 + $0x1a8] sm:$0xf]
        %v2072 = vld [vmem:[#allocation9 + $0x1ac] sm:$0xf]
        %v2073 = vld [vmem:[#allocation9 + $0x1b0] sm:$0xf]
        %v2074 = vld [vmem:[#allocation9 + $0x1b4] sm:$0xf]
        %v2075 = vld [vmem:[#allocation9 + $0x1b8] sm:$0xf]
        %v2076 = vld [vmem:[#allocation9 + $0x1bc] sm:$0xf]
        %v2077 = vld [vmem:[#allocation9 + $0x1c0] sm:$0xf]
        %v2078 = vld [vmem:[#allocation9 + $0x1c4] sm:$0xf]
        %v2079 = vld [vmem:[#allocation9 + $0x1c8] sm:$0xf]
        %v2080 = vld [vmem:[#allocation9 + $0x1cc] sm:$0xf]
        %v2081 = vld [vmem:[#allocation9 + $0x1d0] sm:$0xf]
        %v2082 = vld [vmem:[#allocation9 + $0x1d4] sm:$0xf]
        %v2083 = vld [vmem:[#allocation9 + $0x1d8] sm:$0xf]
        %v2084 = vld [vmem:[#allocation9 + $0x1dc] sm:$0xf]
        %v2085 = vld [vmem:[#allocation9 + $0x1e0] sm:$0xf]
        %v2086 = vld [vmem:[#allocation9 + $0x1e4] sm:$0xf]
        %v2087 = vld [vmem:[#allocation9 + $0x1e8] sm:$0xf]
        %v2088 = vld [vmem:[#allocation9 + $0x1ec] sm:$0xf]
        %v2089 = vld [vmem:[#allocation9 + $0x1f0] sm:$0xf]
        %v2090 = vld [vmem:[#allocation9 + $0x1f4] sm:$0xf]
        %v2091 = vld [vmem:[#allocation9 + $0x1f8] sm:$0xf]
        %v2092 = vld [vmem:[#allocation9 + $0x1fc] sm:$0xf]
        %v2093 = vld [vmem:[#allocation9 + $0x200] sm:$0xf]
        %v2094 = vld [vmem:[#allocation9 + $0x204] sm:$0xf]
        %v2095 = vld [vmem:[#allocation9 + $0x208] sm:$0xf]
        %v2096 = vld [vmem:[#allocation9 + $0x20c] sm:$0xf]
        %v2097 = vld [vmem:[#allocation9 + $0x210] sm:$0xf]
        %v2098 = vld [vmem:[#allocation9 + $0x214] sm:$0xf]
        %v2099 = vld [vmem:[#allocation9 + $0x218] sm:$0xf]
        %v2100 = vld [vmem:[#allocation9 + $0x21c] sm:$0xf]
        %v2101 = vld [vmem:[#allocation9 + $0x220] sm:$0xf]
        %v2102 = vld [vmem:[#allocation9 + $0x224] sm:$0xf]
        %v2103 = vld [vmem:[#allocation9 + $0x228] sm:$0xf]
        %v2104 = vld [vmem:[#allocation9 + $0x22c] sm:$0xf]
        %v2105 = vld [vmem:[#allocation9 + $0x230] sm:$0xf]
        %v2106 = vld [vmem:[#allocation9 + $0x234] sm:$0xf]
        %v2107 = vld [vmem:[#allocation9 + $0x238] sm:$0xf]
        %v2108 = vld [vmem:[#allocation9 + $0x23c] sm:$0xf]
        %v2157 = vunpack.c.l.b16 %v2061
        %v2158 = vunpack.c.l.b16 %v2062
        %v2159 = vunpack.c.l.b16 %v2063
        %v2160 = vunpack.c.l.b16 %v2064
        %v2161 = vunpack.c.l.b16 %v2065
        %v2162 = vunpack.c.l.b16 %v2066
        %v2163 = vunpack.c.l.b16 %v2067
        %v2164 = vunpack.c.l.b16 %v2068
        %v2165 = vunpack.c.l.b16 %v2069
        %v2166 = vunpack.c.l.b16 %v2070
        %v2167 = vunpack.c.l.b16 %v2071
        %v2168 = vunpack.c.l.b16 %v2072
        %v2169 = vunpack.c.l.b16 %v2073
        %v2170 = vunpack.c.l.b16 %v2074
        %v2171 = vunpack.c.l.b16 %v2075
        %v2172 = vunpack.c.l.b16 %v2076
        %v2173 = vunpack.c.l.b16 %v2077
        %v2174 = vunpack.c.l.b16 %v2078
        %v2175 = vunpack.c.l.b16 %v2079
        %v2176 = vunpack.c.l.b16 %v2080
        %v2177 = vunpack.c.l.b16 %v2081
        %v2178 = vunpack.c.l.b16 %v2082
        %v2179 = vunpack.c.l.b16 %v2083
        %v2180 = vunpack.c.l.b16 %v2084
        %v2181 = vunpack.c.l.b16 %v2085
        %v2182 = vunpack.c.l.b16 %v2086
        %v2183 = vunpack.c.l.b16 %v2087
        %v2184 = vunpack.c.l.b16 %v2088
        %v2185 = vunpack.c.l.b16 %v2089
        %v2186 = vunpack.c.l.b16 %v2090
        %v2187 = vunpack.c.l.b16 %v2091
        %v2188 = vunpack.c.l.b16 %v2092
        %v2189 = vunpack.c.l.b16 %v2093
        %v2190 = vunpack.c.l.b16 %v2094
        %v2191 = vunpack.c.l.b16 %v2095
        %v2192 = vunpack.c.l.b16 %v2096
        %v2193 = vunpack.c.l.b16 %v2097
        %v2194 = vunpack.c.l.b16 %v2098
        %v2195 = vunpack.c.l.b16 %v2099
        %v2196 = vunpack.c.l.b16 %v2100
        %v2197 = vunpack.c.l.b16 %v2101
        %v2198 = vunpack.c.l.b16 %v2102
        %v2199 = vunpack.c.l.b16 %v2103
        %v2200 = vunpack.c.l.b16 %v2104
        %v2201 = vunpack.c.l.b16 %v2105
        %v2202 = vunpack.c.l.b16 %v2106
        %v2203 = vunpack.c.l.b16 %v2107
        %v2204 = vunpack.c.l.b16 %v2108
        %v2205 = vpack.c.b16 %v2158, %v2157
        %v2206 = vpack.c.b16 %v2160, %v2159
        %v2207 = vpack.c.b16 %v2162, %v2161
        %v2208 = vpack.c.b16 %v2164, %v2163
        %v2209 = vpack.c.b16 %v2166, %v2165
        %v2210 = vpack.c.b16 %v2168, %v2167
        %v2211 = vpack.c.b16 %v2170, %v2169
        %v2212 = vpack.c.b16 %v2172, %v2171
        %v2213 = vpack.c.b16 %v2174, %v2173
        %v2214 = vpack.c.b16 %v2176, %v2175
        %v2215 = vpack.c.b16 %v2178, %v2177
        %v2216 = vpack.c.b16 %v2180, %v2179
        %v2217 = vpack.c.b16 %v2182, %v2181
        %v2218 = vpack.c.b16 %v2184, %v2183
        %v2219 = vpack.c.b16 %v2186, %v2185
        %v2220 = vpack.c.b16 %v2188, %v2187
        %v2221 = vpack.c.b16 %v2190, %v2189
        %v2222 = vpack.c.b16 %v2192, %v2191
        %v2223 = vpack.c.b16 %v2194, %v2193
        %v2224 = vpack.c.b16 %v2196, %v2195
        %v2225 = vpack.c.b16 %v2198, %v2197
        %v2226 = vpack.c.b16 %v2200, %v2199
        %v2227 = vpack.c.b16 %v2202, %v2201
        %v2228 = vpack.c.b16 %v2204, %v2203
        %2253 = vmatprep.subr.bf16.mxu0 0
        %2254 = vmatpush1.bf16.msra.mxu0 %v2205
        %2255 = vmatprep.subr.bf16.mxu0 0
        %2256 = vmatpush1.bf16.msra.mxu0 %v2206
        %2257 = vmatprep.subr.bf16.mxu0 0
        %2258 = vmatpush1.bf16.msra.mxu0 %v2207
        %2259 = vmatprep.subr.bf16.mxu0 0
        %2260 = vmatpush1.bf16.msra.mxu0 %v2208
        %2261 = vmatprep.subr.bf16.mxu0 0
        %2262 = vmatpush1.bf16.msra.mxu0 %v2209
        %2263 = vmatprep.subr.bf16.mxu0 0
        %2264 = vmatpush1.bf16.msra.mxu0 %v2210
        %2265 = vmatprep.subr.bf16.mxu0 0
        %2266 = vmatpush1.bf16.msra.mxu0 %v2211
        %2267 = vmatprep.subr.bf16.mxu0 0
        %2268 = vmatpush1.bf16.msra.mxu0 %v2212
        %2269 = vmatprep.subr.bf16.mxu0 0
        %2270 = vmatpush1.bf16.msra.mxu0 %v2213
        %2271 = vmatprep.subr.bf16.mxu0 0
        %2272 = vmatpush1.bf16.msra.mxu0 %v2214
        %2273 = vmatprep.subr.bf16.mxu0 0
        %2274 = vmatpush1.bf16.msra.mxu0 %v2215
        %2275 = vmatprep.subr.bf16.mxu0 0
        %2276 = vmatpush1.bf16.msra.mxu0 %v2216
        %2277 = vmatprep.subr.bf16.mxu0 0
        %2278 = vmatpush1.bf16.msra.mxu0 %v2217
        %2279 = vmatprep.subr.bf16.mxu0 0
        %2280 = vmatpush1.bf16.msra.mxu0 %v2218
        %2281 = vmatprep.subr.bf16.mxu0 0
        %2282 = vmatpush1.bf16.msra.mxu0 %v2219
        %2283 = vmatprep.subr.bf16.mxu0 0
        %2284 = vmatpush1.bf16.msra.mxu0 %v2220
        %2285 = vmatprep.mubr.bf16.mxu0 %v2014
        %2286 = vmatmul.mubr.bf16.gmra.mrb[0].mxu0 %v2013
        %v2287 = vpop.f32.mrb[0].mxu0
        %v2288 = vadd.f32 0.0, %v2287
        %v2289 = vpop.f32.mrb[0].mxu0
        %v2290 = vpop.f32.mrb[0].mxu0
        %v2291 = vadd.f32 0.0, %v2290
        %v2292 = vpop.f32.mrb[0].mxu0
        %2293 = vmatprep.mubr.bf16.mxu0 %v2017
        %2294 = vmatmul.mubr.bf16.gmra.mrb[0].mxu0 %v2016
        %v2295 = vpop.f32.mrb[0].mxu0
        %v2296 = vadd.f32 0.0, %v2295
        %v2297 = vpop.f32.mrb[0].mxu0
        %v2298 = vpop.f32.mrb[0].mxu0
        %v2299 = vadd.f32 0.0, %v2298
        %v2300 = vpop.f32.mrb[0].mxu0
        %2301 = vmatprep.mubr.bf16.mxu0 %v2020
        %2302 = vmatmul.mubr.bf16.gmra.mrb[0].mxu0 %v2019
        %v2303 = vpop.f32.mrb[0].mxu0
        %v2304 = vadd.f32 0.0, %v2303
        %v2305 = vpop.f32.mrb[0].mxu0
        %v2306 = vpop.f32.mrb[0].mxu0
        %v2307 = vadd.f32 0.0, %v2306
        %v2308 = vpop.f32.mrb[0].mxu0
        %2309 = vmatprep.mubr.bf16.mxu0 %v2023
        %2310 = vmatmul.mubr.bf16.gmra.mrb[0].mxu0 %v2022
        %v2311 = vpop.f32.mrb[0].mxu0
        %v2312 = vadd.f32 0.0, %v2311
        %v2313 = vpop.f32.mrb[0].mxu0
        %v2314 = vpop.f32.mrb[0].mxu0
        %v2315 = vadd.f32 0.0, %v2314
        %v2316 = vpop.f32.mrb[0].mxu0
        %2317 = vmatprep.mubr.bf16.mxu0 %v2026
        %2318 = vmatmul.mubr.bf16.gmra.mrb[0].mxu0 %v2025
        %v2319 = vpop.f32.mrb[0].mxu0
        %v2320 = vadd.f32 0.0, %v2319
        %v2321 = vpop.f32.mrb[0].mxu0
        %v2322 = vpop.f32.mrb[0].mxu0
        %v2323 = vadd.f32 0.0, %v2322
        %v2324 = vpop.f32.mrb[0].mxu0
        %2325 = vmatprep.mubr.bf16.mxu0 %v2029
        %2326 = vmatmul.mubr.bf16.gmra.mrb[0].mxu0 %v2028
        %v2327 = vpop.f32.mrb[0].mxu0
        %v2328 = vadd.f32 0.0, %v2327
        %v2329 = vpop.f32.mrb[0].mxu0
        %v2330 = vpop.f32.mrb[0].mxu0
        %v2331 = vadd.f32 0.0, %v2330
        %v2332 = vpop.f32.mrb[0].mxu0
        %2333 = vmatprep.mubr.bf16.mxu0 %v2032
        %2334 = vmatmul.mubr.bf16.gmra.mrb[0].mxu0 %v2031
        %v2335 = vpop.f32.mrb[0].mxu0
        %v2336 = vadd.f32 0.0, %v2335
        %v2337 = vpop.f32.mrb[0].mxu0
        %v2338 = vpop.f32.mrb[0].mxu0
        %v2339 = vadd.f32 0.0, %v2338
        %v2340 = vpop.f32.mrb[0].mxu0
        %2341 = vmatprep.mubr.bf16.mxu0 %v2035
        %2342 = vmatmul.mubr.bf16.gmra.mrb[0].mxu0 %v2034
        %v2343 = vpop.f32.mrb[0].mxu0
        %v2344 = vadd.f32 0.0, %v2343
        %v2345 = vpop.f32.mrb[0].mxu0
        %v2346 = vpop.f32.mrb[0].mxu0
        %v2347 = vadd.f32 0.0, %v2346
        %v2348 = vpop.f32.mrb[0].mxu0
        %2349 = vmatprep.mubr.bf16.mxu0 %v2038
        %2350 = vmatmul.mubr.bf16.gmra.mrb[0].mxu0 %v2037
        %v2351 = vpop.f32.mrb[0].mxu0
        %v2352 = vadd.f32 0.0, %v2351
        %v2353 = vpop.f32.mrb[0].mxu0
        %v2354 = vpop.f32.mrb[0].mxu0
        %v2355 = vadd.f32 0.0, %v2354
        %v2356 = vpop.f32.mrb[0].mxu0
        %2357 = vmatprep.mubr.bf16.mxu0 %v2041
        %2358 = vmatmul.mubr.bf16.gmra.mrb[0].mxu0 %v2040
        %v2359 = vpop.f32.mrb[0].mxu0
        %v2360 = vadd.f32 0.0, %v2359
        %v2361 = vpop.f32.mrb[0].mxu0
        %v2362 = vpop.f32.mrb[0].mxu0
        %v2363 = vadd.f32 0.0, %v2362
        %v2364 = vpop.f32.mrb[0].mxu0
        %2365 = vmatprep.mubr.bf16.mxu0 %v2044
        %2366 = vmatmul.mubr.bf16.gmra.mrb[0].mxu0 %v2043
        %v2367 = vpop.f32.mrb[0].mxu0
        %v2368 = vadd.f32 0.0, %v2367
        %v2369 = vpop.f32.mrb[0].mxu0
        %v2370 = vpop.f32.mrb[0].mxu0
        %v2371 = vadd.f32 0.0, %v2370
        %v2372 = vpop.f32.mrb[0].mxu0
        %2373 = vmatprep.mubr.bf16.mxu0 %v2047
        %2374 = vmatmul.mubr.bf16.gmra.mrb[0].mxu0 %v2046
        %v2375 = vpop.f32.mrb[0].mxu0
        %v2376 = vadd.f32 0.0, %v2375
        %v2377 = vpop.f32.mrb[0].mxu0
        %v2378 = vpop.f32.mrb[0].mxu0
        %v2379 = vadd.f32 0.0, %v2378
        %v2380 = vpop.f32.mrb[0].mxu0
        %2381 = vmatprep.mubr.bf16.mxu0 %v2050
        %2382 = vmatmul.mubr.bf16.gmra.mrb[0].mxu0 %v2049
        %v2383 = vpop.f32.mrb[0].mxu0
        %v2384 = vadd.f32 0.0, %v2383
        %v2385 = vpop.f32.mrb[0].mxu0
        %v2386 = vpop.f32.mrb[0].mxu0
        %v2387 = vadd.f32 0.0, %v2386
        %v2388 = vpop.f32.mrb[0].mxu0
        %2389 = vmatprep.mubr.bf16.mxu0 %v2053
        %2390 = vmatmul.mubr.bf16.gmra.mrb[0].mxu0 %v2052
        %v2391 = vpop.f32.mrb[0].mxu0
        %v2392 = vadd.f32 0.0, %v2391
        %v2393 = vpop.f32.mrb[0].mxu0
        %v2394 = vpop.f32.mrb[0].mxu0
        %v2395 = vadd.f32 0.0, %v2394
        %v2396 = vpop.f32.mrb[0].mxu0
        %2397 = vmatprep.mubr.bf16.mxu0 %v2056
        %2398 = vmatmul.mubr.bf16.gmra.mrb[0].mxu0 %v2055
        %v2399 = vpop.f32.mrb[0].mxu0
        %v2400 = vadd.f32 0.0, %v2399
        %v2401 = vpop.f32.mrb[0].mxu0
        %v2402 = vpop.f32.mrb[0].mxu0
        %v2403 = vadd.f32 0.0, %v2402
        %v2404 = vpop.f32.mrb[0].mxu0
        %2405 = vmatprep.mubr.bf16.mxu0 %v2059
        %2406 = vmatmul.mubr.bf16.gmra.mrb[0].mxu0 %v2058
        %v2407 = vpop.f32.mrb[0].mxu0
        %v2408 = vadd.f32 0.0, %v2407
        %v2409 = vpop.f32.mrb[0].mxu0
        %v2410 = vpop.f32.mrb[0].mxu0
        %v2411 = vadd.f32 0.0, %v2410
        %v2412 = vpop.f32.mrb[0].mxu0
        %2413 = vdwg.mxu0
        %2414 = vmatprep.subr.bf16.mxu0 0
        %2415 = vmatpush1.bf16.msra.mxu0 %v2221
        %2416 = vmatprep.subr.bf16.mxu0 0
        %2417 = vmatpush1.bf16.msra.mxu0 %v2222
        %2418 = vmatprep.subr.bf16.mxu0 0
        %2419 = vmatpush1.bf16.msra.mxu0 %v2223
        %2420 = vmatprep.subr.bf16.mxu0 0
        %2421 = vmatpush1.bf16.msra.mxu0 %v2224
        %2422 = vmatprep.subr.bf16.mxu0 0
        %2423 = vmatpush1.bf16.msra.mxu0 %v2225
        %2424 = vmatprep.subr.bf16.mxu0 0
        %2425 = vmatpush1.bf16.msra.mxu0 %v2226
        %2426 = vmatprep.subr.bf16.mxu0 0
        %2427 = vmatpush1.bf16.msra.mxu0 %v2227
        %2428 = vmatprep.subr.bf16.mxu0 0
        %2429 = vmatpush1.bf16.msra.mxu0 %v2228
        %2430 = vmatprep.subr.bf16.mxu0 0
        %2431 = vmatpush1.bf16.msra.mxu0 0
        %2432 = vmatprep.subr.bf16.mxu0 0
        %2433 = vmatpush1.bf16.msra.mxu0 0
        %2434 = vmatprep.subr.bf16.mxu0 0
        %2435 = vmatpush1.bf16.msra.mxu0 0
        %2436 = vmatprep.subr.bf16.mxu0 0
        %2437 = vmatpush1.bf16.msra.mxu0 0
        %2438 = vmatprep.subr.bf16.mxu0 0
        %2439 = vmatpush1.bf16.msra.mxu0 0
        %2440 = vmatprep.subr.bf16.mxu0 0
        %2441 = vmatpush1.bf16.msra.mxu0 0
        %2442 = vmatprep.subr.bf16.mxu0 0
        %2443 = vmatpush1.bf16.msra.mxu0 0
        %2444 = vmatprep.subr.bf16.mxu0 0
        %2445 = vmatpush1.bf16.msra.mxu0 0
        %2446 = vmatprep.mubr.bf16.mxu0 0
        %2447 = vmatmul.mubr.bf16.gmra.mrb[0].mxu0 %v2015
        %v2448 = vpop.f32.mrb[0].mxu0
        %v2449 = vadd.f32 %v2288, %v2448
        %v2450 = vpop.f32.mrb[0].mxu0
        %v2451 = vpop.f32.mrb[0].mxu0
        %v2452 = vadd.f32 %v2291, %v2451
        %v2453 = vpop.f32.mrb[0].mxu0
        %2454 = vmatprep.mubr.bf16.mxu0 0
        %2455 = vmatmul.mubr.bf16.gmra.mrb[0].mxu0 %v2018
        %v2456 = vpop.f32.mrb[0].mxu0
        %v2457 = vadd.f32 %v2296, %v2456
        %v2458 = vpop.f32.mrb[0].mxu0
        %v2459 = vpop.f32.mrb[0].mxu0
        %v2460 = vadd.f32 %v2299, %v2459
        %v2461 = vpop.f32.mrb[0].mxu0
        %2462 = vmatprep.mubr.bf16.mxu0 0
        %2463 = vmatmul.mubr.bf16.gmra.mrb[0].mxu0 %v2021
        %v2464 = vpop.f32.mrb[0].mxu0
        %v2465 = vadd.f32 %v2304, %v2464
        %v2466 = vpop.f32.mrb[0].mxu0
        %v2467 = vpop.f32.mrb[0].mxu0
        %v2468 = vadd.f32 %v2307, %v2467
        %v2469 = vpop.f32.mrb[0].mxu0
        %2470 = vmatprep.mubr.bf16.mxu0 0
        %2471 = vmatmul.mubr.bf16.gmra.mrb[0].mxu0 %v2024
        %v2472 = vpop.f32.mrb[0].mxu0
        %v2473 = vadd.f32 %v2312, %v2472
        %v2474 = vpop.f32.mrb[0].mxu0
        %v2475 = vpop.f32.mrb[0].mxu0
        %v2476 = vadd.f32 %v2315, %v2475
        %v2477 = vpop.f32.mrb[0].mxu0
        %2478 = vmatprep.mubr.bf16.mxu0 0
        %2479 = vmatmul.mubr.bf16.gmra.mrb[0].mxu0 %v2027
        %v2480 = vpop.f32.mrb[0].mxu0
        %v2481 = vadd.f32 %v2320, %v2480
        %v2482 = vpop.f32.mrb[0].mxu0
        %v2483 = vpop.f32.mrb[0].mxu0
        %v2484 = vadd.f32 %v2323, %v2483
        %v2485 = vpop.f32.mrb[0].mxu0
        %2486 = vmatprep.mubr.bf16.mxu0 0
        %2487 = vmatmul.mubr.bf16.gmra.mrb[0].mxu0 %v2030
        %v2488 = vpop.f32.mrb[0].mxu0
        %v2489 = vadd.f32 %v2328, %v2488
        %v2490 = vpop.f32.mrb[0].mxu0
        %v2491 = vpop.f32.mrb[0].mxu0
        %v2492 = vadd.f32 %v2331, %v2491
        %v2493 = vpop.f32.mrb[0].mxu0
        %2494 = vmatprep.mubr.bf16.mxu0 0
        %2495 = vmatmul.mubr.bf16.gmra.mrb[0].mxu0 %v2033
        %v2496 = vpop.f32.mrb[0].mxu0
        %v2497 = vadd.f32 %v2336, %v2496
        %v2498 = vpop.f32.mrb[0].mxu0
        %v2499 = vpop.f32.mrb[0].mxu0
        %v2500 = vadd.f32 %v2339, %v2499
        %v2501 = vpop.f32.mrb[0].mxu0
        %2502 = vmatprep.mubr.bf16.mxu0 0
        %2503 = vmatmul.mubr.bf16.gmra.mrb[0].mxu0 %v2036
        %v2504 = vpop.f32.mrb[0].mxu0
        %v2505 = vadd.f32 %v2344, %v2504
        %v2506 = vpop.f32.mrb[0].mxu0
        %v2507 = vpop.f32.mrb[0].mxu0
        %v2508 = vadd.f32 %v2347, %v2507
        %v2509 = vpop.f32.mrb[0].mxu0
        %2510 = vmatprep.mubr.bf16.mxu0 0
        %2511 = vmatmul.mubr.bf16.gmra.mrb[0].mxu0 %v2039
        %v2512 = vpop.f32.mrb[0].mxu0
        %v2513 = vadd.f32 %v2352, %v2512
        %v2514 = vpop.f32.mrb[0].mxu0
        %v2515 = vpop.f32.mrb[0].mxu0
        %v2516 = vadd.f32 %v2355, %v2515
        %v2517 = vpop.f32.mrb[0].mxu0
        %2518 = vmatprep.mubr.bf16.mxu0 0
        %2519 = vmatmul.mubr.bf16.gmra.mrb[0].mxu0 %v2042
        %v2520 = vpop.f32.mrb[0].mxu0
        %v2521 = vadd.f32 %v2360, %v2520
        %v2522 = vpop.f32.mrb[0].mxu0
        %v2523 = vpop.f32.mrb[0].mxu0
        %v2524 = vadd.f32 %v2363, %v2523
        %v2525 = vpop.f32.mrb[0].mxu0
        %2526 = vmatprep.mubr.bf16.mxu0 0
        %2527 = vmatmul.mubr.bf16.gmra.mrb[0].mxu0 %v2045
        %v2528 = vpop.f32.mrb[0].mxu0
        %v2529 = vadd.f32 %v2368, %v2528
        %v2530 = vpop.f32.mrb[0].mxu0
        %v2531 = vpop.f32.mrb[0].mxu0
        %v2532 = vadd.f32 %v2371, %v2531
        %v2533 = vpop.f32.mrb[0].mxu0
        %2534 = vmatprep.mubr.bf16.mxu0 0
        %2535 = vmatmul.mubr.bf16.gmra.mrb[0].mxu0 %v2048
        %v2536 = vpop.f32.mrb[0].mxu0
        %v2537 = vadd.f32 %v2376, %v2536
        %v2538 = vpop.f32.mrb[0].mxu0
        %v2539 = vpop.f32.mrb[0].mxu0
        %v2540 = vadd.f32 %v2379, %v2539
        %v2541 = vpop.f32.mrb[0].mxu0
        %2542 = vmatprep.mubr.bf16.mxu0 0
        %2543 = vmatmul.mubr.bf16.gmra.mrb[0].mxu0 %v2051
        %v2544 = vpop.f32.mrb[0].mxu0
        %v2545 = vadd.f32 %v2384, %v2544
        %v2546 = vpop.f32.mrb[0].mxu0
        %v2547 = vpop.f32.mrb[0].mxu0
        %v2548 = vadd.f32 %v2387, %v2547
        %v2549 = vpop.f32.mrb[0].mxu0
        %2550 = vmatprep.mubr.bf16.mxu0 0
        %2551 = vmatmul.mubr.bf16.gmra.mrb[0].mxu0 %v2054
        %v2552 = vpop.f32.mrb[0].mxu0
        %v2553 = vadd.f32 %v2392, %v2552
        %v2554 = vpop.f32.mrb[0].mxu0
        %v2555 = vpop.f32.mrb[0].mxu0
        %v2556 = vadd.f32 %v2395, %v2555
        %v2557 = vpop.f32.mrb[0].mxu0
        %2558 = vmatprep.mubr.bf16.mxu0 0
        %2559 = vmatmul.mubr.bf16.gmra.mrb[0].mxu0 %v2057
        %v2560 = vpop.f32.mrb[0].mxu0
        %v2561 = vadd.f32 %v2400, %v2560
        %v2562 = vpop.f32.mrb[0].mxu0
        %v2563 = vpop.f32.mrb[0].mxu0
        %v2564 = vadd.f32 %v2403, %v2563
        %v2565 = vpop.f32.mrb[0].mxu0
        %2566 = vmatprep.mubr.bf16.mxu0 0
        %2567 = vmatmul.mubr.bf16.gmra.mrb[0].mxu0 %v2060
        %v2568 = vpop.f32.mrb[0].mxu0
        %v2569 = vadd.f32 %v2408, %v2568
        %v2570 = vpop.f32.mrb[0].mxu0
        %v2571 = vpop.f32.mrb[0].mxu0
        %v2572 = vadd.f32 %v2411, %v2571
        %v2573 = vpop.f32.mrb[0].mxu0
        %2574 = vdwg.mxu0
        %v2575 = vadd.f32 %v1886, %v2449
        %v2576 = vadd.f32 %v1889, %v2452
        %v2577 = vadd.f32 %v1894, %v2457
        %v2578 = vadd.f32 %v1897, %v2460
        %v2579 = vadd.f32 %v1902, %v2465
        %v2580 = vadd.f32 %v1905, %v2468
        %v2581 = vadd.f32 %v1910, %v2473
        %v2582 = vadd.f32 %v1913, %v2476
        %v2583 = vadd.f32 %v1918, %v2481
        %v2584 = vadd.f32 %v1921, %v2484
        %v2585 = vadd.f32 %v1926, %v2489
        %v2586 = vadd.f32 %v1929, %v2492
        %v2587 = vadd.f32 %v1934, %v2497
        %v2588 = vadd.f32 %v1937, %v2500
        %v2589 = vadd.f32 %v1942, %v2505
        %v2590 = vadd.f32 %v1945, %v2508
        %v2591 = vadd.f32 %v1950, %v2513
        %v2592 = vadd.f32 %v1953, %v2516
        %v2593 = vadd.f32 %v1958, %v2521
        %v2594 = vadd.f32 %v1961, %v2524
        %v2595 = vadd.f32 %v1966, %v2529
        %v2596 = vadd.f32 %v1969, %v2532
        %v2597 = vadd.f32 %v1974, %v2537
        %v2598 = vadd.f32 %v1977, %v2540
        %v2599 = vadd.f32 %v1982, %v2545
        %v2600 = vadd.f32 %v1985, %v2548
        %v2601 = vadd.f32 %v1990, %v2553
        %v2602 = vadd.f32 %v1993, %v2556
        %v2603 = vadd.f32 %v1998, %v2561
        %v2604 = vadd.f32 %v2001, %v2564
        %v2605 = vadd.f32 %v2006, %v2569
        %v2606 = vadd.f32 %v2009, %v2572
        %v2607 = vpack.c.bf16 %v2576, %v2575
        %v2608 = vpack.c.bf16 %v2578, %v2577
        %v2609 = vpack.c.bf16 %v2580, %v2579
        %v2610 = vpack.c.bf16 %v2582, %v2581
        %v2611 = vpack.c.bf16 %v2584, %v2583
        %v2612 = vpack.c.bf16 %v2586, %v2585
        %v2613 = vpack.c.bf16 %v2588, %v2587
        %v2614 = vpack.c.bf16 %v2590, %v2589
        %v2615 = vpack.c.bf16 %v2592, %v2591
        %v2616 = vpack.c.bf16 %v2594, %v2593
        %v2617 = vpack.c.bf16 %v2596, %v2595
        %v2618 = vpack.c.bf16 %v2598, %v2597
        %v2619 = vpack.c.bf16 %v2600, %v2599
        %v2620 = vpack.c.bf16 %v2602, %v2601
        %v2621 = vpack.c.bf16 %v2604, %v2603
        %v2622 = vpack.c.bf16 %v2606, %v2605
        %v2639 = vunpack.c.l.b16 %v2607
        %v2640 = vunpack.c.h.b16 %v2607
        %v2641 = vunpack.c.l.b16 %v2608
        %v2642 = vunpack.c.h.b16 %v2608
        %v2643 = vunpack.c.l.b16 %v2609
        %v2644 = vunpack.c.h.b16 %v2609
        %v2645 = vunpack.c.l.b16 %v2610
        %v2646 = vunpack.c.h.b16 %v2610
        %v2647 = vunpack.c.l.b16 %v2611
        %v2648 = vunpack.c.h.b16 %v2611
        %v2649 = vunpack.c.l.b16 %v2612
        %v2650 = vunpack.c.h.b16 %v2612
        %v2651 = vunpack.c.l.b16 %v2613
        %v2652 = vunpack.c.h.b16 %v2613
        %v2653 = vunpack.c.l.b16 %v2614
        %v2654 = vunpack.c.h.b16 %v2614
        %v2655 = vunpack.c.l.b16 %v2615
        %v2656 = vunpack.c.h.b16 %v2615
        %v2657 = vunpack.c.l.b16 %v2616
        %v2658 = vunpack.c.h.b16 %v2616
        %v2659 = vunpack.c.l.b16 %v2617
        %v2660 = vunpack.c.h.b16 %v2617
        %v2661 = vunpack.c.l.b16 %v2618
        %v2662 = vunpack.c.h.b16 %v2618
        %v2663 = vunpack.c.l.b16 %v2619
        %v2664 = vunpack.c.h.b16 %v2619
        %v2665 = vunpack.c.l.b16 %v2620
        %v2666 = vunpack.c.h.b16 %v2620
        %v2667 = vunpack.c.l.b16 %v2621
        %v2668 = vunpack.c.h.b16 %v2621
        %v2669 = vunpack.c.l.b16 %v2622
        %v2670 = vunpack.c.h.b16 %v2622
        %v2671 = vpack.c.b16 %v2639, %v2639
        %v2672 = vpack.c.b16 %v2640, %v2640
        %v2673 = vpack.c.b16 %v2641, %v2641
        %v2674 = vpack.c.b16 %v2642, %v2642
        %v2675 = vpack.c.b16 %v2643, %v2643
        %v2676 = vpack.c.b16 %v2644, %v2644
        %v2677 = vpack.c.b16 %v2645, %v2645
        %v2678 = vpack.c.b16 %v2646, %v2646
        %v2679 = vpack.c.b16 %v2647, %v2647
        %v2680 = vpack.c.b16 %v2648, %v2648
        %v2681 = vpack.c.b16 %v2649, %v2649
        %v2682 = vpack.c.b16 %v2650, %v2650
        %v2683 = vpack.c.b16 %v2651, %v2651
        %v2684 = vpack.c.b16 %v2652, %v2652
        %v2685 = vpack.c.b16 %v2653, %v2653
        %v2686 = vpack.c.b16 %v2654, %v2654
        %v2687 = vpack.c.b16 %v2655, %v2655
        %v2688 = vpack.c.b16 %v2656, %v2656
        %v2689 = vpack.c.b16 %v2657, %v2657
        %v2690 = vpack.c.b16 %v2658, %v2658
        %v2691 = vpack.c.b16 %v2659, %v2659
        %v2692 = vpack.c.b16 %v2660, %v2660
        %v2693 = vpack.c.b16 %v2661, %v2661
        %v2694 = vpack.c.b16 %v2662, %v2662
        %v2695 = vpack.c.b16 %v2663, %v2663
        %v2696 = vpack.c.b16 %v2664, %v2664
        %v2697 = vpack.c.b16 %v2665, %v2665
        %v2698 = vpack.c.b16 %v2666, %v2666
        %v2699 = vpack.c.b16 %v2667, %v2667
        %v2700 = vpack.c.b16 %v2668, %v2668
        %v2701 = vpack.c.b16 %v2669, %v2669
        %v2702 = vpack.c.b16 %v2670, %v2670
        %2735 = vst [vmem:[%s286] sm:$0xf] %v2671
        %2736 = vst [vmem:[%s286 + $0x4] sm:$0xf] %v2672
        %2737 = vst [vmem:[%s286 + $0x8] sm:$0xf] %v2673
        %2738 = vst [vmem:[%s286 + $0xc] sm:$0xf] %v2674
        %2739 = vst [vmem:[%s286 + $0x10] sm:$0xf] %v2675
        %2740 = vst [vmem:[%s286 + $0x14] sm:$0xf] %v2676
        %2741 = vst [vmem:[%s286 + $0x18] sm:$0xf] %v2677
        %2742 = vst [vmem:[%s286 + $0x1c] sm:$0xf] %v2678
        %2743 = vst [vmem:[%s286 + $0x20] sm:$0xf] %v2679
        %2744 = vst [vmem:[%s286 + $0x24] sm:$0xf] %v2680
        %2745 = vst [vmem:[%s286 + $0x28] sm:$0xf] %v2681
        %2746 = vst [vmem:[%s286 + $0x2c] sm:$0xf] %v2682
        %2747 = vst [vmem:[%s286 + $0x30] sm:$0xf] %v2683
        %2748 = vst [vmem:[%s286 + $0x34] sm:$0xf] %v2684
        %2749 = vst [vmem:[%s286 + $0x38] sm:$0xf] %v2685
        %2750 = vst [vmem:[%s286 + $0x3c] sm:$0xf] %v2686
        %2751 = vst [vmem:[%s286 + $0x40] sm:$0xf] %v2687
        %2752 = vst [vmem:[%s286 + $0x44] sm:$0xf] %v2688
        %2753 = vst [vmem:[%s286 + $0x48] sm:$0xf] %v2689
        %2754 = vst [vmem:[%s286 + $0x4c] sm:$0xf] %v2690
        %2755 = vst [vmem:[%s286 + $0x50] sm:$0xf] %v2691
        %2756 = vst [vmem:[%s286 + $0x54] sm:$0xf] %v2692
        %2757 = vst [vmem:[%s286 + $0x58] sm:$0xf] %v2693
        %2758 = vst [vmem:[%s286 + $0x5c] sm:$0xf] %v2694
        %2759 = vst [vmem:[%s286 + $0x60] sm:$0xf] %v2695
        %2760 = vst [vmem:[%s286 + $0x64] sm:$0xf] %v2696
        %2761 = vst [vmem:[%s286 + $0x68] sm:$0xf] %v2697
        %2762 = vst [vmem:[%s286 + $0x6c] sm:$0xf] %v2698
        %2763 = vst [vmem:[%s286 + $0x70] sm:$0xf] %v2699
        %2764 = vst [vmem:[%s286 + $0x74] sm:$0xf] %v2700
        %2765 = vst [vmem:[%s286 + $0x78] sm:$0xf] %v2701
        %2766 = vst [vmem:[%s286 + $0x7c] sm:$0xf] %v2702
        %v2767 = vadd.f32 %v2575, %v2576
        %v2768 = vadd.f32 %v2767, %v2577
        %v2769 = vadd.f32 %v2768, %v2578
        %v2770 = vadd.f32 %v2769, %v2579
        %v2771 = vadd.f32 %v2770, %v2580
        %v2772 = vadd.f32 %v2771, %v2581
        %v2773 = vadd.f32 %v2772, %v2582
        %v2774 = vadd.f32 %v2773, %v2583
        %v2775 = vadd.f32 %v2774, %v2584
        %v2776 = vadd.f32 %v2775, %v2585
        %v2777 = vadd.f32 %v2776, %v2586
        %v2778 = vadd.f32 %v2777, %v2587
        %v2779 = vadd.f32 %v2778, %v2588
        %v2780 = vadd.f32 %v2779, %v2589
        %v2781 = vadd.f32 %v2780, %v2590
        %v2782 = vadd.f32 %v2781, %v2591
        %v2783 = vadd.f32 %v2782, %v2592
        %v2784 = vadd.f32 %v2783, %v2593
        %v2785 = vadd.f32 %v2784, %v2594
        %v2786 = vadd.f32 %v2785, %v2595
        %v2787 = vadd.f32 %v2786, %v2596
        %v2788 = vadd.f32 %v2787, %v2597
        %v2789 = vadd.f32 %v2788, %v2598
        %v2790 = vadd.f32 %v2789, %v2599
        %v2791 = vadd.f32 %v2790, %v2600
        %v2792 = vadd.f32 %v2791, %v2601
        %v2793 = vadd.f32 %v2792, %v2602
        %v2794 = vadd.f32 %v2793, %v2603
        %v2795 = vadd.f32 %v2794, %v2604
        %v2796 = vadd.f32 %v2795, %v2605
        %v2797 = vadd.f32 %v2796, %v2606
        %v2798 = vrot.slane %v2797, 4
        %v2799 = vadd.f32 %v2797, %v2798
        %v2800 = vrot.slane %v2799, 2
        %v2801 = vadd.f32 %v2799, %v2800
        %v2802 = vrot.slane %v2801, 1
        %v2803 = vadd.f32 %v2801, %v2802
        %v2804 = vmul.f32 %v2575, %v2575
        %v2805 = vmul.f32 %v2576, %v2576
        %v2806 = vmul.f32 %v2577, %v2577
        %v2807 = vmul.f32 %v2578, %v2578
        %v2808 = vmul.f32 %v2579, %v2579
        %v2809 = vmul.f32 %v2580, %v2580
        %v2810 = vmul.f32 %v2581, %v2581
        %v2811 = vmul.f32 %v2582, %v2582
        %v2812 = vmul.f32 %v2583, %v2583
        %v2813 = vmul.f32 %v2584, %v2584
        %v2814 = vmul.f32 %v2585, %v2585
        %v2815 = vmul.f32 %v2586, %v2586
        %v2816 = vmul.f32 %v2587, %v2587
        %v2817 = vmul.f32 %v2588, %v2588
        %v2818 = vmul.f32 %v2589, %v2589
        %v2819 = vmul.f32 %v2590, %v2590
        %v2820 = vmul.f32 %v2591, %v2591
        %v2821 = vmul.f32 %v2592, %v2592
        %v2822 = vmul.f32 %v2593, %v2593
        %v2823 = vmul.f32 %v2594, %v2594
        %v2824 = vmul.f32 %v2595, %v2595
        %v2825 = vmul.f32 %v2596, %v2596
        %v2826 = vmul.f32 %v2597, %v2597
        %v2827 = vmul.f32 %v2598, %v2598
        %v2828 = vmul.f32 %v2599, %v2599
        %v2829 = vmul.f32 %v2600, %v2600
        %v2830 = vmul.f32 %v2601, %v2601
        %v2831 = vmul.f32 %v2602, %v2602
        %v2832 = vmul.f32 %v2603, %v2603
        %v2833 = vmul.f32 %v2604, %v2604
        %v2834 = vmul.f32 %v2605, %v2605
        %v2835 = vmul.f32 %v2606, %v2606
        %v2836 = vadd.f32 %v2804, %v2805
        %v2837 = vadd.f32 %v2836, %v2806
        %v2838 = vadd.f32 %v2837, %v2807
        %v2839 = vadd.f32 %v2838, %v2808
        %v2840 = vadd.f32 %v2839, %v2809
        %v2841 = vadd.f32 %v2840, %v2810
        %v2842 = vadd.f32 %v2841, %v2811
        %v2843 = vadd.f32 %v2842, %v2812
        %v2844 = vadd.f32 %v2843, %v2813
        %v2845 = vadd.f32 %v2844, %v2814
        %v2846 = vadd.f32 %v2845, %v2815
        %v2847 = vadd.f32 %v2846, %v2816
        %v2848 = vadd.f32 %v2847, %v2817
        %v2849 = vadd.f32 %v2848, %v2818
        %v2850 = vadd.f32 %v2849, %v2819
        %v2851 = vadd.f32 %v2850, %v2820
        %v2852 = vadd.f32 %v2851, %v2821
        %v2853 = vadd.f32 %v2852, %v2822
        %v2854 = vadd.f32 %v2853, %v2823
        %v2855 = vadd.f32 %v2854, %v2824
        %v2856 = vadd.f32 %v2855, %v2825
        %v2857 = vadd.f32 %v2856, %v2826
        %v2858 = vadd.f32 %v2857, %v2827
        %v2859 = vadd.f32 %v2858, %v2828
        %v2860 = vadd.f32 %v2859, %v2829
        %v2861 = vadd.f32 %v2860, %v2830
        %v2862 = vadd.f32 %v2861, %v2831
        %v2863 = vadd.f32 %v2862, %v2832
        %v2864 = vadd.f32 %v2863, %v2833
        %v2865 = vadd.f32 %v2864, %v2834
        %v2866 = vadd.f32 %v2865, %v2835
        %v2867 = vrot.slane %v2866, 4
        %v2868 = vadd.f32 %v2866, %v2867
        %v2869 = vrot.slane %v2868, 2
        %v2870 = vadd.f32 %v2868, %v2869
        %v2871 = vrot.slane %v2870, 1
        %v2872 = vadd.f32 %v2870, %v2871
        %vm2873 = vcmask 1040384
        %v2874 = vsel %vm2873, %v2803, %v2872
        %2875 = vst [vmem:[%s293] sm:$0x3] %v2874
        %s2876 = sand.u32 %s125, 1
        %s2877 = scalar_lea.sflag [#allocation5], %s2876
        %s2878 = sand.u32 %s125, 1
        %s2879 = smul.addr %s2878, 128
        %s2880 = scalar_lea.vmem [#allocation11], %s2879
        %s2881 = sand.u32 %s151, 1
        %s2882 = scalar_lea.sflag [#allocation13], %s2881
        %s2883 = sand.u32 %s151, 1
        %s2884 = smul.addr %s2883, 2
        %s2885 = scalar_lea.vmem [#allocation12], %s2884
        // Predicated region
        $region53: #{bottleneck_block.5} parent=35 // pred_check
          %p2886 = pneg %p135
        $region54: #{bottleneck_block.5} parent=35 // pred_check_branch
          %2888 = sbr.rel (%p2886) target = $region56
        $region55: #{bottleneck_block.5} parent=35 // pred_region
          %s2890 = ssub.s32 2048, 2048
          %2891 = vsyncadd %s2877, %s2890
          %s2892 = smul.addr %s28, 32
          %s2893 = smul.addr %s2892, 64
          %s2894 = scalar_lea.hbm %s4, %s2893
          %s2895 = sshll.u32 %s2880, 4
          %s2896 = int_to_ptr.vmem [resolvable:$true] %s2895
          %2901 = dma.vmem_to_hbm [thread:$0]  %s2896, 2048, %s2894, %s2877, 64, 64, 4
        $region56: #{bottleneck_block.5} parent=35 // pred_fallthru
          _
        // Predicated region
        $region57: #{bottleneck_block.5} parent=35 // pred_check
          %p2902 = pneg %p161
        $region58: #{bottleneck_block.5} parent=35 // pred_check_branch
          %2904 = sbr.rel (%p2902) target = $region60
        $region59: #{bottleneck_block.5} parent=35 // pred_region
          %s2906 = ssub.s32 32, 32
          %2907 = vsyncadd %s2882, %s2906
          %s2908 = smul.addr %s28, 32
          %s2909 = scalar_lea.hbm %s5, %s2908
          %s2911 = sshll.u32 %s2885, 4
          %s2912 = int_to_ptr.vmem [resolvable:$true] %s2911
          %2914 = dma.vmem_to_hbm [thread:$0]  %s2912, 32, %s2909, %s2882
        $region60: #{bottleneck_block.5} parent=35 // pred_fallthru
          _
      $region36: #{bottleneck_block.5} parent=5 // pred_fallthru
        _
      %p2915 = scmp.le.s32.totalorder 2, %s23
      // Predicated region
      $region61: #{bottleneck_block.5} parent=5 // pred_check
        %p2916 = pneg %p2915
      $region62: #{bottleneck_block.5} parent=5 // pred_check_branch
        %2918 = sbr.rel (%p2916) target = $region64
      $region63: #{bottleneck_block.5} parent=5 // pred_region
        %s2919 = ssub.s32 %s23, 2
        // Predicated region
        $region65: #{bottleneck_block.5} parent=63 // pred_check
          %p2920 = pneg %p141
        $region66: #{bottleneck_block.5} parent=63 // pred_check_branch
          %2922 = sbr.rel (%p2920) target = $region68
        $region67: #{bottleneck_block.5} parent=63 // pred_region
          %s2923 = sand.u32 %s126, 1
          %s2924 = scalar_lea.sflag [#allocation5], %s2923
          %s2925 = sand.u32 %s126, 1
          %s2926 = smul.addr %s2925, 128
          %s2927 = scalar_lea.vmem [#allocation11], %s2926
          %2928 = dma.done %s2924, 2048
        $region68: #{bottleneck_block.5} parent=63 // pred_fallthru
          _
        // Predicated region
        $region69: #{bottleneck_block.5} parent=63 // pred_check
          %p2929 = pneg %p167
        $region70: #{bottleneck_block.5} parent=63 // pred_check_branch
          %2931 = sbr.rel (%p2929) target = $region72
        $region71: #{bottleneck_block.5} parent=63 // pred_region
          %s2932 = sand.u32 %s152, 1
          %s2933 = scalar_lea.sflag [#allocation13], %s2932
          %s2934 = sand.u32 %s152, 1
          %s2935 = smul.addr %s2934, 2
          %s2936 = scalar_lea.vmem [#allocation12], %s2935
          %2937 = dma.done %s2933, 32
        $region72: #{bottleneck_block.5} parent=63 // pred_fallthru
          _
      $region64: #{bottleneck_block.5} parent=5 // pred_fallthru
        _
    $region6: #{bottleneck_block.5} parent=1 // loop_footer
      %s27 = sadd.s32 1, %s23
    $region7: #{bottleneck_block.5} parent=1 // loop_footer_branch
      %22 = sbr.rel target = $region3
    $region8: #{bottleneck_block.5} parent=1 // loop_exit
      _
    %2938 = vsyncpa [#allocation4], 1
    %s2939 = scalar_lea.sflag [#allocation4], 1
    %2940 = vsyncpa %s2939, 1
    %2941 = vsyncpa [#allocation7], 1
    %2942 = vsyncpa [#allocation10], 1
    %2943 = vsyncpa [#allocation5], 1
    %s2944 = scalar_lea.sflag [#allocation5], 1
    %2945 = vsyncpa %s2944, 1
    %2946 = vsyncpa [#allocation13], 1
    %s2947 = scalar_lea.sflag [#allocation13], 1
    %2948 = vsyncpa %s2947, 1

</llo_original>
